<compile_context>
chip_gen: v5e
topology: v5e:2x2
jax: 0.10.0
libtpu: 0.0.40
codegen_flags: <defaults>
</compile_context>

<pallas_src>
import functools

import jax
import jax.numpy as jnp
from jax.experimental import pallas as pl
from jax.experimental.pallas import tpu as pltpu

# ---------------- settings (stand-in for the `settings` global) -------------
CHANNEL = 8
UNIT_NUM = 3
NEG_SLOPE = 0.2


# ---------------- fused Pallas kernel ----------------------------------------
def _dense_connection_kernel(x_ref, w3_ref, b3_ref, w1_ref, b1_ref, o_ref,
                             xpad_ref, im2col_ref, cat_ref,
                             *, H, W, C, unit_num):
    """One grid step = one image.

    x_ref     : (1, H, W, C)                input image (NHWC)
    w3_ref    : (unit_num, 9*C, C)          im2col-packed 3x3 weights
    b3_ref    : (unit_num, 1, C)            3x3 biases
    w1_ref    : (unit_num, (unit_num+1)*C, C)  zero-padded stacked 1x1 weights
    b1_ref    : (unit_num, 1, C)            1x1 biases
    o_ref     : (1, H, W, C)                output image (NHWC)
    xpad_ref  : (H+2, W+2, C)   VMEM scratch, zero-padded unit input
    im2col_ref: (H, W, 9*C)     VMEM scratch, im2col patches
    cat_ref   : (H, W, (unit_num+1)*C) VMEM scratch, dense-connection buffer
    """
    # Zero scratches once per image: gives the conv padding border and makes
    # the not-yet-written cat columns exactly zero (so the zero-padded 1x1
    # weights give exact results for every unit).
    xpad_ref[...] = jnp.zeros_like(xpad_ref)
    cat_ref[...] = jnp.zeros_like(cat_ref)

    x = x_ref[0]                                   # (H, W, C)
    cat_ref[:, :, 0:C] = x

    cur = x
    for i in range(unit_num):
        # ---- unit: 3x3 conv (padding=1) + LeakyReLU(0.2), via im2col -------
        xpad_ref[1:H + 1, 1:W + 1, :] = cur        # interior; border stays 0
        for kh in range(3):
            for kw in range(3):
                t = kh * 3 + kw
                im2col_ref[:, :, t * C:(t + 1) * C] = (
                    xpad_ref[kh:kh + H, kw:kw + W, :])
        y = jnp.einsum("hwk,kd->hwd", im2col_ref[...], w3_ref[i],
                       preferred_element_type=jnp.float32)     # one K=9*C matmul
        y = y + b3_ref[i]                                      # (1, C) broadcast
        y = jnp.where(y > 0, y, NEG_SLOPE * y)

        # ---- dense concat (VMEM resident) + 1x1 conv + LeakyReLU(0.2) ------
        cat_ref[:, :, (i + 1) * C:(i + 2) * C] = y
        z = jnp.einsum("hwk,kd->hwd", cat_ref[...], w1_ref[i],
                       preferred_element_type=jnp.float32)     # one K=(unit_num+1)*C matmul
        z = z + b1_ref[i]
        z = jnp.where(z > 0, z, NEG_SLOPE * z)
        cur = z

    o_ref[0] = cur


# ---------------- wrapper -----------------------------------------------------
def dense_connection_forward(x_nchw, params, unit_num=UNIT_NUM):
    N, C, H, W = x_nchw.shape
    x = jnp.transpose(x_nchw, (0, 2, 3, 1))                    # NCHW -> NHWC
    cat_c = (unit_num + 1) * C

    # Pack weights once: 3x3 weights -> im2col form (9*C, C); 1x1 weights
    # zero-padded on the input-channel axis to the full cat width and stacked.
    w3 = jnp.stack([params["unit_w"][i].reshape(9 * C, C)
                    for i in range(unit_num)])                 # (U, 9C, C)
    b3 = jnp.stack([params["unit_b"][i].reshape(1, C)
                    for i in range(unit_num)])                 # (U, 1, C)
    w1 = jnp.stack([
        jnp.pad(params["c1_w"][i],
                ((0, cat_c - params["c1_w"][i].shape[0]), (0, 0)))
        for i in range(unit_num)])                             # (U, 4C, C)
    b1 = jnp.stack([params["c1_b"][i].reshape(1, C)
                    for i in range(unit_num)])                 # (U, 1, C)

    kernel = functools.partial(_dense_connection_kernel,
                               H=H, W=W, C=C, unit_num=unit_num)

    out = pl.pallas_call(
        kernel,
        out_shape=jax.ShapeDtypeStruct((N, H, W, C), jnp.float32),
        grid=(N,),
        in_specs=[
            pl.BlockSpec((1, H, W, C), lambda n: (n, 0, 0, 0)),
            pl.BlockSpec((unit_num, 9 * C, C), lambda n: (0, 0, 0)),
            pl.BlockSpec((unit_num, 1, C), lambda n: (0, 0, 0)),
            pl.BlockSpec((unit_num, cat_c, C), lambda n: (0, 0, 0)),
            pl.BlockSpec((unit_num, 1, C), lambda n: (0, 0, 0)),
        ],
        out_specs=pl.BlockSpec((1, H, W, C), lambda n: (n, 0, 0, 0)),
        scratch_shapes=[
            pltpu.VMEM((H + 2, W + 2, C), jnp.float32),        # padded input
            pltpu.VMEM((H, W, 9 * C), jnp.float32),            # im2col patches
            pltpu.VMEM((H, W, cat_c), jnp.float32),            # dense cat buffer
        ],
        compiler_params=pltpu.CompilerParams(
            dimension_semantics=("parallel",)),                # v7x: 2 TCs
    )(x, w3, b3, w1, b1)

    return jnp.transpose(out, (0, 3, 1, 2))                    # NHWC -> NCHW


# ---------------- params ------------------------------------------------------
def init_params(key, channel=CHANNEL, unit_num=UNIT_NUM):
    params = {"unit_w": [], "unit_b": [], "c1_w": [], "c1_b": []}
    for i in range(unit_num):
        key, k1, k2 = jax.random.split(key, 3)
        # unit: 3x3 conv, channel -> channel (HWIO)
        params["unit_w"].append(
            0.1 * jax.random.normal(k1, (3, 3, channel, channel), jnp.float32))
        params["unit_b"].append(
            0.01 * jnp.arange(channel, dtype=jnp.float32))
        # conv1x1: (i+2)*channel -> channel
        cin = (i + 2) * channel
        params["c1_w"].append(
            0.1 * jax.random.normal(k2, (cin, channel), jnp.float32))
        params["c1_b"].append(
            0.01 * jnp.arange(channel, dtype=jnp.float32))
    return params


# ---------------- pure-JAX reference (for validation) ------------------------
def _ref_conv3x3_lrelu(x, w, b):
    y = jax.lax.conv_general_dilated(
        x, w, window_strides=(1, 1), padding="SAME",
        dimension_numbers=("NHWC", "HWIO", "NHWC"))
    y = y + b[None, None, None, :]
    return jnp.where(y > 0, y, NEG_SLOPE * y)


def _ref_conv1x1_lrelu(x, w, b):
    y = jnp.einsum("nhwc,cd->nhwd", x, w) + b[None, None, None, :]
    return jnp.where(y > 0, y, NEG_SLOPE * y)


def dense_connection_ref(x_nchw, params, unit_num=UNIT_NUM):
    x = jnp.transpose(x_nchw, (0, 2, 3, 1))
    cat = [x]
    out = x
    for i in range(unit_num):
        tmp = _ref_conv3x3_lrelu(out, params["unit_w"][i], params["unit_b"][i])
        cat.append(tmp)
        out = _ref_conv1x1_lrelu(jnp.concatenate(cat, axis=-1),
                                 params["c1_w"][i], params["c1_b"][i])
    return jnp.transpose(out, (0, 3, 1, 2))


# ---------------- main --------------------------------------------------------
if __name__ == "__main__":
    key = jax.random.PRNGKey(0)
    key, kx, kp = jax.random.split(key, 3)

    # Input in PyTorch NCHW convention: (batch, channel, H, W)
    x = jax.random.normal(kx, (2, CHANNEL, 16, 16), jnp.float32)
    params = init_params(kp)

    out = dense_connection_forward(x, params)
    out = jax.block_until_ready(out)

    ref = dense_connection_ref(x, params)
    assert out.shape == (2, CHANNEL, 16, 16)
    assert jnp.allclose(out, ref, rtol=1e-4, atol=1e-4), "mismatch vs reference"

    print("KERNEL_OK")
</pallas_src>

<mosaic_0001>
module attributes {stable_mosaic.version = 11 : i64} {
  func.func @_dense_connection_kernel(%arg0: i32, %arg1: memref<1x16x16x8xf32, #tpu.memory_space<vmem>>, %arg2: memref<3x72x8xf32, #tpu.memory_space<vmem>>, %arg3: memref<3x1x8xf32, #tpu.memory_space<vmem>>, %arg4: memref<3x32x8xf32, #tpu.memory_space<vmem>>, %arg5: memref<3x1x8xf32, #tpu.memory_space<vmem>>, %arg6: memref<1x16x16x8xf32, #tpu.memory_space<vmem>>, %arg7: memref<18x18x8xf32, #tpu.memory_space<vmem>>, %arg8: memref<16x16x72xf32, #tpu.memory_space<vmem>>, %arg9: memref<16x16x32xf32, #tpu.memory_space<vmem>>) attributes {dimension_semantics = [#tpu.dimension_semantics<parallel>], iteration_bounds = array<i64: 2>, scalar_prefetch = 0 : i64, scratch_operands = 3 : i64, tpu.core_type = #tpu.core_type<tc>, window_params = [{transform_indices = @transform_0, window_bounds = array<i64: 1, 16, 16, 8>}, {pipeline_mode = #tpu.pipeline_mode<synchronous>, transform_indices = @transform_1, window_bounds = array<i64: 3, 72, 8>}, {pipeline_mode = #tpu.pipeline_mode<synchronous>, transform_indices = @transform_2, window_bounds = array<i64: 3, 1, 8>}, {pipeline_mode = #tpu.pipeline_mode<synchronous>, transform_indices = @transform_3, window_bounds = array<i64: 3, 32, 8>}, {pipeline_mode = #tpu.pipeline_mode<synchronous>, transform_indices = @transform_4, window_bounds = array<i64: 3, 1, 8>}, {transform_indices = @transform_5, window_bounds = array<i64: 1, 16, 16, 8>}]} {
    %cst = arith.constant 0.000000e+00 : f32
    %0 = vector.broadcast %cst : f32 to vector<18x18x8xf32>
    %c0 = arith.constant 0 : index
    %c0_0 = arith.constant 0 : index
    %c0_1 = arith.constant 0 : index
    %1 = vector.load %arg7[%c0, %c0_0, %c0_1] : memref<18x18x8xf32, #tpu.memory_space<vmem>>, vector<18x18x8xf32>
    tpu.vector_store %arg7[%c0, %c0_0, %c0_1], %0 {strides = array<i32>} : memref<18x18x8xf32, #tpu.memory_space<vmem>>, vector<18x18x8xf32>,
    %cst_2 = arith.constant 0.000000e+00 : f32
    %2 = vector.broadcast %cst_2 : f32 to vector<16x16x32xf32>
    %c0_3 = arith.constant 0 : index
    %c0_4 = arith.constant 0 : index
    %c0_5 = arith.constant 0 : index
    %3 = vector.load %arg9[%c0_3, %c0_4, %c0_5] : memref<16x16x32xf32, #tpu.memory_space<vmem>>, vector<16x16x32xf32>
    tpu.vector_store %arg9[%c0_3, %c0_4, %c0_5], %2 {strides = array<i32>} : memref<16x16x32xf32, #tpu.memory_space<vmem>>, vector<16x16x32xf32>,
    %c0_6 = arith.constant 0 : index
    %c0_7 = arith.constant 0 : index
    %c0_8 = arith.constant 0 : index
    %c0_9 = arith.constant 0 : index
    %4 = vector.load %arg1[%c0_6, %c0_7, %c0_8, %c0_9] : memref<1x16x16x8xf32, #tpu.memory_space<vmem>>, vector<1x16x16x8xf32>
    %5 = vector.shape_cast %4 : vector<1x16x16x8xf32> to vector<16x16x8xf32>
    %c0_10 = arith.constant 0 : index
    %c0_11 = arith.constant 0 : index
    %c0_12 = arith.constant 0 : index
    %6 = vector.load %arg9[%c0_10, %c0_11, %c0_12] : memref<16x16x32xf32, #tpu.memory_space<vmem>>, vector<16x16x8xf32>
    tpu.vector_store %arg9[%c0_10, %c0_11, %c0_12], %5 {strides = array<i32>} : memref<16x16x32xf32, #tpu.memory_space<vmem>>, vector<16x16x8xf32>,
    %c1 = arith.constant 1 : index
    %c1_13 = arith.constant 1 : index
    %c0_14 = arith.constant 0 : index
    %7 = vector.load %arg7[%c1, %c1_13, %c0_14] : memref<18x18x8xf32, #tpu.memory_space<vmem>>, vector<16x16x8xf32>
    tpu.vector_store %arg7[%c1, %c1_13, %c0_14], %5 {strides = array<i32>} : memref<18x18x8xf32, #tpu.memory_space<vmem>>, vector<16x16x8xf32>,
    %c0_15 = arith.constant 0 : index
    %c0_16 = arith.constant 0 : index
    %c0_17 = arith.constant 0 : index
    %8 = vector.load %arg7[%c0_15, %c0_16, %c0_17] : memref<18x18x8xf32, #tpu.memory_space<vmem>>, vector<16x16x8xf32>
    %c0_18 = arith.constant 0 : index
    %c0_19 = arith.constant 0 : index
    %c0_20 = arith.constant 0 : index
    %9 = vector.load %arg8[%c0_18, %c0_19, %c0_20] : memref<16x16x72xf32, #tpu.memory_space<vmem>>, vector<16x16x8xf32>
    tpu.vector_store %arg8[%c0_18, %c0_19, %c0_20], %8 {strides = array<i32>} : memref<16x16x72xf32, #tpu.memory_space<vmem>>, vector<16x16x8xf32>,
    %c0_21 = arith.constant 0 : index
    %c1_22 = arith.constant 1 : index
    %c0_23 = arith.constant 0 : index
    %10 = vector.load %arg7[%c0_21, %c1_22, %c0_23] : memref<18x18x8xf32, #tpu.memory_space<vmem>>, vector<16x16x8xf32>
    %c0_24 = arith.constant 0 : index
    %c0_25 = arith.constant 0 : index
    %c8 = arith.constant 8 : index
    %11 = vector.load %arg8[%c0_24, %c0_25, %c8] : memref<16x16x72xf32, #tpu.memory_space<vmem>>, vector<16x16x8xf32>
    tpu.vector_store %arg8[%c0_24, %c0_25, %c8], %10 {strides = array<i32>} : memref<16x16x72xf32, #tpu.memory_space<vmem>>, vector<16x16x8xf32>,
    %c0_26 = arith.constant 0 : index
    %c2 = arith.constant 2 : index
    %c0_27 = arith.constant 0 : index
    %12 = vector.load %arg7[%c0_26, %c2, %c0_27] : memref<18x18x8xf32, #tpu.memory_space<vmem>>, vector<16x16x8xf32>
    %c0_28 = arith.constant 0 : index
    %c0_29 = arith.constant 0 : index
    %c16 = arith.constant 16 : index
    %13 = vector.load %arg8[%c0_28, %c0_29, %c16] : memref<16x16x72xf32, #tpu.memory_space<vmem>>, vector<16x16x8xf32>
    tpu.vector_store %arg8[%c0_28, %c0_29, %c16], %12 {strides = array<i32>} : memref<16x16x72xf32, #tpu.memory_space<vmem>>, vector<16x16x8xf32>,
    %c1_30 = arith.constant 1 : index
    %c0_31 = arith.constant 0 : index
    %c0_32 = arith.constant 0 : index
    %14 = vector.load %arg7[%c1_30, %c0_31, %c0_32] : memref<18x18x8xf32, #tpu.memory_space<vmem>>, vector<16x16x8xf32>
    %c0_33 = arith.constant 0 : index
    %c0_34 = arith.constant 0 : index
    %c24 = arith.constant 24 : index
    %15 = vector.load %arg8[%c0_33, %c0_34, %c24] : memref<16x16x72xf32, #tpu.memory_space<vmem>>, vector<16x16x8xf32>
    tpu.vector_store %arg8[%c0_33, %c0_34, %c24], %14 {strides = array<i32>} : memref<16x16x72xf32, #tpu.memory_space<vmem>>, vector<16x16x8xf32>,
    %c1_35 = arith.constant 1 : index
    %c1_36 = arith.constant 1 : index
    %c0_37 = arith.constant 0 : index
    %16 = vector.load %arg7[%c1_35, %c1_36, %c0_37] : memref<18x18x8xf32, #tpu.memory_space<vmem>>, vector<16x16x8xf32>
    %c0_38 = arith.constant 0 : index
    %c0_39 = arith.constant 0 : index
    %c32 = arith.constant 32 : index
    %17 = vector.load %arg8[%c0_38, %c0_39, %c32] : memref<16x16x72xf32, #tpu.memory_space<vmem>>, vector<16x16x8xf32>
    tpu.vector_store %arg8[%c0_38, %c0_39, %c32], %16 {strides = array<i32>} : memref<16x16x72xf32, #tpu.memory_space<vmem>>, vector<16x16x8xf32>,
    %c1_40 = arith.constant 1 : index
    %c2_41 = arith.constant 2 : index
    %c0_42 = arith.constant 0 : index
    %18 = vector.load %arg7[%c1_40, %c2_41, %c0_42] : memref<18x18x8xf32, #tpu.memory_space<vmem>>, vector<16x16x8xf32>
    %c0_43 = arith.constant 0 : index
    %c0_44 = arith.constant 0 : index
    %c40 = arith.constant 40 : index
    %19 = vector.load %arg8[%c0_43, %c0_44, %c40] : memref<16x16x72xf32, #tpu.memory_space<vmem>>, vector<16x16x8xf32>
    tpu.vector_store %arg8[%c0_43, %c0_44, %c40], %18 {strides = array<i32>} : memref<16x16x72xf32, #tpu.memory_space<vmem>>, vector<16x16x8xf32>,
    %c2_45 = arith.constant 2 : index
    %c0_46 = arith.constant 0 : index
    %c0_47 = arith.constant 0 : index
    %20 = vector.load %arg7[%c2_45, %c0_46, %c0_47] : memref<18x18x8xf32, #tpu.memory_space<vmem>>, vector<16x16x8xf32>
    %c0_48 = arith.constant 0 : index
    %c0_49 = arith.constant 0 : index
    %c48 = arith.constant 48 : index
    %21 = vector.load %arg8[%c0_48, %c0_49, %c48] : memref<16x16x72xf32, #tpu.memory_space<vmem>>, vector<16x16x8xf32>
    tpu.vector_store %arg8[%c0_48, %c0_49, %c48], %20 {strides = array<i32>} : memref<16x16x72xf32, #tpu.memory_space<vmem>>, vector<16x16x8xf32>,
    %c2_50 = arith.constant 2 : index
    %c1_51 = arith.constant 1 : index
    %c0_52 = arith.constant 0 : index
    %22 = vector.load %arg7[%c2_50, %c1_51, %c0_52] : memref<18x18x8xf32, #tpu.memory_space<vmem>>, vector<16x16x8xf32>
    %c0_53 = arith.constant 0 : index
    %c0_54 = arith.constant 0 : index
    %c56 = arith.constant 56 : index
    %23 = vector.load %arg8[%c0_53, %c0_54, %c56] : memref<16x16x72xf32, #tpu.memory_space<vmem>>, vector<16x16x8xf32>
    tpu.vector_store %arg8[%c0_53, %c0_54, %c56], %22 {strides = array<i32>} : memref<16x16x72xf32, #tpu.memory_space<vmem>>, vector<16x16x8xf32>,
    %c2_55 = arith.constant 2 : index
    %c2_56 = arith.constant 2 : index
    %c0_57 = arith.constant 0 : index
    %24 = vector.load %arg7[%c2_55, %c2_56, %c0_57] : memref<18x18x8xf32, #tpu.memory_space<vmem>>, vector<16x16x8xf32>
    %c0_58 = arith.constant 0 : index
    %c0_59 = arith.constant 0 : index
    %c64 = arith.constant 64 : index
    %25 = vector.load %arg8[%c0_58, %c0_59, %c64] : memref<16x16x72xf32, #tpu.memory_space<vmem>>, vector<16x16x8xf32>
    tpu.vector_store %arg8[%c0_58, %c0_59, %c64], %24 {strides = array<i32>} : memref<16x16x72xf32, #tpu.memory_space<vmem>>, vector<16x16x8xf32>,
    %c0_60 = arith.constant 0 : index
    %c0_61 = arith.constant 0 : index
    %c0_62 = arith.constant 0 : index
    %26 = vector.load %arg8[%c0_60, %c0_61, %c0_62] : memref<16x16x72xf32, #tpu.memory_space<vmem>>, vector<16x16x72xf32>
    %c0_63 = arith.constant 0 : index
    %c0_64 = arith.constant 0 : index
    %c0_65 = arith.constant 0 : index
    %27 = vector.load %arg2[%c0_63, %c0_64, %c0_65] : memref<3x72x8xf32, #tpu.memory_space<vmem>>, vector<1x72x8xf32>
    %28 = vector.shape_cast %27 : vector<1x72x8xf32> to vector<72x8xf32>
    "tpu.trace_start"() <{level = 10 : i32, message = "hwk,kd->hwd"}> : () -> ()
    %cst_66 = arith.constant dense<0.000000e+00> : vector<16x16x8xf32>
    %29 = tpu.matmul %26, %28, %cst_66 {dimension_numbers = #tpu.dot_dimension_numbers<[2], [0], [0, 1], [1], [0, 0, 0, 1, 1, 1], [], []>} : vector<16x16x72xf32>, vector<72x8xf32>, vector<16x16x8xf32> -> vector<16x16x8xf32>
    "tpu.trace_stop"() : () -> ()
    %c0_67 = arith.constant 0 : index
    %c0_68 = arith.constant 0 : index
    %c0_69 = arith.constant 0 : index
    %30 = vector.load %arg3[%c0_67, %c0_68, %c0_69] : memref<3x1x8xf32, #tpu.memory_space<vmem>>, vector<1x1x8xf32>
    %31 = vector.shape_cast %30 : vector<1x1x8xf32> to vector<1x8xf32>
    %32 = vector.shape_cast %31 : vector<1x8xf32> to vector<1x1x8xf32>
    %33 = vector.broadcast %32 : vector<1x1x8xf32> to vector<16x16x8xf32>
    %34 = arith.addf %29, %33 : vector<16x16x8xf32>
    %cst_70 = arith.constant 0.000000e+00 : f32
    %35 = vector.broadcast %cst_70 : f32 to vector<16x16x8xf32>
    %36 = arith.cmpf ogt, %34, %35 : vector<16x16x8xf32>
    %cst_71 = arith.constant 2.000000e-01 : f32
    %37 = vector.broadcast %cst_71 : f32 to vector<16x16x8xf32>
    %38 = arith.mulf %37, %34 : vector<16x16x8xf32>
    %39 = arith.select %36, %34, %38 : vector<16x16x8xi1>, vector<16x16x8xf32>
    %c0_72 = arith.constant 0 : index
    %c0_73 = arith.constant 0 : index
    %c8_74 = arith.constant 8 : index
    %40 = vector.load %arg9[%c0_72, %c0_73, %c8_74] : memref<16x16x32xf32, #tpu.memory_space<vmem>>, vector<16x16x8xf32>
    tpu.vector_store %arg9[%c0_72, %c0_73, %c8_74], %39 {strides = array<i32>} : memref<16x16x32xf32, #tpu.memory_space<vmem>>, vector<16x16x8xf32>,
    %c0_75 = arith.constant 0 : index
    %c0_76 = arith.constant 0 : index
    %c0_77 = arith.constant 0 : index
    %41 = vector.load %arg9[%c0_75, %c0_76, %c0_77] : memref<16x16x32xf32, #tpu.memory_space<vmem>>, vector<16x16x32xf32>
    %c0_78 = arith.constant 0 : index
    %c0_79 = arith.constant 0 : index
    %c0_80 = arith.constant 0 : index
    %42 = vector.load %arg4[%c0_78, %c0_79, %c0_80] : memref<3x32x8xf32, #tpu.memory_space<vmem>>, vector<1x32x8xf32>
    %43 = vector.shape_cast %42 : vector<1x32x8xf32> to vector<32x8xf32>
    "tpu.trace_start"() <{level = 10 : i32, message = "hwk,kd->hwd"}> : () -> ()
    %cst_81 = arith.constant dense<0.000000e+00> : vector<16x16x8xf32>
    %44 = tpu.matmul %41, %43, %cst_81 {dimension_numbers = #tpu.dot_dimension_numbers<[2], [0], [0, 1], [1], [0, 0, 0, 1, 1, 1], [], []>} : vector<16x16x32xf32>, vector<32x8xf32>, vector<16x16x8xf32> -> vector<16x16x8xf32>
    "tpu.trace_stop"() : () -> ()
    %c0_82 = arith.constant 0 : index
    %c0_83 = arith.constant 0 : index
    %c0_84 = arith.constant 0 : index
    %45 = vector.load %arg5[%c0_82, %c0_83, %c0_84] : memref<3x1x8xf32, #tpu.memory_space<vmem>>, vector<1x1x8xf32>
    %46 = vector.shape_cast %45 : vector<1x1x8xf32> to vector<1x8xf32>
    %47 = vector.shape_cast %46 : vector<1x8xf32> to vector<1x1x8xf32>
    %48 = vector.broadcast %47 : vector<1x1x8xf32> to vector<16x16x8xf32>
    %49 = arith.addf %44, %48 : vector<16x16x8xf32>
    %cst_85 = arith.constant 0.000000e+00 : f32
    %50 = vector.broadcast %cst_85 : f32 to vector<16x16x8xf32>
    %51 = arith.cmpf ogt, %49, %50 : vector<16x16x8xf32>
    %cst_86 = arith.constant 2.000000e-01 : f32
    %52 = vector.broadcast %cst_86 : f32 to vector<16x16x8xf32>
    %53 = arith.mulf %52, %49 : vector<16x16x8xf32>
    %54 = arith.select %51, %49, %53 : vector<16x16x8xi1>, vector<16x16x8xf32>
    %c1_87 = arith.constant 1 : index
    %c1_88 = arith.constant 1 : index
    %c0_89 = arith.constant 0 : index
    %55 = vector.load %arg7[%c1_87, %c1_88, %c0_89] : memref<18x18x8xf32, #tpu.memory_space<vmem>>, vector<16x16x8xf32>
    tpu.vector_store %arg7[%c1_87, %c1_88, %c0_89], %54 {strides = array<i32>} : memref<18x18x8xf32, #tpu.memory_space<vmem>>, vector<16x16x8xf32>,
    %c0_90 = arith.constant 0 : index
    %c0_91 = arith.constant 0 : index
    %c0_92 = arith.constant 0 : index
    %56 = vector.load %arg7[%c0_90, %c0_91, %c0_92] : memref<18x18x8xf32, #tpu.memory_space<vmem>>, vector<16x16x8xf32>
    %c0_93 = arith.constant 0 : index
    %c0_94 = arith.constant 0 : index
    %c0_95 = arith.constant 0 : index
    %57 = vector.load %arg8[%c0_93, %c0_94, %c0_95] : memref<16x16x72xf32, #tpu.memory_space<vmem>>, vector<16x16x8xf32>
    tpu.vector_store %arg8[%c0_93, %c0_94, %c0_95], %56 {strides = array<i32>} : memref<16x16x72xf32, #tpu.memory_space<vmem>>, vector<16x16x8xf32>,
    %c0_96 = arith.constant 0 : index
    %c1_97 = arith.constant 1 : index
    %c0_98 = arith.constant 0 : index
    %58 = vector.load %arg7[%c0_96, %c1_97, %c0_98] : memref<18x18x8xf32, #tpu.memory_space<vmem>>, vector<16x16x8xf32>
    %c0_99 = arith.constant 0 : index
    %c0_100 = arith.constant 0 : index
    %c8_101 = arith.constant 8 : index
    %59 = vector.load %arg8[%c0_99, %c0_100, %c8_101] : memref<16x16x72xf32, #tpu.memory_space<vmem>>, vector<16x16x8xf32>
    tpu.vector_store %arg8[%c0_99, %c0_100, %c8_101], %58 {strides = array<i32>} : memref<16x16x72xf32, #tpu.memory_space<vmem>>, vector<16x16x8xf32>,
    %c0_102 = arith.constant 0 : index
    %c2_103 = arith.constant 2 : index
    %c0_104 = arith.constant 0 : index
    %60 = vector.load %arg7[%c0_102, %c2_103, %c0_104] : memref<18x18x8xf32, #tpu.memory_space<vmem>>, vector<16x16x8xf32>
    %c0_105 = arith.constant 0 : index
    %c0_106 = arith.constant 0 : index
    %c16_107 = arith.constant 16 : index
    %61 = vector.load %arg8[%c0_105, %c0_106, %c16_107] : memref<16x16x72xf32, #tpu.memory_space<vmem>>, vector<16x16x8xf32>
    tpu.vector_store %arg8[%c0_105, %c0_106, %c16_107], %60 {strides = array<i32>} : memref<16x16x72xf32, #tpu.memory_space<vmem>>, vector<16x16x8xf32>,
    %c1_108 = arith.constant 1 : index
    %c0_109 = arith.constant 0 : index
    %c0_110 = arith.constant 0 : index
    %62 = vector.load %arg7[%c1_108, %c0_109, %c0_110] : memref<18x18x8xf32, #tpu.memory_space<vmem>>, vector<16x16x8xf32>
    %c0_111 = arith.constant 0 : index
    %c0_112 = arith.constant 0 : index
    %c24_113 = arith.constant 24 : index
    %63 = vector.load %arg8[%c0_111, %c0_112, %c24_113] : memref<16x16x72xf32, #tpu.memory_space<vmem>>, vector<16x16x8xf32>
    tpu.vector_store %arg8[%c0_111, %c0_112, %c24_113], %62 {strides = array<i32>} : memref<16x16x72xf32, #tpu.memory_space<vmem>>, vector<16x16x8xf32>,
    %c1_114 = arith.constant 1 : index
    %c1_115 = arith.constant 1 : index
    %c0_116 = arith.constant 0 : index
    %64 = vector.load %arg7[%c1_114, %c1_115, %c0_116] : memref<18x18x8xf32, #tpu.memory_space<vmem>>, vector<16x16x8xf32>
    %c0_117 = arith.constant 0 : index
    %c0_118 = arith.constant 0 : index
    %c32_119 = arith.constant 32 : index
    %65 = vector.load %arg8[%c0_117, %c0_118, %c32_119] : memref<16x16x72xf32, #tpu.memory_space<vmem>>, vector<16x16x8xf32>
    tpu.vector_store %arg8[%c0_117, %c0_118, %c32_119], %64 {strides = array<i32>} : memref<16x16x72xf32, #tpu.memory_space<vmem>>, vector<16x16x8xf32>,
    %c1_120 = arith.constant 1 : index
    %c2_121 = arith.constant 2 : index
    %c0_122 = arith.constant 0 : index
    %66 = vector.load %arg7[%c1_120, %c2_121, %c0_122] : memref<18x18x8xf32, #tpu.memory_space<vmem>>, vector<16x16x8xf32>
    %c0_123 = arith.constant 0 : index
    %c0_124 = arith.constant 0 : index
    %c40_125 = arith.constant 40 : index
    %67 = vector.load %arg8[%c0_123, %c0_124, %c40_125] : memref<16x16x72xf32, #tpu.memory_space<vmem>>, vector<16x16x8xf32>
    tpu.vector_store %arg8[%c0_123, %c0_124, %c40_125], %66 {strides = array<i32>} : memref<16x16x72xf32, #tpu.memory_space<vmem>>, vector<16x16x8xf32>,
    %c2_126 = arith.constant 2 : index
    %c0_127 = arith.constant 0 : index
    %c0_128 = arith.constant 0 : index
    %68 = vector.load %arg7[%c2_126, %c0_127, %c0_128] : memref<18x18x8xf32, #tpu.memory_space<vmem>>, vector<16x16x8xf32>
    %c0_129 = arith.constant 0 : index
    %c0_130 = arith.constant 0 : index
    %c48_131 = arith.constant 48 : index
    %69 = vector.load %arg8[%c0_129, %c0_130, %c48_131] : memref<16x16x72xf32, #tpu.memory_space<vmem>>, vector<16x16x8xf32>
    tpu.vector_store %arg8[%c0_129, %c0_130, %c48_131], %68 {strides = array<i32>} : memref<16x16x72xf32, #tpu.memory_space<vmem>>, vector<16x16x8xf32>,
    %c2_132 = arith.constant 2 : index
    %c1_133 = arith.constant 1 : index
    %c0_134 = arith.constant 0 : index
    %70 = vector.load %arg7[%c2_132, %c1_133, %c0_134] : memref<18x18x8xf32, #tpu.memory_space<vmem>>, vector<16x16x8xf32>
    %c0_135 = arith.constant 0 : index
    %c0_136 = arith.constant 0 : index
    %c56_137 = arith.constant 56 : index
    %71 = vector.load %arg8[%c0_135, %c0_136, %c56_137] : memref<16x16x72xf32, #tpu.memory_space<vmem>>, vector<16x16x8xf32>
    tpu.vector_store %arg8[%c0_135, %c0_136, %c56_137], %70 {strides = array<i32>} : memref<16x16x72xf32, #tpu.memory_space<vmem>>, vector<16x16x8xf32>,
    %c2_138 = arith.constant 2 : index
    %c2_139 = arith.constant 2 : index
    %c0_140 = arith.constant 0 : index
    %72 = vector.load %arg7[%c2_138, %c2_139, %c0_140] : memref<18x18x8xf32, #tpu.memory_space<vmem>>, vector<16x16x8xf32>
    %c0_141 = arith.constant 0 : index
    %c0_142 = arith.constant 0 : index
    %c64_143 = arith.constant 64 : index
    %73 = vector.load %arg8[%c0_141, %c0_142, %c64_143] : memref<16x16x72xf32, #tpu.memory_space<vmem>>, vector<16x16x8xf32>
    tpu.vector_store %arg8[%c0_141, %c0_142, %c64_143], %72 {strides = array<i32>} : memref<16x16x72xf32, #tpu.memory_space<vmem>>, vector<16x16x8xf32>,
    %c0_144 = arith.constant 0 : index
    %c0_145 = arith.constant 0 : index
    %c0_146 = arith.constant 0 : index
    %74 = vector.load %arg8[%c0_144, %c0_145, %c0_146] : memref<16x16x72xf32, #tpu.memory_space<vmem>>, vector<16x16x72xf32>
    %c1_147 = arith.constant 1 : index
    %c0_148 = arith.constant 0 : index
    %c0_149 = arith.constant 0 : index
    %75 = vector.load %arg2[%c1_147, %c0_148, %c0_149] : memref<3x72x8xf32, #tpu.memory_space<vmem>>, vector<1x72x8xf32>
    %76 = vector.shape_cast %75 : vector<1x72x8xf32> to vector<72x8xf32>
    "tpu.trace_start"() <{level = 10 : i32, message = "hwk,kd->hwd"}> : () -> ()
    %cst_150 = arith.constant dense<0.000000e+00> : vector<16x16x8xf32>
    %77 = tpu.matmul %74, %76, %cst_150 {dimension_numbers = #tpu.dot_dimension_numbers<[2], [0], [0, 1], [1], [0, 0, 0, 1, 1, 1], [], []>} : vector<16x16x72xf32>, vector<72x8xf32>, vector<16x16x8xf32> -> vector<16x16x8xf32>
    "tpu.trace_stop"() : () -> ()
    %c1_151 = arith.constant 1 : index
    %c0_152 = arith.constant 0 : index
    %c0_153 = arith.constant 0 : index
    %78 = vector.load %arg3[%c1_151, %c0_152, %c0_153] : memref<3x1x8xf32, #tpu.memory_space<vmem>>, vector<1x1x8xf32>
    %79 = vector.shape_cast %78 : vector<1x1x8xf32> to vector<1x8xf32>
    %80 = vector.shape_cast %79 : vector<1x8xf32> to vector<1x1x8xf32>
    %81 = vector.broadcast %80 : vector<1x1x8xf32> to vector<16x16x8xf32>
    %82 = arith.addf %77, %81 : vector<16x16x8xf32>
    %cst_154 = arith.constant 0.000000e+00 : f32
    %83 = vector.broadcast %cst_154 : f32 to vector<16x16x8xf32>
    %84 = arith.cmpf ogt, %82, %83 : vector<16x16x8xf32>
    %cst_155 = arith.constant 2.000000e-01 : f32
    %85 = vector.broadcast %cst_155 : f32 to vector<16x16x8xf32>
    %86 = arith.mulf %85, %82 : vector<16x16x8xf32>
    %87 = arith.select %84, %82, %86 : vector<16x16x8xi1>, vector<16x16x8xf32>
    %c0_156 = arith.constant 0 : index
    %c0_157 = arith.constant 0 : index
    %c16_158 = arith.constant 16 : index
    %88 = vector.load %arg9[%c0_156, %c0_157, %c16_158] : memref<16x16x32xf32, #tpu.memory_space<vmem>>, vector<16x16x8xf32>
    tpu.vector_store %arg9[%c0_156, %c0_157, %c16_158], %87 {strides = array<i32>} : memref<16x16x32xf32, #tpu.memory_space<vmem>>, vector<16x16x8xf32>,
    %c0_159 = arith.constant 0 : index
    %c0_160 = arith.constant 0 : index
    %c0_161 = arith.constant 0 : index
    %89 = vector.load %arg9[%c0_159, %c0_160, %c0_161] : memref<16x16x32xf32, #tpu.memory_space<vmem>>, vector<16x16x32xf32>
    %c1_162 = arith.constant 1 : index
    %c0_163 = arith.constant 0 : index
    %c0_164 = arith.constant 0 : index
    %90 = vector.load %arg4[%c1_162, %c0_163, %c0_164] : memref<3x32x8xf32, #tpu.memory_space<vmem>>, vector<1x32x8xf32>
    %91 = vector.shape_cast %90 : vector<1x32x8xf32> to vector<32x8xf32>
    "tpu.trace_start"() <{level = 10 : i32, message = "hwk,kd->hwd"}> : () -> ()
    %cst_165 = arith.constant dense<0.000000e+00> : vector<16x16x8xf32>
    %92 = tpu.matmul %89, %91, %cst_165 {dimension_numbers = #tpu.dot_dimension_numbers<[2], [0], [0, 1], [1], [0, 0, 0, 1, 1, 1], [], []>} : vector<16x16x32xf32>, vector<32x8xf32>, vector<16x16x8xf32> -> vector<16x16x8xf32>
    "tpu.trace_stop"() : () -> ()
    %c1_166 = arith.constant 1 : index
    %c0_167 = arith.constant 0 : index
    %c0_168 = arith.constant 0 : index
    %93 = vector.load %arg5[%c1_166, %c0_167, %c0_168] : memref<3x1x8xf32, #tpu.memory_space<vmem>>, vector<1x1x8xf32>
    %94 = vector.shape_cast %93 : vector<1x1x8xf32> to vector<1x8xf32>
    %95 = vector.shape_cast %94 : vector<1x8xf32> to vector<1x1x8xf32>
    %96 = vector.broadcast %95 : vector<1x1x8xf32> to vector<16x16x8xf32>
    %97 = arith.addf %92, %96 : vector<16x16x8xf32>
    %cst_169 = arith.constant 0.000000e+00 : f32
    %98 = vector.broadcast %cst_169 : f32 to vector<16x16x8xf32>
    %99 = arith.cmpf ogt, %97, %98 : vector<16x16x8xf32>
    %cst_170 = arith.constant 2.000000e-01 : f32
    %100 = vector.broadcast %cst_170 : f32 to vector<16x16x8xf32>
    %101 = arith.mulf %100, %97 : vector<16x16x8xf32>
    %102 = arith.select %99, %97, %101 : vector<16x16x8xi1>, vector<16x16x8xf32>
    %c1_171 = arith.constant 1 : index
    %c1_172 = arith.constant 1 : index
    %c0_173 = arith.constant 0 : index
    %103 = vector.load %arg7[%c1_171, %c1_172, %c0_173] : memref<18x18x8xf32, #tpu.memory_space<vmem>>, vector<16x16x8xf32>
    tpu.vector_store %arg7[%c1_171, %c1_172, %c0_173], %102 {strides = array<i32>} : memref<18x18x8xf32, #tpu.memory_space<vmem>>, vector<16x16x8xf32>,
    %c0_174 = arith.constant 0 : index
    %c0_175 = arith.constant 0 : index
    %c0_176 = arith.constant 0 : index
    %104 = vector.load %arg7[%c0_174, %c0_175, %c0_176] : memref<18x18x8xf32, #tpu.memory_space<vmem>>, vector<16x16x8xf32>
    %c0_177 = arith.constant 0 : index
    %c0_178 = arith.constant 0 : index
    %c0_179 = arith.constant 0 : index
    %105 = vector.load %arg8[%c0_177, %c0_178, %c0_179] : memref<16x16x72xf32, #tpu.memory_space<vmem>>, vector<16x16x8xf32>
    tpu.vector_store %arg8[%c0_177, %c0_178, %c0_179], %104 {strides = array<i32>} : memref<16x16x72xf32, #tpu.memory_space<vmem>>, vector<16x16x8xf32>,
    %c0_180 = arith.constant 0 : index
    %c1_181 = arith.constant 1 : index
    %c0_182 = arith.constant 0 : index
    %106 = vector.load %arg7[%c0_180, %c1_181, %c0_182] : memref<18x18x8xf32, #tpu.memory_space<vmem>>, vector<16x16x8xf32>
    %c0_183 = arith.constant 0 : index
    %c0_184 = arith.constant 0 : index
    %c8_185 = arith.constant 8 : index
    %107 = vector.load %arg8[%c0_183, %c0_184, %c8_185] : memref<16x16x72xf32, #tpu.memory_space<vmem>>, vector<16x16x8xf32>
    tpu.vector_store %arg8[%c0_183, %c0_184, %c8_185], %106 {strides = array<i32>} : memref<16x16x72xf32, #tpu.memory_space<vmem>>, vector<16x16x8xf32>,
    %c0_186 = arith.constant 0 : index
    %c2_187 = arith.constant 2 : index
    %c0_188 = arith.constant 0 : index
    %108 = vector.load %arg7[%c0_186, %c2_187, %c0_188] : memref<18x18x8xf32, #tpu.memory_space<vmem>>, vector<16x16x8xf32>
    %c0_189 = arith.constant 0 : index
    %c0_190 = arith.constant 0 : index
    %c16_191 = arith.constant 16 : index
    %109 = vector.load %arg8[%c0_189, %c0_190, %c16_191] : memref<16x16x72xf32, #tpu.memory_space<vmem>>, vector<16x16x8xf32>
    tpu.vector_store %arg8[%c0_189, %c0_190, %c16_191], %108 {strides = array<i32>} : memref<16x16x72xf32, #tpu.memory_space<vmem>>, vector<16x16x8xf32>,
    %c1_192 = arith.constant 1 : index
    %c0_193 = arith.constant 0 : index
    %c0_194 = arith.constant 0 : index
    %110 = vector.load %arg7[%c1_192, %c0_193, %c0_194] : memref<18x18x8xf32, #tpu.memory_space<vmem>>, vector<16x16x8xf32>
    %c0_195 = arith.constant 0 : index
    %c0_196 = arith.constant 0 : index
    %c24_197 = arith.constant 24 : index
    %111 = vector.load %arg8[%c0_195, %c0_196, %c24_197] : memref<16x16x72xf32, #tpu.memory_space<vmem>>, vector<16x16x8xf32>
    tpu.vector_store %arg8[%c0_195, %c0_196, %c24_197], %110 {strides = array<i32>} : memref<16x16x72xf32, #tpu.memory_space<vmem>>, vector<16x16x8xf32>,
    %c1_198 = arith.constant 1 : index
    %c1_199 = arith.constant 1 : index
    %c0_200 = arith.constant 0 : index
    %112 = vector.load %arg7[%c1_198, %c1_199, %c0_200] : memref<18x18x8xf32, #tpu.memory_space<vmem>>, vector<16x16x8xf32>
    %c0_201 = arith.constant 0 : index
    %c0_202 = arith.constant 0 : index
    %c32_203 = arith.constant 32 : index
    %113 = vector.load %arg8[%c0_201, %c0_202, %c32_203] : memref<16x16x72xf32, #tpu.memory_space<vmem>>, vector<16x16x8xf32>
    tpu.vector_store %arg8[%c0_201, %c0_202, %c32_203], %112 {strides = array<i32>} : memref<16x16x72xf32, #tpu.memory_space<vmem>>, vector<16x16x8xf32>,
    %c1_204 = arith.constant 1 : index
    %c2_205 = arith.constant 2 : index
    %c0_206 = arith.constant 0 : index
    %114 = vector.load %arg7[%c1_204, %c2_205, %c0_206] : memref<18x18x8xf32, #tpu.memory_space<vmem>>, vector<16x16x8xf32>
    %c0_207 = arith.constant 0 : index
    %c0_208 = arith.constant 0 : index
    %c40_209 = arith.constant 40 : index
    %115 = vector.load %arg8[%c0_207, %c0_208, %c40_209] : memref<16x16x72xf32, #tpu.memory_space<vmem>>, vector<16x16x8xf32>
    tpu.vector_store %arg8[%c0_207, %c0_208, %c40_209], %114 {strides = array<i32>} : memref<16x16x72xf32, #tpu.memory_space<vmem>>, vector<16x16x8xf32>,
    %c2_210 = arith.constant 2 : index
    %c0_211 = arith.constant 0 : index
    %c0_212 = arith.constant 0 : index
    %116 = vector.load %arg7[%c2_210, %c0_211, %c0_212] : memref<18x18x8xf32, #tpu.memory_space<vmem>>, vector<16x16x8xf32>
    %c0_213 = arith.constant 0 : index
    %c0_214 = arith.constant 0 : index
    %c48_215 = arith.constant 48 : index
    %117 = vector.load %arg8[%c0_213, %c0_214, %c48_215] : memref<16x16x72xf32, #tpu.memory_space<vmem>>, vector<16x16x8xf32>
    tpu.vector_store %arg8[%c0_213, %c0_214, %c48_215], %116 {strides = array<i32>} : memref<16x16x72xf32, #tpu.memory_space<vmem>>, vector<16x16x8xf32>,
    %c2_216 = arith.constant 2 : index
    %c1_217 = arith.constant 1 : index
    %c0_218 = arith.constant 0 : index
    %118 = vector.load %arg7[%c2_216, %c1_217, %c0_218] : memref<18x18x8xf32, #tpu.memory_space<vmem>>, vector<16x16x8xf32>
    %c0_219 = arith.constant 0 : index
    %c0_220 = arith.constant 0 : index
    %c56_221 = arith.constant 56 : index
    %119 = vector.load %arg8[%c0_219, %c0_220, %c56_221] : memref<16x16x72xf32, #tpu.memory_space<vmem>>, vector<16x16x8xf32>
    tpu.vector_store %arg8[%c0_219, %c0_220, %c56_221], %118 {strides = array<i32>} : memref<16x16x72xf32, #tpu.memory_space<vmem>>, vector<16x16x8xf32>,
    %c2_222 = arith.constant 2 : index
    %c2_223 = arith.constant 2 : index
    %c0_224 = arith.constant 0 : index
    %120 = vector.load %arg7[%c2_222, %c2_223, %c0_224] : memref<18x18x8xf32, #tpu.memory_space<vmem>>, vector<16x16x8xf32>
    %c0_225 = arith.constant 0 : index
    %c0_226 = arith.constant 0 : index
    %c64_227 = arith.constant 64 : index
    %121 = vector.load %arg8[%c0_225, %c0_226, %c64_227] : memref<16x16x72xf32, #tpu.memory_space<vmem>>, vector<16x16x8xf32>
    tpu.vector_store %arg8[%c0_225, %c0_226, %c64_227], %120 {strides = array<i32>} : memref<16x16x72xf32, #tpu.memory_space<vmem>>, vector<16x16x8xf32>,
    %c0_228 = arith.constant 0 : index
    %c0_229 = arith.constant 0 : index
    %c0_230 = arith.constant 0 : index
    %122 = vector.load %arg8[%c0_228, %c0_229, %c0_230] : memref<16x16x72xf32, #tpu.memory_space<vmem>>, vector<16x16x72xf32>
    %c2_231 = arith.constant 2 : index
    %c0_232 = arith.constant 0 : index
    %c0_233 = arith.constant 0 : index
    %123 = vector.load %arg2[%c2_231, %c0_232, %c0_233] : memref<3x72x8xf32, #tpu.memory_space<vmem>>, vector<1x72x8xf32>
    %124 = vector.shape_cast %123 : vector<1x72x8xf32> to vector<72x8xf32>
    "tpu.trace_start"() <{level = 10 : i32, message = "hwk,kd->hwd"}> : () -> ()
    %cst_234 = arith.constant dense<0.000000e+00> : vector<16x16x8xf32>
    %125 = tpu.matmul %122, %124, %cst_234 {dimension_numbers = #tpu.dot_dimension_numbers<[2], [0], [0, 1], [1], [0, 0, 0, 1, 1, 1], [], []>} : vector<16x16x72xf32>, vector<72x8xf32>, vector<16x16x8xf32> -> vector<16x16x8xf32>
    "tpu.trace_stop"() : () -> ()
    %c2_235 = arith.constant 2 : index
    %c0_236 = arith.constant 0 : index
    %c0_237 = arith.constant 0 : index
    %126 = vector.load %arg3[%c2_235, %c0_236, %c0_237] : memref<3x1x8xf32, #tpu.memory_space<vmem>>, vector<1x1x8xf32>
    %127 = vector.shape_cast %126 : vector<1x1x8xf32> to vector<1x8xf32>
    %128 = vector.shape_cast %127 : vector<1x8xf32> to vector<1x1x8xf32>
    %129 = vector.broadcast %128 : vector<1x1x8xf32> to vector<16x16x8xf32>
    %130 = arith.addf %125, %129 : vector<16x16x8xf32>
    %cst_238 = arith.constant 0.000000e+00 : f32
    %131 = vector.broadcast %cst_238 : f32 to vector<16x16x8xf32>
    %132 = arith.cmpf ogt, %130, %131 : vector<16x16x8xf32>
    %cst_239 = arith.constant 2.000000e-01 : f32
    %133 = vector.broadcast %cst_239 : f32 to vector<16x16x8xf32>
    %134 = arith.mulf %133, %130 : vector<16x16x8xf32>
    %135 = arith.select %132, %130, %134 : vector<16x16x8xi1>, vector<16x16x8xf32>
    %c0_240 = arith.constant 0 : index
    %c0_241 = arith.constant 0 : index
    %c24_242 = arith.constant 24 : index
    %136 = vector.load %arg9[%c0_240, %c0_241, %c24_242] : memref<16x16x32xf32, #tpu.memory_space<vmem>>, vector<16x16x8xf32>
    tpu.vector_store %arg9[%c0_240, %c0_241, %c24_242], %135 {strides = array<i32>} : memref<16x16x32xf32, #tpu.memory_space<vmem>>, vector<16x16x8xf32>,
    %c0_243 = arith.constant 0 : index
    %c0_244 = arith.constant 0 : index
    %c0_245 = arith.constant 0 : index
    %137 = vector.load %arg9[%c0_243, %c0_244, %c0_245] : memref<16x16x32xf32, #tpu.memory_space<vmem>>, vector<16x16x32xf32>
    %c2_246 = arith.constant 2 : index
    %c0_247 = arith.constant 0 : index
    %c0_248 = arith.constant 0 : index
    %138 = vector.load %arg4[%c2_246, %c0_247, %c0_248] : memref<3x32x8xf32, #tpu.memory_space<vmem>>, vector<1x32x8xf32>
    %139 = vector.shape_cast %138 : vector<1x32x8xf32> to vector<32x8xf32>
    "tpu.trace_start"() <{level = 10 : i32, message = "hwk,kd->hwd"}> : () -> ()
    %cst_249 = arith.constant dense<0.000000e+00> : vector<16x16x8xf32>
    %140 = tpu.matmul %137, %139, %cst_249 {dimension_numbers = #tpu.dot_dimension_numbers<[2], [0], [0, 1], [1], [0, 0, 0, 1, 1, 1], [], []>} : vector<16x16x32xf32>, vector<32x8xf32>, vector<16x16x8xf32> -> vector<16x16x8xf32>
    "tpu.trace_stop"() : () -> ()
    %c2_250 = arith.constant 2 : index
    %c0_251 = arith.constant 0 : index
    %c0_252 = arith.constant 0 : index
    %141 = vector.load %arg5[%c2_250, %c0_251, %c0_252] : memref<3x1x8xf32, #tpu.memory_space<vmem>>, vector<1x1x8xf32>
    %142 = vector.shape_cast %141 : vector<1x1x8xf32> to vector<1x8xf32>
    %143 = vector.shape_cast %142 : vector<1x8xf32> to vector<1x1x8xf32>
    %144 = vector.broadcast %143 : vector<1x1x8xf32> to vector<16x16x8xf32>
    %145 = arith.addf %140, %144 : vector<16x16x8xf32>
    %cst_253 = arith.constant 0.000000e+00 : f32
    %146 = vector.broadcast %cst_253 : f32 to vector<16x16x8xf32>
    %147 = arith.cmpf ogt, %145, %146 : vector<16x16x8xf32>
    %cst_254 = arith.constant 2.000000e-01 : f32
    %148 = vector.broadcast %cst_254 : f32 to vector<16x16x8xf32>
    %149 = arith.mulf %148, %145 : vector<16x16x8xf32>
    %150 = arith.select %147, %145, %149 : vector<16x16x8xi1>, vector<16x16x8xf32>
    %c0_255 = arith.constant 0 : index
    %c0_256 = arith.constant 0 : index
    %c0_257 = arith.constant 0 : index
    %c0_258 = arith.constant 0 : index
    %151 = vector.load %arg6[%c0_255, %c0_256, %c0_257, %c0_258] : memref<1x16x16x8xf32, #tpu.memory_space<vmem>>, vector<1x16x16x8xf32>
    %152 = vector.shape_cast %151 : vector<1x16x16x8xf32> to vector<16x16x8xf32>
    %153 = vector.shape_cast %150 : vector<16x16x8xf32> to vector<1x16x16x8xf32>
    tpu.vector_store %arg6[%c0_255, %c0_256, %c0_257, %c0_258], %153 {strides = array<i32>} : memref<1x16x16x8xf32, #tpu.memory_space<vmem>>, vector<1x16x16x8xf32>,
    return
  }
  func.func @transform_0(%arg0: i32) -> (i32, i32, i32, i32) {
    %c0_i32 = arith.constant 0 : i32
    %c0_i32_0 = arith.constant 0 : i32
    %c0_i32_1 = arith.constant 0 : i32
    %c0_i32_2 = arith.constant 0 : i32
    return %arg0, %c0_i32, %c0_i32_0, %c0_i32_1 : i32, i32, i32, i32
  }
  func.func @transform_1(%arg0: i32) -> (i32, i32, i32) {
    %c0_i32 = arith.constant 0 : i32
    %c0_i32_0 = arith.constant 0 : i32
    %c0_i32_1 = arith.constant 0 : i32
    %c0_i32_2 = arith.constant 0 : i32
    return %c0_i32, %c0_i32_0, %c0_i32_1 : i32, i32, i32
  }
  func.func @transform_2(%arg0: i32) -> (i32, i32, i32) {
    %c0_i32 = arith.constant 0 : i32
    %c0_i32_0 = arith.constant 0 : i32
    %c0_i32_1 = arith.constant 0 : i32
    %c0_i32_2 = arith.constant 0 : i32
    return %c0_i32, %c0_i32_0, %c0_i32_1 : i32, i32, i32
  }
  func.func @transform_3(%arg0: i32) -> (i32, i32, i32) {
    %c0_i32 = arith.constant 0 : i32
    %c0_i32_0 = arith.constant 0 : i32
    %c0_i32_1 = arith.constant 0 : i32
    %c0_i32_2 = arith.constant 0 : i32
    return %c0_i32, %c0_i32_0, %c0_i32_1 : i32, i32, i32
  }
  func.func @transform_4(%arg0: i32) -> (i32, i32, i32) {
    %c0_i32 = arith.constant 0 : i32
    %c0_i32_0 = arith.constant 0 : i32
    %c0_i32_1 = arith.constant 0 : i32
    %c0_i32_2 = arith.constant 0 : i32
    return %c0_i32, %c0_i32_0, %c0_i32_1 : i32, i32, i32
  }
  func.func @transform_5(%arg0: i32) -> (i32, i32, i32, i32) {
    %c0_i32 = arith.constant 0 : i32
    %c0_i32_0 = arith.constant 0 : i32
    %c0_i32_1 = arith.constant 0 : i32
    %c0_i32_2 = arith.constant 0 : i32
    return %arg0, %c0_i32, %c0_i32_0, %c0_i32_1 : i32, i32, i32, i32
  }
}

</mosaic_0001>

<llo_original>
// kernel: tpu_custom_call.1
$region0: #{tpu_custom_call.1}
  #allocation0 [shape = 'u32[]', space=smem, size = 0x4, offset = 0x4, fixed_abs, tag = 'smem constant byte address 0x4 - core index']
  #allocation1 [shape = 'u32[72,128]{1,0:T(1,128)}', space=vmem, size = 0x9000, scoped, tag = 'internal scratch']
  #allocation2 [shape = 'f32[18,18,8]{2,1,0:T(8,128)}', space=vmem, size = 0x36000, scoped, tag = 'scratch operand']
  #allocation3 [shape = 'f32[16,16,72]{2,1,0:T(8,128)}', space=vmem, size = 0x20000, scoped, tag = 'scratch operand']
  #allocation4 [shape = 'f32[16,16,32]{2,1,0:T(8,128)}', space=vmem, size = 0x20000, scoped, tag = 'scratch operand']
  %s0 = inlined_call_operand.vmem [shape: f32[2,16,16,8], index: 0, kind: input, shape index: {}]
  %s1 = inlined_call_operand.vmem [shape: f32[3,72,8], index: 1, kind: input, shape index: {}]
  %s2 = inlined_call_operand.vmem [shape: f32[3,1,8], index: 2, kind: input, shape index: {}]
  %s3 = inlined_call_operand.vmem [shape: f32[3,32,8], index: 3, kind: input, shape index: {}]
  %s4 = inlined_call_operand.vmem [shape: f32[3,1,8], index: 4, kind: input, shape index: {}]
  %s5 = inlined_call_operand.vmem [shape: f32[2,16,16,8], index: 5, kind: output, shape index: {}]
  %s6 = sld [smem:[#allocation0]]
  $region53: #{tpu_custom_call.1} parent=0
    _
  %s8 = ssub.s32 1, %s6
  %s9 = scalar_select 0, %s8, %s6
  loop: start=0, step=1, limit=4
  $region2: #{tpu_custom_call.1} parent=0 // loop_pre_header
    _
  $region3: #{tpu_custom_call.1} parent=0 // loop_header
    %s11 = sphi 0, %s15
    %p12 = scmp.ge.s32.totalorder %s11, 4
    %s21 = sphi 0, %s23
    %s24 = sphi 0, %s21
    %s25 = sphi 0, %s24
    %s41 = sphi 0, %s25
    %s45 = sphi 0, %s45
    %s47 = sphi 0, %s45
    %s48 = sphi 0, %s47
    %s62 = sphi 0, %s48
    %s66 = sphi 0, %s66
    %s68 = sphi 0, %s66
    %s69 = sphi 0, %s68
    %s83 = sphi 0, %s69
    %s87 = sphi 0, %s87
    %s89 = sphi 0, %s87
    %s90 = sphi 0, %s89
    %s104 = sphi 0, %s90
    %s108 = sphi 0, %s108
    %s110 = sphi 0, %s108
    %s111 = sphi 0, %s110
    %s125 = sphi 0, %s111
    %s131 = sphi 0, %s133
    %s134 = sphi 0, %s131
    %s135 = sphi 0, %s134
    %s151 = sphi 0, %s135
  $region4: #{tpu_custom_call.1} parent=0 // loop_header_branch
    %14 = sbr.rel (%p12) target = $region8
  $region5: #{tpu_custom_call.1} parent=0 // loop_body
    %s16 = ssub.s32 %s11, 1
    %s17 = ssub.s32 %s11, 2
    %s18 = sadd.s32 %s11, 1
    %s19 = ssub.s32 %s11, %s18
    %p20 = scmp.eq.s32.totalorder %s19, 0
    %s22 = sadd.s32 %s21, 1
    %s23 = scalar_select %p20, %s21, %s22
    %p26 = pneg %p20
    %p27 = scmp.eq.s32.totalorder %s11, 1
    %p28 = por %p26, %p27
    %p29 = scmp.ne.s32.totalorder %s21, %s24
    %p30 = scmp.eq.s32.totalorder %s11, 0
    %p31 = por %p29, %p30
    %p32 = scmp.ne.s32.totalorder %s21, %s24
    %p33 = scmp.eq.s32.totalorder %s16, 1
    %p34 = por %p32, %p33
    %p35 = scmp.ne.s32.totalorder %s24, %s25
    %p36 = scmp.eq.s32.totalorder %s16, 0
    %p37 = por %p35, %p36
    %p38 = scmp.ne.s32.totalorder %s24, %s25
    %p39 = scmp.eq.s32.totalorder %s17, 1
    %p40 = por %p38, %p39
    %p42 = scmp.ne.s32.totalorder %s25, %s41
    %p43 = scmp.eq.s32.totalorder %s17, 0
    %p44 = por %p42, %p43
    %s46 = sadd.s32 %s45, 1
    %p49 = scmp.eq.s32.totalorder %s11, 1
    %p50 = scmp.ne.s32.totalorder %s45, %s47
    %p51 = scmp.eq.s32.totalorder %s11, 0
    %p52 = por %p50, %p51
    %p53 = scmp.ne.s32.totalorder %s45, %s47
    %p54 = scmp.eq.s32.totalorder %s16, 1
    %p55 = por %p53, %p54
    %p56 = scmp.ne.s32.totalorder %s47, %s48
    %p57 = scmp.eq.s32.totalorder %s16, 0
    %p58 = por %p56, %p57
    %p59 = scmp.ne.s32.totalorder %s47, %s48
    %p60 = scmp.eq.s32.totalorder %s17, 1
    %p61 = por %p59, %p60
    %p63 = scmp.ne.s32.totalorder %s48, %s62
    %p64 = scmp.eq.s32.totalorder %s17, 0
    %p65 = por %p63, %p64
    %s67 = sadd.s32 %s66, 1
    %p70 = scmp.eq.s32.totalorder %s11, 1
    %p71 = scmp.ne.s32.totalorder %s66, %s68
    %p72 = scmp.eq.s32.totalorder %s11, 0
    %p73 = por %p71, %p72
    %p74 = scmp.ne.s32.totalorder %s66, %s68
    %p75 = scmp.eq.s32.totalorder %s16, 1
    %p76 = por %p74, %p75
    %p77 = scmp.ne.s32.totalorder %s68, %s69
    %p78 = scmp.eq.s32.totalorder %s16, 0
    %p79 = por %p77, %p78
    %p80 = scmp.ne.s32.totalorder %s68, %s69
    %p81 = scmp.eq.s32.totalorder %s17, 1
    %p82 = por %p80, %p81
    %p84 = scmp.ne.s32.totalorder %s69, %s83
    %p85 = scmp.eq.s32.totalorder %s17, 0
    %p86 = por %p84, %p85
    %s88 = sadd.s32 %s87, 1
    %p91 = scmp.eq.s32.totalorder %s11, 1
    %p92 = scmp.ne.s32.totalorder %s87, %s89
    %p93 = scmp.eq.s32.totalorder %s11, 0
    %p94 = por %p92, %p93
    %p95 = scmp.ne.s32.totalorder %s87, %s89
    %p96 = scmp.eq.s32.totalorder %s16, 1
    %p97 = por %p95, %p96
    %p98 = scmp.ne.s32.totalorder %s89, %s90
    %p99 = scmp.eq.s32.totalorder %s16, 0
    %p100 = por %p98, %p99
    %p101 = scmp.ne.s32.totalorder %s89, %s90
    %p102 = scmp.eq.s32.totalorder %s17, 1
    %p103 = por %p101, %p102
    %p105 = scmp.ne.s32.totalorder %s90, %s104
    %p106 = scmp.eq.s32.totalorder %s17, 0
    %p107 = por %p105, %p106
    %s109 = sadd.s32 %s108, 1
    %p112 = scmp.eq.s32.totalorder %s11, 1
    %p113 = scmp.ne.s32.totalorder %s108, %s110
    %p114 = scmp.eq.s32.totalorder %s11, 0
    %p115 = por %p113, %p114
    %p116 = scmp.ne.s32.totalorder %s108, %s110
    %p117 = scmp.eq.s32.totalorder %s16, 1
    %p118 = por %p116, %p117
    %p119 = scmp.ne.s32.totalorder %s110, %s111
    %p120 = scmp.eq.s32.totalorder %s16, 0
    %p121 = por %p119, %p120
    %p122 = scmp.ne.s32.totalorder %s110, %s111
    %p123 = scmp.eq.s32.totalorder %s17, 1
    %p124 = por %p122, %p123
    %p126 = scmp.ne.s32.totalorder %s111, %s125
    %p127 = scmp.eq.s32.totalorder %s17, 0
    %p128 = por %p126, %p127
    %s129 = ssub.s32 %s11, %s18
    %p130 = scmp.eq.s32.totalorder %s129, 0
    %s132 = sadd.s32 %s131, 1
    %s133 = scalar_select %p130, %s131, %s132
    %p136 = pneg %p130
    %p137 = scmp.eq.s32.totalorder %s11, 1
    %p138 = por %p136, %p137
    %p139 = scmp.ne.s32.totalorder %s131, %s134
    %p140 = scmp.eq.s32.totalorder %s11, 0
    %p141 = por %p139, %p140
    %p142 = scmp.ne.s32.totalorder %s131, %s134
    %p143 = scmp.eq.s32.totalorder %s16, 1
    %p144 = por %p142, %p143
    %p145 = scmp.ne.s32.totalorder %s134, %s135
    %p146 = scmp.eq.s32.totalorder %s16, 0
    %p147 = por %p145, %p146
    %p148 = scmp.ne.s32.totalorder %s134, %s135
    %p149 = scmp.eq.s32.totalorder %s17, 1
    %p150 = por %p148, %p149
    %p152 = scmp.ne.s32.totalorder %s135, %s151
    %p153 = scmp.eq.s32.totalorder %s17, 0
    %p154 = por %p152, %p153
    %p155 = scmp.le.s32.totalorder 1, %s11
    %p156 = scmp.lt.s32.totalorder %s11, 3
    %p157 = pnand %p155, %p156
    %p158 = pneg %p157
    // Predicated region
    $region9: #{tpu_custom_call.1} parent=5 // pred_check
      _
    $region10: #{tpu_custom_call.1} parent=5 // pred_check_branch
      %160 = sbr.rel (%p157) target = $region12
    $region11: #{tpu_custom_call.1} parent=5 // pred_region
      %s161 = ssub.s32 %s11, 1
      // Predicated region
      $region13: #{tpu_custom_call.1} parent=11 // pred_check
        %p162 = pneg %p58
      $region14: #{tpu_custom_call.1} parent=11 // pred_check_branch
        %164 = sbr.rel (%p162) target = $region16
      $region15: #{tpu_custom_call.1} parent=11 // pred_region
        _
      $region16: #{tpu_custom_call.1} parent=11 // pred_fallthru
        _
      // Predicated region
      $region17: #{tpu_custom_call.1} parent=11 // pred_check
        %p165 = pneg %p79
      $region18: #{tpu_custom_call.1} parent=11 // pred_check_branch
        %167 = sbr.rel (%p165) target = $region20
      $region19: #{tpu_custom_call.1} parent=11 // pred_region
        _
      $region20: #{tpu_custom_call.1} parent=11 // pred_fallthru
        _
      // Predicated region
      $region21: #{tpu_custom_call.1} parent=11 // pred_check
        %p168 = pneg %p100
      $region22: #{tpu_custom_call.1} parent=11 // pred_check_branch
        %170 = sbr.rel (%p168) target = $region24
      $region23: #{tpu_custom_call.1} parent=11 // pred_region
        _
      $region24: #{tpu_custom_call.1} parent=11 // pred_fallthru
        _
      // Predicated region
      $region25: #{tpu_custom_call.1} parent=11 // pred_check
        %p171 = pneg %p121
      $region26: #{tpu_custom_call.1} parent=11 // pred_check_branch
        %173 = sbr.rel (%p171) target = $region28
      $region27: #{tpu_custom_call.1} parent=11 // pred_region
        _
      $region28: #{tpu_custom_call.1} parent=11 // pred_fallthru
        _
    $region12: #{tpu_custom_call.1} parent=5 // pred_fallthru
      _
    %p174 = scmp.lt.s32.totalorder %s11, 2
    // Predicated region
    $region29: #{tpu_custom_call.1} parent=5 // pred_check
      %p175 = pneg %p174
    $region30: #{tpu_custom_call.1} parent=5 // pred_check_branch
      %177 = sbr.rel (%p175) target = $region32
    $region31: #{tpu_custom_call.1} parent=5 // pred_region
      // Predicated region
      $region33: #{tpu_custom_call.1} parent=31 // pred_check
        %p178 = pneg %p31
      $region34: #{tpu_custom_call.1} parent=31 // pred_check_branch
        %180 = sbr.rel (%p178) target = $region36
      $region35: #{tpu_custom_call.1} parent=31 // pred_region
        %p181 = scmp.lt.s32.totalorder %s11, 1
        %s182 = scalar_select %p181, %s11, 1
        %s183 = smul.addr %s182, 32
        %s184 = smul.addr %s183, 8
        %s185 = scalar_lea.vmem %s0, %s184
      $region36: #{tpu_custom_call.1} parent=31 // pred_fallthru
        _
    $region32: #{tpu_custom_call.1} parent=5 // pred_fallthru
      _
    %p186 = scmp.le.s32.totalorder 1, %s11
    %p187 = scmp.lt.s32.totalorder %s11, 3
    %p188 = pnand %p186, %p187
    %p189 = pneg %p188
    // Predicated region
    $region37: #{tpu_custom_call.1} parent=5 // pred_check
      _
    $region38: #{tpu_custom_call.1} parent=5 // pred_check_branch
      %191 = sbr.rel (%p188) target = $region40
    $region39: #{tpu_custom_call.1} parent=5 // pred_region
      %s192 = ssub.s32 %s11, 1
      %p193 = scmp.lt.s32.totalorder %s16, 1
      %s194 = scalar_select %p193, %s16, 1
      %s195 = smul.addr %s194, 32
      %s196 = smul.addr %s195, 8
      %s197 = scalar_lea.vmem %s0, %s196
      %p198 = pneg %p37
      %p199 = pneg %p34
      %p200 = pneg %p58
      %p201 = pneg %p55
      %p202 = pneg %p79
      %p203 = pneg %p76
      %p204 = pneg %p100
      %p205 = pneg %p97
      %p206 = pneg %p121
      %p207 = pneg %p118
      %p208 = pneg %p147
      %p209 = pneg %p144
      %p210 = scmp.lt.s32.totalorder %s16, 1
      %s211 = scalar_select %p210, %s16, 1
      %s212 = smul.addr %s211, 32
      %s213 = smul.addr %s212, 8
      %s214 = scalar_lea.vmem %s5, %s213
      %p215 = scmp.lt.s32.totalorder %s16, 1
      %s216 = scalar_select %p215, %s16, 1
      %s217 = smul.addr %s216, 32
      %s218 = smul.addr %s217, 8
      %s219 = scalar_lea.vmem %s0, %s218
      %p220 = scmp.lt.s32.totalorder %s16, 1
      %s221 = scalar_select %p220, %s16, 1
      %s222 = smul.addr %s221, 32
      %s223 = smul.addr %s222, 8
      %s224 = scalar_lea.vmem %s5, %s223
      %vm225 = vcmask 64512
      %226 = vst.msk [vmem:[#allocation2] sm:$0xff] %vm225, 0.0
      %227 = vst.msk [vmem:[#allocation2 + $0x8] sm:$0xff] %vm225, 0.0
      %vm228 = vcmask 58368
      %229 = vst.msk [vmem:[#allocation2 + $0x10] sm:$0x3] %vm228, 0.0
      %230 = vst.msk [vmem:[#allocation2 + $0x18] sm:$0xff] %vm225, 0.0
      %231 = vst.msk [vmem:[#allocation2 + $0x20] sm:$0xff] %vm225, 0.0
      %232 = vst.msk [vmem:[#allocation2 + $0x28] sm:$0x3] %vm228, 0.0
      %233 = vst.msk [vmem:[#allocation2 + $0x30] sm:$0xff] %vm225, 0.0
      %234 = vst.msk [vmem:[#allocation2 + $0x38] sm:$0xff] %vm225, 0.0
      %235 = vst.msk [vmem:[#allocation2 + $0x40] sm:$0x3] %vm228, 0.0
      %236 = vst.msk [vmem:[#allocation2 + $0x48] sm:$0xff] %vm225, 0.0
      %237 = vst.msk [vmem:[#allocation2 + $0x50] sm:$0xff] %vm225, 0.0
      %238 = vst.msk [vmem:[#allocation2 + $0x58] sm:$0x3] %vm228, 0.0
      %239 = vst.msk [vmem:[#allocation2 + $0x60] sm:$0xff] %vm225, 0.0
      %240 = vst.msk [vmem:[#allocation2 + $0x68] sm:$0xff] %vm225, 0.0
      %241 = vst.msk [vmem:[#allocation2 + $0x70] sm:$0x3] %vm228, 0.0
      %242 = vst.msk [vmem:[#allocation2 + $0x78] sm:$0xff] %vm225, 0.0
      %243 = vst.msk [vmem:[#allocation2 + $0x80] sm:$0xff] %vm225, 0.0
      %244 = vst.msk [vmem:[#allocation2 + $0x88] sm:$0x3] %vm228, 0.0
      %245 = vst.msk [vmem:[#allocation2 + $0x90] sm:$0xff] %vm225, 0.0
      %246 = vst.msk [vmem:[#allocation2 + $0x98] sm:$0xff] %vm225, 0.0
      %247 = vst.msk [vmem:[#allocation2 + $0xa0] sm:$0x3] %vm228, 0.0
      %248 = vst.msk [vmem:[#allocation2 + $0xa8] sm:$0xff] %vm225, 0.0
      %249 = vst.msk [vmem:[#allocation2 + $0xb0] sm:$0xff] %vm225, 0.0
      %250 = vst.msk [vmem:[#allocation2 + $0xb8] sm:$0x3] %vm228, 0.0
      %251 = vst.msk [vmem:[#allocation2 + $0xc0] sm:$0xff] %vm225, 0.0
      %252 = vst.msk [vmem:[#allocation2 + $0xc8] sm:$0xff] %vm225, 0.0
      %253 = vst.msk [vmem:[#allocation2 + $0xd0] sm:$0x3] %vm228, 0.0
      %254 = vst.msk [vmem:[#allocation2 + $0xd8] sm:$0xff] %vm225, 0.0
      %255 = vst.msk [vmem:[#allocation2 + $0xe0] sm:$0xff] %vm225, 0.0
      %256 = vst.msk [vmem:[#allocation2 + $0xe8] sm:$0x3] %vm228, 0.0
      %257 = vst.msk [vmem:[#allocation2 + $0xf0] sm:$0xff] %vm225, 0.0
      %258 = vst.msk [vmem:[#allocation2 + $0xf8] sm:$0xff] %vm225, 0.0
      %259 = vst.msk [vmem:[#allocation2 + $0x100] sm:$0x3] %vm228, 0.0
      %260 = vst.msk [vmem:[#allocation2 + $0x108] sm:$0xff] %vm225, 0.0
      %261 = vst.msk [vmem:[#allocation2 + $0x110] sm:$0xff] %vm225, 0.0
      %262 = vst.msk [vmem:[#allocation2 + $0x118] sm:$0x3] %vm228, 0.0
      %263 = vst.msk [vmem:[#allocation2 + $0x120] sm:$0xff] %vm225, 0.0
      %264 = vst.msk [vmem:[#allocation2 + $0x128] sm:$0xff] %vm225, 0.0
      %265 = vst.msk [vmem:[#allocation2 + $0x130] sm:$0x3] %vm228, 0.0
      %266 = vst.msk [vmem:[#allocation2 + $0x138] sm:$0xff] %vm225, 0.0
      %267 = vst.msk [vmem:[#allocation2 + $0x140] sm:$0xff] %vm225, 0.0
      %268 = vst.msk [vmem:[#allocation2 + $0x148] sm:$0x3] %vm228, 0.0
      %269 = vst.msk [vmem:[#allocation2 + $0x150] sm:$0xff] %vm225, 0.0
      %270 = vst.msk [vmem:[#allocation2 + $0x158] sm:$0xff] %vm225, 0.0
      %271 = vst.msk [vmem:[#allocation2 + $0x160] sm:$0x3] %vm228, 0.0
      %272 = vst.msk [vmem:[#allocation2 + $0x168] sm:$0xff] %vm225, 0.0
      %273 = vst.msk [vmem:[#allocation2 + $0x170] sm:$0xff] %vm225, 0.0
      %274 = vst.msk [vmem:[#allocation2 + $0x178] sm:$0x3] %vm228, 0.0
      %275 = vst.msk [vmem:[#allocation2 + $0x180] sm:$0xff] %vm225, 0.0
      %276 = vst.msk [vmem:[#allocation2 + $0x188] sm:$0xff] %vm225, 0.0
      %277 = vst.msk [vmem:[#allocation2 + $0x190] sm:$0x3] %vm228, 0.0
      %278 = vst.msk [vmem:[#allocation2 + $0x198] sm:$0xff] %vm225, 0.0
      %279 = vst.msk [vmem:[#allocation2 + $0x1a0] sm:$0xff] %vm225, 0.0
      %280 = vst.msk [vmem:[#allocation2 + $0x1a8] sm:$0x3] %vm228, 0.0
      %vm281 = vcmask 261120
      %282 = vst.msk [vmem:[#allocation4] sm:$0xff] %vm281, 0.0
      %283 = vst.msk [vmem:[#allocation4 + $0x8] sm:$0xff] %vm281, 0.0
      %284 = vst.msk [vmem:[#allocation4 + $0x10] sm:$0xff] %vm281, 0.0
      %285 = vst.msk [vmem:[#allocation4 + $0x18] sm:$0xff] %vm281, 0.0
      %286 = vst.msk [vmem:[#allocation4 + $0x20] sm:$0xff] %vm281, 0.0
      %287 = vst.msk [vmem:[#allocation4 + $0x28] sm:$0xff] %vm281, 0.0
      %288 = vst.msk [vmem:[#allocation4 + $0x30] sm:$0xff] %vm281, 0.0
      %289 = vst.msk [vmem:[#allocation4 + $0x38] sm:$0xff] %vm281, 0.0
      %290 = vst.msk [vmem:[#allocation4 + $0x40] sm:$0xff] %vm281, 0.0
      %291 = vst.msk [vmem:[#allocation4 + $0x48] sm:$0xff] %vm281, 0.0
      %292 = vst.msk [vmem:[#allocation4 + $0x50] sm:$0xff] %vm281, 0.0
      %293 = vst.msk [vmem:[#allocation4 + $0x58] sm:$0xff] %vm281, 0.0
      %294 = vst.msk [vmem:[#allocation4 + $0x60] sm:$0xff] %vm281, 0.0
      %295 = vst.msk [vmem:[#allocation4 + $0x68] sm:$0xff] %vm281, 0.0
      %296 = vst.msk [vmem:[#allocation4 + $0x70] sm:$0xff] %vm281, 0.0
      %297 = vst.msk [vmem:[#allocation4 + $0x78] sm:$0xff] %vm281, 0.0
      %298 = vst.msk [vmem:[#allocation4 + $0x80] sm:$0xff] %vm281, 0.0
      %299 = vst.msk [vmem:[#allocation4 + $0x88] sm:$0xff] %vm281, 0.0
      %300 = vst.msk [vmem:[#allocation4 + $0x90] sm:$0xff] %vm281, 0.0
      %301 = vst.msk [vmem:[#allocation4 + $0x98] sm:$0xff] %vm281, 0.0
      %302 = vst.msk [vmem:[#allocation4 + $0xa0] sm:$0xff] %vm281, 0.0
      %303 = vst.msk [vmem:[#allocation4 + $0xa8] sm:$0xff] %vm281, 0.0
      %304 = vst.msk [vmem:[#allocation4 + $0xb0] sm:$0xff] %vm281, 0.0
      %305 = vst.msk [vmem:[#allocation4 + $0xb8] sm:$0xff] %vm281, 0.0
      %306 = vst.msk [vmem:[#allocation4 + $0xc0] sm:$0xff] %vm281, 0.0
      %307 = vst.msk [vmem:[#allocation4 + $0xc8] sm:$0xff] %vm281, 0.0
      %308 = vst.msk [vmem:[#allocation4 + $0xd0] sm:$0xff] %vm281, 0.0
      %309 = vst.msk [vmem:[#allocation4 + $0xd8] sm:$0xff] %vm281, 0.0
      %310 = vst.msk [vmem:[#allocation4 + $0xe0] sm:$0xff] %vm281, 0.0
      %311 = vst.msk [vmem:[#allocation4 + $0xe8] sm:$0xff] %vm281, 0.0
      %312 = vst.msk [vmem:[#allocation4 + $0xf0] sm:$0xff] %vm281, 0.0
      %313 = vst.msk [vmem:[#allocation4 + $0xf8] sm:$0xff] %vm281, 0.0
      %v314 = vld [vmem:[%s219] sm:$0xff]
      %v315 = vld [vmem:[%s219 + $0x8] sm:$0xff]
      %v316 = vld [vmem:[%s219 + $0x10] sm:$0xff]
      %v317 = vld [vmem:[%s219 + $0x18] sm:$0xff]
      %v318 = vld [vmem:[%s219 + $0x20] sm:$0xff]
      %v319 = vld [vmem:[%s219 + $0x28] sm:$0xff]
      %v320 = vld [vmem:[%s219 + $0x30] sm:$0xff]
      %v321 = vld [vmem:[%s219 + $0x38] sm:$0xff]
      %v322 = vld [vmem:[%s219 + $0x40] sm:$0xff]
      %v323 = vld [vmem:[%s219 + $0x48] sm:$0xff]
      %v324 = vld [vmem:[%s219 + $0x50] sm:$0xff]
      %v325 = vld [vmem:[%s219 + $0x58] sm:$0xff]
      %v326 = vld [vmem:[%s219 + $0x60] sm:$0xff]
      %v327 = vld [vmem:[%s219 + $0x68] sm:$0xff]
      %v328 = vld [vmem:[%s219 + $0x70] sm:$0xff]
      %v329 = vld [vmem:[%s219 + $0x78] sm:$0xff]
      %v330 = vld [vmem:[%s219 + $0x80] sm:$0xff]
      %v331 = vld [vmem:[%s219 + $0x88] sm:$0xff]
      %v332 = vld [vmem:[%s219 + $0x90] sm:$0xff]
      %v333 = vld [vmem:[%s219 + $0x98] sm:$0xff]
      %v334 = vld [vmem:[%s219 + $0xa0] sm:$0xff]
      %v335 = vld [vmem:[%s219 + $0xa8] sm:$0xff]
      %v336 = vld [vmem:[%s219 + $0xb0] sm:$0xff]
      %v337 = vld [vmem:[%s219 + $0xb8] sm:$0xff]
      %v338 = vld [vmem:[%s219 + $0xc0] sm:$0xff]
      %v339 = vld [vmem:[%s219 + $0xc8] sm:$0xff]
      %v340 = vld [vmem:[%s219 + $0xd0] sm:$0xff]
      %v341 = vld [vmem:[%s219 + $0xd8] sm:$0xff]
      %v342 = vld [vmem:[%s219 + $0xe0] sm:$0xff]
      %v343 = vld [vmem:[%s219 + $0xe8] sm:$0xff]
      %v344 = vld [vmem:[%s219 + $0xf0] sm:$0xff]
      %v345 = vld [vmem:[%s219 + $0xf8] sm:$0xff]
      %346 = vst.msk [vmem:[#allocation4] sm:$0xff] %vm225, %v314
      %347 = vst.msk [vmem:[#allocation4 + $0x8] sm:$0xff] %vm225, %v315
      %348 = vst.msk [vmem:[#allocation4 + $0x10] sm:$0xff] %vm225, %v316
      %349 = vst.msk [vmem:[#allocation4 + $0x18] sm:$0xff] %vm225, %v317
      %350 = vst.msk [vmem:[#allocation4 + $0x20] sm:$0xff] %vm225, %v318
      %351 = vst.msk [vmem:[#allocation4 + $0x28] sm:$0xff] %vm225, %v319
      %352 = vst.msk [vmem:[#allocation4 + $0x30] sm:$0xff] %vm225, %v320
      %353 = vst.msk [vmem:[#allocation4 + $0x38] sm:$0xff] %vm225, %v321
      %354 = vst.msk [vmem:[#allocation4 + $0x40] sm:$0xff] %vm225, %v322
      %355 = vst.msk [vmem:[#allocation4 + $0x48] sm:$0xff] %vm225, %v323
      %356 = vst.msk [vmem:[#allocation4 + $0x50] sm:$0xff] %vm225, %v324
      %357 = vst.msk [vmem:[#allocation4 + $0x58] sm:$0xff] %vm225, %v325
      %358 = vst.msk [vmem:[#allocation4 + $0x60] sm:$0xff] %vm225, %v326
      %359 = vst.msk [vmem:[#allocation4 + $0x68] sm:$0xff] %vm225, %v327
      %360 = vst.msk [vmem:[#allocation4 + $0x70] sm:$0xff] %vm225, %v328
      %361 = vst.msk [vmem:[#allocation4 + $0x78] sm:$0xff] %vm225, %v329
      %362 = vst.msk [vmem:[#allocation4 + $0x80] sm:$0xff] %vm225, %v330
      %363 = vst.msk [vmem:[#allocation4 + $0x88] sm:$0xff] %vm225, %v331
      %364 = vst.msk [vmem:[#allocation4 + $0x90] sm:$0xff] %vm225, %v332
      %365 = vst.msk [vmem:[#allocation4 + $0x98] sm:$0xff] %vm225, %v333
      %366 = vst.msk [vmem:[#allocation4 + $0xa0] sm:$0xff] %vm225, %v334
      %367 = vst.msk [vmem:[#allocation4 + $0xa8] sm:$0xff] %vm225, %v335
      %368 = vst.msk [vmem:[#allocation4 + $0xb0] sm:$0xff] %vm225, %v336
      %369 = vst.msk [vmem:[#allocation4 + $0xb8] sm:$0xff] %vm225, %v337
      %370 = vst.msk [vmem:[#allocation4 + $0xc0] sm:$0xff] %vm225, %v338
      %371 = vst.msk [vmem:[#allocation4 + $0xc8] sm:$0xff] %vm225, %v339
      %372 = vst.msk [vmem:[#allocation4 + $0xd0] sm:$0xff] %vm225, %v340
      %373 = vst.msk [vmem:[#allocation4 + $0xd8] sm:$0xff] %vm225, %v341
      %374 = vst.msk [vmem:[#allocation4 + $0xe0] sm:$0xff] %vm225, %v342
      %375 = vst.msk [vmem:[#allocation4 + $0xe8] sm:$0xff] %vm225, %v343
      %376 = vst.msk [vmem:[#allocation4 + $0xf0] sm:$0xff] %vm225, %v344
      %377 = vst.msk [vmem:[#allocation4 + $0xf8] sm:$0xff] %vm225, %v345
      %s378 = scalar_lea.vmem [#allocation2], 24
      %379 = vst.msk [vmem:[%s378 + $0x1] sm:$0xff] %vm225, %v314
      %380 = vst.msk [vmem:[%s378 + $0x9] sm:$0xff] %vm225, %v315
      %381 = vst.msk [vmem:[%s378 + $0x19] sm:$0xff] %vm225, %v316
      %382 = vst.msk [vmem:[%s378 + $0x21] sm:$0xff] %vm225, %v317
      %383 = vst.msk [vmem:[%s378 + $0x31] sm:$0xff] %vm225, %v318
      %384 = vst.msk [vmem:[%s378 + $0x39] sm:$0xff] %vm225, %v319
      %385 = vst.msk [vmem:[%s378 + $0x49] sm:$0xff] %vm225, %v320
      %386 = vst.msk [vmem:[%s378 + $0x51] sm:$0xff] %vm225, %v321
      %387 = vst.msk [vmem:[%s378 + $0x61] sm:$0xff] %vm225, %v322
      %388 = vst.msk [vmem:[%s378 + $0x69] sm:$0xff] %vm225, %v323
      %389 = vst.msk [vmem:[%s378 + $0x79] sm:$0xff] %vm225, %v324
      %390 = vst.msk [vmem:[%s378 + $0x81] sm:$0xff] %vm225, %v325
      %391 = vst.msk [vmem:[%s378 + $0x91] sm:$0xff] %vm225, %v326
      %392 = vst.msk [vmem:[%s378 + $0x99] sm:$0xff] %vm225, %v327
      %393 = vst.msk [vmem:[%s378 + $0xa9] sm:$0xff] %vm225, %v328
      %394 = vst.msk [vmem:[%s378 + $0xb1] sm:$0xff] %vm225, %v329
      %395 = vst.msk [vmem:[%s378 + $0xc1] sm:$0xff] %vm225, %v330
      %396 = vst.msk [vmem:[%s378 + $0xc9] sm:$0xff] %vm225, %v331
      %397 = vst.msk [vmem:[%s378 + $0xd9] sm:$0xff] %vm225, %v332
      %398 = vst.msk [vmem:[%s378 + $0xe1] sm:$0xff] %vm225, %v333
      %399 = vst.msk [vmem:[%s378 + $0xf1] sm:$0xff] %vm225, %v334
      %400 = vst.msk [vmem:[%s378 + $0xf9] sm:$0xff] %vm225, %v335
      %401 = vst.msk [vmem:[%s378 + $0x109] sm:$0xff] %vm225, %v336
      %402 = vst.msk [vmem:[%s378 + $0x111] sm:$0xff] %vm225, %v337
      %403 = vst.msk [vmem:[%s378 + $0x121] sm:$0xff] %vm225, %v338
      %404 = vst.msk [vmem:[%s378 + $0x129] sm:$0xff] %vm225, %v339
      %405 = vst.msk [vmem:[%s378 + $0x139] sm:$0xff] %vm225, %v340
      %406 = vst.msk [vmem:[%s378 + $0x141] sm:$0xff] %vm225, %v341
      %407 = vst.msk [vmem:[%s378 + $0x151] sm:$0xff] %vm225, %v342
      %408 = vst.msk [vmem:[%s378 + $0x159] sm:$0xff] %vm225, %v343
      %409 = vst.msk [vmem:[%s378 + $0x169] sm:$0xff] %vm225, %v344
      %410 = vst.msk [vmem:[%s378 + $0x171] sm:$0xff] %vm225, %v345
      %v411 = vld [vmem:[#allocation2] sm:$0xff]
      %v412 = vld [vmem:[#allocation2 + $0x8] sm:$0xff]
      %v413 = vld [vmem:[#allocation2 + $0x18] sm:$0xff]
      %v414 = vld [vmem:[#allocation2 + $0x20] sm:$0xff]
      %v415 = vld [vmem:[#allocation2 + $0x30] sm:$0xff]
      %v416 = vld [vmem:[#allocation2 + $0x38] sm:$0xff]
      %v417 = vld [vmem:[#allocation2 + $0x48] sm:$0xff]
      %v418 = vld [vmem:[#allocation2 + $0x50] sm:$0xff]
      %v419 = vld [vmem:[#allocation2 + $0x60] sm:$0xff]
      %v420 = vld [vmem:[#allocation2 + $0x68] sm:$0xff]
      %v421 = vld [vmem:[#allocation2 + $0x78] sm:$0xff]
      %v422 = vld [vmem:[#allocation2 + $0x80] sm:$0xff]
      %v423 = vld [vmem:[#allocation2 + $0x90] sm:$0xff]
      %v424 = vld [vmem:[#allocation2 + $0x98] sm:$0xff]
      %v425 = vld [vmem:[#allocation2 + $0xa8] sm:$0xff]
      %v426 = vld [vmem:[#allocation2 + $0xb0] sm:$0xff]
      %v427 = vld [vmem:[#allocation2 + $0xc0] sm:$0xff]
      %v428 = vld [vmem:[#allocation2 + $0xc8] sm:$0xff]
      %v429 = vld [vmem:[#allocation2 + $0xd8] sm:$0xff]
      %v430 = vld [vmem:[#allocation2 + $0xe0] sm:$0xff]
      %v431 = vld [vmem:[#allocation2 + $0xf0] sm:$0xff]
      %v432 = vld [vmem:[#allocation2 + $0xf8] sm:$0xff]
      %v433 = vld [vmem:[#allocation2 + $0x108] sm:$0xff]
      %v434 = vld [vmem:[#allocation2 + $0x110] sm:$0xff]
      %v435 = vld [vmem:[#allocation2 + $0x120] sm:$0xff]
      %v436 = vld [vmem:[#allocation2 + $0x128] sm:$0xff]
      %v437 = vld [vmem:[#allocation2 + $0x138] sm:$0xff]
      %v438 = vld [vmem:[#allocation2 + $0x140] sm:$0xff]
      %v439 = vld [vmem:[#allocation2 + $0x150] sm:$0xff]
      %v440 = vld [vmem:[#allocation2 + $0x158] sm:$0xff]
      %v441 = vld [vmem:[#allocation2 + $0x168] sm:$0xff]
      %v442 = vld [vmem:[#allocation2 + $0x170] sm:$0xff]
      %443 = vst.msk [vmem:[#allocation3] sm:$0xff] %vm225, %v411
      %444 = vst.msk [vmem:[#allocation3 + $0x8] sm:$0xff] %vm225, %v412
      %445 = vst.msk [vmem:[#allocation3 + $0x10] sm:$0xff] %vm225, %v413
      %446 = vst.msk [vmem:[#allocation3 + $0x18] sm:$0xff] %vm225, %v414
      %447 = vst.msk [vmem:[#allocation3 + $0x20] sm:$0xff] %vm225, %v415
      %448 = vst.msk [vmem:[#allocation3 + $0x28] sm:$0xff] %vm225, %v416
      %449 = vst.msk [vmem:[#allocation3 + $0x30] sm:$0xff] %vm225, %v417
      %450 = vst.msk [vmem:[#allocation3 + $0x38] sm:$0xff] %vm225, %v418
      %451 = vst.msk [vmem:[#allocation3 + $0x40] sm:$0xff] %vm225, %v419
      %452 = vst.msk [vmem:[#allocation3 + $0x48] sm:$0xff] %vm225, %v420
      %453 = vst.msk [vmem:[#allocation3 + $0x50] sm:$0xff] %vm225, %v421
      %454 = vst.msk [vmem:[#allocation3 + $0x58] sm:$0xff] %vm225, %v422
      %455 = vst.msk [vmem:[#allocation3 + $0x60] sm:$0xff] %vm225, %v423
      %456 = vst.msk [vmem:[#allocation3 + $0x68] sm:$0xff] %vm225, %v424
      %457 = vst.msk [vmem:[#allocation3 + $0x70] sm:$0xff] %vm225, %v425
      %458 = vst.msk [vmem:[#allocation3 + $0x78] sm:$0xff] %vm225, %v426
      %459 = vst.msk [vmem:[#allocation3 + $0x80] sm:$0xff] %vm225, %v427
      %460 = vst.msk [vmem:[#allocation3 + $0x88] sm:$0xff] %vm225, %v428
      %461 = vst.msk [vmem:[#allocation3 + $0x90] sm:$0xff] %vm225, %v429
      %462 = vst.msk [vmem:[#allocation3 + $0x98] sm:$0xff] %vm225, %v430
      %463 = vst.msk [vmem:[#allocation3 + $0xa0] sm:$0xff] %vm225, %v431
      %464 = vst.msk [vmem:[#allocation3 + $0xa8] sm:$0xff] %vm225, %v432
      %465 = vst.msk [vmem:[#allocation3 + $0xb0] sm:$0xff] %vm225, %v433
      %466 = vst.msk [vmem:[#allocation3 + $0xb8] sm:$0xff] %vm225, %v434
      %467 = vst.msk [vmem:[#allocation3 + $0xc0] sm:$0xff] %vm225, %v435
      %468 = vst.msk [vmem:[#allocation3 + $0xc8] sm:$0xff] %vm225, %v436
      %469 = vst.msk [vmem:[#allocation3 + $0xd0] sm:$0xff] %vm225, %v437
      %470 = vst.msk [vmem:[#allocation3 + $0xd8] sm:$0xff] %vm225, %v438
      %471 = vst.msk [vmem:[#allocation3 + $0xe0] sm:$0xff] %vm225, %v439
      %472 = vst.msk [vmem:[#allocation3 + $0xe8] sm:$0xff] %vm225, %v440
      %473 = vst.msk [vmem:[#allocation3 + $0xf0] sm:$0xff] %vm225, %v441
      %474 = vst.msk [vmem:[#allocation3 + $0xf8] sm:$0xff] %vm225, %v442
      %v475 = vld [vmem:[#allocation2 + $0x1] sm:$0xff]
      %v476 = vld [vmem:[#allocation2 + $0x9] sm:$0xff]
      %v477 = vld [vmem:[#allocation2 + $0x19] sm:$0xff]
      %v478 = vld [vmem:[#allocation2 + $0x21] sm:$0xff]
      %v479 = vld [vmem:[#allocation2 + $0x31] sm:$0xff]
      %v480 = vld [vmem:[#allocation2 + $0x39] sm:$0xff]
      %v481 = vld [vmem:[#allocation2 + $0x49] sm:$0xff]
      %v482 = vld [vmem:[#allocation2 + $0x51] sm:$0xff]
      %v483 = vld [vmem:[#allocation2 + $0x61] sm:$0xff]
      %v484 = vld [vmem:[#allocation2 + $0x69] sm:$0xff]
      %v485 = vld [vmem:[#allocation2 + $0x79] sm:$0xff]
      %v486 = vld [vmem:[#allocation2 + $0x81] sm:$0xff]
      %v487 = vld [vmem:[#allocation2 + $0x91] sm:$0xff]
      %v488 = vld [vmem:[#allocation2 + $0x99] sm:$0xff]
      %v489 = vld [vmem:[#allocation2 + $0xa9] sm:$0xff]
      %v490 = vld [vmem:[#allocation2 + $0xb1] sm:$0xff]
      %v491 = vld [vmem:[#allocation2 + $0xc1] sm:$0xff]
      %v492 = vld [vmem:[#allocation2 + $0xc9] sm:$0xff]
      %v493 = vld [vmem:[#allocation2 + $0xd9] sm:$0xff]
      %v494 = vld [vmem:[#allocation2 + $0xe1] sm:$0xff]
      %v495 = vld [vmem:[#allocation2 + $0xf1] sm:$0xff]
      %v496 = vld [vmem:[#allocation2 + $0xf9] sm:$0xff]
      %v497 = vld [vmem:[#allocation2 + $0x109] sm:$0xff]
      %v498 = vld [vmem:[#allocation2 + $0x111] sm:$0xff]
      %v499 = vld [vmem:[#allocation2 + $0x121] sm:$0xff]
      %v500 = vld [vmem:[#allocation2 + $0x129] sm:$0xff]
      %v501 = vld [vmem:[#allocation2 + $0x139] sm:$0xff]
      %v502 = vld [vmem:[#allocation2 + $0x141] sm:$0xff]
      %v503 = vld [vmem:[#allocation2 + $0x151] sm:$0xff]
      %v504 = vld [vmem:[#allocation2 + $0x159] sm:$0xff]
      %v505 = vld [vmem:[#allocation2 + $0x169] sm:$0xff]
      %v506 = vld [vmem:[#allocation2 + $0x171] sm:$0xff]
      %539 = vrot.lane.b32.xlu0 %v475, 8
      %v540 = vpop.permute.xlu0 %539
      %541 = vrot.lane.b32.xlu0 %v476, 8
      %v542 = vpop.permute.xlu0 %541
      %543 = vrot.lane.b32.xlu0 %v477, 8
      %v544 = vpop.permute.xlu0 %543
      %545 = vrot.lane.b32.xlu0 %v478, 8
      %v546 = vpop.permute.xlu0 %545
      %547 = vrot.lane.b32.xlu0 %v479, 8
      %v548 = vpop.permute.xlu0 %547
      %549 = vrot.lane.b32.xlu0 %v480, 8
      %v550 = vpop.permute.xlu0 %549
      %551 = vrot.lane.b32.xlu0 %v481, 8
      %v552 = vpop.permute.xlu0 %551
      %553 = vrot.lane.b32.xlu0 %v482, 8
      %v554 = vpop.permute.xlu0 %553
      %555 = vrot.lane.b32.xlu0 %v483, 8
      %v556 = vpop.permute.xlu0 %555
      %557 = vrot.lane.b32.xlu0 %v484, 8
      %v558 = vpop.permute.xlu0 %557
      %559 = vrot.lane.b32.xlu0 %v485, 8
      %v560 = vpop.permute.xlu0 %559
      %561 = vrot.lane.b32.xlu0 %v486, 8
      %v562 = vpop.permute.xlu0 %561
      %563 = vrot.lane.b32.xlu0 %v487, 8
      %v564 = vpop.permute.xlu0 %563
      %565 = vrot.lane.b32.xlu0 %v488, 8
      %v566 = vpop.permute.xlu0 %565
      %567 = vrot.lane.b32.xlu0 %v489, 8
      %v568 = vpop.permute.xlu0 %567
      %569 = vrot.lane.b32.xlu0 %v490, 8
      %v570 = vpop.permute.xlu0 %569
      %571 = vrot.lane.b32.xlu0 %v491, 8
      %v572 = vpop.permute.xlu0 %571
      %573 = vrot.lane.b32.xlu0 %v492, 8
      %v574 = vpop.permute.xlu0 %573
      %575 = vrot.lane.b32.xlu0 %v493, 8
      %v576 = vpop.permute.xlu0 %575
      %577 = vrot.lane.b32.xlu0 %v494, 8
      %v578 = vpop.permute.xlu0 %577
      %579 = vrot.lane.b32.xlu0 %v495, 8
      %v580 = vpop.permute.xlu0 %579
      %581 = vrot.lane.b32.xlu0 %v496, 8
      %v582 = vpop.permute.xlu0 %581
      %583 = vrot.lane.b32.xlu0 %v497, 8
      %v584 = vpop.permute.xlu0 %583
      %585 = vrot.lane.b32.xlu0 %v498, 8
      %v586 = vpop.permute.xlu0 %585
      %587 = vrot.lane.b32.xlu0 %v499, 8
      %v588 = vpop.permute.xlu0 %587
      %589 = vrot.lane.b32.xlu0 %v500, 8
      %v590 = vpop.permute.xlu0 %589
      %591 = vrot.lane.b32.xlu0 %v501, 8
      %v592 = vpop.permute.xlu0 %591
      %593 = vrot.lane.b32.xlu0 %v502, 8
      %v594 = vpop.permute.xlu0 %593
      %595 = vrot.lane.b32.xlu0 %v503, 8
      %v596 = vpop.permute.xlu0 %595
      %597 = vrot.lane.b32.xlu0 %v504, 8
      %v598 = vpop.permute.xlu0 %597
      %599 = vrot.lane.b32.xlu0 %v505, 8
      %v600 = vpop.permute.xlu0 %599
      %601 = vrot.lane.b32.xlu0 %v506, 8
      %v602 = vpop.permute.xlu0 %601
      %vm635 = vcmask 130112
      %636 = vst.msk [vmem:[#allocation3] sm:$0xff] %vm635, %v540
      %637 = vst.msk [vmem:[#allocation3 + $0x8] sm:$0xff] %vm635, %v542
      %638 = vst.msk [vmem:[#allocation3 + $0x10] sm:$0xff] %vm635, %v544
      %639 = vst.msk [vmem:[#allocation3 + $0x18] sm:$0xff] %vm635, %v546
      %640 = vst.msk [vmem:[#allocation3 + $0x20] sm:$0xff] %vm635, %v548
      %641 = vst.msk [vmem:[#allocation3 + $0x28] sm:$0xff] %vm635, %v550
      %642 = vst.msk [vmem:[#allocation3 + $0x30] sm:$0xff] %vm635, %v552
      %643 = vst.msk [vmem:[#allocation3 + $0x38] sm:$0xff] %vm635, %v554
      %644 = vst.msk [vmem:[#allocation3 + $0x40] sm:$0xff] %vm635, %v556
      %645 = vst.msk [vmem:[#allocation3 + $0x48] sm:$0xff] %vm635, %v558
      %646 = vst.msk [vmem:[#allocation3 + $0x50] sm:$0xff] %vm635, %v560
      %647 = vst.msk [vmem:[#allocation3 + $0x58] sm:$0xff] %vm635, %v562
      %648 = vst.msk [vmem:[#allocation3 + $0x60] sm:$0xff] %vm635, %v564
      %649 = vst.msk [vmem:[#allocation3 + $0x68] sm:$0xff] %vm635, %v566
      %650 = vst.msk [vmem:[#allocation3 + $0x70] sm:$0xff] %vm635, %v568
      %651 = vst.msk [vmem:[#allocation3 + $0x78] sm:$0xff] %vm635, %v570
      %652 = vst.msk [vmem:[#allocation3 + $0x80] sm:$0xff] %vm635, %v572
      %653 = vst.msk [vmem:[#allocation3 + $0x88] sm:$0xff] %vm635, %v574
      %654 = vst.msk [vmem:[#allocation3 + $0x90] sm:$0xff] %vm635, %v576
      %655 = vst.msk [vmem:[#allocation3 + $0x98] sm:$0xff] %vm635, %v578
      %656 = vst.msk [vmem:[#allocation3 + $0xa0] sm:$0xff] %vm635, %v580
      %657 = vst.msk [vmem:[#allocation3 + $0xa8] sm:$0xff] %vm635, %v582
      %658 = vst.msk [vmem:[#allocation3 + $0xb0] sm:$0xff] %vm635, %v584
      %659 = vst.msk [vmem:[#allocation3 + $0xb8] sm:$0xff] %vm635, %v586
      %660 = vst.msk [vmem:[#allocation3 + $0xc0] sm:$0xff] %vm635, %v588
      %661 = vst.msk [vmem:[#allocation3 + $0xc8] sm:$0xff] %vm635, %v590
      %662 = vst.msk [vmem:[#allocation3 + $0xd0] sm:$0xff] %vm635, %v592
      %663 = vst.msk [vmem:[#allocation3 + $0xd8] sm:$0xff] %vm635, %v594
      %664 = vst.msk [vmem:[#allocation3 + $0xe0] sm:$0xff] %vm635, %v596
      %665 = vst.msk [vmem:[#allocation3 + $0xe8] sm:$0xff] %vm635, %v598
      %666 = vst.msk [vmem:[#allocation3 + $0xf0] sm:$0xff] %vm635, %v600
      %667 = vst.msk [vmem:[#allocation3 + $0xf8] sm:$0xff] %vm635, %v602
      %v668 = vld [vmem:[#allocation2 + $0x2] sm:$0xff]
      %v669 = vld [vmem:[#allocation2 + $0xa] sm:$0xff]
      %v670 = vld [vmem:[#allocation2 + $0x1a] sm:$0xff]
      %v671 = vld [vmem:[#allocation2 + $0x22] sm:$0xff]
      %v672 = vld [vmem:[#allocation2 + $0x32] sm:$0xff]
      %v673 = vld [vmem:[#allocation2 + $0x3a] sm:$0xff]
      %v674 = vld [vmem:[#allocation2 + $0x4a] sm:$0xff]
      %v675 = vld [vmem:[#allocation2 + $0x52] sm:$0xff]
      %v676 = vld [vmem:[#allocation2 + $0x62] sm:$0xff]
      %v677 = vld [vmem:[#allocation2 + $0x6a] sm:$0xff]
      %v678 = vld [vmem:[#allocation2 + $0x7a] sm:$0xff]
      %v679 = vld [vmem:[#allocation2 + $0x82] sm:$0xff]
      %v680 = vld [vmem:[#allocation2 + $0x92] sm:$0xff]
      %v681 = vld [vmem:[#allocation2 + $0x9a] sm:$0xff]
      %v682 = vld [vmem:[#allocation2 + $0xaa] sm:$0xff]
      %v683 = vld [vmem:[#allocation2 + $0xb2] sm:$0xff]
      %v684 = vld [vmem:[#allocation2 + $0xc2] sm:$0xff]
      %v685 = vld [vmem:[#allocation2 + $0xca] sm:$0xff]
      %v686 = vld [vmem:[#allocation2 + $0xda] sm:$0xff]
      %v687 = vld [vmem:[#allocation2 + $0xe2] sm:$0xff]
      %v688 = vld [vmem:[#allocation2 + $0xf2] sm:$0xff]
      %v689 = vld [vmem:[#allocation2 + $0xfa] sm:$0xff]
      %v690 = vld [vmem:[#allocation2 + $0x10a] sm:$0xff]
      %v691 = vld [vmem:[#allocation2 + $0x112] sm:$0xff]
      %v692 = vld [vmem:[#allocation2 + $0x122] sm:$0xff]
      %v693 = vld [vmem:[#allocation2 + $0x12a] sm:$0xff]
      %v694 = vld [vmem:[#allocation2 + $0x13a] sm:$0xff]
      %v695 = vld [vmem:[#allocation2 + $0x142] sm:$0xff]
      %v696 = vld [vmem:[#allocation2 + $0x152] sm:$0xff]
      %v697 = vld [vmem:[#allocation2 + $0x15a] sm:$0xff]
      %v698 = vld [vmem:[#allocation2 + $0x16a] sm:$0xff]
      %v699 = vld [vmem:[#allocation2 + $0x172] sm:$0xff]
      %732 = vrot.lane.b32.xlu0 %v668, 16
      %v733 = vpop.permute.xlu0 %732
      %734 = vrot.lane.b32.xlu0 %v669, 16
      %v735 = vpop.permute.xlu0 %734
      %736 = vrot.lane.b32.xlu0 %v670, 16
      %v737 = vpop.permute.xlu0 %736
      %738 = vrot.lane.b32.xlu0 %v671, 16
      %v739 = vpop.permute.xlu0 %738
      %740 = vrot.lane.b32.xlu0 %v672, 16
      %v741 = vpop.permute.xlu0 %740
      %742 = vrot.lane.b32.xlu0 %v673, 16
      %v743 = vpop.permute.xlu0 %742
      %744 = vrot.lane.b32.xlu0 %v674, 16
      %v745 = vpop.permute.xlu0 %744
      %746 = vrot.lane.b32.xlu0 %v675, 16
      %v747 = vpop.permute.xlu0 %746
      %748 = vrot.lane.b32.xlu0 %v676, 16
      %v749 = vpop.permute.xlu0 %748
      %750 = vrot.lane.b32.xlu0 %v677, 16
      %v751 = vpop.permute.xlu0 %750
      %752 = vrot.lane.b32.xlu0 %v678, 16
      %v753 = vpop.permute.xlu0 %752
      %754 = vrot.lane.b32.xlu0 %v679, 16
      %v755 = vpop.permute.xlu0 %754
      %756 = vrot.lane.b32.xlu0 %v680, 16
      %v757 = vpop.permute.xlu0 %756
      %758 = vrot.lane.b32.xlu0 %v681, 16
      %v759 = vpop.permute.xlu0 %758
      %760 = vrot.lane.b32.xlu0 %v682, 16
      %v761 = vpop.permute.xlu0 %760
      %762 = vrot.lane.b32.xlu0 %v683, 16
      %v763 = vpop.permute.xlu0 %762
      %764 = vrot.lane.b32.xlu0 %v684, 16
      %v765 = vpop.permute.xlu0 %764
      %766 = vrot.lane.b32.xlu0 %v685, 16
      %v767 = vpop.permute.xlu0 %766
      %768 = vrot.lane.b32.xlu0 %v686, 16
      %v769 = vpop.permute.xlu0 %768
      %770 = vrot.lane.b32.xlu0 %v687, 16
      %v771 = vpop.permute.xlu0 %770
      %772 = vrot.lane.b32.xlu0 %v688, 16
      %v773 = vpop.permute.xlu0 %772
      %774 = vrot.lane.b32.xlu0 %v689, 16
      %v775 = vpop.permute.xlu0 %774
      %776 = vrot.lane.b32.xlu0 %v690, 16
      %v777 = vpop.permute.xlu0 %776
      %778 = vrot.lane.b32.xlu0 %v691, 16
      %v779 = vpop.permute.xlu0 %778
      %780 = vrot.lane.b32.xlu0 %v692, 16
      %v781 = vpop.permute.xlu0 %780
      %782 = vrot.lane.b32.xlu0 %v693, 16
      %v783 = vpop.permute.xlu0 %782
      %784 = vrot.lane.b32.xlu0 %v694, 16
      %v785 = vpop.permute.xlu0 %784
      %786 = vrot.lane.b32.xlu0 %v695, 16
      %v787 = vpop.permute.xlu0 %786
      %788 = vrot.lane.b32.xlu0 %v696, 16
      %v789 = vpop.permute.xlu0 %788
      %790 = vrot.lane.b32.xlu0 %v697, 16
      %v791 = vpop.permute.xlu0 %790
      %792 = vrot.lane.b32.xlu0 %v698, 16
      %v793 = vpop.permute.xlu0 %792
      %794 = vrot.lane.b32.xlu0 %v699, 16
      %v795 = vpop.permute.xlu0 %794
      %vm828 = vcmask 195712
      %829 = vst.msk [vmem:[#allocation3] sm:$0xff] %vm828, %v733
      %830 = vst.msk [vmem:[#allocation3 + $0x8] sm:$0xff] %vm828, %v735
      %831 = vst.msk [vmem:[#allocation3 + $0x10] sm:$0xff] %vm828, %v737
      %832 = vst.msk [vmem:[#allocation3 + $0x18] sm:$0xff] %vm828, %v739
      %833 = vst.msk [vmem:[#allocation3 + $0x20] sm:$0xff] %vm828, %v741
      %834 = vst.msk [vmem:[#allocation3 + $0x28] sm:$0xff] %vm828, %v743
      %835 = vst.msk [vmem:[#allocation3 + $0x30] sm:$0xff] %vm828, %v745
      %836 = vst.msk [vmem:[#allocation3 + $0x38] sm:$0xff] %vm828, %v747
      %837 = vst.msk [vmem:[#allocation3 + $0x40] sm:$0xff] %vm828, %v749
      %838 = vst.msk [vmem:[#allocation3 + $0x48] sm:$0xff] %vm828, %v751
      %839 = vst.msk [vmem:[#allocation3 + $0x50] sm:$0xff] %vm828, %v753
      %840 = vst.msk [vmem:[#allocation3 + $0x58] sm:$0xff] %vm828, %v755
      %841 = vst.msk [vmem:[#allocation3 + $0x60] sm:$0xff] %vm828, %v757
      %842 = vst.msk [vmem:[#allocation3 + $0x68] sm:$0xff] %vm828, %v759
      %843 = vst.msk [vmem:[#allocation3 + $0x70] sm:$0xff] %vm828, %v761
      %844 = vst.msk [vmem:[#allocation3 + $0x78] sm:$0xff] %vm828, %v763
      %845 = vst.msk [vmem:[#allocation3 + $0x80] sm:$0xff] %vm828, %v765
      %846 = vst.msk [vmem:[#allocation3 + $0x88] sm:$0xff] %vm828, %v767
      %847 = vst.msk [vmem:[#allocation3 + $0x90] sm:$0xff] %vm828, %v769
      %848 = vst.msk [vmem:[#allocation3 + $0x98] sm:$0xff] %vm828, %v771
      %849 = vst.msk [vmem:[#allocation3 + $0xa0] sm:$0xff] %vm828, %v773
      %850 = vst.msk [vmem:[#allocation3 + $0xa8] sm:$0xff] %vm828, %v775
      %851 = vst.msk [vmem:[#allocation3 + $0xb0] sm:$0xff] %vm828, %v777
      %852 = vst.msk [vmem:[#allocation3 + $0xb8] sm:$0xff] %vm828, %v779
      %853 = vst.msk [vmem:[#allocation3 + $0xc0] sm:$0xff] %vm828, %v781
      %854 = vst.msk [vmem:[#allocation3 + $0xc8] sm:$0xff] %vm828, %v783
      %855 = vst.msk [vmem:[#allocation3 + $0xd0] sm:$0xff] %vm828, %v785
      %856 = vst.msk [vmem:[#allocation3 + $0xd8] sm:$0xff] %vm828, %v787
      %857 = vst.msk [vmem:[#allocation3 + $0xe0] sm:$0xff] %vm828, %v789
      %858 = vst.msk [vmem:[#allocation3 + $0xe8] sm:$0xff] %vm828, %v791
      %859 = vst.msk [vmem:[#allocation3 + $0xf0] sm:$0xff] %vm828, %v793
      %860 = vst.msk [vmem:[#allocation3 + $0xf8] sm:$0xff] %vm828, %v795
      %v861 = vld [vmem:[%s378] sm:$0xff]
      %v862 = vld [vmem:[%s378 + $0x8] sm:$0xff]
      %v863 = vld [vmem:[%s378 + $0x18] sm:$0xff]
      %v864 = vld [vmem:[%s378 + $0x20] sm:$0xff]
      %v865 = vld [vmem:[%s378 + $0x30] sm:$0xff]
      %v866 = vld [vmem:[%s378 + $0x38] sm:$0xff]
      %v867 = vld [vmem:[%s378 + $0x48] sm:$0xff]
      %v868 = vld [vmem:[%s378 + $0x50] sm:$0xff]
      %v869 = vld [vmem:[%s378 + $0x60] sm:$0xff]
      %v870 = vld [vmem:[%s378 + $0x68] sm:$0xff]
      %v871 = vld [vmem:[%s378 + $0x78] sm:$0xff]
      %v872 = vld [vmem:[%s378 + $0x80] sm:$0xff]
      %v873 = vld [vmem:[%s378 + $0x90] sm:$0xff]
      %v874 = vld [vmem:[%s378 + $0x98] sm:$0xff]
      %v875 = vld [vmem:[%s378 + $0xa8] sm:$0xff]
      %v876 = vld [vmem:[%s378 + $0xb0] sm:$0xff]
      %v877 = vld [vmem:[%s378 + $0xc0] sm:$0xff]
      %v878 = vld [vmem:[%s378 + $0xc8] sm:$0xff]
      %v879 = vld [vmem:[%s378 + $0xd8] sm:$0xff]
      %v880 = vld [vmem:[%s378 + $0xe0] sm:$0xff]
      %v881 = vld [vmem:[%s378 + $0xf0] sm:$0xff]
      %v882 = vld [vmem:[%s378 + $0xf8] sm:$0xff]
      %v883 = vld [vmem:[%s378 + $0x108] sm:$0xff]
      %v884 = vld [vmem:[%s378 + $0x110] sm:$0xff]
      %v885 = vld [vmem:[%s378 + $0x120] sm:$0xff]
      %v886 = vld [vmem:[%s378 + $0x128] sm:$0xff]
      %v887 = vld [vmem:[%s378 + $0x138] sm:$0xff]
      %v888 = vld [vmem:[%s378 + $0x140] sm:$0xff]
      %v889 = vld [vmem:[%s378 + $0x150] sm:$0xff]
      %v890 = vld [vmem:[%s378 + $0x158] sm:$0xff]
      %v891 = vld [vmem:[%s378 + $0x168] sm:$0xff]
      %v892 = vld [vmem:[%s378 + $0x170] sm:$0xff]
      %925 = vrot.lane.b32.xlu0 %v861, 24
      %v926 = vpop.permute.xlu0 %925
      %927 = vrot.lane.b32.xlu0 %v862, 24
      %v928 = vpop.permute.xlu0 %927
      %929 = vrot.lane.b32.xlu0 %v863, 24
      %v930 = vpop.permute.xlu0 %929
      %931 = vrot.lane.b32.xlu0 %v864, 24
      %v932 = vpop.permute.xlu0 %931
      %933 = vrot.lane.b32.xlu0 %v865, 24
      %v934 = vpop.permute.xlu0 %933
      %935 = vrot.lane.b32.xlu0 %v866, 24
      %v936 = vpop.permute.xlu0 %935
      %937 = vrot.lane.b32.xlu0 %v867, 24
      %v938 = vpop.permute.xlu0 %937
      %939 = vrot.lane.b32.xlu0 %v868, 24
      %v940 = vpop.permute.xlu0 %939
      %941 = vrot.lane.b32.xlu0 %v869, 24
      %v942 = vpop.permute.xlu0 %941
      %943 = vrot.lane.b32.xlu0 %v870, 24
      %v944 = vpop.permute.xlu0 %943
      %945 = vrot.lane.b32.xlu0 %v871, 24
      %v946 = vpop.permute.xlu0 %945
      %947 = vrot.lane.b32.xlu0 %v872, 24
      %v948 = vpop.permute.xlu0 %947
      %949 = vrot.lane.b32.xlu0 %v873, 24
      %v950 = vpop.permute.xlu0 %949
      %951 = vrot.lane.b32.xlu0 %v874, 24
      %v952 = vpop.permute.xlu0 %951
      %953 = vrot.lane.b32.xlu0 %v875, 24
      %v954 = vpop.permute.xlu0 %953
      %955 = vrot.lane.b32.xlu0 %v876, 24
      %v956 = vpop.permute.xlu0 %955
      %957 = vrot.lane.b32.xlu0 %v877, 24
      %v958 = vpop.permute.xlu0 %957
      %959 = vrot.lane.b32.xlu0 %v878, 24
      %v960 = vpop.permute.xlu0 %959
      %961 = vrot.lane.b32.xlu0 %v879, 24
      %v962 = vpop.permute.xlu0 %961
      %963 = vrot.lane.b32.xlu0 %v880, 24
      %v964 = vpop.permute.xlu0 %963
      %965 = vrot.lane.b32.xlu0 %v881, 24
      %v966 = vpop.permute.xlu0 %965
      %967 = vrot.lane.b32.xlu0 %v882, 24
      %v968 = vpop.permute.xlu0 %967
      %969 = vrot.lane.b32.xlu0 %v883, 24
      %v970 = vpop.permute.xlu0 %969
      %971 = vrot.lane.b32.xlu0 %v884, 24
      %v972 = vpop.permute.xlu0 %971
      %973 = vrot.lane.b32.xlu0 %v885, 24
      %v974 = vpop.permute.xlu0 %973
      %975 = vrot.lane.b32.xlu0 %v886, 24
      %v976 = vpop.permute.xlu0 %975
      %977 = vrot.lane.b32.xlu0 %v887, 24
      %v978 = vpop.permute.xlu0 %977
      %979 = vrot.lane.b32.xlu0 %v888, 24
      %v980 = vpop.permute.xlu0 %979
      %981 = vrot.lane.b32.xlu0 %v889, 24
      %v982 = vpop.permute.xlu0 %981
      %983 = vrot.lane.b32.xlu0 %v890, 24
      %v984 = vpop.permute.xlu0 %983
      %985 = vrot.lane.b32.xlu0 %v891, 24
      %v986 = vpop.permute.xlu0 %985
      %987 = vrot.lane.b32.xlu0 %v892, 24
      %v988 = vpop.permute.xlu0 %987
      %vm1021 = vcmask 261312
      %1022 = vst.msk [vmem:[#allocation3] sm:$0xff] %vm1021, %v926
      %1023 = vst.msk [vmem:[#allocation3 + $0x8] sm:$0xff] %vm1021, %v928
      %1024 = vst.msk [vmem:[#allocation3 + $0x10] sm:$0xff] %vm1021, %v930
      %1025 = vst.msk [vmem:[#allocation3 + $0x18] sm:$0xff] %vm1021, %v932
      %1026 = vst.msk [vmem:[#allocation3 + $0x20] sm:$0xff] %vm1021, %v934
      %1027 = vst.msk [vmem:[#allocation3 + $0x28] sm:$0xff] %vm1021, %v936
      %1028 = vst.msk [vmem:[#allocation3 + $0x30] sm:$0xff] %vm1021, %v938
      %1029 = vst.msk [vmem:[#allocation3 + $0x38] sm:$0xff] %vm1021, %v940
      %1030 = vst.msk [vmem:[#allocation3 + $0x40] sm:$0xff] %vm1021, %v942
      %1031 = vst.msk [vmem:[#allocation3 + $0x48] sm:$0xff] %vm1021, %v944
      %1032 = vst.msk [vmem:[#allocation3 + $0x50] sm:$0xff] %vm1021, %v946
      %1033 = vst.msk [vmem:[#allocation3 + $0x58] sm:$0xff] %vm1021, %v948
      %1034 = vst.msk [vmem:[#allocation3 + $0x60] sm:$0xff] %vm1021, %v950
      %1035 = vst.msk [vmem:[#allocation3 + $0x68] sm:$0xff] %vm1021, %v952
      %1036 = vst.msk [vmem:[#allocation3 + $0x70] sm:$0xff] %vm1021, %v954
      %1037 = vst.msk [vmem:[#allocation3 + $0x78] sm:$0xff] %vm1021, %v956
      %1038 = vst.msk [vmem:[#allocation3 + $0x80] sm:$0xff] %vm1021, %v958
      %1039 = vst.msk [vmem:[#allocation3 + $0x88] sm:$0xff] %vm1021, %v960
      %1040 = vst.msk [vmem:[#allocation3 + $0x90] sm:$0xff] %vm1021, %v962
      %1041 = vst.msk [vmem:[#allocation3 + $0x98] sm:$0xff] %vm1021, %v964
      %1042 = vst.msk [vmem:[#allocation3 + $0xa0] sm:$0xff] %vm1021, %v966
      %1043 = vst.msk [vmem:[#allocation3 + $0xa8] sm:$0xff] %vm1021, %v968
      %1044 = vst.msk [vmem:[#allocation3 + $0xb0] sm:$0xff] %vm1021, %v970
      %1045 = vst.msk [vmem:[#allocation3 + $0xb8] sm:$0xff] %vm1021, %v972
      %1046 = vst.msk [vmem:[#allocation3 + $0xc0] sm:$0xff] %vm1021, %v974
      %1047 = vst.msk [vmem:[#allocation3 + $0xc8] sm:$0xff] %vm1021, %v976
      %1048 = vst.msk [vmem:[#allocation3 + $0xd0] sm:$0xff] %vm1021, %v978
      %1049 = vst.msk [vmem:[#allocation3 + $0xd8] sm:$0xff] %vm1021, %v980
      %1050 = vst.msk [vmem:[#allocation3 + $0xe0] sm:$0xff] %vm1021, %v982
      %1051 = vst.msk [vmem:[#allocation3 + $0xe8] sm:$0xff] %vm1021, %v984
      %1052 = vst.msk [vmem:[#allocation3 + $0xf0] sm:$0xff] %vm1021, %v986
      %1053 = vst.msk [vmem:[#allocation3 + $0xf8] sm:$0xff] %vm1021, %v988
      %v1054 = vld [vmem:[%s378 + $0x1] sm:$0xff]
      %v1055 = vld [vmem:[%s378 + $0x9] sm:$0xff]
      %v1056 = vld [vmem:[%s378 + $0x19] sm:$0xff]
      %v1057 = vld [vmem:[%s378 + $0x21] sm:$0xff]
      %v1058 = vld [vmem:[%s378 + $0x31] sm:$0xff]
      %v1059 = vld [vmem:[%s378 + $0x39] sm:$0xff]
      %v1060 = vld [vmem:[%s378 + $0x49] sm:$0xff]
      %v1061 = vld [vmem:[%s378 + $0x51] sm:$0xff]
      %v1062 = vld [vmem:[%s378 + $0x61] sm:$0xff]
      %v1063 = vld [vmem:[%s378 + $0x69] sm:$0xff]
      %v1064 = vld [vmem:[%s378 + $0x79] sm:$0xff]
      %v1065 = vld [vmem:[%s378 + $0x81] sm:$0xff]
      %v1066 = vld [vmem:[%s378 + $0x91] sm:$0xff]
      %v1067 = vld [vmem:[%s378 + $0x99] sm:$0xff]
      %v1068 = vld [vmem:[%s378 + $0xa9] sm:$0xff]
      %v1069 = vld [vmem:[%s378 + $0xb1] sm:$0xff]
      %v1070 = vld [vmem:[%s378 + $0xc1] sm:$0xff]
      %v1071 = vld [vmem:[%s378 + $0xc9] sm:$0xff]
      %v1072 = vld [vmem:[%s378 + $0xd9] sm:$0xff]
      %v1073 = vld [vmem:[%s378 + $0xe1] sm:$0xff]
      %v1074 = vld [vmem:[%s378 + $0xf1] sm:$0xff]
      %v1075 = vld [vmem:[%s378 + $0xf9] sm:$0xff]
      %v1076 = vld [vmem:[%s378 + $0x109] sm:$0xff]
      %v1077 = vld [vmem:[%s378 + $0x111] sm:$0xff]
      %v1078 = vld [vmem:[%s378 + $0x121] sm:$0xff]
      %v1079 = vld [vmem:[%s378 + $0x129] sm:$0xff]
      %v1080 = vld [vmem:[%s378 + $0x139] sm:$0xff]
      %v1081 = vld [vmem:[%s378 + $0x141] sm:$0xff]
      %v1082 = vld [vmem:[%s378 + $0x151] sm:$0xff]
      %v1083 = vld [vmem:[%s378 + $0x159] sm:$0xff]
      %v1084 = vld [vmem:[%s378 + $0x169] sm:$0xff]
      %v1085 = vld [vmem:[%s378 + $0x171] sm:$0xff]
      %1118 = vrot.lane.b32.xlu0 %v1054, 32
      %v1119 = vpop.permute.xlu0 %1118
      %1120 = vrot.lane.b32.xlu0 %v1055, 32
      %v1121 = vpop.permute.xlu0 %1120
      %1122 = vrot.lane.b32.xlu0 %v1056, 32
      %v1123 = vpop.permute.xlu0 %1122
      %1124 = vrot.lane.b32.xlu0 %v1057, 32
      %v1125 = vpop.permute.xlu0 %1124
      %1126 = vrot.lane.b32.xlu0 %v1058, 32
      %v1127 = vpop.permute.xlu0 %1126
      %1128 = vrot.lane.b32.xlu0 %v1059, 32
      %v1129 = vpop.permute.xlu0 %1128
      %1130 = vrot.lane.b32.xlu0 %v1060, 32
      %v1131 = vpop.permute.xlu0 %1130
      %1132 = vrot.lane.b32.xlu0 %v1061, 32
      %v1133 = vpop.permute.xlu0 %1132
      %1134 = vrot.lane.b32.xlu0 %v1062, 32
      %v1135 = vpop.permute.xlu0 %1134
      %1136 = vrot.lane.b32.xlu0 %v1063, 32
      %v1137 = vpop.permute.xlu0 %1136
      %1138 = vrot.lane.b32.xlu0 %v1064, 32
      %v1139 = vpop.permute.xlu0 %1138
      %1140 = vrot.lane.b32.xlu0 %v1065, 32
      %v1141 = vpop.permute.xlu0 %1140
      %1142 = vrot.lane.b32.xlu0 %v1066, 32
      %v1143 = vpop.permute.xlu0 %1142
      %1144 = vrot.lane.b32.xlu0 %v1067, 32
      %v1145 = vpop.permute.xlu0 %1144
      %1146 = vrot.lane.b32.xlu0 %v1068, 32
      %v1147 = vpop.permute.xlu0 %1146
      %1148 = vrot.lane.b32.xlu0 %v1069, 32
      %v1149 = vpop.permute.xlu0 %1148
      %1150 = vrot.lane.b32.xlu0 %v1070, 32
      %v1151 = vpop.permute.xlu0 %1150
      %1152 = vrot.lane.b32.xlu0 %v1071, 32
      %v1153 = vpop.permute.xlu0 %1152
      %1154 = vrot.lane.b32.xlu0 %v1072, 32
      %v1155 = vpop.permute.xlu0 %1154
      %1156 = vrot.lane.b32.xlu0 %v1073, 32
      %v1157 = vpop.permute.xlu0 %1156
      %1158 = vrot.lane.b32.xlu0 %v1074, 32
      %v1159 = vpop.permute.xlu0 %1158
      %1160 = vrot.lane.b32.xlu0 %v1075, 32
      %v1161 = vpop.permute.xlu0 %1160
      %1162 = vrot.lane.b32.xlu0 %v1076, 32
      %v1163 = vpop.permute.xlu0 %1162
      %1164 = vrot.lane.b32.xlu0 %v1077, 32
      %v1165 = vpop.permute.xlu0 %1164
      %1166 = vrot.lane.b32.xlu0 %v1078, 32
      %v1167 = vpop.permute.xlu0 %1166
      %1168 = vrot.lane.b32.xlu0 %v1079, 32
      %v1169 = vpop.permute.xlu0 %1168
      %1170 = vrot.lane.b32.xlu0 %v1080, 32
      %v1171 = vpop.permute.xlu0 %1170
      %1172 = vrot.lane.b32.xlu0 %v1081, 32
      %v1173 = vpop.permute.xlu0 %1172
      %1174 = vrot.lane.b32.xlu0 %v1082, 32
      %v1175 = vpop.permute.xlu0 %1174
      %1176 = vrot.lane.b32.xlu0 %v1083, 32
      %v1177 = vpop.permute.xlu0 %1176
      %1178 = vrot.lane.b32.xlu0 %v1084, 32
      %v1179 = vpop.permute.xlu0 %1178
      %1180 = vrot.lane.b32.xlu0 %v1085, 32
      %v1181 = vpop.permute.xlu0 %1180
      %vm1214 = vcmask 326912
      %1215 = vst.msk [vmem:[#allocation3] sm:$0xff] %vm1214, %v1119
      %1216 = vst.msk [vmem:[#allocation3 + $0x8] sm:$0xff] %vm1214, %v1121
      %1217 = vst.msk [vmem:[#allocation3 + $0x10] sm:$0xff] %vm1214, %v1123
      %1218 = vst.msk [vmem:[#allocation3 + $0x18] sm:$0xff] %vm1214, %v1125
      %1219 = vst.msk [vmem:[#allocation3 + $0x20] sm:$0xff] %vm1214, %v1127
      %1220 = vst.msk [vmem:[#allocation3 + $0x28] sm:$0xff] %vm1214, %v1129
      %1221 = vst.msk [vmem:[#allocation3 + $0x30] sm:$0xff] %vm1214, %v1131
      %1222 = vst.msk [vmem:[#allocation3 + $0x38] sm:$0xff] %vm1214, %v1133
      %1223 = vst.msk [vmem:[#allocation3 + $0x40] sm:$0xff] %vm1214, %v1135
      %1224 = vst.msk [vmem:[#allocation3 + $0x48] sm:$0xff] %vm1214, %v1137
      %1225 = vst.msk [vmem:[#allocation3 + $0x50] sm:$0xff] %vm1214, %v1139
      %1226 = vst.msk [vmem:[#allocation3 + $0x58] sm:$0xff] %vm1214, %v1141
      %1227 = vst.msk [vmem:[#allocation3 + $0x60] sm:$0xff] %vm1214, %v1143
      %1228 = vst.msk [vmem:[#allocation3 + $0x68] sm:$0xff] %vm1214, %v1145
      %1229 = vst.msk [vmem:[#allocation3 + $0x70] sm:$0xff] %vm1214, %v1147
      %1230 = vst.msk [vmem:[#allocation3 + $0x78] sm:$0xff] %vm1214, %v1149
      %1231 = vst.msk [vmem:[#allocation3 + $0x80] sm:$0xff] %vm1214, %v1151
      %1232 = vst.msk [vmem:[#allocation3 + $0x88] sm:$0xff] %vm1214, %v1153
      %1233 = vst.msk [vmem:[#allocation3 + $0x90] sm:$0xff] %vm1214, %v1155
      %1234 = vst.msk [vmem:[#allocation3 + $0x98] sm:$0xff] %vm1214, %v1157
      %1235 = vst.msk [vmem:[#allocation3 + $0xa0] sm:$0xff] %vm1214, %v1159
      %1236 = vst.msk [vmem:[#allocation3 + $0xa8] sm:$0xff] %vm1214, %v1161
      %1237 = vst.msk [vmem:[#allocation3 + $0xb0] sm:$0xff] %vm1214, %v1163
      %1238 = vst.msk [vmem:[#allocation3 + $0xb8] sm:$0xff] %vm1214, %v1165
      %1239 = vst.msk [vmem:[#allocation3 + $0xc0] sm:$0xff] %vm1214, %v1167
      %1240 = vst.msk [vmem:[#allocation3 + $0xc8] sm:$0xff] %vm1214, %v1169
      %1241 = vst.msk [vmem:[#allocation3 + $0xd0] sm:$0xff] %vm1214, %v1171
      %1242 = vst.msk [vmem:[#allocation3 + $0xd8] sm:$0xff] %vm1214, %v1173
      %1243 = vst.msk [vmem:[#allocation3 + $0xe0] sm:$0xff] %vm1214, %v1175
      %1244 = vst.msk [vmem:[#allocation3 + $0xe8] sm:$0xff] %vm1214, %v1177
      %1245 = vst.msk [vmem:[#allocation3 + $0xf0] sm:$0xff] %vm1214, %v1179
      %1246 = vst.msk [vmem:[#allocation3 + $0xf8] sm:$0xff] %vm1214, %v1181
      %v1247 = vld [vmem:[%s378 + $0x2] sm:$0xff]
      %v1248 = vld [vmem:[%s378 + $0xa] sm:$0xff]
      %v1249 = vld [vmem:[%s378 + $0x1a] sm:$0xff]
      %v1250 = vld [vmem:[%s378 + $0x22] sm:$0xff]
      %v1251 = vld [vmem:[%s378 + $0x32] sm:$0xff]
      %v1252 = vld [vmem:[%s378 + $0x3a] sm:$0xff]
      %v1253 = vld [vmem:[%s378 + $0x4a] sm:$0xff]
      %v1254 = vld [vmem:[%s378 + $0x52] sm:$0xff]
      %v1255 = vld [vmem:[%s378 + $0x62] sm:$0xff]
      %v1256 = vld [vmem:[%s378 + $0x6a] sm:$0xff]
      %v1257 = vld [vmem:[%s378 + $0x7a] sm:$0xff]
      %v1258 = vld [vmem:[%s378 + $0x82] sm:$0xff]
      %v1259 = vld [vmem:[%s378 + $0x92] sm:$0xff]
      %v1260 = vld [vmem:[%s378 + $0x9a] sm:$0xff]
      %v1261 = vld [vmem:[%s378 + $0xaa] sm:$0xff]
      %v1262 = vld [vmem:[%s378 + $0xb2] sm:$0xff]
      %v1263 = vld [vmem:[%s378 + $0xc2] sm:$0xff]
      %v1264 = vld [vmem:[%s378 + $0xca] sm:$0xff]
      %v1265 = vld [vmem:[%s378 + $0xda] sm:$0xff]
      %v1266 = vld [vmem:[%s378 + $0xe2] sm:$0xff]
      %v1267 = vld [vmem:[%s378 + $0xf2] sm:$0xff]
      %v1268 = vld [vmem:[%s378 + $0xfa] sm:$0xff]
      %v1269 = vld [vmem:[%s378 + $0x10a] sm:$0xff]
      %v1270 = vld [vmem:[%s378 + $0x112] sm:$0xff]
      %v1271 = vld [vmem:[%s378 + $0x122] sm:$0xff]
      %v1272 = vld [vmem:[%s378 + $0x12a] sm:$0xff]
      %v1273 = vld [vmem:[%s378 + $0x13a] sm:$0xff]
      %v1274 = vld [vmem:[%s378 + $0x142] sm:$0xff]
      %v1275 = vld [vmem:[%s378 + $0x152] sm:$0xff]
      %v1276 = vld [vmem:[%s378 + $0x15a] sm:$0xff]
      %v1277 = vld [vmem:[%s378 + $0x16a] sm:$0xff]
      %v1278 = vld [vmem:[%s378 + $0x172] sm:$0xff]
      %1311 = vrot.lane.b32.xlu0 %v1247, 40
      %v1312 = vpop.permute.xlu0 %1311
      %1313 = vrot.lane.b32.xlu0 %v1248, 40
      %v1314 = vpop.permute.xlu0 %1313
      %1315 = vrot.lane.b32.xlu0 %v1249, 40
      %v1316 = vpop.permute.xlu0 %1315
      %1317 = vrot.lane.b32.xlu0 %v1250, 40
      %v1318 = vpop.permute.xlu0 %1317
      %1319 = vrot.lane.b32.xlu0 %v1251, 40
      %v1320 = vpop.permute.xlu0 %1319
      %1321 = vrot.lane.b32.xlu0 %v1252, 40
      %v1322 = vpop.permute.xlu0 %1321
      %1323 = vrot.lane.b32.xlu0 %v1253, 40
      %v1324 = vpop.permute.xlu0 %1323
      %1325 = vrot.lane.b32.xlu0 %v1254, 40
      %v1326 = vpop.permute.xlu0 %1325
      %1327 = vrot.lane.b32.xlu0 %v1255, 40
      %v1328 = vpop.permute.xlu0 %1327
      %1329 = vrot.lane.b32.xlu0 %v1256, 40
      %v1330 = vpop.permute.xlu0 %1329
      %1331 = vrot.lane.b32.xlu0 %v1257, 40
      %v1332 = vpop.permute.xlu0 %1331
      %1333 = vrot.lane.b32.xlu0 %v1258, 40
      %v1334 = vpop.permute.xlu0 %1333
      %1335 = vrot.lane.b32.xlu0 %v1259, 40
      %v1336 = vpop.permute.xlu0 %1335
      %1337 = vrot.lane.b32.xlu0 %v1260, 40
      %v1338 = vpop.permute.xlu0 %1337
      %1339 = vrot.lane.b32.xlu0 %v1261, 40
      %v1340 = vpop.permute.xlu0 %1339
      %1341 = vrot.lane.b32.xlu0 %v1262, 40
      %v1342 = vpop.permute.xlu0 %1341
      %1343 = vrot.lane.b32.xlu0 %v1263, 40
      %v1344 = vpop.permute.xlu0 %1343
      %1345 = vrot.lane.b32.xlu0 %v1264, 40
      %v1346 = vpop.permute.xlu0 %1345
      %1347 = vrot.lane.b32.xlu0 %v1265, 40
      %v1348 = vpop.permute.xlu0 %1347
      %1349 = vrot.lane.b32.xlu0 %v1266, 40
      %v1350 = vpop.permute.xlu0 %1349
      %1351 = vrot.lane.b32.xlu0 %v1267, 40
      %v1352 = vpop.permute.xlu0 %1351
      %1353 = vrot.lane.b32.xlu0 %v1268, 40
      %v1354 = vpop.permute.xlu0 %1353
      %1355 = vrot.lane.b32.xlu0 %v1269, 40
      %v1356 = vpop.permute.xlu0 %1355
      %1357 = vrot.lane.b32.xlu0 %v1270, 40
      %v1358 = vpop.permute.xlu0 %1357
      %1359 = vrot.lane.b32.xlu0 %v1271, 40
      %v1360 = vpop.permute.xlu0 %1359
      %1361 = vrot.lane.b32.xlu0 %v1272, 40
      %v1362 = vpop.permute.xlu0 %1361
      %1363 = vrot.lane.b32.xlu0 %v1273, 40
      %v1364 = vpop.permute.xlu0 %1363
      %1365 = vrot.lane.b32.xlu0 %v1274, 40
      %v1366 = vpop.permute.xlu0 %1365
      %1367 = vrot.lane.b32.xlu0 %v1275, 40
      %v1368 = vpop.permute.xlu0 %1367
      %1369 = vrot.lane.b32.xlu0 %v1276, 40
      %v1370 = vpop.permute.xlu0 %1369
      %1371 = vrot.lane.b32.xlu0 %v1277, 40
      %v1372 = vpop.permute.xlu0 %1371
      %1373 = vrot.lane.b32.xlu0 %v1278, 40
      %v1374 = vpop.permute.xlu0 %1373
      %vm1407 = vcmask 392512
      %1408 = vst.msk [vmem:[#allocation3] sm:$0xff] %vm1407, %v1312
      %1409 = vst.msk [vmem:[#allocation3 + $0x8] sm:$0xff] %vm1407, %v1314
      %1410 = vst.msk [vmem:[#allocation3 + $0x10] sm:$0xff] %vm1407, %v1316
      %1411 = vst.msk [vmem:[#allocation3 + $0x18] sm:$0xff] %vm1407, %v1318
      %1412 = vst.msk [vmem:[#allocation3 + $0x20] sm:$0xff] %vm1407, %v1320
      %1413 = vst.msk [vmem:[#allocation3 + $0x28] sm:$0xff] %vm1407, %v1322
      %1414 = vst.msk [vmem:[#allocation3 + $0x30] sm:$0xff] %vm1407, %v1324
      %1415 = vst.msk [vmem:[#allocation3 + $0x38] sm:$0xff] %vm1407, %v1326
      %1416 = vst.msk [vmem:[#allocation3 + $0x40] sm:$0xff] %vm1407, %v1328
      %1417 = vst.msk [vmem:[#allocation3 + $0x48] sm:$0xff] %vm1407, %v1330
      %1418 = vst.msk [vmem:[#allocation3 + $0x50] sm:$0xff] %vm1407, %v1332
      %1419 = vst.msk [vmem:[#allocation3 + $0x58] sm:$0xff] %vm1407, %v1334
      %1420 = vst.msk [vmem:[#allocation3 + $0x60] sm:$0xff] %vm1407, %v1336
      %1421 = vst.msk [vmem:[#allocation3 + $0x68] sm:$0xff] %vm1407, %v1338
      %1422 = vst.msk [vmem:[#allocation3 + $0x70] sm:$0xff] %vm1407, %v1340
      %1423 = vst.msk [vmem:[#allocation3 + $0x78] sm:$0xff] %vm1407, %v1342
      %1424 = vst.msk [vmem:[#allocation3 + $0x80] sm:$0xff] %vm1407, %v1344
      %1425 = vst.msk [vmem:[#allocation3 + $0x88] sm:$0xff] %vm1407, %v1346
      %1426 = vst.msk [vmem:[#allocation3 + $0x90] sm:$0xff] %vm1407, %v1348
      %1427 = vst.msk [vmem:[#allocation3 + $0x98] sm:$0xff] %vm1407, %v1350
      %1428 = vst.msk [vmem:[#allocation3 + $0xa0] sm:$0xff] %vm1407, %v1352
      %1429 = vst.msk [vmem:[#allocation3 + $0xa8] sm:$0xff] %vm1407, %v1354
      %1430 = vst.msk [vmem:[#allocation3 + $0xb0] sm:$0xff] %vm1407, %v1356
      %1431 = vst.msk [vmem:[#allocation3 + $0xb8] sm:$0xff] %vm1407, %v1358
      %1432 = vst.msk [vmem:[#allocation3 + $0xc0] sm:$0xff] %vm1407, %v1360
      %1433 = vst.msk [vmem:[#allocation3 + $0xc8] sm:$0xff] %vm1407, %v1362
      %1434 = vst.msk [vmem:[#allocation3 + $0xd0] sm:$0xff] %vm1407, %v1364
      %1435 = vst.msk [vmem:[#allocation3 + $0xd8] sm:$0xff] %vm1407, %v1366
      %1436 = vst.msk [vmem:[#allocation3 + $0xe0] sm:$0xff] %vm1407, %v1368
      %1437 = vst.msk [vmem:[#allocation3 + $0xe8] sm:$0xff] %vm1407, %v1370
      %1438 = vst.msk [vmem:[#allocation3 + $0xf0] sm:$0xff] %vm1407, %v1372
      %1439 = vst.msk [vmem:[#allocation3 + $0xf8] sm:$0xff] %vm1407, %v1374
      %s1440 = scalar_lea.vmem [#allocation2], 48
      %v1441 = vld [vmem:[%s1440] sm:$0xff]
      %v1442 = vld [vmem:[%s1440 + $0x8] sm:$0xff]
      %v1443 = vld [vmem:[%s1440 + $0x18] sm:$0xff]
      %v1444 = vld [vmem:[%s1440 + $0x20] sm:$0xff]
      %v1445 = vld [vmem:[%s1440 + $0x30] sm:$0xff]
      %v1446 = vld [vmem:[%s1440 + $0x38] sm:$0xff]
      %v1447 = vld [vmem:[%s1440 + $0x48] sm:$0xff]
      %v1448 = vld [vmem:[%s1440 + $0x50] sm:$0xff]
      %v1449 = vld [vmem:[%s1440 + $0x60] sm:$0xff]
      %v1450 = vld [vmem:[%s1440 + $0x68] sm:$0xff]
      %v1451 = vld [vmem:[%s1440 + $0x78] sm:$0xff]
      %v1452 = vld [vmem:[%s1440 + $0x80] sm:$0xff]
      %v1453 = vld [vmem:[%s1440 + $0x90] sm:$0xff]
      %v1454 = vld [vmem:[%s1440 + $0x98] sm:$0xff]
      %v1455 = vld [vmem:[%s1440 + $0xa8] sm:$0xff]
      %v1456 = vld [vmem:[%s1440 + $0xb0] sm:$0xff]
      %v1457 = vld [vmem:[%s1440 + $0xc0] sm:$0xff]
      %v1458 = vld [vmem:[%s1440 + $0xc8] sm:$0xff]
      %v1459 = vld [vmem:[%s1440 + $0xd8] sm:$0xff]
      %v1460 = vld [vmem:[%s1440 + $0xe0] sm:$0xff]
      %v1461 = vld [vmem:[%s1440 + $0xf0] sm:$0xff]
      %v1462 = vld [vmem:[%s1440 + $0xf8] sm:$0xff]
      %v1463 = vld [vmem:[%s1440 + $0x108] sm:$0xff]
      %v1464 = vld [vmem:[%s1440 + $0x110] sm:$0xff]
      %v1465 = vld [vmem:[%s1440 + $0x120] sm:$0xff]
      %v1466 = vld [vmem:[%s1440 + $0x128] sm:$0xff]
      %v1467 = vld [vmem:[%s1440 + $0x138] sm:$0xff]
      %v1468 = vld [vmem:[%s1440 + $0x140] sm:$0xff]
      %v1469 = vld [vmem:[%s1440 + $0x150] sm:$0xff]
      %v1470 = vld [vmem:[%s1440 + $0x158] sm:$0xff]
      %v1471 = vld [vmem:[%s1440 + $0x168] sm:$0xff]
      %v1472 = vld [vmem:[%s1440 + $0x170] sm:$0xff]
      %1505 = vrot.lane.b32.xlu0 %v1441, 48
      %v1506 = vpop.permute.xlu0 %1505
      %1507 = vrot.lane.b32.xlu0 %v1442, 48
      %v1508 = vpop.permute.xlu0 %1507
      %1509 = vrot.lane.b32.xlu0 %v1443, 48
      %v1510 = vpop.permute.xlu0 %1509
      %1511 = vrot.lane.b32.xlu0 %v1444, 48
      %v1512 = vpop.permute.xlu0 %1511
      %1513 = vrot.lane.b32.xlu0 %v1445, 48
      %v1514 = vpop.permute.xlu0 %1513
      %1515 = vrot.lane.b32.xlu0 %v1446, 48
      %v1516 = vpop.permute.xlu0 %1515
      %1517 = vrot.lane.b32.xlu0 %v1447, 48
      %v1518 = vpop.permute.xlu0 %1517
      %1519 = vrot.lane.b32.xlu0 %v1448, 48
      %v1520 = vpop.permute.xlu0 %1519
      %1521 = vrot.lane.b32.xlu0 %v1449, 48
      %v1522 = vpop.permute.xlu0 %1521
      %1523 = vrot.lane.b32.xlu0 %v1450, 48
      %v1524 = vpop.permute.xlu0 %1523
      %1525 = vrot.lane.b32.xlu0 %v1451, 48
      %v1526 = vpop.permute.xlu0 %1525
      %1527 = vrot.lane.b32.xlu0 %v1452, 48
      %v1528 = vpop.permute.xlu0 %1527
      %1529 = vrot.lane.b32.xlu0 %v1453, 48
      %v1530 = vpop.permute.xlu0 %1529
      %1531 = vrot.lane.b32.xlu0 %v1454, 48
      %v1532 = vpop.permute.xlu0 %1531
      %1533 = vrot.lane.b32.xlu0 %v1455, 48
      %v1534 = vpop.permute.xlu0 %1533
      %1535 = vrot.lane.b32.xlu0 %v1456, 48
      %v1536 = vpop.permute.xlu0 %1535
      %1537 = vrot.lane.b32.xlu0 %v1457, 48
      %v1538 = vpop.permute.xlu0 %1537
      %1539 = vrot.lane.b32.xlu0 %v1458, 48
      %v1540 = vpop.permute.xlu0 %1539
      %1541 = vrot.lane.b32.xlu0 %v1459, 48
      %v1542 = vpop.permute.xlu0 %1541
      %1543 = vrot.lane.b32.xlu0 %v1460, 48
      %v1544 = vpop.permute.xlu0 %1543
      %1545 = vrot.lane.b32.xlu0 %v1461, 48
      %v1546 = vpop.permute.xlu0 %1545
      %1547 = vrot.lane.b32.xlu0 %v1462, 48
      %v1548 = vpop.permute.xlu0 %1547
      %1549 = vrot.lane.b32.xlu0 %v1463, 48
      %v1550 = vpop.permute.xlu0 %1549
      %1551 = vrot.lane.b32.xlu0 %v1464, 48
      %v1552 = vpop.permute.xlu0 %1551
      %1553 = vrot.lane.b32.xlu0 %v1465, 48
      %v1554 = vpop.permute.xlu0 %1553
      %1555 = vrot.lane.b32.xlu0 %v1466, 48
      %v1556 = vpop.permute.xlu0 %1555
      %1557 = vrot.lane.b32.xlu0 %v1467, 48
      %v1558 = vpop.permute.xlu0 %1557
      %1559 = vrot.lane.b32.xlu0 %v1468, 48
      %v1560 = vpop.permute.xlu0 %1559
      %1561 = vrot.lane.b32.xlu0 %v1469, 48
      %v1562 = vpop.permute.xlu0 %1561
      %1563 = vrot.lane.b32.xlu0 %v1470, 48
      %v1564 = vpop.permute.xlu0 %1563
      %1565 = vrot.lane.b32.xlu0 %v1471, 48
      %v1566 = vpop.permute.xlu0 %1565
      %1567 = vrot.lane.b32.xlu0 %v1472, 48
      %v1568 = vpop.permute.xlu0 %1567
      %vm1601 = vcmask 458112
      %1602 = vst.msk [vmem:[#allocation3] sm:$0xff] %vm1601, %v1506
      %1603 = vst.msk [vmem:[#allocation3 + $0x8] sm:$0xff] %vm1601, %v1508
      %1604 = vst.msk [vmem:[#allocation3 + $0x10] sm:$0xff] %vm1601, %v1510
      %1605 = vst.msk [vmem:[#allocation3 + $0x18] sm:$0xff] %vm1601, %v1512
      %1606 = vst.msk [vmem:[#allocation3 + $0x20] sm:$0xff] %vm1601, %v1514
      %1607 = vst.msk [vmem:[#allocation3 + $0x28] sm:$0xff] %vm1601, %v1516
      %1608 = vst.msk [vmem:[#allocation3 + $0x30] sm:$0xff] %vm1601, %v1518
      %1609 = vst.msk [vmem:[#allocation3 + $0x38] sm:$0xff] %vm1601, %v1520
      %1610 = vst.msk [vmem:[#allocation3 + $0x40] sm:$0xff] %vm1601, %v1522
      %1611 = vst.msk [vmem:[#allocation3 + $0x48] sm:$0xff] %vm1601, %v1524
      %1612 = vst.msk [vmem:[#allocation3 + $0x50] sm:$0xff] %vm1601, %v1526
      %1613 = vst.msk [vmem:[#allocation3 + $0x58] sm:$0xff] %vm1601, %v1528
      %1614 = vst.msk [vmem:[#allocation3 + $0x60] sm:$0xff] %vm1601, %v1530
      %1615 = vst.msk [vmem:[#allocation3 + $0x68] sm:$0xff] %vm1601, %v1532
      %1616 = vst.msk [vmem:[#allocation3 + $0x70] sm:$0xff] %vm1601, %v1534
      %1617 = vst.msk [vmem:[#allocation3 + $0x78] sm:$0xff] %vm1601, %v1536
      %1618 = vst.msk [vmem:[#allocation3 + $0x80] sm:$0xff] %vm1601, %v1538
      %1619 = vst.msk [vmem:[#allocation3 + $0x88] sm:$0xff] %vm1601, %v1540
      %1620 = vst.msk [vmem:[#allocation3 + $0x90] sm:$0xff] %vm1601, %v1542
      %1621 = vst.msk [vmem:[#allocation3 + $0x98] sm:$0xff] %vm1601, %v1544
      %1622 = vst.msk [vmem:[#allocation3 + $0xa0] sm:$0xff] %vm1601, %v1546
      %1623 = vst.msk [vmem:[#allocation3 + $0xa8] sm:$0xff] %vm1601, %v1548
      %1624 = vst.msk [vmem:[#allocation3 + $0xb0] sm:$0xff] %vm1601, %v1550
      %1625 = vst.msk [vmem:[#allocation3 + $0xb8] sm:$0xff] %vm1601, %v1552
      %1626 = vst.msk [vmem:[#allocation3 + $0xc0] sm:$0xff] %vm1601, %v1554
      %1627 = vst.msk [vmem:[#allocation3 + $0xc8] sm:$0xff] %vm1601, %v1556
      %1628 = vst.msk [vmem:[#allocation3 + $0xd0] sm:$0xff] %vm1601, %v1558
      %1629 = vst.msk [vmem:[#allocation3 + $0xd8] sm:$0xff] %vm1601, %v1560
      %1630 = vst.msk [vmem:[#allocation3 + $0xe0] sm:$0xff] %vm1601, %v1562
      %1631 = vst.msk [vmem:[#allocation3 + $0xe8] sm:$0xff] %vm1601, %v1564
      %1632 = vst.msk [vmem:[#allocation3 + $0xf0] sm:$0xff] %vm1601, %v1566
      %1633 = vst.msk [vmem:[#allocation3 + $0xf8] sm:$0xff] %vm1601, %v1568
      %v1634 = vld [vmem:[%s1440 + $0x1] sm:$0xff]
      %v1635 = vld [vmem:[%s1440 + $0x9] sm:$0xff]
      %v1636 = vld [vmem:[%s1440 + $0x19] sm:$0xff]
      %v1637 = vld [vmem:[%s1440 + $0x21] sm:$0xff]
      %v1638 = vld [vmem:[%s1440 + $0x31] sm:$0xff]
      %v1639 = vld [vmem:[%s1440 + $0x39] sm:$0xff]
      %v1640 = vld [vmem:[%s1440 + $0x49] sm:$0xff]
      %v1641 = vld [vmem:[%s1440 + $0x51] sm:$0xff]
      %v1642 = vld [vmem:[%s1440 + $0x61] sm:$0xff]
      %v1643 = vld [vmem:[%s1440 + $0x69] sm:$0xff]
      %v1644 = vld [vmem:[%s1440 + $0x79] sm:$0xff]
      %v1645 = vld [vmem:[%s1440 + $0x81] sm:$0xff]
      %v1646 = vld [vmem:[%s1440 + $0x91] sm:$0xff]
      %v1647 = vld [vmem:[%s1440 + $0x99] sm:$0xff]
      %v1648 = vld [vmem:[%s1440 + $0xa9] sm:$0xff]
      %v1649 = vld [vmem:[%s1440 + $0xb1] sm:$0xff]
      %v1650 = vld [vmem:[%s1440 + $0xc1] sm:$0xff]
      %v1651 = vld [vmem:[%s1440 + $0xc9] sm:$0xff]
      %v1652 = vld [vmem:[%s1440 + $0xd9] sm:$0xff]
      %v1653 = vld [vmem:[%s1440 + $0xe1] sm:$0xff]
      %v1654 = vld [vmem:[%s1440 + $0xf1] sm:$0xff]
      %v1655 = vld [vmem:[%s1440 + $0xf9] sm:$0xff]
      %v1656 = vld [vmem:[%s1440 + $0x109] sm:$0xff]
      %v1657 = vld [vmem:[%s1440 + $0x111] sm:$0xff]
      %v1658 = vld [vmem:[%s1440 + $0x121] sm:$0xff]
      %v1659 = vld [vmem:[%s1440 + $0x129] sm:$0xff]
      %v1660 = vld [vmem:[%s1440 + $0x139] sm:$0xff]
      %v1661 = vld [vmem:[%s1440 + $0x141] sm:$0xff]
      %v1662 = vld [vmem:[%s1440 + $0x151] sm:$0xff]
      %v1663 = vld [vmem:[%s1440 + $0x159] sm:$0xff]
      %v1664 = vld [vmem:[%s1440 + $0x169] sm:$0xff]
      %v1665 = vld [vmem:[%s1440 + $0x171] sm:$0xff]
      %1698 = vrot.lane.b32.xlu0 %v1634, 56
      %v1699 = vpop.permute.xlu0 %1698
      %1700 = vrot.lane.b32.xlu0 %v1635, 56
      %v1701 = vpop.permute.xlu0 %1700
      %1702 = vrot.lane.b32.xlu0 %v1636, 56
      %v1703 = vpop.permute.xlu0 %1702
      %1704 = vrot.lane.b32.xlu0 %v1637, 56
      %v1705 = vpop.permute.xlu0 %1704
      %1706 = vrot.lane.b32.xlu0 %v1638, 56
      %v1707 = vpop.permute.xlu0 %1706
      %1708 = vrot.lane.b32.xlu0 %v1639, 56
      %v1709 = vpop.permute.xlu0 %1708
      %1710 = vrot.lane.b32.xlu0 %v1640, 56
      %v1711 = vpop.permute.xlu0 %1710
      %1712 = vrot.lane.b32.xlu0 %v1641, 56
      %v1713 = vpop.permute.xlu0 %1712
      %1714 = vrot.lane.b32.xlu0 %v1642, 56
      %v1715 = vpop.permute.xlu0 %1714
      %1716 = vrot.lane.b32.xlu0 %v1643, 56
      %v1717 = vpop.permute.xlu0 %1716
      %1718 = vrot.lane.b32.xlu0 %v1644, 56
      %v1719 = vpop.permute.xlu0 %1718
      %1720 = vrot.lane.b32.xlu0 %v1645, 56
      %v1721 = vpop.permute.xlu0 %1720
      %1722 = vrot.lane.b32.xlu0 %v1646, 56
      %v1723 = vpop.permute.xlu0 %1722
      %1724 = vrot.lane.b32.xlu0 %v1647, 56
      %v1725 = vpop.permute.xlu0 %1724
      %1726 = vrot.lane.b32.xlu0 %v1648, 56
      %v1727 = vpop.permute.xlu0 %1726
      %1728 = vrot.lane.b32.xlu0 %v1649, 56
      %v1729 = vpop.permute.xlu0 %1728
      %1730 = vrot.lane.b32.xlu0 %v1650, 56
      %v1731 = vpop.permute.xlu0 %1730
      %1732 = vrot.lane.b32.xlu0 %v1651, 56
      %v1733 = vpop.permute.xlu0 %1732
      %1734 = vrot.lane.b32.xlu0 %v1652, 56
      %v1735 = vpop.permute.xlu0 %1734
      %1736 = vrot.lane.b32.xlu0 %v1653, 56
      %v1737 = vpop.permute.xlu0 %1736
      %1738 = vrot.lane.b32.xlu0 %v1654, 56
      %v1739 = vpop.permute.xlu0 %1738
      %1740 = vrot.lane.b32.xlu0 %v1655, 56
      %v1741 = vpop.permute.xlu0 %1740
      %1742 = vrot.lane.b32.xlu0 %v1656, 56
      %v1743 = vpop.permute.xlu0 %1742
      %1744 = vrot.lane.b32.xlu0 %v1657, 56
      %v1745 = vpop.permute.xlu0 %1744
      %1746 = vrot.lane.b32.xlu0 %v1658, 56
      %v1747 = vpop.permute.xlu0 %1746
      %1748 = vrot.lane.b32.xlu0 %v1659, 56
      %v1749 = vpop.permute.xlu0 %1748
      %1750 = vrot.lane.b32.xlu0 %v1660, 56
      %v1751 = vpop.permute.xlu0 %1750
      %1752 = vrot.lane.b32.xlu0 %v1661, 56
      %v1753 = vpop.permute.xlu0 %1752
      %1754 = vrot.lane.b32.xlu0 %v1662, 56
      %v1755 = vpop.permute.xlu0 %1754
      %1756 = vrot.lane.b32.xlu0 %v1663, 56
      %v1757 = vpop.permute.xlu0 %1756
      %1758 = vrot.lane.b32.xlu0 %v1664, 56
      %v1759 = vpop.permute.xlu0 %1758
      %1760 = vrot.lane.b32.xlu0 %v1665, 56
      %v1761 = vpop.permute.xlu0 %1760
      %vm1794 = vcmask 523712
      %1795 = vst.msk [vmem:[#allocation3] sm:$0xff] %vm1794, %v1699
      %1796 = vst.msk [vmem:[#allocation3 + $0x8] sm:$0xff] %vm1794, %v1701
      %1797 = vst.msk [vmem:[#allocation3 + $0x10] sm:$0xff] %vm1794, %v1703
      %1798 = vst.msk [vmem:[#allocation3 + $0x18] sm:$0xff] %vm1794, %v1705
      %1799 = vst.msk [vmem:[#allocation3 + $0x20] sm:$0xff] %vm1794, %v1707
      %1800 = vst.msk [vmem:[#allocation3 + $0x28] sm:$0xff] %vm1794, %v1709
      %1801 = vst.msk [vmem:[#allocation3 + $0x30] sm:$0xff] %vm1794, %v1711
      %1802 = vst.msk [vmem:[#allocation3 + $0x38] sm:$0xff] %vm1794, %v1713
      %1803 = vst.msk [vmem:[#allocation3 + $0x40] sm:$0xff] %vm1794, %v1715
      %1804 = vst.msk [vmem:[#allocation3 + $0x48] sm:$0xff] %vm1794, %v1717
      %1805 = vst.msk [vmem:[#allocation3 + $0x50] sm:$0xff] %vm1794, %v1719
      %1806 = vst.msk [vmem:[#allocation3 + $0x58] sm:$0xff] %vm1794, %v1721
      %1807 = vst.msk [vmem:[#allocation3 + $0x60] sm:$0xff] %vm1794, %v1723
      %1808 = vst.msk [vmem:[#allocation3 + $0x68] sm:$0xff] %vm1794, %v1725
      %1809 = vst.msk [vmem:[#allocation3 + $0x70] sm:$0xff] %vm1794, %v1727
      %1810 = vst.msk [vmem:[#allocation3 + $0x78] sm:$0xff] %vm1794, %v1729
      %1811 = vst.msk [vmem:[#allocation3 + $0x80] sm:$0xff] %vm1794, %v1731
      %1812 = vst.msk [vmem:[#allocation3 + $0x88] sm:$0xff] %vm1794, %v1733
      %1813 = vst.msk [vmem:[#allocation3 + $0x90] sm:$0xff] %vm1794, %v1735
      %1814 = vst.msk [vmem:[#allocation3 + $0x98] sm:$0xff] %vm1794, %v1737
      %1815 = vst.msk [vmem:[#allocation3 + $0xa0] sm:$0xff] %vm1794, %v1739
      %1816 = vst.msk [vmem:[#allocation3 + $0xa8] sm:$0xff] %vm1794, %v1741
      %1817 = vst.msk [vmem:[#allocation3 + $0xb0] sm:$0xff] %vm1794, %v1743
      %1818 = vst.msk [vmem:[#allocation3 + $0xb8] sm:$0xff] %vm1794, %v1745
      %1819 = vst.msk [vmem:[#allocation3 + $0xc0] sm:$0xff] %vm1794, %v1747
      %1820 = vst.msk [vmem:[#allocation3 + $0xc8] sm:$0xff] %vm1794, %v1749
      %1821 = vst.msk [vmem:[#allocation3 + $0xd0] sm:$0xff] %vm1794, %v1751
      %1822 = vst.msk [vmem:[#allocation3 + $0xd8] sm:$0xff] %vm1794, %v1753
      %1823 = vst.msk [vmem:[#allocation3 + $0xe0] sm:$0xff] %vm1794, %v1755
      %1824 = vst.msk [vmem:[#allocation3 + $0xe8] sm:$0xff] %vm1794, %v1757
      %1825 = vst.msk [vmem:[#allocation3 + $0xf0] sm:$0xff] %vm1794, %v1759
      %1826 = vst.msk [vmem:[#allocation3 + $0xf8] sm:$0xff] %vm1794, %v1761
      %v1827 = vld [vmem:[%s1440 + $0x2] sm:$0xff]
      %v1828 = vld [vmem:[%s1440 + $0xa] sm:$0xff]
      %v1829 = vld [vmem:[%s1440 + $0x1a] sm:$0xff]
      %v1830 = vld [vmem:[%s1440 + $0x22] sm:$0xff]
      %v1831 = vld [vmem:[%s1440 + $0x32] sm:$0xff]
      %v1832 = vld [vmem:[%s1440 + $0x3a] sm:$0xff]
      %v1833 = vld [vmem:[%s1440 + $0x4a] sm:$0xff]
      %v1834 = vld [vmem:[%s1440 + $0x52] sm:$0xff]
      %v1835 = vld [vmem:[%s1440 + $0x62] sm:$0xff]
      %v1836 = vld [vmem:[%s1440 + $0x6a] sm:$0xff]
      %v1837 = vld [vmem:[%s1440 + $0x7a] sm:$0xff]
      %v1838 = vld [vmem:[%s1440 + $0x82] sm:$0xff]
      %v1839 = vld [vmem:[%s1440 + $0x92] sm:$0xff]
      %v1840 = vld [vmem:[%s1440 + $0x9a] sm:$0xff]
      %v1841 = vld [vmem:[%s1440 + $0xaa] sm:$0xff]
      %v1842 = vld [vmem:[%s1440 + $0xb2] sm:$0xff]
      %v1843 = vld [vmem:[%s1440 + $0xc2] sm:$0xff]
      %v1844 = vld [vmem:[%s1440 + $0xca] sm:$0xff]
      %v1845 = vld [vmem:[%s1440 + $0xda] sm:$0xff]
      %v1846 = vld [vmem:[%s1440 + $0xe2] sm:$0xff]
      %v1847 = vld [vmem:[%s1440 + $0xf2] sm:$0xff]
      %v1848 = vld [vmem:[%s1440 + $0xfa] sm:$0xff]
      %v1849 = vld [vmem:[%s1440 + $0x10a] sm:$0xff]
      %v1850 = vld [vmem:[%s1440 + $0x112] sm:$0xff]
      %v1851 = vld [vmem:[%s1440 + $0x122] sm:$0xff]
      %v1852 = vld [vmem:[%s1440 + $0x12a] sm:$0xff]
      %v1853 = vld [vmem:[%s1440 + $0x13a] sm:$0xff]
      %v1854 = vld [vmem:[%s1440 + $0x142] sm:$0xff]
      %v1855 = vld [vmem:[%s1440 + $0x152] sm:$0xff]
      %v1856 = vld [vmem:[%s1440 + $0x15a] sm:$0xff]
      %v1857 = vld [vmem:[%s1440 + $0x16a] sm:$0xff]
      %v1858 = vld [vmem:[%s1440 + $0x172] sm:$0xff]
      %1891 = vrot.lane.b32.xlu0 %v1827, 64
      %v1892 = vpop.permute.xlu0 %1891
      %1893 = vrot.lane.b32.xlu0 %v1828, 64
      %v1894 = vpop.permute.xlu0 %1893
      %1895 = vrot.lane.b32.xlu0 %v1829, 64
      %v1896 = vpop.permute.xlu0 %1895
      %1897 = vrot.lane.b32.xlu0 %v1830, 64
      %v1898 = vpop.permute.xlu0 %1897
      %1899 = vrot.lane.b32.xlu0 %v1831, 64
      %v1900 = vpop.permute.xlu0 %1899
      %1901 = vrot.lane.b32.xlu0 %v1832, 64
      %v1902 = vpop.permute.xlu0 %1901
      %1903 = vrot.lane.b32.xlu0 %v1833, 64
      %v1904 = vpop.permute.xlu0 %1903
      %1905 = vrot.lane.b32.xlu0 %v1834, 64
      %v1906 = vpop.permute.xlu0 %1905
      %1907 = vrot.lane.b32.xlu0 %v1835, 64
      %v1908 = vpop.permute.xlu0 %1907
      %1909 = vrot.lane.b32.xlu0 %v1836, 64
      %v1910 = vpop.permute.xlu0 %1909
      %1911 = vrot.lane.b32.xlu0 %v1837, 64
      %v1912 = vpop.permute.xlu0 %1911
      %1913 = vrot.lane.b32.xlu0 %v1838, 64
      %v1914 = vpop.permute.xlu0 %1913
      %1915 = vrot.lane.b32.xlu0 %v1839, 64
      %v1916 = vpop.permute.xlu0 %1915
      %1917 = vrot.lane.b32.xlu0 %v1840, 64
      %v1918 = vpop.permute.xlu0 %1917
      %1919 = vrot.lane.b32.xlu0 %v1841, 64
      %v1920 = vpop.permute.xlu0 %1919
      %1921 = vrot.lane.b32.xlu0 %v1842, 64
      %v1922 = vpop.permute.xlu0 %1921
      %1923 = vrot.lane.b32.xlu0 %v1843, 64
      %v1924 = vpop.permute.xlu0 %1923
      %1925 = vrot.lane.b32.xlu0 %v1844, 64
      %v1926 = vpop.permute.xlu0 %1925
      %1927 = vrot.lane.b32.xlu0 %v1845, 64
      %v1928 = vpop.permute.xlu0 %1927
      %1929 = vrot.lane.b32.xlu0 %v1846, 64
      %v1930 = vpop.permute.xlu0 %1929
      %1931 = vrot.lane.b32.xlu0 %v1847, 64
      %v1932 = vpop.permute.xlu0 %1931
      %1933 = vrot.lane.b32.xlu0 %v1848, 64
      %v1934 = vpop.permute.xlu0 %1933
      %1935 = vrot.lane.b32.xlu0 %v1849, 64
      %v1936 = vpop.permute.xlu0 %1935
      %1937 = vrot.lane.b32.xlu0 %v1850, 64
      %v1938 = vpop.permute.xlu0 %1937
      %1939 = vrot.lane.b32.xlu0 %v1851, 64
      %v1940 = vpop.permute.xlu0 %1939
      %1941 = vrot.lane.b32.xlu0 %v1852, 64
      %v1942 = vpop.permute.xlu0 %1941
      %1943 = vrot.lane.b32.xlu0 %v1853, 64
      %v1944 = vpop.permute.xlu0 %1943
      %1945 = vrot.lane.b32.xlu0 %v1854, 64
      %v1946 = vpop.permute.xlu0 %1945
      %1947 = vrot.lane.b32.xlu0 %v1855, 64
      %v1948 = vpop.permute.xlu0 %1947
      %1949 = vrot.lane.b32.xlu0 %v1856, 64
      %v1950 = vpop.permute.xlu0 %1949
      %1951 = vrot.lane.b32.xlu0 %v1857, 64
      %v1952 = vpop.permute.xlu0 %1951
      %1953 = vrot.lane.b32.xlu0 %v1858, 64
      %v1954 = vpop.permute.xlu0 %1953
      %vm1987 = vcmask 589312
      %1988 = vst.msk [vmem:[#allocation3] sm:$0xff] %vm1987, %v1892
      %1989 = vst.msk [vmem:[#allocation3 + $0x8] sm:$0xff] %vm1987, %v1894
      %1990 = vst.msk [vmem:[#allocation3 + $0x10] sm:$0xff] %vm1987, %v1896
      %1991 = vst.msk [vmem:[#allocation3 + $0x18] sm:$0xff] %vm1987, %v1898
      %1992 = vst.msk [vmem:[#allocation3 + $0x20] sm:$0xff] %vm1987, %v1900
      %1993 = vst.msk [vmem:[#allocation3 + $0x28] sm:$0xff] %vm1987, %v1902
      %1994 = vst.msk [vmem:[#allocation3 + $0x30] sm:$0xff] %vm1987, %v1904
      %1995 = vst.msk [vmem:[#allocation3 + $0x38] sm:$0xff] %vm1987, %v1906
      %1996 = vst.msk [vmem:[#allocation3 + $0x40] sm:$0xff] %vm1987, %v1908
      %1997 = vst.msk [vmem:[#allocation3 + $0x48] sm:$0xff] %vm1987, %v1910
      %1998 = vst.msk [vmem:[#allocation3 + $0x50] sm:$0xff] %vm1987, %v1912
      %1999 = vst.msk [vmem:[#allocation3 + $0x58] sm:$0xff] %vm1987, %v1914
      %2000 = vst.msk [vmem:[#allocation3 + $0x60] sm:$0xff] %vm1987, %v1916
      %2001 = vst.msk [vmem:[#allocation3 + $0x68] sm:$0xff] %vm1987, %v1918
      %2002 = vst.msk [vmem:[#allocation3 + $0x70] sm:$0xff] %vm1987, %v1920
      %2003 = vst.msk [vmem:[#allocation3 + $0x78] sm:$0xff] %vm1987, %v1922
      %2004 = vst.msk [vmem:[#allocation3 + $0x80] sm:$0xff] %vm1987, %v1924
      %2005 = vst.msk [vmem:[#allocation3 + $0x88] sm:$0xff] %vm1987, %v1926
      %2006 = vst.msk [vmem:[#allocation3 + $0x90] sm:$0xff] %vm1987, %v1928
      %2007 = vst.msk [vmem:[#allocation3 + $0x98] sm:$0xff] %vm1987, %v1930
      %2008 = vst.msk [vmem:[#allocation3 + $0xa0] sm:$0xff] %vm1987, %v1932
      %2009 = vst.msk [vmem:[#allocation3 + $0xa8] sm:$0xff] %vm1987, %v1934
      %2010 = vst.msk [vmem:[#allocation3 + $0xb0] sm:$0xff] %vm1987, %v1936
      %2011 = vst.msk [vmem:[#allocation3 + $0xb8] sm:$0xff] %vm1987, %v1938
      %2012 = vst.msk [vmem:[#allocation3 + $0xc0] sm:$0xff] %vm1987, %v1940
      %2013 = vst.msk [vmem:[#allocation3 + $0xc8] sm:$0xff] %vm1987, %v1942
      %2014 = vst.msk [vmem:[#allocation3 + $0xd0] sm:$0xff] %vm1987, %v1944
      %2015 = vst.msk [vmem:[#allocation3 + $0xd8] sm:$0xff] %vm1987, %v1946
      %2016 = vst.msk [vmem:[#allocation3 + $0xe0] sm:$0xff] %vm1987, %v1948
      %2017 = vst.msk [vmem:[#allocation3 + $0xe8] sm:$0xff] %vm1987, %v1950
      %2018 = vst.msk [vmem:[#allocation3 + $0xf0] sm:$0xff] %vm1987, %v1952
      %2019 = vst.msk [vmem:[#allocation3 + $0xf8] sm:$0xff] %vm1987, %v1954
      %v2020 = vld [vmem:[#allocation3] sm:$0xff]
      %v2021 = vld [vmem:[#allocation3 + $0x8] sm:$0xff]
      %v2022 = vld [vmem:[#allocation3 + $0x10] sm:$0xff]
      %v2023 = vld [vmem:[#allocation3 + $0x18] sm:$0xff]
      %v2024 = vld [vmem:[#allocation3 + $0x20] sm:$0xff]
      %v2025 = vld [vmem:[#allocation3 + $0x28] sm:$0xff]
      %v2026 = vld [vmem:[#allocation3 + $0x30] sm:$0xff]
      %v2027 = vld [vmem:[#allocation3 + $0x38] sm:$0xff]
      %v2028 = vld [vmem:[#allocation3 + $0x40] sm:$0xff]
      %v2029 = vld [vmem:[#allocation3 + $0x48] sm:$0xff]
      %v2030 = vld [vmem:[#allocation3 + $0x50] sm:$0xff]
      %v2031 = vld [vmem:[#allocation3 + $0x58] sm:$0xff]
      %v2032 = vld [vmem:[#allocation3 + $0x60] sm:$0xff]
      %v2033 = vld [vmem:[#allocation3 + $0x68] sm:$0xff]
      %v2034 = vld [vmem:[#allocation3 + $0x70] sm:$0xff]
      %v2035 = vld [vmem:[#allocation3 + $0x78] sm:$0xff]
      %v2036 = vld [vmem:[#allocation3 + $0x80] sm:$0xff]
      %v2037 = vld [vmem:[#allocation3 + $0x88] sm:$0xff]
      %v2038 = vld [vmem:[#allocation3 + $0x90] sm:$0xff]
      %v2039 = vld [vmem:[#allocation3 + $0x98] sm:$0xff]
      %v2040 = vld [vmem:[#allocation3 + $0xa0] sm:$0xff]
      %v2041 = vld [vmem:[#allocation3 + $0xa8] sm:$0xff]
      %v2042 = vld [vmem:[#allocation3 + $0xb0] sm:$0xff]
      %v2043 = vld [vmem:[#allocation3 + $0xb8] sm:$0xff]
      %v2044 = vld [vmem:[#allocation3 + $0xc0] sm:$0xff]
      %v2045 = vld [vmem:[#allocation3 + $0xc8] sm:$0xff]
      %v2046 = vld [vmem:[#allocation3 + $0xd0] sm:$0xff]
      %v2047 = vld [vmem:[#allocation3 + $0xd8] sm:$0xff]
      %v2048 = vld [vmem:[#allocation3 + $0xe0] sm:$0xff]
      %v2049 = vld [vmem:[#allocation3 + $0xe8] sm:$0xff]
      %v2050 = vld [vmem:[#allocation3 + $0xf0] sm:$0xff]
      %v2051 = vld [vmem:[#allocation3 + $0xf8] sm:$0xff]
      %v2052 = vld [vmem:[%s1] sm:$0xff]
      %v2053 = vld [vmem:[%s1 + $0x8] sm:$0xff]
      %v2054 = vld [vmem:[%s1 + $0x10] sm:$0xff]
      %v2055 = vld [vmem:[%s1 + $0x18] sm:$0xff]
      %v2056 = vld [vmem:[%s1 + $0x20] sm:$0xff]
      %v2057 = vld [vmem:[%s1 + $0x28] sm:$0xff]
      %v2058 = vld [vmem:[%s1 + $0x30] sm:$0xff]
      %v2059 = vld [vmem:[%s1 + $0x38] sm:$0xff]
      %v2060 = vld [vmem:[%s1 + $0x40] sm:$0xff]
      %v2061 = vld [vmem:[%s2] sm:$0x1]
      %v2063 = vperm.slane %v2061, 0
      %vm2065 = vcmask 588800
      %v2067 = vsel %vm2065, %v2020, 0
      %v2070 = vsel %vm2065, %v2021, 0
      %v2073 = vsel %vm2065, %v2022, 0
      %v2076 = vsel %vm2065, %v2023, 0
      %v2079 = vsel %vm2065, %v2024, 0
      %v2082 = vsel %vm2065, %v2025, 0
      %v2085 = vsel %vm2065, %v2026, 0
      %v2088 = vsel %vm2065, %v2027, 0
      %v2091 = vsel %vm2065, %v2028, 0
      %v2094 = vsel %vm2065, %v2029, 0
      %v2097 = vsel %vm2065, %v2030, 0
      %v2100 = vsel %vm2065, %v2031, 0
      %v2103 = vsel %vm2065, %v2032, 0
      %v2106 = vsel %vm2065, %v2033, 0
      %v2109 = vsel %vm2065, %v2034, 0
      %v2112 = vsel %vm2065, %v2035, 0
      %v2115 = vsel %vm2065, %v2036, 0
      %v2118 = vsel %vm2065, %v2037, 0
      %v2121 = vsel %vm2065, %v2038, 0
      %v2124 = vsel %vm2065, %v2039, 0
      %v2127 = vsel %vm2065, %v2040, 0
      %v2130 = vsel %vm2065, %v2041, 0
      %v2133 = vsel %vm2065, %v2042, 0
      %v2136 = vsel %vm2065, %v2043, 0
      %v2139 = vsel %vm2065, %v2044, 0
      %v2142 = vsel %vm2065, %v2045, 0
      %v2145 = vsel %vm2065, %v2046, 0
      %v2148 = vsel %vm2065, %v2047, 0
      %v2151 = vsel %vm2065, %v2048, 0
      %v2154 = vsel %vm2065, %v2049, 0
      %v2157 = vsel %vm2065, %v2050, 0
      %v2160 = vsel %vm2065, %v2051, 0
      %2162 = vmatpush.msra.mxu0 0.0
      %2163 = vmatpush.msra.mxu0 0.0
      %2164 = vmatpush.msra.mxu0 0.0
      %2165 = vmatpush.msra.mxu0 0.0
      %2166 = vmatpush.msra.mxu0 0.0
      %2167 = vmatpush.msra.mxu0 0.0
      %2168 = vmatpush.msra.mxu0 0.0
      %2169 = vmatpush.msra.mxu0 %v2060
      %2170 = vmatpush.msra.mxu0 %v2059
      %2171 = vmatpush.msra.mxu0 %v2058
      %2172 = vmatpush.msra.mxu0 %v2057
      %2173 = vmatpush.msra.mxu0 %v2056
      %2174 = vmatpush.msra.mxu0 %v2055
      %2175 = vmatpush.msra.mxu0 %v2054
      %2176 = vmatpush.msra.mxu0 %v2053
      %2177 = vmatpush.msra.mxu0 %v2052
      %2178 = vmatmul.f32.gmra.mxu0 %v2067
      %v2179 = vpop.f32.mrf.mxu0
      %v2180 = vadd.f32 %v2063, %v2179
      %2181 = vmatmul.f32.gmra.mxu0 %v2070
      %v2182 = vpop.f32.mrf.mxu0
      %v2183 = vadd.f32 %v2063, %v2182
      %2184 = vmatmul.f32.gmra.mxu0 %v2073
      %v2185 = vpop.f32.mrf.mxu0
      %v2186 = vadd.f32 %v2063, %v2185
      %2187 = vmatmul.f32.gmra.mxu0 %v2076
      %v2188 = vpop.f32.mrf.mxu0
      %v2189 = vadd.f32 %v2063, %v2188
      %2190 = vmatmul.f32.gmra.mxu0 %v2079
      %v2191 = vpop.f32.mrf.mxu0
      %v2192 = vadd.f32 %v2063, %v2191
      %2193 = vmatmul.f32.gmra.mxu0 %v2082
      %v2194 = vpop.f32.mrf.mxu0
      %v2195 = vadd.f32 %v2063, %v2194
      %2196 = vmatmul.f32.gmra.mxu0 %v2085
      %v2197 = vpop.f32.mrf.mxu0
      %v2198 = vadd.f32 %v2063, %v2197
      %2199 = vmatmul.f32.gmra.mxu0 %v2088
      %v2200 = vpop.f32.mrf.mxu0
      %v2201 = vadd.f32 %v2063, %v2200
      %2202 = vmatmul.f32.gmra.mxu0 %v2091
      %v2203 = vpop.f32.mrf.mxu0
      %v2204 = vadd.f32 %v2063, %v2203
      %2205 = vmatmul.f32.gmra.mxu0 %v2094
      %v2206 = vpop.f32.mrf.mxu0
      %v2207 = vadd.f32 %v2063, %v2206
      %2208 = vmatmul.f32.gmra.mxu0 %v2097
      %v2209 = vpop.f32.mrf.mxu0
      %v2210 = vadd.f32 %v2063, %v2209
      %2211 = vmatmul.f32.gmra.mxu0 %v2100
      %v2212 = vpop.f32.mrf.mxu0
      %v2213 = vadd.f32 %v2063, %v2212
      %2214 = vmatmul.f32.gmra.mxu0 %v2103
      %v2215 = vpop.f32.mrf.mxu0
      %v2216 = vadd.f32 %v2063, %v2215
      %2217 = vmatmul.f32.gmra.mxu0 %v2106
      %v2218 = vpop.f32.mrf.mxu0
      %v2219 = vadd.f32 %v2063, %v2218
      %2220 = vmatmul.f32.gmra.mxu0 %v2109
      %v2221 = vpop.f32.mrf.mxu0
      %v2222 = vadd.f32 %v2063, %v2221
      %2223 = vmatmul.f32.gmra.mxu0 %v2112
      %v2224 = vpop.f32.mrf.mxu0
      %v2225 = vadd.f32 %v2063, %v2224
      %2226 = vmatmul.f32.gmra.mxu0 %v2115
      %v2227 = vpop.f32.mrf.mxu0
      %v2228 = vadd.f32 %v2063, %v2227
      %2229 = vmatmul.f32.gmra.mxu0 %v2118
      %v2230 = vpop.f32.mrf.mxu0
      %v2231 = vadd.f32 %v2063, %v2230
      %2232 = vmatmul.f32.gmra.mxu0 %v2121
      %v2233 = vpop.f32.mrf.mxu0
      %v2234 = vadd.f32 %v2063, %v2233
      %2235 = vmatmul.f32.gmra.mxu0 %v2124
      %v2236 = vpop.f32.mrf.mxu0
      %v2237 = vadd.f32 %v2063, %v2236
      %2238 = vmatmul.f32.gmra.mxu0 %v2127
      %v2239 = vpop.f32.mrf.mxu0
      %v2240 = vadd.f32 %v2063, %v2239
      %2241 = vmatmul.f32.gmra.mxu0 %v2130
      %v2242 = vpop.f32.mrf.mxu0
      %v2243 = vadd.f32 %v2063, %v2242
      %2244 = vmatmul.f32.gmra.mxu0 %v2133
      %v2245 = vpop.f32.mrf.mxu0
      %v2246 = vadd.f32 %v2063, %v2245
      %2247 = vmatmul.f32.gmra.mxu0 %v2136
      %v2248 = vpop.f32.mrf.mxu0
      %v2249 = vadd.f32 %v2063, %v2248
      %2250 = vmatmul.f32.gmra.mxu0 %v2139
      %v2251 = vpop.f32.mrf.mxu0
      %v2252 = vadd.f32 %v2063, %v2251
      %2253 = vmatmul.f32.gmra.mxu0 %v2142
      %v2254 = vpop.f32.mrf.mxu0
      %v2255 = vadd.f32 %v2063, %v2254
      %2256 = vmatmul.f32.gmra.mxu0 %v2145
      %v2257 = vpop.f32.mrf.mxu0
      %v2258 = vadd.f32 %v2063, %v2257
      %2259 = vmatmul.f32.gmra.mxu0 %v2148
      %v2260 = vpop.f32.mrf.mxu0
      %v2261 = vadd.f32 %v2063, %v2260
      %2262 = vmatmul.f32.gmra.mxu0 %v2151
      %v2263 = vpop.f32.mrf.mxu0
      %v2264 = vadd.f32 %v2063, %v2263
      %2265 = vmatmul.f32.gmra.mxu0 %v2154
      %v2266 = vpop.f32.mrf.mxu0
      %v2267 = vadd.f32 %v2063, %v2266
      %2268 = vmatmul.f32.gmra.mxu0 %v2157
      %v2269 = vpop.f32.mrf.mxu0
      %v2270 = vadd.f32 %v2063, %v2269
      %2271 = vmatmul.f32.gmra.mxu0 %v2160
      %v2272 = vpop.f32.mrf.mxu0
      %v2273 = vadd.f32 %v2063, %v2272
      %2274 = vdwg.mxu0
      %vm2275 = vcmp.gt.f32.partialorder %v2180, 0.0
      %vm2276 = vcmp.gt.f32.partialorder %v2183, 0.0
      %vm2277 = vcmp.gt.f32.partialorder %v2186, 0.0
      %vm2278 = vcmp.gt.f32.partialorder %v2189, 0.0
      %vm2279 = vcmp.gt.f32.partialorder %v2192, 0.0
      %vm2280 = vcmp.gt.f32.partialorder %v2195, 0.0
      %vm2281 = vcmp.gt.f32.partialorder %v2198, 0.0
      %vm2282 = vcmp.gt.f32.partialorder %v2201, 0.0
      %vm2283 = vcmp.gt.f32.partialorder %v2204, 0.0
      %vm2284 = vcmp.gt.f32.partialorder %v2207, 0.0
      %vm2285 = vcmp.gt.f32.partialorder %v2210, 0.0
      %vm2286 = vcmp.gt.f32.partialorder %v2213, 0.0
      %vm2287 = vcmp.gt.f32.partialorder %v2216, 0.0
      %vm2288 = vcmp.gt.f32.partialorder %v2219, 0.0
      %vm2289 = vcmp.gt.f32.partialorder %v2222, 0.0
      %vm2290 = vcmp.gt.f32.partialorder %v2225, 0.0
      %vm2291 = vcmp.gt.f32.partialorder %v2228, 0.0
      %vm2292 = vcmp.gt.f32.partialorder %v2231, 0.0
      %vm2293 = vcmp.gt.f32.partialorder %v2234, 0.0
      %vm2294 = vcmp.gt.f32.partialorder %v2237, 0.0
      %vm2295 = vcmp.gt.f32.partialorder %v2240, 0.0
      %vm2296 = vcmp.gt.f32.partialorder %v2243, 0.0
      %vm2297 = vcmp.gt.f32.partialorder %v2246, 0.0
      %vm2298 = vcmp.gt.f32.partialorder %v2249, 0.0
      %vm2299 = vcmp.gt.f32.partialorder %v2252, 0.0
      %vm2300 = vcmp.gt.f32.partialorder %v2255, 0.0
      %vm2301 = vcmp.gt.f32.partialorder %v2258, 0.0
      %vm2302 = vcmp.gt.f32.partialorder %v2261, 0.0
      %vm2303 = vcmp.gt.f32.partialorder %v2264, 0.0
      %vm2304 = vcmp.gt.f32.partialorder %v2267, 0.0
      %vm2305 = vcmp.gt.f32.partialorder %v2270, 0.0
      %vm2306 = vcmp.gt.f32.partialorder %v2273, 0.0
      %v2307 = vmul.f32 %v2180, 0.2
      %v2308 = vmul.f32 %v2183, 0.2
      %v2309 = vmul.f32 %v2186, 0.2
      %v2310 = vmul.f32 %v2189, 0.2
      %v2311 = vmul.f32 %v2192, 0.2
      %v2312 = vmul.f32 %v2195, 0.2
      %v2313 = vmul.f32 %v2198, 0.2
      %v2314 = vmul.f32 %v2201, 0.2
      %v2315 = vmul.f32 %v2204, 0.2
      %v2316 = vmul.f32 %v2207, 0.2
      %v2317 = vmul.f32 %v2210, 0.2
      %v2318 = vmul.f32 %v2213, 0.2
      %v2319 = vmul.f32 %v2216, 0.2
      %v2320 = vmul.f32 %v2219, 0.2
      %v2321 = vmul.f32 %v2222, 0.2
      %v2322 = vmul.f32 %v2225, 0.2
      %v2323 = vmul.f32 %v2228, 0.2
      %v2324 = vmul.f32 %v2231, 0.2
      %v2325 = vmul.f32 %v2234, 0.2
      %v2326 = vmul.f32 %v2237, 0.2
      %v2327 = vmul.f32 %v2240, 0.2
      %v2328 = vmul.f32 %v2243, 0.2
      %v2329 = vmul.f32 %v2246, 0.2
      %v2330 = vmul.f32 %v2249, 0.2
      %v2331 = vmul.f32 %v2252, 0.2
      %v2332 = vmul.f32 %v2255, 0.2
      %v2333 = vmul.f32 %v2258, 0.2
      %v2334 = vmul.f32 %v2261, 0.2
      %v2335 = vmul.f32 %v2264, 0.2
      %v2336 = vmul.f32 %v2267, 0.2
      %v2337 = vmul.f32 %v2270, 0.2
      %v2338 = vmul.f32 %v2273, 0.2
      %v2339 = vsel %vm2275, %v2180, %v2307
      %v2340 = vsel %vm2276, %v2183, %v2308
      %v2341 = vsel %vm2277, %v2186, %v2309
      %v2342 = vsel %vm2278, %v2189, %v2310
      %v2343 = vsel %vm2279, %v2192, %v2311
      %v2344 = vsel %vm2280, %v2195, %v2312
      %v2345 = vsel %vm2281, %v2198, %v2313
      %v2346 = vsel %vm2282, %v2201, %v2314
      %v2347 = vsel %vm2283, %v2204, %v2315
      %v2348 = vsel %vm2284, %v2207, %v2316
      %v2349 = vsel %vm2285, %v2210, %v2317
      %v2350 = vsel %vm2286, %v2213, %v2318
      %v2351 = vsel %vm2287, %v2216, %v2319
      %v2352 = vsel %vm2288, %v2219, %v2320
      %v2353 = vsel %vm2289, %v2222, %v2321
      %v2354 = vsel %vm2290, %v2225, %v2322
      %v2355 = vsel %vm2291, %v2228, %v2323
      %v2356 = vsel %vm2292, %v2231, %v2324
      %v2357 = vsel %vm2293, %v2234, %v2325
      %v2358 = vsel %vm2294, %v2237, %v2326
      %v2359 = vsel %vm2295, %v2240, %v2327
      %v2360 = vsel %vm2296, %v2243, %v2328
      %v2361 = vsel %vm2297, %v2246, %v2329
      %v2362 = vsel %vm2298, %v2249, %v2330
      %v2363 = vsel %vm2299, %v2252, %v2331
      %v2364 = vsel %vm2300, %v2255, %v2332
      %v2365 = vsel %vm2301, %v2258, %v2333
      %v2366 = vsel %vm2302, %v2261, %v2334
      %v2367 = vsel %vm2303, %v2264, %v2335
      %v2368 = vsel %vm2304, %v2267, %v2336
      %v2369 = vsel %vm2305, %v2270, %v2337
      %v2370 = vsel %vm2306, %v2273, %v2338
      %2403 = vrot.lane.b32.xlu0 %v2339, 8
      %v2404 = vpop.permute.xlu0 %2403
      %2405 = vrot.lane.b32.xlu0 %v2340, 8
      %v2406 = vpop.permute.xlu0 %2405
      %2407 = vrot.lane.b32.xlu0 %v2341, 8
      %v2408 = vpop.permute.xlu0 %2407
      %2409 = vrot.lane.b32.xlu0 %v2342, 8
      %v2410 = vpop.permute.xlu0 %2409
      %2411 = vrot.lane.b32.xlu0 %v2343, 8
      %v2412 = vpop.permute.xlu0 %2411
      %2413 = vrot.lane.b32.xlu0 %v2344, 8
      %v2414 = vpop.permute.xlu0 %2413
      %2415 = vrot.lane.b32.xlu0 %v2345, 8
      %v2416 = vpop.permute.xlu0 %2415
      %2417 = vrot.lane.b32.xlu0 %v2346, 8
      %v2418 = vpop.permute.xlu0 %2417
      %2419 = vrot.lane.b32.xlu0 %v2347, 8
      %v2420 = vpop.permute.xlu0 %2419
      %2421 = vrot.lane.b32.xlu0 %v2348, 8
      %v2422 = vpop.permute.xlu0 %2421
      %2423 = vrot.lane.b32.xlu0 %v2349, 8
      %v2424 = vpop.permute.xlu0 %2423
      %2425 = vrot.lane.b32.xlu0 %v2350, 8
      %v2426 = vpop.permute.xlu0 %2425
      %2427 = vrot.lane.b32.xlu0 %v2351, 8
      %v2428 = vpop.permute.xlu0 %2427
      %2429 = vrot.lane.b32.xlu0 %v2352, 8
      %v2430 = vpop.permute.xlu0 %2429
      %2431 = vrot.lane.b32.xlu0 %v2353, 8
      %v2432 = vpop.permute.xlu0 %2431
      %2433 = vrot.lane.b32.xlu0 %v2354, 8
      %v2434 = vpop.permute.xlu0 %2433
      %2435 = vrot.lane.b32.xlu0 %v2355, 8
      %v2436 = vpop.permute.xlu0 %2435
      %2437 = vrot.lane.b32.xlu0 %v2356, 8
      %v2438 = vpop.permute.xlu0 %2437
      %2439 = vrot.lane.b32.xlu0 %v2357, 8
      %v2440 = vpop.permute.xlu0 %2439
      %2441 = vrot.lane.b32.xlu0 %v2358, 8
      %v2442 = vpop.permute.xlu0 %2441
      %2443 = vrot.lane.b32.xlu0 %v2359, 8
      %v2444 = vpop.permute.xlu0 %2443
      %2445 = vrot.lane.b32.xlu0 %v2360, 8
      %v2446 = vpop.permute.xlu0 %2445
      %2447 = vrot.lane.b32.xlu0 %v2361, 8
      %v2448 = vpop.permute.xlu0 %2447
      %2449 = vrot.lane.b32.xlu0 %v2362, 8
      %v2450 = vpop.permute.xlu0 %2449
      %2451 = vrot.lane.b32.xlu0 %v2363, 8
      %v2452 = vpop.permute.xlu0 %2451
      %2453 = vrot.lane.b32.xlu0 %v2364, 8
      %v2454 = vpop.permute.xlu0 %2453
      %2455 = vrot.lane.b32.xlu0 %v2365, 8
      %v2456 = vpop.permute.xlu0 %2455
      %2457 = vrot.lane.b32.xlu0 %v2366, 8
      %v2458 = vpop.permute.xlu0 %2457
      %2459 = vrot.lane.b32.xlu0 %v2367, 8
      %v2460 = vpop.permute.xlu0 %2459
      %2461 = vrot.lane.b32.xlu0 %v2368, 8
      %v2462 = vpop.permute.xlu0 %2461
      %2463 = vrot.lane.b32.xlu0 %v2369, 8
      %v2464 = vpop.permute.xlu0 %2463
      %2465 = vrot.lane.b32.xlu0 %v2370, 8
      %v2466 = vpop.permute.xlu0 %2465
      %2499 = vst.msk [vmem:[#allocation4] sm:$0xff] %vm635, %v2404
      %2500 = vst.msk [vmem:[#allocation4 + $0x8] sm:$0xff] %vm635, %v2406
      %2501 = vst.msk [vmem:[#allocation4 + $0x10] sm:$0xff] %vm635, %v2408
      %2502 = vst.msk [vmem:[#allocation4 + $0x18] sm:$0xff] %vm635, %v2410
      %2503 = vst.msk [vmem:[#allocation4 + $0x20] sm:$0xff] %vm635, %v2412
      %2504 = vst.msk [vmem:[#allocation4 + $0x28] sm:$0xff] %vm635, %v2414
      %2505 = vst.msk [vmem:[#allocation4 + $0x30] sm:$0xff] %vm635, %v2416
      %2506 = vst.msk [vmem:[#allocation4 + $0x38] sm:$0xff] %vm635, %v2418
      %2507 = vst.msk [vmem:[#allocation4 + $0x40] sm:$0xff] %vm635, %v2420
      %2508 = vst.msk [vmem:[#allocation4 + $0x48] sm:$0xff] %vm635, %v2422
      %2509 = vst.msk [vmem:[#allocation4 + $0x50] sm:$0xff] %vm635, %v2424
      %2510 = vst.msk [vmem:[#allocation4 + $0x58] sm:$0xff] %vm635, %v2426
      %2511 = vst.msk [vmem:[#allocation4 + $0x60] sm:$0xff] %vm635, %v2428
      %2512 = vst.msk [vmem:[#allocation4 + $0x68] sm:$0xff] %vm635, %v2430
      %2513 = vst.msk [vmem:[#allocation4 + $0x70] sm:$0xff] %vm635, %v2432
      %2514 = vst.msk [vmem:[#allocation4 + $0x78] sm:$0xff] %vm635, %v2434
      %2515 = vst.msk [vmem:[#allocation4 + $0x80] sm:$0xff] %vm635, %v2436
      %2516 = vst.msk [vmem:[#allocation4 + $0x88] sm:$0xff] %vm635, %v2438
      %2517 = vst.msk [vmem:[#allocation4 + $0x90] sm:$0xff] %vm635, %v2440
      %2518 = vst.msk [vmem:[#allocation4 + $0x98] sm:$0xff] %vm635, %v2442
      %2519 = vst.msk [vmem:[#allocation4 + $0xa0] sm:$0xff] %vm635, %v2444
      %2520 = vst.msk [vmem:[#allocation4 + $0xa8] sm:$0xff] %vm635, %v2446
      %2521 = vst.msk [vmem:[#allocation4 + $0xb0] sm:$0xff] %vm635, %v2448
      %2522 = vst.msk [vmem:[#allocation4 + $0xb8] sm:$0xff] %vm635, %v2450
      %2523 = vst.msk [vmem:[#allocation4 + $0xc0] sm:$0xff] %vm635, %v2452
      %2524 = vst.msk [vmem:[#allocation4 + $0xc8] sm:$0xff] %vm635, %v2454
      %2525 = vst.msk [vmem:[#allocation4 + $0xd0] sm:$0xff] %vm635, %v2456
      %2526 = vst.msk [vmem:[#allocation4 + $0xd8] sm:$0xff] %vm635, %v2458
      %2527 = vst.msk [vmem:[#allocation4 + $0xe0] sm:$0xff] %vm635, %v2460
      %2528 = vst.msk [vmem:[#allocation4 + $0xe8] sm:$0xff] %vm635, %v2462
      %2529 = vst.msk [vmem:[#allocation4 + $0xf0] sm:$0xff] %vm635, %v2464
      %2530 = vst.msk [vmem:[#allocation4 + $0xf8] sm:$0xff] %vm635, %v2466
      %v2531 = vld [vmem:[#allocation4] sm:$0xff]
      %v2532 = vld [vmem:[#allocation4 + $0x8] sm:$0xff]
      %v2533 = vld [vmem:[#allocation4 + $0x10] sm:$0xff]
      %v2534 = vld [vmem:[#allocation4 + $0x18] sm:$0xff]
      %v2535 = vld [vmem:[#allocation4 + $0x20] sm:$0xff]
      %v2536 = vld [vmem:[#allocation4 + $0x28] sm:$0xff]
      %v2537 = vld [vmem:[#allocation4 + $0x30] sm:$0xff]
      %v2538 = vld [vmem:[#allocation4 + $0x38] sm:$0xff]
      %v2539 = vld [vmem:[#allocation4 + $0x40] sm:$0xff]
      %v2540 = vld [vmem:[#allocation4 + $0x48] sm:$0xff]
      %v2541 = vld [vmem:[#allocation4 + $0x50] sm:$0xff]
      %v2542 = vld [vmem:[#allocation4 + $0x58] sm:$0xff]
      %v2543 = vld [vmem:[#allocation4 + $0x60] sm:$0xff]
      %v2544 = vld [vmem:[#allocation4 + $0x68] sm:$0xff]
      %v2545 = vld [vmem:[#allocation4 + $0x70] sm:$0xff]
      %v2546 = vld [vmem:[#allocation4 + $0x78] sm:$0xff]
      %v2547 = vld [vmem:[#allocation4 + $0x80] sm:$0xff]
      %v2548 = vld [vmem:[#allocation4 + $0x88] sm:$0xff]
      %v2549 = vld [vmem:[#allocation4 + $0x90] sm:$0xff]
      %v2550 = vld [vmem:[#allocation4 + $0x98] sm:$0xff]
      %v2551 = vld [vmem:[#allocation4 + $0xa0] sm:$0xff]
      %v2552 = vld [vmem:[#allocation4 + $0xa8] sm:$0xff]
      %v2553 = vld [vmem:[#allocation4 + $0xb0] sm:$0xff]
      %v2554 = vld [vmem:[#allocation4 + $0xb8] sm:$0xff]
      %v2555 = vld [vmem:[#allocation4 + $0xc0] sm:$0xff]
      %v2556 = vld [vmem:[#allocation4 + $0xc8] sm:$0xff]
      %v2557 = vld [vmem:[#allocation4 + $0xd0] sm:$0xff]
      %v2558 = vld [vmem:[#allocation4 + $0xd8] sm:$0xff]
      %v2559 = vld [vmem:[#allocation4 + $0xe0] sm:$0xff]
      %v2560 = vld [vmem:[#allocation4 + $0xe8] sm:$0xff]
      %v2561 = vld [vmem:[#allocation4 + $0xf0] sm:$0xff]
      %v2562 = vld [vmem:[#allocation4 + $0xf8] sm:$0xff]
      %v2563 = vld [vmem:[%s3] sm:$0xff]
      %v2564 = vld [vmem:[%s3 + $0x8] sm:$0xff]
      %v2565 = vld [vmem:[%s3 + $0x10] sm:$0xff]
      %v2566 = vld [vmem:[%s3 + $0x18] sm:$0xff]
      %v2567 = vld [vmem:[%s4] sm:$0x1]
      %v2569 = vperm.slane %v2567, 0
      %v2572 = vsel %vm281, %v2531, 0
      %v2575 = vsel %vm281, %v2532, 0
      %v2578 = vsel %vm281, %v2533, 0
      %v2581 = vsel %vm281, %v2534, 0
      %v2584 = vsel %vm281, %v2535, 0
      %v2587 = vsel %vm281, %v2536, 0
      %v2590 = vsel %vm281, %v2537, 0
      %v2593 = vsel %vm281, %v2538, 0
      %v2596 = vsel %vm281, %v2539, 0
      %v2599 = vsel %vm281, %v2540, 0
      %v2602 = vsel %vm281, %v2541, 0
      %v2605 = vsel %vm281, %v2542, 0
      %v2608 = vsel %vm281, %v2543, 0
      %v2611 = vsel %vm281, %v2544, 0
      %v2614 = vsel %vm281, %v2545, 0
      %v2617 = vsel %vm281, %v2546, 0
      %v2620 = vsel %vm281, %v2547, 0
      %v2623 = vsel %vm281, %v2548, 0
      %v2626 = vsel %vm281, %v2549, 0
      %v2629 = vsel %vm281, %v2550, 0
      %v2632 = vsel %vm281, %v2551, 0
      %v2635 = vsel %vm281, %v2552, 0
      %v2638 = vsel %vm281, %v2553, 0
      %v2641 = vsel %vm281, %v2554, 0
      %v2644 = vsel %vm281, %v2555, 0
      %v2647 = vsel %vm281, %v2556, 0
      %v2650 = vsel %vm281, %v2557, 0
      %v2653 = vsel %vm281, %v2558, 0
      %v2656 = vsel %vm281, %v2559, 0
      %v2659 = vsel %vm281, %v2560, 0
      %v2662 = vsel %vm281, %v2561, 0
      %v2665 = vsel %vm281, %v2562, 0
      %2667 = vmatpush.msra.mxu0 0.0
      %2668 = vmatpush.msra.mxu0 0.0
      %2669 = vmatpush.msra.mxu0 0.0
      %2670 = vmatpush.msra.mxu0 0.0
      %2671 = vmatpush.msra.mxu0 0.0
      %2672 = vmatpush.msra.mxu0 0.0
      %2673 = vmatpush.msra.mxu0 0.0
      %2674 = vmatpush.msra.mxu0 0.0
      %2675 = vmatpush.msra.mxu0 0.0
      %2676 = vmatpush.msra.mxu0 0.0
      %2677 = vmatpush.msra.mxu0 0.0
      %2678 = vmatpush.msra.mxu0 0.0
      %2679 = vmatpush.msra.mxu0 %v2566
      %2680 = vmatpush.msra.mxu0 %v2565
      %2681 = vmatpush.msra.mxu0 %v2564
      %2682 = vmatpush.msra.mxu0 %v2563
      %2683 = vmatmul.f32.gmra.mxu0 %v2572
      %v2684 = vpop.f32.mrf.mxu0
      %v2685 = vadd.f32 %v2569, %v2684
      %2686 = vmatmul.f32.gmra.mxu0 %v2575
      %v2687 = vpop.f32.mrf.mxu0
      %v2688 = vadd.f32 %v2569, %v2687
      %2689 = vmatmul.f32.gmra.mxu0 %v2578
      %v2690 = vpop.f32.mrf.mxu0
      %v2691 = vadd.f32 %v2569, %v2690
      %2692 = vmatmul.f32.gmra.mxu0 %v2581
      %v2693 = vpop.f32.mrf.mxu0
      %v2694 = vadd.f32 %v2569, %v2693
      %2695 = vmatmul.f32.gmra.mxu0 %v2584
      %v2696 = vpop.f32.mrf.mxu0
      %v2697 = vadd.f32 %v2569, %v2696
      %2698 = vmatmul.f32.gmra.mxu0 %v2587
      %v2699 = vpop.f32.mrf.mxu0
      %v2700 = vadd.f32 %v2569, %v2699
      %2701 = vmatmul.f32.gmra.mxu0 %v2590
      %v2702 = vpop.f32.mrf.mxu0
      %v2703 = vadd.f32 %v2569, %v2702
      %2704 = vmatmul.f32.gmra.mxu0 %v2593
      %v2705 = vpop.f32.mrf.mxu0
      %v2706 = vadd.f32 %v2569, %v2705
      %2707 = vmatmul.f32.gmra.mxu0 %v2596
      %v2708 = vpop.f32.mrf.mxu0
      %v2709 = vadd.f32 %v2569, %v2708
      %2710 = vmatmul.f32.gmra.mxu0 %v2599
      %v2711 = vpop.f32.mrf.mxu0
      %v2712 = vadd.f32 %v2569, %v2711
      %2713 = vmatmul.f32.gmra.mxu0 %v2602
      %v2714 = vpop.f32.mrf.mxu0
      %v2715 = vadd.f32 %v2569, %v2714
      %2716 = vmatmul.f32.gmra.mxu0 %v2605
      %v2717 = vpop.f32.mrf.mxu0
      %v2718 = vadd.f32 %v2569, %v2717
      %2719 = vmatmul.f32.gmra.mxu0 %v2608
      %v2720 = vpop.f32.mrf.mxu0
      %v2721 = vadd.f32 %v2569, %v2720
      %2722 = vmatmul.f32.gmra.mxu0 %v2611
      %v2723 = vpop.f32.mrf.mxu0
      %v2724 = vadd.f32 %v2569, %v2723
      %2725 = vmatmul.f32.gmra.mxu0 %v2614
      %v2726 = vpop.f32.mrf.mxu0
      %v2727 = vadd.f32 %v2569, %v2726
      %2728 = vmatmul.f32.gmra.mxu0 %v2617
      %v2729 = vpop.f32.mrf.mxu0
      %v2730 = vadd.f32 %v2569, %v2729
      %2731 = vmatmul.f32.gmra.mxu0 %v2620
      %v2732 = vpop.f32.mrf.mxu0
      %v2733 = vadd.f32 %v2569, %v2732
      %2734 = vmatmul.f32.gmra.mxu0 %v2623
      %v2735 = vpop.f32.mrf.mxu0
      %v2736 = vadd.f32 %v2569, %v2735
      %2737 = vmatmul.f32.gmra.mxu0 %v2626
      %v2738 = vpop.f32.mrf.mxu0
      %v2739 = vadd.f32 %v2569, %v2738
      %2740 = vmatmul.f32.gmra.mxu0 %v2629
      %v2741 = vpop.f32.mrf.mxu0
      %v2742 = vadd.f32 %v2569, %v2741
      %2743 = vmatmul.f32.gmra.mxu0 %v2632
      %v2744 = vpop.f32.mrf.mxu0
      %v2745 = vadd.f32 %v2569, %v2744
      %2746 = vmatmul.f32.gmra.mxu0 %v2635
      %v2747 = vpop.f32.mrf.mxu0
      %v2748 = vadd.f32 %v2569, %v2747
      %2749 = vmatmul.f32.gmra.mxu0 %v2638
      %v2750 = vpop.f32.mrf.mxu0
      %v2751 = vadd.f32 %v2569, %v2750
      %2752 = vmatmul.f32.gmra.mxu0 %v2641
      %v2753 = vpop.f32.mrf.mxu0
      %v2754 = vadd.f32 %v2569, %v2753
      %2755 = vmatmul.f32.gmra.mxu0 %v2644
      %v2756 = vpop.f32.mrf.mxu0
      %v2757 = vadd.f32 %v2569, %v2756
      %2758 = vmatmul.f32.gmra.mxu0 %v2647
      %v2759 = vpop.f32.mrf.mxu0
      %v2760 = vadd.f32 %v2569, %v2759
      %2761 = vmatmul.f32.gmra.mxu0 %v2650
      %v2762 = vpop.f32.mrf.mxu0
      %v2763 = vadd.f32 %v2569, %v2762
      %2764 = vmatmul.f32.gmra.mxu0 %v2653
      %v2765 = vpop.f32.mrf.mxu0
      %v2766 = vadd.f32 %v2569, %v2765
      %2767 = vmatmul.f32.gmra.mxu0 %v2656
      %v2768 = vpop.f32.mrf.mxu0
      %v2769 = vadd.f32 %v2569, %v2768
      %2770 = vmatmul.f32.gmra.mxu0 %v2659
      %v2771 = vpop.f32.mrf.mxu0
      %v2772 = vadd.f32 %v2569, %v2771
      %2773 = vmatmul.f32.gmra.mxu0 %v2662
      %v2774 = vpop.f32.mrf.mxu0
      %v2775 = vadd.f32 %v2569, %v2774
      %2776 = vmatmul.f32.gmra.mxu0 %v2665
      %v2777 = vpop.f32.mrf.mxu0
      %v2778 = vadd.f32 %v2569, %v2777
      %2779 = vdwg.mxu0
      %vm2780 = vcmp.gt.f32.partialorder %v2685, 0.0
      %vm2781 = vcmp.gt.f32.partialorder %v2688, 0.0
      %vm2782 = vcmp.gt.f32.partialorder %v2691, 0.0
      %vm2783 = vcmp.gt.f32.partialorder %v2694, 0.0
      %vm2784 = vcmp.gt.f32.partialorder %v2697, 0.0
      %vm2785 = vcmp.gt.f32.partialorder %v2700, 0.0
      %vm2786 = vcmp.gt.f32.partialorder %v2703, 0.0
      %vm2787 = vcmp.gt.f32.partialorder %v2706, 0.0
      %vm2788 = vcmp.gt.f32.partialorder %v2709, 0.0
      %vm2789 = vcmp.gt.f32.partialorder %v2712, 0.0
      %vm2790 = vcmp.gt.f32.partialorder %v2715, 0.0
      %vm2791 = vcmp.gt.f32.partialorder %v2718, 0.0
      %vm2792 = vcmp.gt.f32.partialorder %v2721, 0.0
      %vm2793 = vcmp.gt.f32.partialorder %v2724, 0.0
      %vm2794 = vcmp.gt.f32.partialorder %v2727, 0.0
      %vm2795 = vcmp.gt.f32.partialorder %v2730, 0.0
      %vm2796 = vcmp.gt.f32.partialorder %v2733, 0.0
      %vm2797 = vcmp.gt.f32.partialorder %v2736, 0.0
      %vm2798 = vcmp.gt.f32.partialorder %v2739, 0.0
      %vm2799 = vcmp.gt.f32.partialorder %v2742, 0.0
      %vm2800 = vcmp.gt.f32.partialorder %v2745, 0.0
      %vm2801 = vcmp.gt.f32.partialorder %v2748, 0.0
      %vm2802 = vcmp.gt.f32.partialorder %v2751, 0.0
      %vm2803 = vcmp.gt.f32.partialorder %v2754, 0.0
      %vm2804 = vcmp.gt.f32.partialorder %v2757, 0.0
      %vm2805 = vcmp.gt.f32.partialorder %v2760, 0.0
      %vm2806 = vcmp.gt.f32.partialorder %v2763, 0.0
      %vm2807 = vcmp.gt.f32.partialorder %v2766, 0.0
      %vm2808 = vcmp.gt.f32.partialorder %v2769, 0.0
      %vm2809 = vcmp.gt.f32.partialorder %v2772, 0.0
      %vm2810 = vcmp.gt.f32.partialorder %v2775, 0.0
      %vm2811 = vcmp.gt.f32.partialorder %v2778, 0.0
      %v2812 = vmul.f32 %v2685, 0.2
      %v2813 = vmul.f32 %v2688, 0.2
      %v2814 = vmul.f32 %v2691, 0.2
      %v2815 = vmul.f32 %v2694, 0.2
      %v2816 = vmul.f32 %v2697, 0.2
      %v2817 = vmul.f32 %v2700, 0.2
      %v2818 = vmul.f32 %v2703, 0.2
      %v2819 = vmul.f32 %v2706, 0.2
      %v2820 = vmul.f32 %v2709, 0.2
      %v2821 = vmul.f32 %v2712, 0.2
      %v2822 = vmul.f32 %v2715, 0.2
      %v2823 = vmul.f32 %v2718, 0.2
      %v2824 = vmul.f32 %v2721, 0.2
      %v2825 = vmul.f32 %v2724, 0.2
      %v2826 = vmul.f32 %v2727, 0.2
      %v2827 = vmul.f32 %v2730, 0.2
      %v2828 = vmul.f32 %v2733, 0.2
      %v2829 = vmul.f32 %v2736, 0.2
      %v2830 = vmul.f32 %v2739, 0.2
      %v2831 = vmul.f32 %v2742, 0.2
      %v2832 = vmul.f32 %v2745, 0.2
      %v2833 = vmul.f32 %v2748, 0.2
      %v2834 = vmul.f32 %v2751, 0.2
      %v2835 = vmul.f32 %v2754, 0.2
      %v2836 = vmul.f32 %v2757, 0.2
      %v2837 = vmul.f32 %v2760, 0.2
      %v2838 = vmul.f32 %v2763, 0.2
      %v2839 = vmul.f32 %v2766, 0.2
      %v2840 = vmul.f32 %v2769, 0.2
      %v2841 = vmul.f32 %v2772, 0.2
      %v2842 = vmul.f32 %v2775, 0.2
      %v2843 = vmul.f32 %v2778, 0.2
      %v2844 = vsel %vm2780, %v2685, %v2812
      %v2845 = vsel %vm2781, %v2688, %v2813
      %v2846 = vsel %vm2782, %v2691, %v2814
      %v2847 = vsel %vm2783, %v2694, %v2815
      %v2848 = vsel %vm2784, %v2697, %v2816
      %v2849 = vsel %vm2785, %v2700, %v2817
      %v2850 = vsel %vm2786, %v2703, %v2818
      %v2851 = vsel %vm2787, %v2706, %v2819
      %v2852 = vsel %vm2788, %v2709, %v2820
      %v2853 = vsel %vm2789, %v2712, %v2821
      %v2854 = vsel %vm2790, %v2715, %v2822
      %v2855 = vsel %vm2791, %v2718, %v2823
      %v2856 = vsel %vm2792, %v2721, %v2824
      %v2857 = vsel %vm2793, %v2724, %v2825
      %v2858 = vsel %vm2794, %v2727, %v2826
      %v2859 = vsel %vm2795, %v2730, %v2827
      %v2860 = vsel %vm2796, %v2733, %v2828
      %v2861 = vsel %vm2797, %v2736, %v2829
      %v2862 = vsel %vm2798, %v2739, %v2830
      %v2863 = vsel %vm2799, %v2742, %v2831
      %v2864 = vsel %vm2800, %v2745, %v2832
      %v2865 = vsel %vm2801, %v2748, %v2833
      %v2866 = vsel %vm2802, %v2751, %v2834
      %v2867 = vsel %vm2803, %v2754, %v2835
      %v2868 = vsel %vm2804, %v2757, %v2836
      %v2869 = vsel %vm2805, %v2760, %v2837
      %v2870 = vsel %vm2806, %v2763, %v2838
      %v2871 = vsel %vm2807, %v2766, %v2839
      %v2872 = vsel %vm2808, %v2769, %v2840
      %v2873 = vsel %vm2809, %v2772, %v2841
      %v2874 = vsel %vm2810, %v2775, %v2842
      %v2875 = vsel %vm2811, %v2778, %v2843
      %2876 = vst.msk [vmem:[%s378 + $0x1] sm:$0xff] %vm225, %v2844
      %2877 = vst.msk [vmem:[%s378 + $0x9] sm:$0xff] %vm225, %v2845
      %2878 = vst.msk [vmem:[%s378 + $0x19] sm:$0xff] %vm225, %v2846
      %2879 = vst.msk [vmem:[%s378 + $0x21] sm:$0xff] %vm225, %v2847
      %2880 = vst.msk [vmem:[%s378 + $0x31] sm:$0xff] %vm225, %v2848
      %2881 = vst.msk [vmem:[%s378 + $0x39] sm:$0xff] %vm225, %v2849
      %2882 = vst.msk [vmem:[%s378 + $0x49] sm:$0xff] %vm225, %v2850
      %2883 = vst.msk [vmem:[%s378 + $0x51] sm:$0xff] %vm225, %v2851
      %2884 = vst.msk [vmem:[%s378 + $0x61] sm:$0xff] %vm225, %v2852
      %2885 = vst.msk [vmem:[%s378 + $0x69] sm:$0xff] %vm225, %v2853
      %2886 = vst.msk [vmem:[%s378 + $0x79] sm:$0xff] %vm225, %v2854
      %2887 = vst.msk [vmem:[%s378 + $0x81] sm:$0xff] %vm225, %v2855
      %2888 = vst.msk [vmem:[%s378 + $0x91] sm:$0xff] %vm225, %v2856
      %2889 = vst.msk [vmem:[%s378 + $0x99] sm:$0xff] %vm225, %v2857
      %2890 = vst.msk [vmem:[%s378 + $0xa9] sm:$0xff] %vm225, %v2858
      %2891 = vst.msk [vmem:[%s378 + $0xb1] sm:$0xff] %vm225, %v2859
      %2892 = vst.msk [vmem:[%s378 + $0xc1] sm:$0xff] %vm225, %v2860
      %2893 = vst.msk [vmem:[%s378 + $0xc9] sm:$0xff] %vm225, %v2861
      %2894 = vst.msk [vmem:[%s378 + $0xd9] sm:$0xff] %vm225, %v2862
      %2895 = vst.msk [vmem:[%s378 + $0xe1] sm:$0xff] %vm225, %v2863
      %2896 = vst.msk [vmem:[%s378 + $0xf1] sm:$0xff] %vm225, %v2864
      %2897 = vst.msk [vmem:[%s378 + $0xf9] sm:$0xff] %vm225, %v2865
      %2898 = vst.msk [vmem:[%s378 + $0x109] sm:$0xff] %vm225, %v2866
      %2899 = vst.msk [vmem:[%s378 + $0x111] sm:$0xff] %vm225, %v2867
      %2900 = vst.msk [vmem:[%s378 + $0x121] sm:$0xff] %vm225, %v2868
      %2901 = vst.msk [vmem:[%s378 + $0x129] sm:$0xff] %vm225, %v2869
      %2902 = vst.msk [vmem:[%s378 + $0x139] sm:$0xff] %vm225, %v2870
      %2903 = vst.msk [vmem:[%s378 + $0x141] sm:$0xff] %vm225, %v2871
      %2904 = vst.msk [vmem:[%s378 + $0x151] sm:$0xff] %vm225, %v2872
      %2905 = vst.msk [vmem:[%s378 + $0x159] sm:$0xff] %vm225, %v2873
      %2906 = vst.msk [vmem:[%s378 + $0x169] sm:$0xff] %vm225, %v2874
      %2907 = vst.msk [vmem:[%s378 + $0x171] sm:$0xff] %vm225, %v2875
      %v2908 = vld [vmem:[#allocation2] sm:$0xff]
      %v2909 = vld [vmem:[#allocation2 + $0x8] sm:$0xff]
      %v2910 = vld [vmem:[#allocation2 + $0x18] sm:$0xff]
      %v2911 = vld [vmem:[#allocation2 + $0x20] sm:$0xff]
      %v2912 = vld [vmem:[#allocation2 + $0x30] sm:$0xff]
      %v2913 = vld [vmem:[#allocation2 + $0x38] sm:$0xff]
      %v2914 = vld [vmem:[#allocation2 + $0x48] sm:$0xff]
      %v2915 = vld [vmem:[#allocation2 + $0x50] sm:$0xff]
      %v2916 = vld [vmem:[#allocation2 + $0x60] sm:$0xff]
      %v2917 = vld [vmem:[#allocation2 + $0x68] sm:$0xff]
      %v2918 = vld [vmem:[#allocation2 + $0x78] sm:$0xff]
      %v2919 = vld [vmem:[#allocation2 + $0x80] sm:$0xff]
      %v2920 = vld [vmem:[#allocation2 + $0x90] sm:$0xff]
      %v2921 = vld [vmem:[#allocation2 + $0x98] sm:$0xff]
      %v2922 = vld [vmem:[#allocation2 + $0xa8] sm:$0xff]
      %v2923 = vld [vmem:[#allocation2 + $0xb0] sm:$0xff]
      %v2924 = vld [vmem:[#allocation2 + $0xc0] sm:$0xff]
      %v2925 = vld [vmem:[#allocation2 + $0xc8] sm:$0xff]
      %v2926 = vld [vmem:[#allocation2 + $0xd8] sm:$0xff]
      %v2927 = vld [vmem:[#allocation2 + $0xe0] sm:$0xff]
      %v2928 = vld [vmem:[#allocation2 + $0xf0] sm:$0xff]
      %v2929 = vld [vmem:[#allocation2 + $0xf8] sm:$0xff]
      %v2930 = vld [vmem:[#allocation2 + $0x108] sm:$0xff]
      %v2931 = vld [vmem:[#allocation2 + $0x110] sm:$0xff]
      %v2932 = vld [vmem:[#allocation2 + $0x120] sm:$0xff]
      %v2933 = vld [vmem:[#allocation2 + $0x128] sm:$0xff]
      %v2934 = vld [vmem:[#allocation2 + $0x138] sm:$0xff]
      %v2935 = vld [vmem:[#allocation2 + $0x140] sm:$0xff]
      %v2936 = vld [vmem:[#allocation2 + $0x150] sm:$0xff]
      %v2937 = vld [vmem:[#allocation2 + $0x158] sm:$0xff]
      %v2938 = vld [vmem:[#allocation2 + $0x168] sm:$0xff]
      %v2939 = vld [vmem:[#allocation2 + $0x170] sm:$0xff]
      %2940 = vst.msk [vmem:[#allocation3] sm:$0xff] %vm225, %v2908
      %2941 = vst.msk [vmem:[#allocation3 + $0x8] sm:$0xff] %vm225, %v2909
      %2942 = vst.msk [vmem:[#allocation3 + $0x10] sm:$0xff] %vm225, %v2910
      %2943 = vst.msk [vmem:[#allocation3 + $0x18] sm:$0xff] %vm225, %v2911
      %2944 = vst.msk [vmem:[#allocation3 + $0x20] sm:$0xff] %vm225, %v2912
      %2945 = vst.msk [vmem:[#allocation3 + $0x28] sm:$0xff] %vm225, %v2913
      %2946 = vst.msk [vmem:[#allocation3 + $0x30] sm:$0xff] %vm225, %v2914
      %2947 = vst.msk [vmem:[#allocation3 + $0x38] sm:$0xff] %vm225, %v2915
      %2948 = vst.msk [vmem:[#allocation3 + $0x40] sm:$0xff] %vm225, %v2916
      %2949 = vst.msk [vmem:[#allocation3 + $0x48] sm:$0xff] %vm225, %v2917
      %2950 = vst.msk [vmem:[#allocation3 + $0x50] sm:$0xff] %vm225, %v2918
      %2951 = vst.msk [vmem:[#allocation3 + $0x58] sm:$0xff] %vm225, %v2919
      %2952 = vst.msk [vmem:[#allocation3 + $0x60] sm:$0xff] %vm225, %v2920
      %2953 = vst.msk [vmem:[#allocation3 + $0x68] sm:$0xff] %vm225, %v2921
      %2954 = vst.msk [vmem:[#allocation3 + $0x70] sm:$0xff] %vm225, %v2922
      %2955 = vst.msk [vmem:[#allocation3 + $0x78] sm:$0xff] %vm225, %v2923
      %2956 = vst.msk [vmem:[#allocation3 + $0x80] sm:$0xff] %vm225, %v2924
      %2957 = vst.msk [vmem:[#allocation3 + $0x88] sm:$0xff] %vm225, %v2925
      %2958 = vst.msk [vmem:[#allocation3 + $0x90] sm:$0xff] %vm225, %v2926
      %2959 = vst.msk [vmem:[#allocation3 + $0x98] sm:$0xff] %vm225, %v2927
      %2960 = vst.msk [vmem:[#allocation3 + $0xa0] sm:$0xff] %vm225, %v2928
      %2961 = vst.msk [vmem:[#allocation3 + $0xa8] sm:$0xff] %vm225, %v2929
      %2962 = vst.msk [vmem:[#allocation3 + $0xb0] sm:$0xff] %vm225, %v2930
      %2963 = vst.msk [vmem:[#allocation3 + $0xb8] sm:$0xff] %vm225, %v2931
      %2964 = vst.msk [vmem:[#allocation3 + $0xc0] sm:$0xff] %vm225, %v2932
      %2965 = vst.msk [vmem:[#allocation3 + $0xc8] sm:$0xff] %vm225, %v2933
      %2966 = vst.msk [vmem:[#allocation3 + $0xd0] sm:$0xff] %vm225, %v2934
      %2967 = vst.msk [vmem:[#allocation3 + $0xd8] sm:$0xff] %vm225, %v2935
      %2968 = vst.msk [vmem:[#allocation3 + $0xe0] sm:$0xff] %vm225, %v2936
      %2969 = vst.msk [vmem:[#allocation3 + $0xe8] sm:$0xff] %vm225, %v2937
      %2970 = vst.msk [vmem:[#allocation3 + $0xf0] sm:$0xff] %vm225, %v2938
      %2971 = vst.msk [vmem:[#allocation3 + $0xf8] sm:$0xff] %vm225, %v2939
      %v2972 = vld [vmem:[#allocation2 + $0x1] sm:$0xff]
      %v2973 = vld [vmem:[#allocation2 + $0x9] sm:$0xff]
      %v2974 = vld [vmem:[#allocation2 + $0x19] sm:$0xff]
      %v2975 = vld [vmem:[#allocation2 + $0x21] sm:$0xff]
      %v2976 = vld [vmem:[#allocation2 + $0x31] sm:$0xff]
      %v2977 = vld [vmem:[#allocation2 + $0x39] sm:$0xff]
      %v2978 = vld [vmem:[#allocation2 + $0x49] sm:$0xff]
      %v2979 = vld [vmem:[#allocation2 + $0x51] sm:$0xff]
      %v2980 = vld [vmem:[#allocation2 + $0x61] sm:$0xff]
      %v2981 = vld [vmem:[#allocation2 + $0x69] sm:$0xff]
      %v2982 = vld [vmem:[#allocation2 + $0x79] sm:$0xff]
      %v2983 = vld [vmem:[#allocation2 + $0x81] sm:$0xff]
      %v2984 = vld [vmem:[#allocation2 + $0x91] sm:$0xff]
      %v2985 = vld [vmem:[#allocation2 + $0x99] sm:$0xff]
      %v2986 = vld [vmem:[#allocation2 + $0xa9] sm:$0xff]
      %v2987 = vld [vmem:[#allocation2 + $0xb1] sm:$0xff]
      %v2988 = vld [vmem:[#allocation2 + $0xc1] sm:$0xff]
      %v2989 = vld [vmem:[#allocation2 + $0xc9] sm:$0xff]
      %v2990 = vld [vmem:[#allocation2 + $0xd9] sm:$0xff]
      %v2991 = vld [vmem:[#allocation2 + $0xe1] sm:$0xff]
      %v2992 = vld [vmem:[#allocation2 + $0xf1] sm:$0xff]
      %v2993 = vld [vmem:[#allocation2 + $0xf9] sm:$0xff]
      %v2994 = vld [vmem:[#allocation2 + $0x109] sm:$0xff]
      %v2995 = vld [vmem:[#allocation2 + $0x111] sm:$0xff]
      %v2996 = vld [vmem:[#allocation2 + $0x121] sm:$0xff]
      %v2997 = vld [vmem:[#allocation2 + $0x129] sm:$0xff]
      %v2998 = vld [vmem:[#allocation2 + $0x139] sm:$0xff]
      %v2999 = vld [vmem:[#allocation2 + $0x141] sm:$0xff]
      %v3000 = vld [vmem:[#allocation2 + $0x151] sm:$0xff]
      %v3001 = vld [vmem:[#allocation2 + $0x159] sm:$0xff]
      %v3002 = vld [vmem:[#allocation2 + $0x169] sm:$0xff]
      %v3003 = vld [vmem:[#allocation2 + $0x171] sm:$0xff]
      %3036 = vrot.lane.b32.xlu0 %v2972, 8
      %v3037 = vpop.permute.xlu0 %3036
      %3038 = vrot.lane.b32.xlu0 %v2973, 8
      %v3039 = vpop.permute.xlu0 %3038
      %3040 = vrot.lane.b32.xlu0 %v2974, 8
      %v3041 = vpop.permute.xlu0 %3040
      %3042 = vrot.lane.b32.xlu0 %v2975, 8
      %v3043 = vpop.permute.xlu0 %3042
      %3044 = vrot.lane.b32.xlu0 %v2976, 8
      %v3045 = vpop.permute.xlu0 %3044
      %3046 = vrot.lane.b32.xlu0 %v2977, 8
      %v3047 = vpop.permute.xlu0 %3046
      %3048 = vrot.lane.b32.xlu0 %v2978, 8
      %v3049 = vpop.permute.xlu0 %3048
      %3050 = vrot.lane.b32.xlu0 %v2979, 8
      %v3051 = vpop.permute.xlu0 %3050
      %3052 = vrot.lane.b32.xlu0 %v2980, 8
      %v3053 = vpop.permute.xlu0 %3052
      %3054 = vrot.lane.b32.xlu0 %v2981, 8
      %v3055 = vpop.permute.xlu0 %3054
      %3056 = vrot.lane.b32.xlu0 %v2982, 8
      %v3057 = vpop.permute.xlu0 %3056
      %3058 = vrot.lane.b32.xlu0 %v2983, 8
      %v3059 = vpop.permute.xlu0 %3058
      %3060 = vrot.lane.b32.xlu0 %v2984, 8
      %v3061 = vpop.permute.xlu0 %3060
      %3062 = vrot.lane.b32.xlu0 %v2985, 8
      %v3063 = vpop.permute.xlu0 %3062
      %3064 = vrot.lane.b32.xlu0 %v2986, 8
      %v3065 = vpop.permute.xlu0 %3064
      %3066 = vrot.lane.b32.xlu0 %v2987, 8
      %v3067 = vpop.permute.xlu0 %3066
      %3068 = vrot.lane.b32.xlu0 %v2988, 8
      %v3069 = vpop.permute.xlu0 %3068
      %3070 = vrot.lane.b32.xlu0 %v2989, 8
      %v3071 = vpop.permute.xlu0 %3070
      %3072 = vrot.lane.b32.xlu0 %v2990, 8
      %v3073 = vpop.permute.xlu0 %3072
      %3074 = vrot.lane.b32.xlu0 %v2991, 8
      %v3075 = vpop.permute.xlu0 %3074
      %3076 = vrot.lane.b32.xlu0 %v2992, 8
      %v3077 = vpop.permute.xlu0 %3076
      %3078 = vrot.lane.b32.xlu0 %v2993, 8
      %v3079 = vpop.permute.xlu0 %3078
      %3080 = vrot.lane.b32.xlu0 %v2994, 8
      %v3081 = vpop.permute.xlu0 %3080
      %3082 = vrot.lane.b32.xlu0 %v2995, 8
      %v3083 = vpop.permute.xlu0 %3082
      %3084 = vrot.lane.b32.xlu0 %v2996, 8
      %v3085 = vpop.permute.xlu0 %3084
      %3086 = vrot.lane.b32.xlu0 %v2997, 8
      %v3087 = vpop.permute.xlu0 %3086
      %3088 = vrot.lane.b32.xlu0 %v2998, 8
      %v3089 = vpop.permute.xlu0 %3088
      %3090 = vrot.lane.b32.xlu0 %v2999, 8
      %v3091 = vpop.permute.xlu0 %3090
      %3092 = vrot.lane.b32.xlu0 %v3000, 8
      %v3093 = vpop.permute.xlu0 %3092
      %3094 = vrot.lane.b32.xlu0 %v3001, 8
      %v3095 = vpop.permute.xlu0 %3094
      %3096 = vrot.lane.b32.xlu0 %v3002, 8
      %v3097 = vpop.permute.xlu0 %3096
      %3098 = vrot.lane.b32.xlu0 %v3003, 8
      %v3099 = vpop.permute.xlu0 %3098
      %3132 = vst.msk [vmem:[#allocation3] sm:$0xff] %vm635, %v3037
      %3133 = vst.msk [vmem:[#allocation3 + $0x8] sm:$0xff] %vm635, %v3039
      %3134 = vst.msk [vmem:[#allocation3 + $0x10] sm:$0xff] %vm635, %v3041
      %3135 = vst.msk [vmem:[#allocation3 + $0x18] sm:$0xff] %vm635, %v3043
      %3136 = vst.msk [vmem:[#allocation3 + $0x20] sm:$0xff] %vm635, %v3045
      %3137 = vst.msk [vmem:[#allocation3 + $0x28] sm:$0xff] %vm635, %v3047
      %3138 = vst.msk [vmem:[#allocation3 + $0x30] sm:$0xff] %vm635, %v3049
      %3139 = vst.msk [vmem:[#allocation3 + $0x38] sm:$0xff] %vm635, %v3051
      %3140 = vst.msk [vmem:[#allocation3 + $0x40] sm:$0xff] %vm635, %v3053
      %3141 = vst.msk [vmem:[#allocation3 + $0x48] sm:$0xff] %vm635, %v3055
      %3142 = vst.msk [vmem:[#allocation3 + $0x50] sm:$0xff] %vm635, %v3057
      %3143 = vst.msk [vmem:[#allocation3 + $0x58] sm:$0xff] %vm635, %v3059
      %3144 = vst.msk [vmem:[#allocation3 + $0x60] sm:$0xff] %vm635, %v3061
      %3145 = vst.msk [vmem:[#allocation3 + $0x68] sm:$0xff] %vm635, %v3063
      %3146 = vst.msk [vmem:[#allocation3 + $0x70] sm:$0xff] %vm635, %v3065
      %3147 = vst.msk [vmem:[#allocation3 + $0x78] sm:$0xff] %vm635, %v3067
      %3148 = vst.msk [vmem:[#allocation3 + $0x80] sm:$0xff] %vm635, %v3069
      %3149 = vst.msk [vmem:[#allocation3 + $0x88] sm:$0xff] %vm635, %v3071
      %3150 = vst.msk [vmem:[#allocation3 + $0x90] sm:$0xff] %vm635, %v3073
      %3151 = vst.msk [vmem:[#allocation3 + $0x98] sm:$0xff] %vm635, %v3075
      %3152 = vst.msk [vmem:[#allocation3 + $0xa0] sm:$0xff] %vm635, %v3077
      %3153 = vst.msk [vmem:[#allocation3 + $0xa8] sm:$0xff] %vm635, %v3079
      %3154 = vst.msk [vmem:[#allocation3 + $0xb0] sm:$0xff] %vm635, %v3081
      %3155 = vst.msk [vmem:[#allocation3 + $0xb8] sm:$0xff] %vm635, %v3083
      %3156 = vst.msk [vmem:[#allocation3 + $0xc0] sm:$0xff] %vm635, %v3085
      %3157 = vst.msk [vmem:[#allocation3 + $0xc8] sm:$0xff] %vm635, %v3087
      %3158 = vst.msk [vmem:[#allocation3 + $0xd0] sm:$0xff] %vm635, %v3089
      %3159 = vst.msk [vmem:[#allocation3 + $0xd8] sm:$0xff] %vm635, %v3091
      %3160 = vst.msk [vmem:[#allocation3 + $0xe0] sm:$0xff] %vm635, %v3093
      %3161 = vst.msk [vmem:[#allocation3 + $0xe8] sm:$0xff] %vm635, %v3095
      %3162 = vst.msk [vmem:[#allocation3 + $0xf0] sm:$0xff] %vm635, %v3097
      %3163 = vst.msk [vmem:[#allocation3 + $0xf8] sm:$0xff] %vm635, %v3099
      %v3164 = vld [vmem:[#allocation2 + $0x2] sm:$0xff]
      %v3165 = vld [vmem:[#allocation2 + $0xa] sm:$0xff]
      %v3166 = vld [vmem:[#allocation2 + $0x1a] sm:$0xff]
      %v3167 = vld [vmem:[#allocation2 + $0x22] sm:$0xff]
      %v3168 = vld [vmem:[#allocation2 + $0x32] sm:$0xff]
      %v3169 = vld [vmem:[#allocation2 + $0x3a] sm:$0xff]
      %v3170 = vld [vmem:[#allocation2 + $0x4a] sm:$0xff]
      %v3171 = vld [vmem:[#allocation2 + $0x52] sm:$0xff]
      %v3172 = vld [vmem:[#allocation2 + $0x62] sm:$0xff]
      %v3173 = vld [vmem:[#allocation2 + $0x6a] sm:$0xff]
      %v3174 = vld [vmem:[#allocation2 + $0x7a] sm:$0xff]
      %v3175 = vld [vmem:[#allocation2 + $0x82] sm:$0xff]
      %v3176 = vld [vmem:[#allocation2 + $0x92] sm:$0xff]
      %v3177 = vld [vmem:[#allocation2 + $0x9a] sm:$0xff]
      %v3178 = vld [vmem:[#allocation2 + $0xaa] sm:$0xff]
      %v3179 = vld [vmem:[#allocation2 + $0xb2] sm:$0xff]
      %v3180 = vld [vmem:[#allocation2 + $0xc2] sm:$0xff]
      %v3181 = vld [vmem:[#allocation2 + $0xca] sm:$0xff]
      %v3182 = vld [vmem:[#allocation2 + $0xda] sm:$0xff]
      %v3183 = vld [vmem:[#allocation2 + $0xe2] sm:$0xff]
      %v3184 = vld [vmem:[#allocation2 + $0xf2] sm:$0xff]
      %v3185 = vld [vmem:[#allocation2 + $0xfa] sm:$0xff]
      %v3186 = vld [vmem:[#allocation2 + $0x10a] sm:$0xff]
      %v3187 = vld [vmem:[#allocation2 + $0x112] sm:$0xff]
      %v3188 = vld [vmem:[#allocation2 + $0x122] sm:$0xff]
      %v3189 = vld [vmem:[#allocation2 + $0x12a] sm:$0xff]
      %v3190 = vld [vmem:[#allocation2 + $0x13a] sm:$0xff]
      %v3191 = vld [vmem:[#allocation2 + $0x142] sm:$0xff]
      %v3192 = vld [vmem:[#allocation2 + $0x152] sm:$0xff]
      %v3193 = vld [vmem:[#allocation2 + $0x15a] sm:$0xff]
      %v3194 = vld [vmem:[#allocation2 + $0x16a] sm:$0xff]
      %v3195 = vld [vmem:[#allocation2 + $0x172] sm:$0xff]
      %3228 = vrot.lane.b32.xlu0 %v3164, 16
      %v3229 = vpop.permute.xlu0 %3228
      %3230 = vrot.lane.b32.xlu0 %v3165, 16
      %v3231 = vpop.permute.xlu0 %3230
      %3232 = vrot.lane.b32.xlu0 %v3166, 16
      %v3233 = vpop.permute.xlu0 %3232
      %3234 = vrot.lane.b32.xlu0 %v3167, 16
      %v3235 = vpop.permute.xlu0 %3234
      %3236 = vrot.lane.b32.xlu0 %v3168, 16
      %v3237 = vpop.permute.xlu0 %3236
      %3238 = vrot.lane.b32.xlu0 %v3169, 16
      %v3239 = vpop.permute.xlu0 %3238
      %3240 = vrot.lane.b32.xlu0 %v3170, 16
      %v3241 = vpop.permute.xlu0 %3240
      %3242 = vrot.lane.b32.xlu0 %v3171, 16
      %v3243 = vpop.permute.xlu0 %3242
      %3244 = vrot.lane.b32.xlu0 %v3172, 16
      %v3245 = vpop.permute.xlu0 %3244
      %3246 = vrot.lane.b32.xlu0 %v3173, 16
      %v3247 = vpop.permute.xlu0 %3246
      %3248 = vrot.lane.b32.xlu0 %v3174, 16
      %v3249 = vpop.permute.xlu0 %3248
      %3250 = vrot.lane.b32.xlu0 %v3175, 16
      %v3251 = vpop.permute.xlu0 %3250
      %3252 = vrot.lane.b32.xlu0 %v3176, 16
      %v3253 = vpop.permute.xlu0 %3252
      %3254 = vrot.lane.b32.xlu0 %v3177, 16
      %v3255 = vpop.permute.xlu0 %3254
      %3256 = vrot.lane.b32.xlu0 %v3178, 16
      %v3257 = vpop.permute.xlu0 %3256
      %3258 = vrot.lane.b32.xlu0 %v3179, 16
      %v3259 = vpop.permute.xlu0 %3258
      %3260 = vrot.lane.b32.xlu0 %v3180, 16
      %v3261 = vpop.permute.xlu0 %3260
      %3262 = vrot.lane.b32.xlu0 %v3181, 16
      %v3263 = vpop.permute.xlu0 %3262
      %3264 = vrot.lane.b32.xlu0 %v3182, 16
      %v3265 = vpop.permute.xlu0 %3264
      %3266 = vrot.lane.b32.xlu0 %v3183, 16
      %v3267 = vpop.permute.xlu0 %3266
      %3268 = vrot.lane.b32.xlu0 %v3184, 16
      %v3269 = vpop.permute.xlu0 %3268
      %3270 = vrot.lane.b32.xlu0 %v3185, 16
      %v3271 = vpop.permute.xlu0 %3270
      %3272 = vrot.lane.b32.xlu0 %v3186, 16
      %v3273 = vpop.permute.xlu0 %3272
      %3274 = vrot.lane.b32.xlu0 %v3187, 16
      %v3275 = vpop.permute.xlu0 %3274
      %3276 = vrot.lane.b32.xlu0 %v3188, 16
      %v3277 = vpop.permute.xlu0 %3276
      %3278 = vrot.lane.b32.xlu0 %v3189, 16
      %v3279 = vpop.permute.xlu0 %3278
      %3280 = vrot.lane.b32.xlu0 %v3190, 16
      %v3281 = vpop.permute.xlu0 %3280
      %3282 = vrot.lane.b32.xlu0 %v3191, 16
      %v3283 = vpop.permute.xlu0 %3282
      %3284 = vrot.lane.b32.xlu0 %v3192, 16
      %v3285 = vpop.permute.xlu0 %3284
      %3286 = vrot.lane.b32.xlu0 %v3193, 16
      %v3287 = vpop.permute.xlu0 %3286
      %3288 = vrot.lane.b32.xlu0 %v3194, 16
      %v3289 = vpop.permute.xlu0 %3288
      %3290 = vrot.lane.b32.xlu0 %v3195, 16
      %v3291 = vpop.permute.xlu0 %3290
      %3324 = vst.msk [vmem:[#allocation3] sm:$0xff] %vm828, %v3229
      %3325 = vst.msk [vmem:[#allocation3 + $0x8] sm:$0xff] %vm828, %v3231
      %3326 = vst.msk [vmem:[#allocation3 + $0x10] sm:$0xff] %vm828, %v3233
      %3327 = vst.msk [vmem:[#allocation3 + $0x18] sm:$0xff] %vm828, %v3235
      %3328 = vst.msk [vmem:[#allocation3 + $0x20] sm:$0xff] %vm828, %v3237
      %3329 = vst.msk [vmem:[#allocation3 + $0x28] sm:$0xff] %vm828, %v3239
      %3330 = vst.msk [vmem:[#allocation3 + $0x30] sm:$0xff] %vm828, %v3241
      %3331 = vst.msk [vmem:[#allocation3 + $0x38] sm:$0xff] %vm828, %v3243
      %3332 = vst.msk [vmem:[#allocation3 + $0x40] sm:$0xff] %vm828, %v3245
      %3333 = vst.msk [vmem:[#allocation3 + $0x48] sm:$0xff] %vm828, %v3247
      %3334 = vst.msk [vmem:[#allocation3 + $0x50] sm:$0xff] %vm828, %v3249
      %3335 = vst.msk [vmem:[#allocation3 + $0x58] sm:$0xff] %vm828, %v3251
      %3336 = vst.msk [vmem:[#allocation3 + $0x60] sm:$0xff] %vm828, %v3253
      %3337 = vst.msk [vmem:[#allocation3 + $0x68] sm:$0xff] %vm828, %v3255
      %3338 = vst.msk [vmem:[#allocation3 + $0x70] sm:$0xff] %vm828, %v3257
      %3339 = vst.msk [vmem:[#allocation3 + $0x78] sm:$0xff] %vm828, %v3259
      %3340 = vst.msk [vmem:[#allocation3 + $0x80] sm:$0xff] %vm828, %v3261
      %3341 = vst.msk [vmem:[#allocation3 + $0x88] sm:$0xff] %vm828, %v3263
      %3342 = vst.msk [vmem:[#allocation3 + $0x90] sm:$0xff] %vm828, %v3265
      %3343 = vst.msk [vmem:[#allocation3 + $0x98] sm:$0xff] %vm828, %v3267
      %3344 = vst.msk [vmem:[#allocation3 + $0xa0] sm:$0xff] %vm828, %v3269
      %3345 = vst.msk [vmem:[#allocation3 + $0xa8] sm:$0xff] %vm828, %v3271
      %3346 = vst.msk [vmem:[#allocation3 + $0xb0] sm:$0xff] %vm828, %v3273
      %3347 = vst.msk [vmem:[#allocation3 + $0xb8] sm:$0xff] %vm828, %v3275
      %3348 = vst.msk [vmem:[#allocation3 + $0xc0] sm:$0xff] %vm828, %v3277
      %3349 = vst.msk [vmem:[#allocation3 + $0xc8] sm:$0xff] %vm828, %v3279
      %3350 = vst.msk [vmem:[#allocation3 + $0xd0] sm:$0xff] %vm828, %v3281
      %3351 = vst.msk [vmem:[#allocation3 + $0xd8] sm:$0xff] %vm828, %v3283
      %3352 = vst.msk [vmem:[#allocation3 + $0xe0] sm:$0xff] %vm828, %v3285
      %3353 = vst.msk [vmem:[#allocation3 + $0xe8] sm:$0xff] %vm828, %v3287
      %3354 = vst.msk [vmem:[#allocation3 + $0xf0] sm:$0xff] %vm828, %v3289
      %3355 = vst.msk [vmem:[#allocation3 + $0xf8] sm:$0xff] %vm828, %v3291
      %v3356 = vld [vmem:[%s378] sm:$0xff]
      %v3357 = vld [vmem:[%s378 + $0x8] sm:$0xff]
      %v3358 = vld [vmem:[%s378 + $0x18] sm:$0xff]
      %v3359 = vld [vmem:[%s378 + $0x20] sm:$0xff]
      %v3360 = vld [vmem:[%s378 + $0x30] sm:$0xff]
      %v3361 = vld [vmem:[%s378 + $0x38] sm:$0xff]
      %v3362 = vld [vmem:[%s378 + $0x48] sm:$0xff]
      %v3363 = vld [vmem:[%s378 + $0x50] sm:$0xff]
      %v3364 = vld [vmem:[%s378 + $0x60] sm:$0xff]
      %v3365 = vld [vmem:[%s378 + $0x68] sm:$0xff]
      %v3366 = vld [vmem:[%s378 + $0x78] sm:$0xff]
      %v3367 = vld [vmem:[%s378 + $0x80] sm:$0xff]
      %v3368 = vld [vmem:[%s378 + $0x90] sm:$0xff]
      %v3369 = vld [vmem:[%s378 + $0x98] sm:$0xff]
      %v3370 = vld [vmem:[%s378 + $0xa8] sm:$0xff]
      %v3371 = vld [vmem:[%s378 + $0xb0] sm:$0xff]
      %v3372 = vld [vmem:[%s378 + $0xc0] sm:$0xff]
      %v3373 = vld [vmem:[%s378 + $0xc8] sm:$0xff]
      %v3374 = vld [vmem:[%s378 + $0xd8] sm:$0xff]
      %v3375 = vld [vmem:[%s378 + $0xe0] sm:$0xff]
      %v3376 = vld [vmem:[%s378 + $0xf0] sm:$0xff]
      %v3377 = vld [vmem:[%s378 + $0xf8] sm:$0xff]
      %v3378 = vld [vmem:[%s378 + $0x108] sm:$0xff]
      %v3379 = vld [vmem:[%s378 + $0x110] sm:$0xff]
      %v3380 = vld [vmem:[%s378 + $0x120] sm:$0xff]
      %v3381 = vld [vmem:[%s378 + $0x128] sm:$0xff]
      %v3382 = vld [vmem:[%s378 + $0x138] sm:$0xff]
      %v3383 = vld [vmem:[%s378 + $0x140] sm:$0xff]
      %v3384 = vld [vmem:[%s378 + $0x150] sm:$0xff]
      %v3385 = vld [vmem:[%s378 + $0x158] sm:$0xff]
      %v3386 = vld [vmem:[%s378 + $0x168] sm:$0xff]
      %v3387 = vld [vmem:[%s378 + $0x170] sm:$0xff]
      %3420 = vrot.lane.b32.xlu0 %v3356, 24
      %v3421 = vpop.permute.xlu0 %3420
      %3422 = vrot.lane.b32.xlu0 %v3357, 24
      %v3423 = vpop.permute.xlu0 %3422
      %3424 = vrot.lane.b32.xlu0 %v3358, 24
      %v3425 = vpop.permute.xlu0 %3424
      %3426 = vrot.lane.b32.xlu0 %v3359, 24
      %v3427 = vpop.permute.xlu0 %3426
      %3428 = vrot.lane.b32.xlu0 %v3360, 24
      %v3429 = vpop.permute.xlu0 %3428
      %3430 = vrot.lane.b32.xlu0 %v3361, 24
      %v3431 = vpop.permute.xlu0 %3430
      %3432 = vrot.lane.b32.xlu0 %v3362, 24
      %v3433 = vpop.permute.xlu0 %3432
      %3434 = vrot.lane.b32.xlu0 %v3363, 24
      %v3435 = vpop.permute.xlu0 %3434
      %3436 = vrot.lane.b32.xlu0 %v3364, 24
      %v3437 = vpop.permute.xlu0 %3436
      %3438 = vrot.lane.b32.xlu0 %v3365, 24
      %v3439 = vpop.permute.xlu0 %3438
      %3440 = vrot.lane.b32.xlu0 %v3366, 24
      %v3441 = vpop.permute.xlu0 %3440
      %3442 = vrot.lane.b32.xlu0 %v3367, 24
      %v3443 = vpop.permute.xlu0 %3442
      %3444 = vrot.lane.b32.xlu0 %v3368, 24
      %v3445 = vpop.permute.xlu0 %3444
      %3446 = vrot.lane.b32.xlu0 %v3369, 24
      %v3447 = vpop.permute.xlu0 %3446
      %3448 = vrot.lane.b32.xlu0 %v3370, 24
      %v3449 = vpop.permute.xlu0 %3448
      %3450 = vrot.lane.b32.xlu0 %v3371, 24
      %v3451 = vpop.permute.xlu0 %3450
      %3452 = vrot.lane.b32.xlu0 %v3372, 24
      %v3453 = vpop.permute.xlu0 %3452
      %3454 = vrot.lane.b32.xlu0 %v3373, 24
      %v3455 = vpop.permute.xlu0 %3454
      %3456 = vrot.lane.b32.xlu0 %v3374, 24
      %v3457 = vpop.permute.xlu0 %3456
      %3458 = vrot.lane.b32.xlu0 %v3375, 24
      %v3459 = vpop.permute.xlu0 %3458
      %3460 = vrot.lane.b32.xlu0 %v3376, 24
      %v3461 = vpop.permute.xlu0 %3460
      %3462 = vrot.lane.b32.xlu0 %v3377, 24
      %v3463 = vpop.permute.xlu0 %3462
      %3464 = vrot.lane.b32.xlu0 %v3378, 24
      %v3465 = vpop.permute.xlu0 %3464
      %3466 = vrot.lane.b32.xlu0 %v3379, 24
      %v3467 = vpop.permute.xlu0 %3466
      %3468 = vrot.lane.b32.xlu0 %v3380, 24
      %v3469 = vpop.permute.xlu0 %3468
      %3470 = vrot.lane.b32.xlu0 %v3381, 24
      %v3471 = vpop.permute.xlu0 %3470
      %3472 = vrot.lane.b32.xlu0 %v3382, 24
      %v3473 = vpop.permute.xlu0 %3472
      %3474 = vrot.lane.b32.xlu0 %v3383, 24
      %v3475 = vpop.permute.xlu0 %3474
      %3476 = vrot.lane.b32.xlu0 %v3384, 24
      %v3477 = vpop.permute.xlu0 %3476
      %3478 = vrot.lane.b32.xlu0 %v3385, 24
      %v3479 = vpop.permute.xlu0 %3478
      %3480 = vrot.lane.b32.xlu0 %v3386, 24
      %v3481 = vpop.permute.xlu0 %3480
      %3482 = vrot.lane.b32.xlu0 %v3387, 24
      %v3483 = vpop.permute.xlu0 %3482
      %3516 = vst.msk [vmem:[#allocation3] sm:$0xff] %vm1021, %v3421
      %3517 = vst.msk [vmem:[#allocation3 + $0x8] sm:$0xff] %vm1021, %v3423
      %3518 = vst.msk [vmem:[#allocation3 + $0x10] sm:$0xff] %vm1021, %v3425
      %3519 = vst.msk [vmem:[#allocation3 + $0x18] sm:$0xff] %vm1021, %v3427
      %3520 = vst.msk [vmem:[#allocation3 + $0x20] sm:$0xff] %vm1021, %v3429
      %3521 = vst.msk [vmem:[#allocation3 + $0x28] sm:$0xff] %vm1021, %v3431
      %3522 = vst.msk [vmem:[#allocation3 + $0x30] sm:$0xff] %vm1021, %v3433
      %3523 = vst.msk [vmem:[#allocation3 + $0x38] sm:$0xff] %vm1021, %v3435
      %3524 = vst.msk [vmem:[#allocation3 + $0x40] sm:$0xff] %vm1021, %v3437
      %3525 = vst.msk [vmem:[#allocation3 + $0x48] sm:$0xff] %vm1021, %v3439
      %3526 = vst.msk [vmem:[#allocation3 + $0x50] sm:$0xff] %vm1021, %v3441
      %3527 = vst.msk [vmem:[#allocation3 + $0x58] sm:$0xff] %vm1021, %v3443
      %3528 = vst.msk [vmem:[#allocation3 + $0x60] sm:$0xff] %vm1021, %v3445
      %3529 = vst.msk [vmem:[#allocation3 + $0x68] sm:$0xff] %vm1021, %v3447
      %3530 = vst.msk [vmem:[#allocation3 + $0x70] sm:$0xff] %vm1021, %v3449
      %3531 = vst.msk [vmem:[#allocation3 + $0x78] sm:$0xff] %vm1021, %v3451
      %3532 = vst.msk [vmem:[#allocation3 + $0x80] sm:$0xff] %vm1021, %v3453
      %3533 = vst.msk [vmem:[#allocation3 + $0x88] sm:$0xff] %vm1021, %v3455
      %3534 = vst.msk [vmem:[#allocation3 + $0x90] sm:$0xff] %vm1021, %v3457
      %3535 = vst.msk [vmem:[#allocation3 + $0x98] sm:$0xff] %vm1021, %v3459
      %3536 = vst.msk [vmem:[#allocation3 + $0xa0] sm:$0xff] %vm1021, %v3461
      %3537 = vst.msk [vmem:[#allocation3 + $0xa8] sm:$0xff] %vm1021, %v3463
      %3538 = vst.msk [vmem:[#allocation3 + $0xb0] sm:$0xff] %vm1021, %v3465
      %3539 = vst.msk [vmem:[#allocation3 + $0xb8] sm:$0xff] %vm1021, %v3467
      %3540 = vst.msk [vmem:[#allocation3 + $0xc0] sm:$0xff] %vm1021, %v3469
      %3541 = vst.msk [vmem:[#allocation3 + $0xc8] sm:$0xff] %vm1021, %v3471
      %3542 = vst.msk [vmem:[#allocation3 + $0xd0] sm:$0xff] %vm1021, %v3473
      %3543 = vst.msk [vmem:[#allocation3 + $0xd8] sm:$0xff] %vm1021, %v3475
      %3544 = vst.msk [vmem:[#allocation3 + $0xe0] sm:$0xff] %vm1021, %v3477
      %3545 = vst.msk [vmem:[#allocation3 + $0xe8] sm:$0xff] %vm1021, %v3479
      %3546 = vst.msk [vmem:[#allocation3 + $0xf0] sm:$0xff] %vm1021, %v3481
      %3547 = vst.msk [vmem:[#allocation3 + $0xf8] sm:$0xff] %vm1021, %v3483
      %v3548 = vld [vmem:[%s378 + $0x1] sm:$0xff]
      %v3549 = vld [vmem:[%s378 + $0x9] sm:$0xff]
      %v3550 = vld [vmem:[%s378 + $0x19] sm:$0xff]
      %v3551 = vld [vmem:[%s378 + $0x21] sm:$0xff]
      %v3552 = vld [vmem:[%s378 + $0x31] sm:$0xff]
      %v3553 = vld [vmem:[%s378 + $0x39] sm:$0xff]
      %v3554 = vld [vmem:[%s378 + $0x49] sm:$0xff]
      %v3555 = vld [vmem:[%s378 + $0x51] sm:$0xff]
      %v3556 = vld [vmem:[%s378 + $0x61] sm:$0xff]
      %v3557 = vld [vmem:[%s378 + $0x69] sm:$0xff]
      %v3558 = vld [vmem:[%s378 + $0x79] sm:$0xff]
      %v3559 = vld [vmem:[%s378 + $0x81] sm:$0xff]
      %v3560 = vld [vmem:[%s378 + $0x91] sm:$0xff]
      %v3561 = vld [vmem:[%s378 + $0x99] sm:$0xff]
      %v3562 = vld [vmem:[%s378 + $0xa9] sm:$0xff]
      %v3563 = vld [vmem:[%s378 + $0xb1] sm:$0xff]
      %v3564 = vld [vmem:[%s378 + $0xc1] sm:$0xff]
      %v3565 = vld [vmem:[%s378 + $0xc9] sm:$0xff]
      %v3566 = vld [vmem:[%s378 + $0xd9] sm:$0xff]
      %v3567 = vld [vmem:[%s378 + $0xe1] sm:$0xff]
      %v3568 = vld [vmem:[%s378 + $0xf1] sm:$0xff]
      %v3569 = vld [vmem:[%s378 + $0xf9] sm:$0xff]
      %v3570 = vld [vmem:[%s378 + $0x109] sm:$0xff]
      %v3571 = vld [vmem:[%s378 + $0x111] sm:$0xff]
      %v3572 = vld [vmem:[%s378 + $0x121] sm:$0xff]
      %v3573 = vld [vmem:[%s378 + $0x129] sm:$0xff]
      %v3574 = vld [vmem:[%s378 + $0x139] sm:$0xff]
      %v3575 = vld [vmem:[%s378 + $0x141] sm:$0xff]
      %v3576 = vld [vmem:[%s378 + $0x151] sm:$0xff]
      %v3577 = vld [vmem:[%s378 + $0x159] sm:$0xff]
      %v3578 = vld [vmem:[%s378 + $0x169] sm:$0xff]
      %v3579 = vld [vmem:[%s378 + $0x171] sm:$0xff]
      %3612 = vrot.lane.b32.xlu0 %v3548, 32
      %v3613 = vpop.permute.xlu0 %3612
      %3614 = vrot.lane.b32.xlu0 %v3549, 32
      %v3615 = vpop.permute.xlu0 %3614
      %3616 = vrot.lane.b32.xlu0 %v3550, 32
      %v3617 = vpop.permute.xlu0 %3616
      %3618 = vrot.lane.b32.xlu0 %v3551, 32
      %v3619 = vpop.permute.xlu0 %3618
      %3620 = vrot.lane.b32.xlu0 %v3552, 32
      %v3621 = vpop.permute.xlu0 %3620
      %3622 = vrot.lane.b32.xlu0 %v3553, 32
      %v3623 = vpop.permute.xlu0 %3622
      %3624 = vrot.lane.b32.xlu0 %v3554, 32
      %v3625 = vpop.permute.xlu0 %3624
      %3626 = vrot.lane.b32.xlu0 %v3555, 32
      %v3627 = vpop.permute.xlu0 %3626
      %3628 = vrot.lane.b32.xlu0 %v3556, 32
      %v3629 = vpop.permute.xlu0 %3628
      %3630 = vrot.lane.b32.xlu0 %v3557, 32
      %v3631 = vpop.permute.xlu0 %3630
      %3632 = vrot.lane.b32.xlu0 %v3558, 32
      %v3633 = vpop.permute.xlu0 %3632
      %3634 = vrot.lane.b32.xlu0 %v3559, 32
      %v3635 = vpop.permute.xlu0 %3634
      %3636 = vrot.lane.b32.xlu0 %v3560, 32
      %v3637 = vpop.permute.xlu0 %3636
      %3638 = vrot.lane.b32.xlu0 %v3561, 32
      %v3639 = vpop.permute.xlu0 %3638
      %3640 = vrot.lane.b32.xlu0 %v3562, 32
      %v3641 = vpop.permute.xlu0 %3640
      %3642 = vrot.lane.b32.xlu0 %v3563, 32
      %v3643 = vpop.permute.xlu0 %3642
      %3644 = vrot.lane.b32.xlu0 %v3564, 32
      %v3645 = vpop.permute.xlu0 %3644
      %3646 = vrot.lane.b32.xlu0 %v3565, 32
      %v3647 = vpop.permute.xlu0 %3646
      %3648 = vrot.lane.b32.xlu0 %v3566, 32
      %v3649 = vpop.permute.xlu0 %3648
      %3650 = vrot.lane.b32.xlu0 %v3567, 32
      %v3651 = vpop.permute.xlu0 %3650
      %3652 = vrot.lane.b32.xlu0 %v3568, 32
      %v3653 = vpop.permute.xlu0 %3652
      %3654 = vrot.lane.b32.xlu0 %v3569, 32
      %v3655 = vpop.permute.xlu0 %3654
      %3656 = vrot.lane.b32.xlu0 %v3570, 32
      %v3657 = vpop.permute.xlu0 %3656
      %3658 = vrot.lane.b32.xlu0 %v3571, 32
      %v3659 = vpop.permute.xlu0 %3658
      %3660 = vrot.lane.b32.xlu0 %v3572, 32
      %v3661 = vpop.permute.xlu0 %3660
      %3662 = vrot.lane.b32.xlu0 %v3573, 32
      %v3663 = vpop.permute.xlu0 %3662
      %3664 = vrot.lane.b32.xlu0 %v3574, 32
      %v3665 = vpop.permute.xlu0 %3664
      %3666 = vrot.lane.b32.xlu0 %v3575, 32
      %v3667 = vpop.permute.xlu0 %3666
      %3668 = vrot.lane.b32.xlu0 %v3576, 32
      %v3669 = vpop.permute.xlu0 %3668
      %3670 = vrot.lane.b32.xlu0 %v3577, 32
      %v3671 = vpop.permute.xlu0 %3670
      %3672 = vrot.lane.b32.xlu0 %v3578, 32
      %v3673 = vpop.permute.xlu0 %3672
      %3674 = vrot.lane.b32.xlu0 %v3579, 32
      %v3675 = vpop.permute.xlu0 %3674
      %3708 = vst.msk [vmem:[#allocation3] sm:$0xff] %vm1214, %v3613
      %3709 = vst.msk [vmem:[#allocation3 + $0x8] sm:$0xff] %vm1214, %v3615
      %3710 = vst.msk [vmem:[#allocation3 + $0x10] sm:$0xff] %vm1214, %v3617
      %3711 = vst.msk [vmem:[#allocation3 + $0x18] sm:$0xff] %vm1214, %v3619
      %3712 = vst.msk [vmem:[#allocation3 + $0x20] sm:$0xff] %vm1214, %v3621
      %3713 = vst.msk [vmem:[#allocation3 + $0x28] sm:$0xff] %vm1214, %v3623
      %3714 = vst.msk [vmem:[#allocation3 + $0x30] sm:$0xff] %vm1214, %v3625
      %3715 = vst.msk [vmem:[#allocation3 + $0x38] sm:$0xff] %vm1214, %v3627
      %3716 = vst.msk [vmem:[#allocation3 + $0x40] sm:$0xff] %vm1214, %v3629
      %3717 = vst.msk [vmem:[#allocation3 + $0x48] sm:$0xff] %vm1214, %v3631
      %3718 = vst.msk [vmem:[#allocation3 + $0x50] sm:$0xff] %vm1214, %v3633
      %3719 = vst.msk [vmem:[#allocation3 + $0x58] sm:$0xff] %vm1214, %v3635
      %3720 = vst.msk [vmem:[#allocation3 + $0x60] sm:$0xff] %vm1214, %v3637
      %3721 = vst.msk [vmem:[#allocation3 + $0x68] sm:$0xff] %vm1214, %v3639
      %3722 = vst.msk [vmem:[#allocation3 + $0x70] sm:$0xff] %vm1214, %v3641
      %3723 = vst.msk [vmem:[#allocation3 + $0x78] sm:$0xff] %vm1214, %v3643
      %3724 = vst.msk [vmem:[#allocation3 + $0x80] sm:$0xff] %vm1214, %v3645
      %3725 = vst.msk [vmem:[#allocation3 + $0x88] sm:$0xff] %vm1214, %v3647
      %3726 = vst.msk [vmem:[#allocation3 + $0x90] sm:$0xff] %vm1214, %v3649
      %3727 = vst.msk [vmem:[#allocation3 + $0x98] sm:$0xff] %vm1214, %v3651
      %3728 = vst.msk [vmem:[#allocation3 + $0xa0] sm:$0xff] %vm1214, %v3653
      %3729 = vst.msk [vmem:[#allocation3 + $0xa8] sm:$0xff] %vm1214, %v3655
      %3730 = vst.msk [vmem:[#allocation3 + $0xb0] sm:$0xff] %vm1214, %v3657
      %3731 = vst.msk [vmem:[#allocation3 + $0xb8] sm:$0xff] %vm1214, %v3659
      %3732 = vst.msk [vmem:[#allocation3 + $0xc0] sm:$0xff] %vm1214, %v3661
      %3733 = vst.msk [vmem:[#allocation3 + $0xc8] sm:$0xff] %vm1214, %v3663
      %3734 = vst.msk [vmem:[#allocation3 + $0xd0] sm:$0xff] %vm1214, %v3665
      %3735 = vst.msk [vmem:[#allocation3 + $0xd8] sm:$0xff] %vm1214, %v3667
      %3736 = vst.msk [vmem:[#allocation3 + $0xe0] sm:$0xff] %vm1214, %v3669
      %3737 = vst.msk [vmem:[#allocation3 + $0xe8] sm:$0xff] %vm1214, %v3671
      %3738 = vst.msk [vmem:[#allocation3 + $0xf0] sm:$0xff] %vm1214, %v3673
      %3739 = vst.msk [vmem:[#allocation3 + $0xf8] sm:$0xff] %vm1214, %v3675
      %v3740 = vld [vmem:[%s378 + $0x2] sm:$0xff]
      %v3741 = vld [vmem:[%s378 + $0xa] sm:$0xff]
      %v3742 = vld [vmem:[%s378 + $0x1a] sm:$0xff]
      %v3743 = vld [vmem:[%s378 + $0x22] sm:$0xff]
      %v3744 = vld [vmem:[%s378 + $0x32] sm:$0xff]
      %v3745 = vld [vmem:[%s378 + $0x3a] sm:$0xff]
      %v3746 = vld [vmem:[%s378 + $0x4a] sm:$0xff]
      %v3747 = vld [vmem:[%s378 + $0x52] sm:$0xff]
      %v3748 = vld [vmem:[%s378 + $0x62] sm:$0xff]
      %v3749 = vld [vmem:[%s378 + $0x6a] sm:$0xff]
      %v3750 = vld [vmem:[%s378 + $0x7a] sm:$0xff]
      %v3751 = vld [vmem:[%s378 + $0x82] sm:$0xff]
      %v3752 = vld [vmem:[%s378 + $0x92] sm:$0xff]
      %v3753 = vld [vmem:[%s378 + $0x9a] sm:$0xff]
      %v3754 = vld [vmem:[%s378 + $0xaa] sm:$0xff]
      %v3755 = vld [vmem:[%s378 + $0xb2] sm:$0xff]
      %v3756 = vld [vmem:[%s378 + $0xc2] sm:$0xff]
      %v3757 = vld [vmem:[%s378 + $0xca] sm:$0xff]
      %v3758 = vld [vmem:[%s378 + $0xda] sm:$0xff]
      %v3759 = vld [vmem:[%s378 + $0xe2] sm:$0xff]
      %v3760 = vld [vmem:[%s378 + $0xf2] sm:$0xff]
      %v3761 = vld [vmem:[%s378 + $0xfa] sm:$0xff]
      %v3762 = vld [vmem:[%s378 + $0x10a] sm:$0xff]
      %v3763 = vld [vmem:[%s378 + $0x112] sm:$0xff]
      %v3764 = vld [vmem:[%s378 + $0x122] sm:$0xff]
      %v3765 = vld [vmem:[%s378 + $0x12a] sm:$0xff]
      %v3766 = vld [vmem:[%s378 + $0x13a] sm:$0xff]
      %v3767 = vld [vmem:[%s378 + $0x142] sm:$0xff]
      %v3768 = vld [vmem:[%s378 + $0x152] sm:$0xff]
      %v3769 = vld [vmem:[%s378 + $0x15a] sm:$0xff]
      %v3770 = vld [vmem:[%s378 + $0x16a] sm:$0xff]
      %v3771 = vld [vmem:[%s378 + $0x172] sm:$0xff]
      %3804 = vrot.lane.b32.xlu0 %v3740, 40
      %v3805 = vpop.permute.xlu0 %3804
      %3806 = vrot.lane.b32.xlu0 %v3741, 40
      %v3807 = vpop.permute.xlu0 %3806
      %3808 = vrot.lane.b32.xlu0 %v3742, 40
      %v3809 = vpop.permute.xlu0 %3808
      %3810 = vrot.lane.b32.xlu0 %v3743, 40
      %v3811 = vpop.permute.xlu0 %3810
      %3812 = vrot.lane.b32.xlu0 %v3744, 40
      %v3813 = vpop.permute.xlu0 %3812
      %3814 = vrot.lane.b32.xlu0 %v3745, 40
      %v3815 = vpop.permute.xlu0 %3814
      %3816 = vrot.lane.b32.xlu0 %v3746, 40
      %v3817 = vpop.permute.xlu0 %3816
      %3818 = vrot.lane.b32.xlu0 %v3747, 40
      %v3819 = vpop.permute.xlu0 %3818
      %3820 = vrot.lane.b32.xlu0 %v3748, 40
      %v3821 = vpop.permute.xlu0 %3820
      %3822 = vrot.lane.b32.xlu0 %v3749, 40
      %v3823 = vpop.permute.xlu0 %3822
      %3824 = vrot.lane.b32.xlu0 %v3750, 40
      %v3825 = vpop.permute.xlu0 %3824
      %3826 = vrot.lane.b32.xlu0 %v3751, 40
      %v3827 = vpop.permute.xlu0 %3826
      %3828 = vrot.lane.b32.xlu0 %v3752, 40
      %v3829 = vpop.permute.xlu0 %3828
      %3830 = vrot.lane.b32.xlu0 %v3753, 40
      %v3831 = vpop.permute.xlu0 %3830
      %3832 = vrot.lane.b32.xlu0 %v3754, 40
      %v3833 = vpop.permute.xlu0 %3832
      %3834 = vrot.lane.b32.xlu0 %v3755, 40
      %v3835 = vpop.permute.xlu0 %3834
      %3836 = vrot.lane.b32.xlu0 %v3756, 40
      %v3837 = vpop.permute.xlu0 %3836
      %3838 = vrot.lane.b32.xlu0 %v3757, 40
      %v3839 = vpop.permute.xlu0 %3838
      %3840 = vrot.lane.b32.xlu0 %v3758, 40
      %v3841 = vpop.permute.xlu0 %3840
      %3842 = vrot.lane.b32.xlu0 %v3759, 40
      %v3843 = vpop.permute.xlu0 %3842
      %3844 = vrot.lane.b32.xlu0 %v3760, 40
      %v3845 = vpop.permute.xlu0 %3844
      %3846 = vrot.lane.b32.xlu0 %v3761, 40
      %v3847 = vpop.permute.xlu0 %3846
      %3848 = vrot.lane.b32.xlu0 %v3762, 40
      %v3849 = vpop.permute.xlu0 %3848
      %3850 = vrot.lane.b32.xlu0 %v3763, 40
      %v3851 = vpop.permute.xlu0 %3850
      %3852 = vrot.lane.b32.xlu0 %v3764, 40
      %v3853 = vpop.permute.xlu0 %3852
      %3854 = vrot.lane.b32.xlu0 %v3765, 40
      %v3855 = vpop.permute.xlu0 %3854
      %3856 = vrot.lane.b32.xlu0 %v3766, 40
      %v3857 = vpop.permute.xlu0 %3856
      %3858 = vrot.lane.b32.xlu0 %v3767, 40
      %v3859 = vpop.permute.xlu0 %3858
      %3860 = vrot.lane.b32.xlu0 %v3768, 40
      %v3861 = vpop.permute.xlu0 %3860
      %3862 = vrot.lane.b32.xlu0 %v3769, 40
      %v3863 = vpop.permute.xlu0 %3862
      %3864 = vrot.lane.b32.xlu0 %v3770, 40
      %v3865 = vpop.permute.xlu0 %3864
      %3866 = vrot.lane.b32.xlu0 %v3771, 40
      %v3867 = vpop.permute.xlu0 %3866
      %3900 = vst.msk [vmem:[#allocation3] sm:$0xff] %vm1407, %v3805
      %3901 = vst.msk [vmem:[#allocation3 + $0x8] sm:$0xff] %vm1407, %v3807
      %3902 = vst.msk [vmem:[#allocation3 + $0x10] sm:$0xff] %vm1407, %v3809
      %3903 = vst.msk [vmem:[#allocation3 + $0x18] sm:$0xff] %vm1407, %v3811
      %3904 = vst.msk [vmem:[#allocation3 + $0x20] sm:$0xff] %vm1407, %v3813
      %3905 = vst.msk [vmem:[#allocation3 + $0x28] sm:$0xff] %vm1407, %v3815
      %3906 = vst.msk [vmem:[#allocation3 + $0x30] sm:$0xff] %vm1407, %v3817
      %3907 = vst.msk [vmem:[#allocation3 + $0x38] sm:$0xff] %vm1407, %v3819
      %3908 = vst.msk [vmem:[#allocation3 + $0x40] sm:$0xff] %vm1407, %v3821
      %3909 = vst.msk [vmem:[#allocation3 + $0x48] sm:$0xff] %vm1407, %v3823
      %3910 = vst.msk [vmem:[#allocation3 + $0x50] sm:$0xff] %vm1407, %v3825
      %3911 = vst.msk [vmem:[#allocation3 + $0x58] sm:$0xff] %vm1407, %v3827
      %3912 = vst.msk [vmem:[#allocation3 + $0x60] sm:$0xff] %vm1407, %v3829
      %3913 = vst.msk [vmem:[#allocation3 + $0x68] sm:$0xff] %vm1407, %v3831
      %3914 = vst.msk [vmem:[#allocation3 + $0x70] sm:$0xff] %vm1407, %v3833
      %3915 = vst.msk [vmem:[#allocation3 + $0x78] sm:$0xff] %vm1407, %v3835
      %3916 = vst.msk [vmem:[#allocation3 + $0x80] sm:$0xff] %vm1407, %v3837
      %3917 = vst.msk [vmem:[#allocation3 + $0x88] sm:$0xff] %vm1407, %v3839
      %3918 = vst.msk [vmem:[#allocation3 + $0x90] sm:$0xff] %vm1407, %v3841
      %3919 = vst.msk [vmem:[#allocation3 + $0x98] sm:$0xff] %vm1407, %v3843
      %3920 = vst.msk [vmem:[#allocation3 + $0xa0] sm:$0xff] %vm1407, %v3845
      %3921 = vst.msk [vmem:[#allocation3 + $0xa8] sm:$0xff] %vm1407, %v3847
      %3922 = vst.msk [vmem:[#allocation3 + $0xb0] sm:$0xff] %vm1407, %v3849
      %3923 = vst.msk [vmem:[#allocation3 + $0xb8] sm:$0xff] %vm1407, %v3851
      %3924 = vst.msk [vmem:[#allocation3 + $0xc0] sm:$0xff] %vm1407, %v3853
      %3925 = vst.msk [vmem:[#allocation3 + $0xc8] sm:$0xff] %vm1407, %v3855
      %3926 = vst.msk [vmem:[#allocation3 + $0xd0] sm:$0xff] %vm1407, %v3857
      %3927 = vst.msk [vmem:[#allocation3 + $0xd8] sm:$0xff] %vm1407, %v3859
      %3928 = vst.msk [vmem:[#allocation3 + $0xe0] sm:$0xff] %vm1407, %v3861
      %3929 = vst.msk [vmem:[#allocation3 + $0xe8] sm:$0xff] %vm1407, %v3863
      %3930 = vst.msk [vmem:[#allocation3 + $0xf0] sm:$0xff] %vm1407, %v3865
      %3931 = vst.msk [vmem:[#allocation3 + $0xf8] sm:$0xff] %vm1407, %v3867
      %v3932 = vld [vmem:[%s1440] sm:$0xff]
      %v3933 = vld [vmem:[%s1440 + $0x8] sm:$0xff]
      %v3934 = vld [vmem:[%s1440 + $0x18] sm:$0xff]
      %v3935 = vld [vmem:[%s1440 + $0x20] sm:$0xff]
      %v3936 = vld [vmem:[%s1440 + $0x30] sm:$0xff]
      %v3937 = vld [vmem:[%s1440 + $0x38] sm:$0xff]
      %v3938 = vld [vmem:[%s1440 + $0x48] sm:$0xff]
      %v3939 = vld [vmem:[%s1440 + $0x50] sm:$0xff]
      %v3940 = vld [vmem:[%s1440 + $0x60] sm:$0xff]
      %v3941 = vld [vmem:[%s1440 + $0x68] sm:$0xff]
      %v3942 = vld [vmem:[%s1440 + $0x78] sm:$0xff]
      %v3943 = vld [vmem:[%s1440 + $0x80] sm:$0xff]
      %v3944 = vld [vmem:[%s1440 + $0x90] sm:$0xff]
      %v3945 = vld [vmem:[%s1440 + $0x98] sm:$0xff]
      %v3946 = vld [vmem:[%s1440 + $0xa8] sm:$0xff]
      %v3947 = vld [vmem:[%s1440 + $0xb0] sm:$0xff]
      %v3948 = vld [vmem:[%s1440 + $0xc0] sm:$0xff]
      %v3949 = vld [vmem:[%s1440 + $0xc8] sm:$0xff]
      %v3950 = vld [vmem:[%s1440 + $0xd8] sm:$0xff]
      %v3951 = vld [vmem:[%s1440 + $0xe0] sm:$0xff]
      %v3952 = vld [vmem:[%s1440 + $0xf0] sm:$0xff]
      %v3953 = vld [vmem:[%s1440 + $0xf8] sm:$0xff]
      %v3954 = vld [vmem:[%s1440 + $0x108] sm:$0xff]
      %v3955 = vld [vmem:[%s1440 + $0x110] sm:$0xff]
      %v3956 = vld [vmem:[%s1440 + $0x120] sm:$0xff]
      %v3957 = vld [vmem:[%s1440 + $0x128] sm:$0xff]
      %v3958 = vld [vmem:[%s1440 + $0x138] sm:$0xff]
      %v3959 = vld [vmem:[%s1440 + $0x140] sm:$0xff]
      %v3960 = vld [vmem:[%s1440 + $0x150] sm:$0xff]
      %v3961 = vld [vmem:[%s1440 + $0x158] sm:$0xff]
      %v3962 = vld [vmem:[%s1440 + $0x168] sm:$0xff]
      %v3963 = vld [vmem:[%s1440 + $0x170] sm:$0xff]
      %3996 = vrot.lane.b32.xlu0 %v3932, 48
      %v3997 = vpop.permute.xlu0 %3996
      %3998 = vrot.lane.b32.xlu0 %v3933, 48
      %v3999 = vpop.permute.xlu0 %3998
      %4000 = vrot.lane.b32.xlu0 %v3934, 48
      %v4001 = vpop.permute.xlu0 %4000
      %4002 = vrot.lane.b32.xlu0 %v3935, 48
      %v4003 = vpop.permute.xlu0 %4002
      %4004 = vrot.lane.b32.xlu0 %v3936, 48
      %v4005 = vpop.permute.xlu0 %4004
      %4006 = vrot.lane.b32.xlu0 %v3937, 48
      %v4007 = vpop.permute.xlu0 %4006
      %4008 = vrot.lane.b32.xlu0 %v3938, 48
      %v4009 = vpop.permute.xlu0 %4008
      %4010 = vrot.lane.b32.xlu0 %v3939, 48
      %v4011 = vpop.permute.xlu0 %4010
      %4012 = vrot.lane.b32.xlu0 %v3940, 48
      %v4013 = vpop.permute.xlu0 %4012
      %4014 = vrot.lane.b32.xlu0 %v3941, 48
      %v4015 = vpop.permute.xlu0 %4014
      %4016 = vrot.lane.b32.xlu0 %v3942, 48
      %v4017 = vpop.permute.xlu0 %4016
      %4018 = vrot.lane.b32.xlu0 %v3943, 48
      %v4019 = vpop.permute.xlu0 %4018
      %4020 = vrot.lane.b32.xlu0 %v3944, 48
      %v4021 = vpop.permute.xlu0 %4020
      %4022 = vrot.lane.b32.xlu0 %v3945, 48
      %v4023 = vpop.permute.xlu0 %4022
      %4024 = vrot.lane.b32.xlu0 %v3946, 48
      %v4025 = vpop.permute.xlu0 %4024
      %4026 = vrot.lane.b32.xlu0 %v3947, 48
      %v4027 = vpop.permute.xlu0 %4026
      %4028 = vrot.lane.b32.xlu0 %v3948, 48
      %v4029 = vpop.permute.xlu0 %4028
      %4030 = vrot.lane.b32.xlu0 %v3949, 48
      %v4031 = vpop.permute.xlu0 %4030
      %4032 = vrot.lane.b32.xlu0 %v3950, 48
      %v4033 = vpop.permute.xlu0 %4032
      %4034 = vrot.lane.b32.xlu0 %v3951, 48
      %v4035 = vpop.permute.xlu0 %4034
      %4036 = vrot.lane.b32.xlu0 %v3952, 48
      %v4037 = vpop.permute.xlu0 %4036
      %4038 = vrot.lane.b32.xlu0 %v3953, 48
      %v4039 = vpop.permute.xlu0 %4038
      %4040 = vrot.lane.b32.xlu0 %v3954, 48
      %v4041 = vpop.permute.xlu0 %4040
      %4042 = vrot.lane.b32.xlu0 %v3955, 48
      %v4043 = vpop.permute.xlu0 %4042
      %4044 = vrot.lane.b32.xlu0 %v3956, 48
      %v4045 = vpop.permute.xlu0 %4044
      %4046 = vrot.lane.b32.xlu0 %v3957, 48
      %v4047 = vpop.permute.xlu0 %4046
      %4048 = vrot.lane.b32.xlu0 %v3958, 48
      %v4049 = vpop.permute.xlu0 %4048
      %4050 = vrot.lane.b32.xlu0 %v3959, 48
      %v4051 = vpop.permute.xlu0 %4050
      %4052 = vrot.lane.b32.xlu0 %v3960, 48
      %v4053 = vpop.permute.xlu0 %4052
      %4054 = vrot.lane.b32.xlu0 %v3961, 48
      %v4055 = vpop.permute.xlu0 %4054
      %4056 = vrot.lane.b32.xlu0 %v3962, 48
      %v4057 = vpop.permute.xlu0 %4056
      %4058 = vrot.lane.b32.xlu0 %v3963, 48
      %v4059 = vpop.permute.xlu0 %4058
      %4092 = vst.msk [vmem:[#allocation3] sm:$0xff] %vm1601, %v3997
      %4093 = vst.msk [vmem:[#allocation3 + $0x8] sm:$0xff] %vm1601, %v3999
      %4094 = vst.msk [vmem:[#allocation3 + $0x10] sm:$0xff] %vm1601, %v4001
      %4095 = vst.msk [vmem:[#allocation3 + $0x18] sm:$0xff] %vm1601, %v4003
      %4096 = vst.msk [vmem:[#allocation3 + $0x20] sm:$0xff] %vm1601, %v4005
      %4097 = vst.msk [vmem:[#allocation3 + $0x28] sm:$0xff] %vm1601, %v4007
      %4098 = vst.msk [vmem:[#allocation3 + $0x30] sm:$0xff] %vm1601, %v4009
      %4099 = vst.msk [vmem:[#allocation3 + $0x38] sm:$0xff] %vm1601, %v4011
      %4100 = vst.msk [vmem:[#allocation3 + $0x40] sm:$0xff] %vm1601, %v4013
      %4101 = vst.msk [vmem:[#allocation3 + $0x48] sm:$0xff] %vm1601, %v4015
      %4102 = vst.msk [vmem:[#allocation3 + $0x50] sm:$0xff] %vm1601, %v4017
      %4103 = vst.msk [vmem:[#allocation3 + $0x58] sm:$0xff] %vm1601, %v4019
      %4104 = vst.msk [vmem:[#allocation3 + $0x60] sm:$0xff] %vm1601, %v4021
      %4105 = vst.msk [vmem:[#allocation3 + $0x68] sm:$0xff] %vm1601, %v4023
      %4106 = vst.msk [vmem:[#allocation3 + $0x70] sm:$0xff] %vm1601, %v4025
      %4107 = vst.msk [vmem:[#allocation3 + $0x78] sm:$0xff] %vm1601, %v4027
      %4108 = vst.msk [vmem:[#allocation3 + $0x80] sm:$0xff] %vm1601, %v4029
      %4109 = vst.msk [vmem:[#allocation3 + $0x88] sm:$0xff] %vm1601, %v4031
      %4110 = vst.msk [vmem:[#allocation3 + $0x90] sm:$0xff] %vm1601, %v4033
      %4111 = vst.msk [vmem:[#allocation3 + $0x98] sm:$0xff] %vm1601, %v4035
      %4112 = vst.msk [vmem:[#allocation3 + $0xa0] sm:$0xff] %vm1601, %v4037
      %4113 = vst.msk [vmem:[#allocation3 + $0xa8] sm:$0xff] %vm1601, %v4039
      %4114 = vst.msk [vmem:[#allocation3 + $0xb0] sm:$0xff] %vm1601, %v4041
      %4115 = vst.msk [vmem:[#allocation3 + $0xb8] sm:$0xff] %vm1601, %v4043
      %4116 = vst.msk [vmem:[#allocation3 + $0xc0] sm:$0xff] %vm1601, %v4045
      %4117 = vst.msk [vmem:[#allocation3 + $0xc8] sm:$0xff] %vm1601, %v4047
      %4118 = vst.msk [vmem:[#allocation3 + $0xd0] sm:$0xff] %vm1601, %v4049
      %4119 = vst.msk [vmem:[#allocation3 + $0xd8] sm:$0xff] %vm1601, %v4051
      %4120 = vst.msk [vmem:[#allocation3 + $0xe0] sm:$0xff] %vm1601, %v4053
      %4121 = vst.msk [vmem:[#allocation3 + $0xe8] sm:$0xff] %vm1601, %v4055
      %4122 = vst.msk [vmem:[#allocation3 + $0xf0] sm:$0xff] %vm1601, %v4057
      %4123 = vst.msk [vmem:[#allocation3 + $0xf8] sm:$0xff] %vm1601, %v4059
      %v4124 = vld [vmem:[%s1440 + $0x1] sm:$0xff]
      %v4125 = vld [vmem:[%s1440 + $0x9] sm:$0xff]
      %v4126 = vld [vmem:[%s1440 + $0x19] sm:$0xff]
      %v4127 = vld [vmem:[%s1440 + $0x21] sm:$0xff]
      %v4128 = vld [vmem:[%s1440 + $0x31] sm:$0xff]
      %v4129 = vld [vmem:[%s1440 + $0x39] sm:$0xff]
      %v4130 = vld [vmem:[%s1440 + $0x49] sm:$0xff]
      %v4131 = vld [vmem:[%s1440 + $0x51] sm:$0xff]
      %v4132 = vld [vmem:[%s1440 + $0x61] sm:$0xff]
      %v4133 = vld [vmem:[%s1440 + $0x69] sm:$0xff]
      %v4134 = vld [vmem:[%s1440 + $0x79] sm:$0xff]
      %v4135 = vld [vmem:[%s1440 + $0x81] sm:$0xff]
      %v4136 = vld [vmem:[%s1440 + $0x91] sm:$0xff]
      %v4137 = vld [vmem:[%s1440 + $0x99] sm:$0xff]
      %v4138 = vld [vmem:[%s1440 + $0xa9] sm:$0xff]
      %v4139 = vld [vmem:[%s1440 + $0xb1] sm:$0xff]
      %v4140 = vld [vmem:[%s1440 + $0xc1] sm:$0xff]
      %v4141 = vld [vmem:[%s1440 + $0xc9] sm:$0xff]
      %v4142 = vld [vmem:[%s1440 + $0xd9] sm:$0xff]
      %v4143 = vld [vmem:[%s1440 + $0xe1] sm:$0xff]
      %v4144 = vld [vmem:[%s1440 + $0xf1] sm:$0xff]
      %v4145 = vld [vmem:[%s1440 + $0xf9] sm:$0xff]
      %v4146 = vld [vmem:[%s1440 + $0x109] sm:$0xff]
      %v4147 = vld [vmem:[%s1440 + $0x111] sm:$0xff]
      %v4148 = vld [vmem:[%s1440 + $0x121] sm:$0xff]
      %v4149 = vld [vmem:[%s1440 + $0x129] sm:$0xff]
      %v4150 = vld [vmem:[%s1440 + $0x139] sm:$0xff]
      %v4151 = vld [vmem:[%s1440 + $0x141] sm:$0xff]
      %v4152 = vld [vmem:[%s1440 + $0x151] sm:$0xff]
      %v4153 = vld [vmem:[%s1440 + $0x159] sm:$0xff]
      %v4154 = vld [vmem:[%s1440 + $0x169] sm:$0xff]
      %v4155 = vld [vmem:[%s1440 + $0x171] sm:$0xff]
      %4188 = vrot.lane.b32.xlu0 %v4124, 56
      %v4189 = vpop.permute.xlu0 %4188
      %4190 = vrot.lane.b32.xlu0 %v4125, 56
      %v4191 = vpop.permute.xlu0 %4190
      %4192 = vrot.lane.b32.xlu0 %v4126, 56
      %v4193 = vpop.permute.xlu0 %4192
      %4194 = vrot.lane.b32.xlu0 %v4127, 56
      %v4195 = vpop.permute.xlu0 %4194
      %4196 = vrot.lane.b32.xlu0 %v4128, 56
      %v4197 = vpop.permute.xlu0 %4196
      %4198 = vrot.lane.b32.xlu0 %v4129, 56
      %v4199 = vpop.permute.xlu0 %4198
      %4200 = vrot.lane.b32.xlu0 %v4130, 56
      %v4201 = vpop.permute.xlu0 %4200
      %4202 = vrot.lane.b32.xlu0 %v4131, 56
      %v4203 = vpop.permute.xlu0 %4202
      %4204 = vrot.lane.b32.xlu0 %v4132, 56
      %v4205 = vpop.permute.xlu0 %4204
      %4206 = vrot.lane.b32.xlu0 %v4133, 56
      %v4207 = vpop.permute.xlu0 %4206
      %4208 = vrot.lane.b32.xlu0 %v4134, 56
      %v4209 = vpop.permute.xlu0 %4208
      %4210 = vrot.lane.b32.xlu0 %v4135, 56
      %v4211 = vpop.permute.xlu0 %4210
      %4212 = vrot.lane.b32.xlu0 %v4136, 56
      %v4213 = vpop.permute.xlu0 %4212
      %4214 = vrot.lane.b32.xlu0 %v4137, 56
      %v4215 = vpop.permute.xlu0 %4214
      %4216 = vrot.lane.b32.xlu0 %v4138, 56
      %v4217 = vpop.permute.xlu0 %4216
      %4218 = vrot.lane.b32.xlu0 %v4139, 56
      %v4219 = vpop.permute.xlu0 %4218
      %4220 = vrot.lane.b32.xlu0 %v4140, 56
      %v4221 = vpop.permute.xlu0 %4220
      %4222 = vrot.lane.b32.xlu0 %v4141, 56
      %v4223 = vpop.permute.xlu0 %4222
      %4224 = vrot.lane.b32.xlu0 %v4142, 56
      %v4225 = vpop.permute.xlu0 %4224
      %4226 = vrot.lane.b32.xlu0 %v4143, 56
      %v4227 = vpop.permute.xlu0 %4226
      %4228 = vrot.lane.b32.xlu0 %v4144, 56
      %v4229 = vpop.permute.xlu0 %4228
      %4230 = vrot.lane.b32.xlu0 %v4145, 56
      %v4231 = vpop.permute.xlu0 %4230
      %4232 = vrot.lane.b32.xlu0 %v4146, 56
      %v4233 = vpop.permute.xlu0 %4232
      %4234 = vrot.lane.b32.xlu0 %v4147, 56
      %v4235 = vpop.permute.xlu0 %4234
      %4236 = vrot.lane.b32.xlu0 %v4148, 56
      %v4237 = vpop.permute.xlu0 %4236
      %4238 = vrot.lane.b32.xlu0 %v4149, 56
      %v4239 = vpop.permute.xlu0 %4238
      %4240 = vrot.lane.b32.xlu0 %v4150, 56
      %v4241 = vpop.permute.xlu0 %4240
      %4242 = vrot.lane.b32.xlu0 %v4151, 56
      %v4243 = vpop.permute.xlu0 %4242
      %4244 = vrot.lane.b32.xlu0 %v4152, 56
      %v4245 = vpop.permute.xlu0 %4244
      %4246 = vrot.lane.b32.xlu0 %v4153, 56
      %v4247 = vpop.permute.xlu0 %4246
      %4248 = vrot.lane.b32.xlu0 %v4154, 56
      %v4249 = vpop.permute.xlu0 %4248
      %4250 = vrot.lane.b32.xlu0 %v4155, 56
      %v4251 = vpop.permute.xlu0 %4250
      %4284 = vst.msk [vmem:[#allocation3] sm:$0xff] %vm1794, %v4189
      %4285 = vst.msk [vmem:[#allocation3 + $0x8] sm:$0xff] %vm1794, %v4191
      %4286 = vst.msk [vmem:[#allocation3 + $0x10] sm:$0xff] %vm1794, %v4193
      %4287 = vst.msk [vmem:[#allocation3 + $0x18] sm:$0xff] %vm1794, %v4195
      %4288 = vst.msk [vmem:[#allocation3 + $0x20] sm:$0xff] %vm1794, %v4197
      %4289 = vst.msk [vmem:[#allocation3 + $0x28] sm:$0xff] %vm1794, %v4199
      %4290 = vst.msk [vmem:[#allocation3 + $0x30] sm:$0xff] %vm1794, %v4201
      %4291 = vst.msk [vmem:[#allocation3 + $0x38] sm:$0xff] %vm1794, %v4203
      %4292 = vst.msk [vmem:[#allocation3 + $0x40] sm:$0xff] %vm1794, %v4205
      %4293 = vst.msk [vmem:[#allocation3 + $0x48] sm:$0xff] %vm1794, %v4207
      %4294 = vst.msk [vmem:[#allocation3 + $0x50] sm:$0xff] %vm1794, %v4209
      %4295 = vst.msk [vmem:[#allocation3 + $0x58] sm:$0xff] %vm1794, %v4211
      %4296 = vst.msk [vmem:[#allocation3 + $0x60] sm:$0xff] %vm1794, %v4213
      %4297 = vst.msk [vmem:[#allocation3 + $0x68] sm:$0xff] %vm1794, %v4215
      %4298 = vst.msk [vmem:[#allocation3 + $0x70] sm:$0xff] %vm1794, %v4217
      %4299 = vst.msk [vmem:[#allocation3 + $0x78] sm:$0xff] %vm1794, %v4219
      %4300 = vst.msk [vmem:[#allocation3 + $0x80] sm:$0xff] %vm1794, %v4221
      %4301 = vst.msk [vmem:[#allocation3 + $0x88] sm:$0xff] %vm1794, %v4223
      %4302 = vst.msk [vmem:[#allocation3 + $0x90] sm:$0xff] %vm1794, %v4225
      %4303 = vst.msk [vmem:[#allocation3 + $0x98] sm:$0xff] %vm1794, %v4227
      %4304 = vst.msk [vmem:[#allocation3 + $0xa0] sm:$0xff] %vm1794, %v4229
      %4305 = vst.msk [vmem:[#allocation3 + $0xa8] sm:$0xff] %vm1794, %v4231
      %4306 = vst.msk [vmem:[#allocation3 + $0xb0] sm:$0xff] %vm1794, %v4233
      %4307 = vst.msk [vmem:[#allocation3 + $0xb8] sm:$0xff] %vm1794, %v4235
      %4308 = vst.msk [vmem:[#allocation3 + $0xc0] sm:$0xff] %vm1794, %v4237
      %4309 = vst.msk [vmem:[#allocation3 + $0xc8] sm:$0xff] %vm1794, %v4239
      %4310 = vst.msk [vmem:[#allocation3 + $0xd0] sm:$0xff] %vm1794, %v4241
      %4311 = vst.msk [vmem:[#allocation3 + $0xd8] sm:$0xff] %vm1794, %v4243
      %4312 = vst.msk [vmem:[#allocation3 + $0xe0] sm:$0xff] %vm1794, %v4245
      %4313 = vst.msk [vmem:[#allocation3 + $0xe8] sm:$0xff] %vm1794, %v4247
      %4314 = vst.msk [vmem:[#allocation3 + $0xf0] sm:$0xff] %vm1794, %v4249
      %4315 = vst.msk [vmem:[#allocation3 + $0xf8] sm:$0xff] %vm1794, %v4251
      %v4316 = vld [vmem:[%s1440 + $0x2] sm:$0xff]
      %v4317 = vld [vmem:[%s1440 + $0xa] sm:$0xff]
      %v4318 = vld [vmem:[%s1440 + $0x1a] sm:$0xff]
      %v4319 = vld [vmem:[%s1440 + $0x22] sm:$0xff]
      %v4320 = vld [vmem:[%s1440 + $0x32] sm:$0xff]
      %v4321 = vld [vmem:[%s1440 + $0x3a] sm:$0xff]
      %v4322 = vld [vmem:[%s1440 + $0x4a] sm:$0xff]
      %v4323 = vld [vmem:[%s1440 + $0x52] sm:$0xff]
      %v4324 = vld [vmem:[%s1440 + $0x62] sm:$0xff]
      %v4325 = vld [vmem:[%s1440 + $0x6a] sm:$0xff]
      %v4326 = vld [vmem:[%s1440 + $0x7a] sm:$0xff]
      %v4327 = vld [vmem:[%s1440 + $0x82] sm:$0xff]
      %v4328 = vld [vmem:[%s1440 + $0x92] sm:$0xff]
      %v4329 = vld [vmem:[%s1440 + $0x9a] sm:$0xff]
      %v4330 = vld [vmem:[%s1440 + $0xaa] sm:$0xff]
      %v4331 = vld [vmem:[%s1440 + $0xb2] sm:$0xff]
      %v4332 = vld [vmem:[%s1440 + $0xc2] sm:$0xff]
      %v4333 = vld [vmem:[%s1440 + $0xca] sm:$0xff]
      %v4334 = vld [vmem:[%s1440 + $0xda] sm:$0xff]
      %v4335 = vld [vmem:[%s1440 + $0xe2] sm:$0xff]
      %v4336 = vld [vmem:[%s1440 + $0xf2] sm:$0xff]
      %v4337 = vld [vmem:[%s1440 + $0xfa] sm:$0xff]
      %v4338 = vld [vmem:[%s1440 + $0x10a] sm:$0xff]
      %v4339 = vld [vmem:[%s1440 + $0x112] sm:$0xff]
      %v4340 = vld [vmem:[%s1440 + $0x122] sm:$0xff]
      %v4341 = vld [vmem:[%s1440 + $0x12a] sm:$0xff]
      %v4342 = vld [vmem:[%s1440 + $0x13a] sm:$0xff]
      %v4343 = vld [vmem:[%s1440 + $0x142] sm:$0xff]
      %v4344 = vld [vmem:[%s1440 + $0x152] sm:$0xff]
      %v4345 = vld [vmem:[%s1440 + $0x15a] sm:$0xff]
      %v4346 = vld [vmem:[%s1440 + $0x16a] sm:$0xff]
      %v4347 = vld [vmem:[%s1440 + $0x172] sm:$0xff]
      %4380 = vrot.lane.b32.xlu0 %v4316, 64
      %v4381 = vpop.permute.xlu0 %4380
      %4382 = vrot.lane.b32.xlu0 %v4317, 64
      %v4383 = vpop.permute.xlu0 %4382
      %4384 = vrot.lane.b32.xlu0 %v4318, 64
      %v4385 = vpop.permute.xlu0 %4384
      %4386 = vrot.lane.b32.xlu0 %v4319, 64
      %v4387 = vpop.permute.xlu0 %4386
      %4388 = vrot.lane.b32.xlu0 %v4320, 64
      %v4389 = vpop.permute.xlu0 %4388
      %4390 = vrot.lane.b32.xlu0 %v4321, 64
      %v4391 = vpop.permute.xlu0 %4390
      %4392 = vrot.lane.b32.xlu0 %v4322, 64
      %v4393 = vpop.permute.xlu0 %4392
      %4394 = vrot.lane.b32.xlu0 %v4323, 64
      %v4395 = vpop.permute.xlu0 %4394
      %4396 = vrot.lane.b32.xlu0 %v4324, 64
      %v4397 = vpop.permute.xlu0 %4396
      %4398 = vrot.lane.b32.xlu0 %v4325, 64
      %v4399 = vpop.permute.xlu0 %4398
      %4400 = vrot.lane.b32.xlu0 %v4326, 64
      %v4401 = vpop.permute.xlu0 %4400
      %4402 = vrot.lane.b32.xlu0 %v4327, 64
      %v4403 = vpop.permute.xlu0 %4402
      %4404 = vrot.lane.b32.xlu0 %v4328, 64
      %v4405 = vpop.permute.xlu0 %4404
      %4406 = vrot.lane.b32.xlu0 %v4329, 64
      %v4407 = vpop.permute.xlu0 %4406
      %4408 = vrot.lane.b32.xlu0 %v4330, 64
      %v4409 = vpop.permute.xlu0 %4408
      %4410 = vrot.lane.b32.xlu0 %v4331, 64
      %v4411 = vpop.permute.xlu0 %4410
      %4412 = vrot.lane.b32.xlu0 %v4332, 64
      %v4413 = vpop.permute.xlu0 %4412
      %4414 = vrot.lane.b32.xlu0 %v4333, 64
      %v4415 = vpop.permute.xlu0 %4414
      %4416 = vrot.lane.b32.xlu0 %v4334, 64
      %v4417 = vpop.permute.xlu0 %4416
      %4418 = vrot.lane.b32.xlu0 %v4335, 64
      %v4419 = vpop.permute.xlu0 %4418
      %4420 = vrot.lane.b32.xlu0 %v4336, 64
      %v4421 = vpop.permute.xlu0 %4420
      %4422 = vrot.lane.b32.xlu0 %v4337, 64
      %v4423 = vpop.permute.xlu0 %4422
      %4424 = vrot.lane.b32.xlu0 %v4338, 64
      %v4425 = vpop.permute.xlu0 %4424
      %4426 = vrot.lane.b32.xlu0 %v4339, 64
      %v4427 = vpop.permute.xlu0 %4426
      %4428 = vrot.lane.b32.xlu0 %v4340, 64
      %v4429 = vpop.permute.xlu0 %4428
      %4430 = vrot.lane.b32.xlu0 %v4341, 64
      %v4431 = vpop.permute.xlu0 %4430
      %4432 = vrot.lane.b32.xlu0 %v4342, 64
      %v4433 = vpop.permute.xlu0 %4432
      %4434 = vrot.lane.b32.xlu0 %v4343, 64
      %v4435 = vpop.permute.xlu0 %4434
      %4436 = vrot.lane.b32.xlu0 %v4344, 64
      %v4437 = vpop.permute.xlu0 %4436
      %4438 = vrot.lane.b32.xlu0 %v4345, 64
      %v4439 = vpop.permute.xlu0 %4438
      %4440 = vrot.lane.b32.xlu0 %v4346, 64
      %v4441 = vpop.permute.xlu0 %4440
      %4442 = vrot.lane.b32.xlu0 %v4347, 64
      %v4443 = vpop.permute.xlu0 %4442
      %4476 = vst.msk [vmem:[#allocation3] sm:$0xff] %vm1987, %v4381
      %4477 = vst.msk [vmem:[#allocation3 + $0x8] sm:$0xff] %vm1987, %v4383
      %4478 = vst.msk [vmem:[#allocation3 + $0x10] sm:$0xff] %vm1987, %v4385
      %4479 = vst.msk [vmem:[#allocation3 + $0x18] sm:$0xff] %vm1987, %v4387
      %4480 = vst.msk [vmem:[#allocation3 + $0x20] sm:$0xff] %vm1987, %v4389
      %4481 = vst.msk [vmem:[#allocation3 + $0x28] sm:$0xff] %vm1987, %v4391
      %4482 = vst.msk [vmem:[#allocation3 + $0x30] sm:$0xff] %vm1987, %v4393
      %4483 = vst.msk [vmem:[#allocation3 + $0x38] sm:$0xff] %vm1987, %v4395
      %4484 = vst.msk [vmem:[#allocation3 + $0x40] sm:$0xff] %vm1987, %v4397
      %4485 = vst.msk [vmem:[#allocation3 + $0x48] sm:$0xff] %vm1987, %v4399
      %4486 = vst.msk [vmem:[#allocation3 + $0x50] sm:$0xff] %vm1987, %v4401
      %4487 = vst.msk [vmem:[#allocation3 + $0x58] sm:$0xff] %vm1987, %v4403
      %4488 = vst.msk [vmem:[#allocation3 + $0x60] sm:$0xff] %vm1987, %v4405
      %4489 = vst.msk [vmem:[#allocation3 + $0x68] sm:$0xff] %vm1987, %v4407
      %4490 = vst.msk [vmem:[#allocation3 + $0x70] sm:$0xff] %vm1987, %v4409
      %4491 = vst.msk [vmem:[#allocation3 + $0x78] sm:$0xff] %vm1987, %v4411
      %4492 = vst.msk [vmem:[#allocation3 + $0x80] sm:$0xff] %vm1987, %v4413
      %4493 = vst.msk [vmem:[#allocation3 + $0x88] sm:$0xff] %vm1987, %v4415
      %4494 = vst.msk [vmem:[#allocation3 + $0x90] sm:$0xff] %vm1987, %v4417
      %4495 = vst.msk [vmem:[#allocation3 + $0x98] sm:$0xff] %vm1987, %v4419
      %4496 = vst.msk [vmem:[#allocation3 + $0xa0] sm:$0xff] %vm1987, %v4421
      %4497 = vst.msk [vmem:[#allocation3 + $0xa8] sm:$0xff] %vm1987, %v4423
      %4498 = vst.msk [vmem:[#allocation3 + $0xb0] sm:$0xff] %vm1987, %v4425
      %4499 = vst.msk [vmem:[#allocation3 + $0xb8] sm:$0xff] %vm1987, %v4427
      %4500 = vst.msk [vmem:[#allocation3 + $0xc0] sm:$0xff] %vm1987, %v4429
      %4501 = vst.msk [vmem:[#allocation3 + $0xc8] sm:$0xff] %vm1987, %v4431
      %4502 = vst.msk [vmem:[#allocation3 + $0xd0] sm:$0xff] %vm1987, %v4433
      %4503 = vst.msk [vmem:[#allocation3 + $0xd8] sm:$0xff] %vm1987, %v4435
      %4504 = vst.msk [vmem:[#allocation3 + $0xe0] sm:$0xff] %vm1987, %v4437
      %4505 = vst.msk [vmem:[#allocation3 + $0xe8] sm:$0xff] %vm1987, %v4439
      %4506 = vst.msk [vmem:[#allocation3 + $0xf0] sm:$0xff] %vm1987, %v4441
      %4507 = vst.msk [vmem:[#allocation3 + $0xf8] sm:$0xff] %vm1987, %v4443
      %v4508 = vld [vmem:[#allocation3] sm:$0xff]
      %v4509 = vld [vmem:[#allocation3 + $0x8] sm:$0xff]
      %v4510 = vld [vmem:[#allocation3 + $0x10] sm:$0xff]
      %v4511 = vld [vmem:[#allocation3 + $0x18] sm:$0xff]
      %v4512 = vld [vmem:[#allocation3 + $0x20] sm:$0xff]
      %v4513 = vld [vmem:[#allocation3 + $0x28] sm:$0xff]
      %v4514 = vld [vmem:[#allocation3 + $0x30] sm:$0xff]
      %v4515 = vld [vmem:[#allocation3 + $0x38] sm:$0xff]
      %v4516 = vld [vmem:[#allocation3 + $0x40] sm:$0xff]
      %v4517 = vld [vmem:[#allocation3 + $0x48] sm:$0xff]
      %v4518 = vld [vmem:[#allocation3 + $0x50] sm:$0xff]
      %v4519 = vld [vmem:[#allocation3 + $0x58] sm:$0xff]
      %v4520 = vld [vmem:[#allocation3 + $0x60] sm:$0xff]
      %v4521 = vld [vmem:[#allocation3 + $0x68] sm:$0xff]
      %v4522 = vld [vmem:[#allocation3 + $0x70] sm:$0xff]
      %v4523 = vld [vmem:[#allocation3 + $0x78] sm:$0xff]
      %v4524 = vld [vmem:[#allocation3 + $0x80] sm:$0xff]
      %v4525 = vld [vmem:[#allocation3 + $0x88] sm:$0xff]
      %v4526 = vld [vmem:[#allocation3 + $0x90] sm:$0xff]
      %v4527 = vld [vmem:[#allocation3 + $0x98] sm:$0xff]
      %v4528 = vld [vmem:[#allocation3 + $0xa0] sm:$0xff]
      %v4529 = vld [vmem:[#allocation3 + $0xa8] sm:$0xff]
      %v4530 = vld [vmem:[#allocation3 + $0xb0] sm:$0xff]
      %v4531 = vld [vmem:[#allocation3 + $0xb8] sm:$0xff]
      %v4532 = vld [vmem:[#allocation3 + $0xc0] sm:$0xff]
      %v4533 = vld [vmem:[#allocation3 + $0xc8] sm:$0xff]
      %v4534 = vld [vmem:[#allocation3 + $0xd0] sm:$0xff]
      %v4535 = vld [vmem:[#allocation3 + $0xd8] sm:$0xff]
      %v4536 = vld [vmem:[#allocation3 + $0xe0] sm:$0xff]
      %v4537 = vld [vmem:[#allocation3 + $0xe8] sm:$0xff]
      %v4538 = vld [vmem:[#allocation3 + $0xf0] sm:$0xff]
      %v4539 = vld [vmem:[#allocation3 + $0xf8] sm:$0xff]
      %s4540 = scalar_lea.vmem %s1, 72
      %v4541 = vld [vmem:[%s4540] sm:$0xff]
      %v4542 = vld [vmem:[%s4540 + $0x8] sm:$0xff]
      %v4543 = vld [vmem:[%s4540 + $0x10] sm:$0xff]
      %v4544 = vld [vmem:[%s4540 + $0x18] sm:$0xff]
      %v4545 = vld [vmem:[%s4540 + $0x20] sm:$0xff]
      %v4546 = vld [vmem:[%s4540 + $0x28] sm:$0xff]
      %v4547 = vld [vmem:[%s4540 + $0x30] sm:$0xff]
      %v4548 = vld [vmem:[%s4540 + $0x38] sm:$0xff]
      %v4549 = vld [vmem:[%s4540 + $0x40] sm:$0xff]
      %s4550 = scalar_lea.vmem %s2, 1
      %v4551 = vld [vmem:[%s4550] sm:$0x1]
      %v4553 = vperm.slane %v4551, 0
      %v4556 = vsel %vm2065, %v4508, 0
      %v4559 = vsel %vm2065, %v4509, 0
      %v4562 = vsel %vm2065, %v4510, 0
      %v4565 = vsel %vm2065, %v4511, 0
      %v4568 = vsel %vm2065, %v4512, 0
      %v4571 = vsel %vm2065, %v4513, 0
      %v4574 = vsel %vm2065, %v4514, 0
      %v4577 = vsel %vm2065, %v4515, 0
      %v4580 = vsel %vm2065, %v4516, 0
      %v4583 = vsel %vm2065, %v4517, 0
      %v4586 = vsel %vm2065, %v4518, 0
      %v4589 = vsel %vm2065, %v4519, 0
      %v4592 = vsel %vm2065, %v4520, 0
      %v4595 = vsel %vm2065, %v4521, 0
      %v4598 = vsel %vm2065, %v4522, 0
      %v4601 = vsel %vm2065, %v4523, 0
      %v4604 = vsel %vm2065, %v4524, 0
      %v4607 = vsel %vm2065, %v4525, 0
      %v4610 = vsel %vm2065, %v4526, 0
      %v4613 = vsel %vm2065, %v4527, 0
      %v4616 = vsel %vm2065, %v4528, 0
      %v4619 = vsel %vm2065, %v4529, 0
      %v4622 = vsel %vm2065, %v4530, 0
      %v4625 = vsel %vm2065, %v4531, 0
      %v4628 = vsel %vm2065, %v4532, 0
      %v4631 = vsel %vm2065, %v4533, 0
      %v4634 = vsel %vm2065, %v4534, 0
      %v4637 = vsel %vm2065, %v4535, 0
      %v4640 = vsel %vm2065, %v4536, 0
      %v4643 = vsel %vm2065, %v4537, 0
      %v4646 = vsel %vm2065, %v4538, 0
      %v4649 = vsel %vm2065, %v4539, 0
      %4651 = vmatpush.msra.mxu0 0.0
      %4652 = vmatpush.msra.mxu0 0.0
      %4653 = vmatpush.msra.mxu0 0.0
      %4654 = vmatpush.msra.mxu0 0.0
      %4655 = vmatpush.msra.mxu0 0.0
      %4656 = vmatpush.msra.mxu0 0.0
      %4657 = vmatpush.msra.mxu0 0.0
      %4658 = vmatpush.msra.mxu0 %v4549
      %4659 = vmatpush.msra.mxu0 %v4548
      %4660 = vmatpush.msra.mxu0 %v4547
      %4661 = vmatpush.msra.mxu0 %v4546
      %4662 = vmatpush.msra.mxu0 %v4545
      %4663 = vmatpush.msra.mxu0 %v4544
      %4664 = vmatpush.msra.mxu0 %v4543
      %4665 = vmatpush.msra.mxu0 %v4542
      %4666 = vmatpush.msra.mxu0 %v4541
      %4667 = vmatmul.f32.gmra.mxu0 %v4556
      %v4668 = vpop.f32.mrf.mxu0
      %v4669 = vadd.f32 %v4553, %v4668
      %4670 = vmatmul.f32.gmra.mxu0 %v4559
      %v4671 = vpop.f32.mrf.mxu0
      %v4672 = vadd.f32 %v4553, %v4671
      %4673 = vmatmul.f32.gmra.mxu0 %v4562
      %v4674 = vpop.f32.mrf.mxu0
      %v4675 = vadd.f32 %v4553, %v4674
      %4676 = vmatmul.f32.gmra.mxu0 %v4565
      %v4677 = vpop.f32.mrf.mxu0
      %v4678 = vadd.f32 %v4553, %v4677
      %4679 = vmatmul.f32.gmra.mxu0 %v4568
      %v4680 = vpop.f32.mrf.mxu0
      %v4681 = vadd.f32 %v4553, %v4680
      %4682 = vmatmul.f32.gmra.mxu0 %v4571
      %v4683 = vpop.f32.mrf.mxu0
      %v4684 = vadd.f32 %v4553, %v4683
      %4685 = vmatmul.f32.gmra.mxu0 %v4574
      %v4686 = vpop.f32.mrf.mxu0
      %v4687 = vadd.f32 %v4553, %v4686
      %4688 = vmatmul.f32.gmra.mxu0 %v4577
      %v4689 = vpop.f32.mrf.mxu0
      %v4690 = vadd.f32 %v4553, %v4689
      %4691 = vmatmul.f32.gmra.mxu0 %v4580
      %v4692 = vpop.f32.mrf.mxu0
      %v4693 = vadd.f32 %v4553, %v4692
      %4694 = vmatmul.f32.gmra.mxu0 %v4583
      %v4695 = vpop.f32.mrf.mxu0
      %v4696 = vadd.f32 %v4553, %v4695
      %4697 = vmatmul.f32.gmra.mxu0 %v4586
      %v4698 = vpop.f32.mrf.mxu0
      %v4699 = vadd.f32 %v4553, %v4698
      %4700 = vmatmul.f32.gmra.mxu0 %v4589
      %v4701 = vpop.f32.mrf.mxu0
      %v4702 = vadd.f32 %v4553, %v4701
      %4703 = vmatmul.f32.gmra.mxu0 %v4592
      %v4704 = vpop.f32.mrf.mxu0
      %v4705 = vadd.f32 %v4553, %v4704
      %4706 = vmatmul.f32.gmra.mxu0 %v4595
      %v4707 = vpop.f32.mrf.mxu0
      %v4708 = vadd.f32 %v4553, %v4707
      %4709 = vmatmul.f32.gmra.mxu0 %v4598
      %v4710 = vpop.f32.mrf.mxu0
      %v4711 = vadd.f32 %v4553, %v4710
      %4712 = vmatmul.f32.gmra.mxu0 %v4601
      %v4713 = vpop.f32.mrf.mxu0
      %v4714 = vadd.f32 %v4553, %v4713
      %4715 = vmatmul.f32.gmra.mxu0 %v4604
      %v4716 = vpop.f32.mrf.mxu0
      %v4717 = vadd.f32 %v4553, %v4716
      %4718 = vmatmul.f32.gmra.mxu0 %v4607
      %v4719 = vpop.f32.mrf.mxu0
      %v4720 = vadd.f32 %v4553, %v4719
      %4721 = vmatmul.f32.gmra.mxu0 %v4610
      %v4722 = vpop.f32.mrf.mxu0
      %v4723 = vadd.f32 %v4553, %v4722
      %4724 = vmatmul.f32.gmra.mxu0 %v4613
      %v4725 = vpop.f32.mrf.mxu0
      %v4726 = vadd.f32 %v4553, %v4725
      %4727 = vmatmul.f32.gmra.mxu0 %v4616
      %v4728 = vpop.f32.mrf.mxu0
      %v4729 = vadd.f32 %v4553, %v4728
      %4730 = vmatmul.f32.gmra.mxu0 %v4619
      %v4731 = vpop.f32.mrf.mxu0
      %v4732 = vadd.f32 %v4553, %v4731
      %4733 = vmatmul.f32.gmra.mxu0 %v4622
      %v4734 = vpop.f32.mrf.mxu0
      %v4735 = vadd.f32 %v4553, %v4734
      %4736 = vmatmul.f32.gmra.mxu0 %v4625
      %v4737 = vpop.f32.mrf.mxu0
      %v4738 = vadd.f32 %v4553, %v4737
      %4739 = vmatmul.f32.gmra.mxu0 %v4628
      %v4740 = vpop.f32.mrf.mxu0
      %v4741 = vadd.f32 %v4553, %v4740
      %4742 = vmatmul.f32.gmra.mxu0 %v4631
      %v4743 = vpop.f32.mrf.mxu0
      %v4744 = vadd.f32 %v4553, %v4743
      %4745 = vmatmul.f32.gmra.mxu0 %v4634
      %v4746 = vpop.f32.mrf.mxu0
      %v4747 = vadd.f32 %v4553, %v4746
      %4748 = vmatmul.f32.gmra.mxu0 %v4637
      %v4749 = vpop.f32.mrf.mxu0
      %v4750 = vadd.f32 %v4553, %v4749
      %4751 = vmatmul.f32.gmra.mxu0 %v4640
      %v4752 = vpop.f32.mrf.mxu0
      %v4753 = vadd.f32 %v4553, %v4752
      %4754 = vmatmul.f32.gmra.mxu0 %v4643
      %v4755 = vpop.f32.mrf.mxu0
      %v4756 = vadd.f32 %v4553, %v4755
      %4757 = vmatmul.f32.gmra.mxu0 %v4646
      %v4758 = vpop.f32.mrf.mxu0
      %v4759 = vadd.f32 %v4553, %v4758
      %4760 = vmatmul.f32.gmra.mxu0 %v4649
      %v4761 = vpop.f32.mrf.mxu0
      %v4762 = vadd.f32 %v4553, %v4761
      %4763 = vdwg.mxu0
      %vm4764 = vcmp.gt.f32.partialorder %v4669, 0.0
      %vm4765 = vcmp.gt.f32.partialorder %v4672, 0.0
      %vm4766 = vcmp.gt.f32.partialorder %v4675, 0.0
      %vm4767 = vcmp.gt.f32.partialorder %v4678, 0.0
      %vm4768 = vcmp.gt.f32.partialorder %v4681, 0.0
      %vm4769 = vcmp.gt.f32.partialorder %v4684, 0.0
      %vm4770 = vcmp.gt.f32.partialorder %v4687, 0.0
      %vm4771 = vcmp.gt.f32.partialorder %v4690, 0.0
      %vm4772 = vcmp.gt.f32.partialorder %v4693, 0.0
      %vm4773 = vcmp.gt.f32.partialorder %v4696, 0.0
      %vm4774 = vcmp.gt.f32.partialorder %v4699, 0.0
      %vm4775 = vcmp.gt.f32.partialorder %v4702, 0.0
      %vm4776 = vcmp.gt.f32.partialorder %v4705, 0.0
      %vm4777 = vcmp.gt.f32.partialorder %v4708, 0.0
      %vm4778 = vcmp.gt.f32.partialorder %v4711, 0.0
      %vm4779 = vcmp.gt.f32.partialorder %v4714, 0.0
      %vm4780 = vcmp.gt.f32.partialorder %v4717, 0.0
      %vm4781 = vcmp.gt.f32.partialorder %v4720, 0.0
      %vm4782 = vcmp.gt.f32.partialorder %v4723, 0.0
      %vm4783 = vcmp.gt.f32.partialorder %v4726, 0.0
      %vm4784 = vcmp.gt.f32.partialorder %v4729, 0.0
      %vm4785 = vcmp.gt.f32.partialorder %v4732, 0.0
      %vm4786 = vcmp.gt.f32.partialorder %v4735, 0.0
      %vm4787 = vcmp.gt.f32.partialorder %v4738, 0.0
      %vm4788 = vcmp.gt.f32.partialorder %v4741, 0.0
      %vm4789 = vcmp.gt.f32.partialorder %v4744, 0.0
      %vm4790 = vcmp.gt.f32.partialorder %v4747, 0.0
      %vm4791 = vcmp.gt.f32.partialorder %v4750, 0.0
      %vm4792 = vcmp.gt.f32.partialorder %v4753, 0.0
      %vm4793 = vcmp.gt.f32.partialorder %v4756, 0.0
      %vm4794 = vcmp.gt.f32.partialorder %v4759, 0.0
      %vm4795 = vcmp.gt.f32.partialorder %v4762, 0.0
      %v4796 = vmul.f32 %v4669, 0.2
      %v4797 = vmul.f32 %v4672, 0.2
      %v4798 = vmul.f32 %v4675, 0.2
      %v4799 = vmul.f32 %v4678, 0.2
      %v4800 = vmul.f32 %v4681, 0.2
      %v4801 = vmul.f32 %v4684, 0.2
      %v4802 = vmul.f32 %v4687, 0.2
      %v4803 = vmul.f32 %v4690, 0.2
      %v4804 = vmul.f32 %v4693, 0.2
      %v4805 = vmul.f32 %v4696, 0.2
      %v4806 = vmul.f32 %v4699, 0.2
      %v4807 = vmul.f32 %v4702, 0.2
      %v4808 = vmul.f32 %v4705, 0.2
      %v4809 = vmul.f32 %v4708, 0.2
      %v4810 = vmul.f32 %v4711, 0.2
      %v4811 = vmul.f32 %v4714, 0.2
      %v4812 = vmul.f32 %v4717, 0.2
      %v4813 = vmul.f32 %v4720, 0.2
      %v4814 = vmul.f32 %v4723, 0.2
      %v4815 = vmul.f32 %v4726, 0.2
      %v4816 = vmul.f32 %v4729, 0.2
      %v4817 = vmul.f32 %v4732, 0.2
      %v4818 = vmul.f32 %v4735, 0.2
      %v4819 = vmul.f32 %v4738, 0.2
      %v4820 = vmul.f32 %v4741, 0.2
      %v4821 = vmul.f32 %v4744, 0.2
      %v4822 = vmul.f32 %v4747, 0.2
      %v4823 = vmul.f32 %v4750, 0.2
      %v4824 = vmul.f32 %v4753, 0.2
      %v4825 = vmul.f32 %v4756, 0.2
      %v4826 = vmul.f32 %v4759, 0.2
      %v4827 = vmul.f32 %v4762, 0.2
      %v4828 = vsel %vm4764, %v4669, %v4796
      %v4829 = vsel %vm4765, %v4672, %v4797
      %v4830 = vsel %vm4766, %v4675, %v4798
      %v4831 = vsel %vm4767, %v4678, %v4799
      %v4832 = vsel %vm4768, %v4681, %v4800
      %v4833 = vsel %vm4769, %v4684, %v4801
      %v4834 = vsel %vm4770, %v4687, %v4802
      %v4835 = vsel %vm4771, %v4690, %v4803
      %v4836 = vsel %vm4772, %v4693, %v4804
      %v4837 = vsel %vm4773, %v4696, %v4805
      %v4838 = vsel %vm4774, %v4699, %v4806
      %v4839 = vsel %vm4775, %v4702, %v4807
      %v4840 = vsel %vm4776, %v4705, %v4808
      %v4841 = vsel %vm4777, %v4708, %v4809
      %v4842 = vsel %vm4778, %v4711, %v4810
      %v4843 = vsel %vm4779, %v4714, %v4811
      %v4844 = vsel %vm4780, %v4717, %v4812
      %v4845 = vsel %vm4781, %v4720, %v4813
      %v4846 = vsel %vm4782, %v4723, %v4814
      %v4847 = vsel %vm4783, %v4726, %v4815
      %v4848 = vsel %vm4784, %v4729, %v4816
      %v4849 = vsel %vm4785, %v4732, %v4817
      %v4850 = vsel %vm4786, %v4735, %v4818
      %v4851 = vsel %vm4787, %v4738, %v4819
      %v4852 = vsel %vm4788, %v4741, %v4820
      %v4853 = vsel %vm4789, %v4744, %v4821
      %v4854 = vsel %vm4790, %v4747, %v4822
      %v4855 = vsel %vm4791, %v4750, %v4823
      %v4856 = vsel %vm4792, %v4753, %v4824
      %v4857 = vsel %vm4793, %v4756, %v4825
      %v4858 = vsel %vm4794, %v4759, %v4826
      %v4859 = vsel %vm4795, %v4762, %v4827
      %4892 = vrot.lane.b32.xlu0 %v4828, 16
      %v4893 = vpop.permute.xlu0 %4892
      %4894 = vrot.lane.b32.xlu0 %v4829, 16
      %v4895 = vpop.permute.xlu0 %4894
      %4896 = vrot.lane.b32.xlu0 %v4830, 16
      %v4897 = vpop.permute.xlu0 %4896
      %4898 = vrot.lane.b32.xlu0 %v4831, 16
      %v4899 = vpop.permute.xlu0 %4898
      %4900 = vrot.lane.b32.xlu0 %v4832, 16
      %v4901 = vpop.permute.xlu0 %4900
      %4902 = vrot.lane.b32.xlu0 %v4833, 16
      %v4903 = vpop.permute.xlu0 %4902
      %4904 = vrot.lane.b32.xlu0 %v4834, 16
      %v4905 = vpop.permute.xlu0 %4904
      %4906 = vrot.lane.b32.xlu0 %v4835, 16
      %v4907 = vpop.permute.xlu0 %4906
      %4908 = vrot.lane.b32.xlu0 %v4836, 16
      %v4909 = vpop.permute.xlu0 %4908
      %4910 = vrot.lane.b32.xlu0 %v4837, 16
      %v4911 = vpop.permute.xlu0 %4910
      %4912 = vrot.lane.b32.xlu0 %v4838, 16
      %v4913 = vpop.permute.xlu0 %4912
      %4914 = vrot.lane.b32.xlu0 %v4839, 16
      %v4915 = vpop.permute.xlu0 %4914
      %4916 = vrot.lane.b32.xlu0 %v4840, 16
      %v4917 = vpop.permute.xlu0 %4916
      %4918 = vrot.lane.b32.xlu0 %v4841, 16
      %v4919 = vpop.permute.xlu0 %4918
      %4920 = vrot.lane.b32.xlu0 %v4842, 16
      %v4921 = vpop.permute.xlu0 %4920
      %4922 = vrot.lane.b32.xlu0 %v4843, 16
      %v4923 = vpop.permute.xlu0 %4922
      %4924 = vrot.lane.b32.xlu0 %v4844, 16
      %v4925 = vpop.permute.xlu0 %4924
      %4926 = vrot.lane.b32.xlu0 %v4845, 16
      %v4927 = vpop.permute.xlu0 %4926
      %4928 = vrot.lane.b32.xlu0 %v4846, 16
      %v4929 = vpop.permute.xlu0 %4928
      %4930 = vrot.lane.b32.xlu0 %v4847, 16
      %v4931 = vpop.permute.xlu0 %4930
      %4932 = vrot.lane.b32.xlu0 %v4848, 16
      %v4933 = vpop.permute.xlu0 %4932
      %4934 = vrot.lane.b32.xlu0 %v4849, 16
      %v4935 = vpop.permute.xlu0 %4934
      %4936 = vrot.lane.b32.xlu0 %v4850, 16
      %v4937 = vpop.permute.xlu0 %4936
      %4938 = vrot.lane.b32.xlu0 %v4851, 16
      %v4939 = vpop.permute.xlu0 %4938
      %4940 = vrot.lane.b32.xlu0 %v4852, 16
      %v4941 = vpop.permute.xlu0 %4940
      %4942 = vrot.lane.b32.xlu0 %v4853, 16
      %v4943 = vpop.permute.xlu0 %4942
      %4944 = vrot.lane.b32.xlu0 %v4854, 16
      %v4945 = vpop.permute.xlu0 %4944
      %4946 = vrot.lane.b32.xlu0 %v4855, 16
      %v4947 = vpop.permute.xlu0 %4946
      %4948 = vrot.lane.b32.xlu0 %v4856, 16
      %v4949 = vpop.permute.xlu0 %4948
      %4950 = vrot.lane.b32.xlu0 %v4857, 16
      %v4951 = vpop.permute.xlu0 %4950
      %4952 = vrot.lane.b32.xlu0 %v4858, 16
      %v4953 = vpop.permute.xlu0 %4952
      %4954 = vrot.lane.b32.xlu0 %v4859, 16
      %v4955 = vpop.permute.xlu0 %4954
      %4988 = vst.msk [vmem:[#allocation4] sm:$0xff] %vm828, %v4893
      %4989 = vst.msk [vmem:[#allocation4 + $0x8] sm:$0xff] %vm828, %v4895
      %4990 = vst.msk [vmem:[#allocation4 + $0x10] sm:$0xff] %vm828, %v4897
      %4991 = vst.msk [vmem:[#allocation4 + $0x18] sm:$0xff] %vm828, %v4899
      %4992 = vst.msk [vmem:[#allocation4 + $0x20] sm:$0xff] %vm828, %v4901
      %4993 = vst.msk [vmem:[#allocation4 + $0x28] sm:$0xff] %vm828, %v4903
      %4994 = vst.msk [vmem:[#allocation4 + $0x30] sm:$0xff] %vm828, %v4905
      %4995 = vst.msk [vmem:[#allocation4 + $0x38] sm:$0xff] %vm828, %v4907
      %4996 = vst.msk [vmem:[#allocation4 + $0x40] sm:$0xff] %vm828, %v4909
      %4997 = vst.msk [vmem:[#allocation4 + $0x48] sm:$0xff] %vm828, %v4911
      %4998 = vst.msk [vmem:[#allocation4 + $0x50] sm:$0xff] %vm828, %v4913
      %4999 = vst.msk [vmem:[#allocation4 + $0x58] sm:$0xff] %vm828, %v4915
      %5000 = vst.msk [vmem:[#allocation4 + $0x60] sm:$0xff] %vm828, %v4917
      %5001 = vst.msk [vmem:[#allocation4 + $0x68] sm:$0xff] %vm828, %v4919
      %5002 = vst.msk [vmem:[#allocation4 + $0x70] sm:$0xff] %vm828, %v4921
      %5003 = vst.msk [vmem:[#allocation4 + $0x78] sm:$0xff] %vm828, %v4923
      %5004 = vst.msk [vmem:[#allocation4 + $0x80] sm:$0xff] %vm828, %v4925
      %5005 = vst.msk [vmem:[#allocation4 + $0x88] sm:$0xff] %vm828, %v4927
      %5006 = vst.msk [vmem:[#allocation4 + $0x90] sm:$0xff] %vm828, %v4929
      %5007 = vst.msk [vmem:[#allocation4 + $0x98] sm:$0xff] %vm828, %v4931
      %5008 = vst.msk [vmem:[#allocation4 + $0xa0] sm:$0xff] %vm828, %v4933
      %5009 = vst.msk [vmem:[#allocation4 + $0xa8] sm:$0xff] %vm828, %v4935
      %5010 = vst.msk [vmem:[#allocation4 + $0xb0] sm:$0xff] %vm828, %v4937
      %5011 = vst.msk [vmem:[#allocation4 + $0xb8] sm:$0xff] %vm828, %v4939
      %5012 = vst.msk [vmem:[#allocation4 + $0xc0] sm:$0xff] %vm828, %v4941
      %5013 = vst.msk [vmem:[#allocation4 + $0xc8] sm:$0xff] %vm828, %v4943
      %5014 = vst.msk [vmem:[#allocation4 + $0xd0] sm:$0xff] %vm828, %v4945
      %5015 = vst.msk [vmem:[#allocation4 + $0xd8] sm:$0xff] %vm828, %v4947
      %5016 = vst.msk [vmem:[#allocation4 + $0xe0] sm:$0xff] %vm828, %v4949
      %5017 = vst.msk [vmem:[#allocation4 + $0xe8] sm:$0xff] %vm828, %v4951
      %5018 = vst.msk [vmem:[#allocation4 + $0xf0] sm:$0xff] %vm828, %v4953
      %5019 = vst.msk [vmem:[#allocation4 + $0xf8] sm:$0xff] %vm828, %v4955
      %v5020 = vld [vmem:[#allocation4] sm:$0xff]
      %v5021 = vld [vmem:[#allocation4 + $0x8] sm:$0xff]
      %v5022 = vld [vmem:[#allocation4 + $0x10] sm:$0xff]
      %v5023 = vld [vmem:[#allocation4 + $0x18] sm:$0xff]
      %v5024 = vld [vmem:[#allocation4 + $0x20] sm:$0xff]
      %v5025 = vld [vmem:[#allocation4 + $0x28] sm:$0xff]
      %v5026 = vld [vmem:[#allocation4 + $0x30] sm:$0xff]
      %v5027 = vld [vmem:[#allocation4 + $0x38] sm:$0xff]
      %v5028 = vld [vmem:[#allocation4 + $0x40] sm:$0xff]
      %v5029 = vld [vmem:[#allocation4 + $0x48] sm:$0xff]
      %v5030 = vld [vmem:[#allocation4 + $0x50] sm:$0xff]
      %v5031 = vld [vmem:[#allocation4 + $0x58] sm:$0xff]
      %v5032 = vld [vmem:[#allocation4 + $0x60] sm:$0xff]
      %v5033 = vld [vmem:[#allocation4 + $0x68] sm:$0xff]
      %v5034 = vld [vmem:[#allocation4 + $0x70] sm:$0xff]
      %v5035 = vld [vmem:[#allocation4 + $0x78] sm:$0xff]
      %v5036 = vld [vmem:[#allocation4 + $0x80] sm:$0xff]
      %v5037 = vld [vmem:[#allocation4 + $0x88] sm:$0xff]
      %v5038 = vld [vmem:[#allocation4 + $0x90] sm:$0xff]
      %v5039 = vld [vmem:[#allocation4 + $0x98] sm:$0xff]
      %v5040 = vld [vmem:[#allocation4 + $0xa0] sm:$0xff]
      %v5041 = vld [vmem:[#allocation4 + $0xa8] sm:$0xff]
      %v5042 = vld [vmem:[#allocation4 + $0xb0] sm:$0xff]
      %v5043 = vld [vmem:[#allocation4 + $0xb8] sm:$0xff]
      %v5044 = vld [vmem:[#allocation4 + $0xc0] sm:$0xff]
      %v5045 = vld [vmem:[#allocation4 + $0xc8] sm:$0xff]
      %v5046 = vld [vmem:[#allocation4 + $0xd0] sm:$0xff]
      %v5047 = vld [vmem:[#allocation4 + $0xd8] sm:$0xff]
      %v5048 = vld [vmem:[#allocation4 + $0xe0] sm:$0xff]
      %v5049 = vld [vmem:[#allocation4 + $0xe8] sm:$0xff]
      %v5050 = vld [vmem:[#allocation4 + $0xf0] sm:$0xff]
      %v5051 = vld [vmem:[#allocation4 + $0xf8] sm:$0xff]
      %s5052 = scalar_lea.vmem %s3, 32
      %v5053 = vld [vmem:[%s5052] sm:$0xff]
      %v5054 = vld [vmem:[%s5052 + $0x8] sm:$0xff]
      %v5055 = vld [vmem:[%s5052 + $0x10] sm:$0xff]
      %v5056 = vld [vmem:[%s5052 + $0x18] sm:$0xff]
      %s5057 = scalar_lea.vmem %s4, 1
      %v5058 = vld [vmem:[%s5057] sm:$0x1]
      %v5060 = vperm.slane %v5058, 0
      %v5063 = vsel %vm281, %v5020, 0
      %v5066 = vsel %vm281, %v5021, 0
      %v5069 = vsel %vm281, %v5022, 0
      %v5072 = vsel %vm281, %v5023, 0
      %v5075 = vsel %vm281, %v5024, 0
      %v5078 = vsel %vm281, %v5025, 0
      %v5081 = vsel %vm281, %v5026, 0
      %v5084 = vsel %vm281, %v5027, 0
      %v5087 = vsel %vm281, %v5028, 0
      %v5090 = vsel %vm281, %v5029, 0
      %v5093 = vsel %vm281, %v5030, 0
      %v5096 = vsel %vm281, %v5031, 0
      %v5099 = vsel %vm281, %v5032, 0
      %v5102 = vsel %vm281, %v5033, 0
      %v5105 = vsel %vm281, %v5034, 0
      %v5108 = vsel %vm281, %v5035, 0
      %v5111 = vsel %vm281, %v5036, 0
      %v5114 = vsel %vm281, %v5037, 0
      %v5117 = vsel %vm281, %v5038, 0
      %v5120 = vsel %vm281, %v5039, 0
      %v5123 = vsel %vm281, %v5040, 0
      %v5126 = vsel %vm281, %v5041, 0
      %v5129 = vsel %vm281, %v5042, 0
      %v5132 = vsel %vm281, %v5043, 0
      %v5135 = vsel %vm281, %v5044, 0
      %v5138 = vsel %vm281, %v5045, 0
      %v5141 = vsel %vm281, %v5046, 0
      %v5144 = vsel %vm281, %v5047, 0
      %v5147 = vsel %vm281, %v5048, 0
      %v5150 = vsel %vm281, %v5049, 0
      %v5153 = vsel %vm281, %v5050, 0
      %v5156 = vsel %vm281, %v5051, 0
      %5158 = vmatpush.msra.mxu0 0.0
      %5159 = vmatpush.msra.mxu0 0.0
      %5160 = vmatpush.msra.mxu0 0.0
      %5161 = vmatpush.msra.mxu0 0.0
      %5162 = vmatpush.msra.mxu0 0.0
      %5163 = vmatpush.msra.mxu0 0.0
      %5164 = vmatpush.msra.mxu0 0.0
      %5165 = vmatpush.msra.mxu0 0.0
      %5166 = vmatpush.msra.mxu0 0.0
      %5167 = vmatpush.msra.mxu0 0.0
      %5168 = vmatpush.msra.mxu0 0.0
      %5169 = vmatpush.msra.mxu0 0.0
      %5170 = vmatpush.msra.mxu0 %v5056
      %5171 = vmatpush.msra.mxu0 %v5055
      %5172 = vmatpush.msra.mxu0 %v5054
      %5173 = vmatpush.msra.mxu0 %v5053
      %5174 = vmatmul.f32.gmra.mxu0 %v5063
      %v5175 = vpop.f32.mrf.mxu0
      %v5176 = vadd.f32 %v5060, %v5175
      %5177 = vmatmul.f32.gmra.mxu0 %v5066
      %v5178 = vpop.f32.mrf.mxu0
      %v5179 = vadd.f32 %v5060, %v5178
      %5180 = vmatmul.f32.gmra.mxu0 %v5069
      %v5181 = vpop.f32.mrf.mxu0
      %v5182 = vadd.f32 %v5060, %v5181
      %5183 = vmatmul.f32.gmra.mxu0 %v5072
      %v5184 = vpop.f32.mrf.mxu0
      %v5185 = vadd.f32 %v5060, %v5184
      %5186 = vmatmul.f32.gmra.mxu0 %v5075
      %v5187 = vpop.f32.mrf.mxu0
      %v5188 = vadd.f32 %v5060, %v5187
      %5189 = vmatmul.f32.gmra.mxu0 %v5078
      %v5190 = vpop.f32.mrf.mxu0
      %v5191 = vadd.f32 %v5060, %v5190
      %5192 = vmatmul.f32.gmra.mxu0 %v5081
      %v5193 = vpop.f32.mrf.mxu0
      %v5194 = vadd.f32 %v5060, %v5193
      %5195 = vmatmul.f32.gmra.mxu0 %v5084
      %v5196 = vpop.f32.mrf.mxu0
      %v5197 = vadd.f32 %v5060, %v5196
      %5198 = vmatmul.f32.gmra.mxu0 %v5087
      %v5199 = vpop.f32.mrf.mxu0
      %v5200 = vadd.f32 %v5060, %v5199
      %5201 = vmatmul.f32.gmra.mxu0 %v5090
      %v5202 = vpop.f32.mrf.mxu0
      %v5203 = vadd.f32 %v5060, %v5202
      %5204 = vmatmul.f32.gmra.mxu0 %v5093
      %v5205 = vpop.f32.mrf.mxu0
      %v5206 = vadd.f32 %v5060, %v5205
      %5207 = vmatmul.f32.gmra.mxu0 %v5096
      %v5208 = vpop.f32.mrf.mxu0
      %v5209 = vadd.f32 %v5060, %v5208
      %5210 = vmatmul.f32.gmra.mxu0 %v5099
      %v5211 = vpop.f32.mrf.mxu0
      %v5212 = vadd.f32 %v5060, %v5211
      %5213 = vmatmul.f32.gmra.mxu0 %v5102
      %v5214 = vpop.f32.mrf.mxu0
      %v5215 = vadd.f32 %v5060, %v5214
      %5216 = vmatmul.f32.gmra.mxu0 %v5105
      %v5217 = vpop.f32.mrf.mxu0
      %v5218 = vadd.f32 %v5060, %v5217
      %5219 = vmatmul.f32.gmra.mxu0 %v5108
      %v5220 = vpop.f32.mrf.mxu0
      %v5221 = vadd.f32 %v5060, %v5220
      %5222 = vmatmul.f32.gmra.mxu0 %v5111
      %v5223 = vpop.f32.mrf.mxu0
      %v5224 = vadd.f32 %v5060, %v5223
      %5225 = vmatmul.f32.gmra.mxu0 %v5114
      %v5226 = vpop.f32.mrf.mxu0
      %v5227 = vadd.f32 %v5060, %v5226
      %5228 = vmatmul.f32.gmra.mxu0 %v5117
      %v5229 = vpop.f32.mrf.mxu0
      %v5230 = vadd.f32 %v5060, %v5229
      %5231 = vmatmul.f32.gmra.mxu0 %v5120
      %v5232 = vpop.f32.mrf.mxu0
      %v5233 = vadd.f32 %v5060, %v5232
      %5234 = vmatmul.f32.gmra.mxu0 %v5123
      %v5235 = vpop.f32.mrf.mxu0
      %v5236 = vadd.f32 %v5060, %v5235
      %5237 = vmatmul.f32.gmra.mxu0 %v5126
      %v5238 = vpop.f32.mrf.mxu0
      %v5239 = vadd.f32 %v5060, %v5238
      %5240 = vmatmul.f32.gmra.mxu0 %v5129
      %v5241 = vpop.f32.mrf.mxu0
      %v5242 = vadd.f32 %v5060, %v5241
      %5243 = vmatmul.f32.gmra.mxu0 %v5132
      %v5244 = vpop.f32.mrf.mxu0
      %v5245 = vadd.f32 %v5060, %v5244
      %5246 = vmatmul.f32.gmra.mxu0 %v5135
      %v5247 = vpop.f32.mrf.mxu0
      %v5248 = vadd.f32 %v5060, %v5247
      %5249 = vmatmul.f32.gmra.mxu0 %v5138
      %v5250 = vpop.f32.mrf.mxu0
      %v5251 = vadd.f32 %v5060, %v5250
      %5252 = vmatmul.f32.gmra.mxu0 %v5141
      %v5253 = vpop.f32.mrf.mxu0
      %v5254 = vadd.f32 %v5060, %v5253
      %5255 = vmatmul.f32.gmra.mxu0 %v5144
      %v5256 = vpop.f32.mrf.mxu0
      %v5257 = vadd.f32 %v5060, %v5256
      %5258 = vmatmul.f32.gmra.mxu0 %v5147
      %v5259 = vpop.f32.mrf.mxu0
      %v5260 = vadd.f32 %v5060, %v5259
      %5261 = vmatmul.f32.gmra.mxu0 %v5150
      %v5262 = vpop.f32.mrf.mxu0
      %v5263 = vadd.f32 %v5060, %v5262
      %5264 = vmatmul.f32.gmra.mxu0 %v5153
      %v5265 = vpop.f32.mrf.mxu0
      %v5266 = vadd.f32 %v5060, %v5265
      %5267 = vmatmul.f32.gmra.mxu0 %v5156
      %v5268 = vpop.f32.mrf.mxu0
      %v5269 = vadd.f32 %v5060, %v5268
      %5270 = vdwg.mxu0
      %vm5271 = vcmp.gt.f32.partialorder %v5176, 0.0
      %vm5272 = vcmp.gt.f32.partialorder %v5179, 0.0
      %vm5273 = vcmp.gt.f32.partialorder %v5182, 0.0
      %vm5274 = vcmp.gt.f32.partialorder %v5185, 0.0
      %vm5275 = vcmp.gt.f32.partialorder %v5188, 0.0
      %vm5276 = vcmp.gt.f32.partialorder %v5191, 0.0
      %vm5277 = vcmp.gt.f32.partialorder %v5194, 0.0
      %vm5278 = vcmp.gt.f32.partialorder %v5197, 0.0
      %vm5279 = vcmp.gt.f32.partialorder %v5200, 0.0
      %vm5280 = vcmp.gt.f32.partialorder %v5203, 0.0
      %vm5281 = vcmp.gt.f32.partialorder %v5206, 0.0
      %vm5282 = vcmp.gt.f32.partialorder %v5209, 0.0
      %vm5283 = vcmp.gt.f32.partialorder %v5212, 0.0
      %vm5284 = vcmp.gt.f32.partialorder %v5215, 0.0
      %vm5285 = vcmp.gt.f32.partialorder %v5218, 0.0
      %vm5286 = vcmp.gt.f32.partialorder %v5221, 0.0
      %vm5287 = vcmp.gt.f32.partialorder %v5224, 0.0
      %vm5288 = vcmp.gt.f32.partialorder %v5227, 0.0
      %vm5289 = vcmp.gt.f32.partialorder %v5230, 0.0
      %vm5290 = vcmp.gt.f32.partialorder %v5233, 0.0
      %vm5291 = vcmp.gt.f32.partialorder %v5236, 0.0
      %vm5292 = vcmp.gt.f32.partialorder %v5239, 0.0
      %vm5293 = vcmp.gt.f32.partialorder %v5242, 0.0
      %vm5294 = vcmp.gt.f32.partialorder %v5245, 0.0
      %vm5295 = vcmp.gt.f32.partialorder %v5248, 0.0
      %vm5296 = vcmp.gt.f32.partialorder %v5251, 0.0
      %vm5297 = vcmp.gt.f32.partialorder %v5254, 0.0
      %vm5298 = vcmp.gt.f32.partialorder %v5257, 0.0
      %vm5299 = vcmp.gt.f32.partialorder %v5260, 0.0
      %vm5300 = vcmp.gt.f32.partialorder %v5263, 0.0
      %vm5301 = vcmp.gt.f32.partialorder %v5266, 0.0
      %vm5302 = vcmp.gt.f32.partialorder %v5269, 0.0
      %v5303 = vmul.f32 %v5176, 0.2
      %v5304 = vmul.f32 %v5179, 0.2
      %v5305 = vmul.f32 %v5182, 0.2
      %v5306 = vmul.f32 %v5185, 0.2
      %v5307 = vmul.f32 %v5188, 0.2
      %v5308 = vmul.f32 %v5191, 0.2
      %v5309 = vmul.f32 %v5194, 0.2
      %v5310 = vmul.f32 %v5197, 0.2
      %v5311 = vmul.f32 %v5200, 0.2
      %v5312 = vmul.f32 %v5203, 0.2
      %v5313 = vmul.f32 %v5206, 0.2
      %v5314 = vmul.f32 %v5209, 0.2
      %v5315 = vmul.f32 %v5212, 0.2
      %v5316 = vmul.f32 %v5215, 0.2
      %v5317 = vmul.f32 %v5218, 0.2
      %v5318 = vmul.f32 %v5221, 0.2
      %v5319 = vmul.f32 %v5224, 0.2
      %v5320 = vmul.f32 %v5227, 0.2
      %v5321 = vmul.f32 %v5230, 0.2
      %v5322 = vmul.f32 %v5233, 0.2
      %v5323 = vmul.f32 %v5236, 0.2
      %v5324 = vmul.f32 %v5239, 0.2
      %v5325 = vmul.f32 %v5242, 0.2
      %v5326 = vmul.f32 %v5245, 0.2
      %v5327 = vmul.f32 %v5248, 0.2
      %v5328 = vmul.f32 %v5251, 0.2
      %v5329 = vmul.f32 %v5254, 0.2
      %v5330 = vmul.f32 %v5257, 0.2
      %v5331 = vmul.f32 %v5260, 0.2
      %v5332 = vmul.f32 %v5263, 0.2
      %v5333 = vmul.f32 %v5266, 0.2
      %v5334 = vmul.f32 %v5269, 0.2
      %v5335 = vsel %vm5271, %v5176, %v5303
      %v5336 = vsel %vm5272, %v5179, %v5304
      %v5337 = vsel %vm5273, %v5182, %v5305
      %v5338 = vsel %vm5274, %v5185, %v5306
      %v5339 = vsel %vm5275, %v5188, %v5307
      %v5340 = vsel %vm5276, %v5191, %v5308
      %v5341 = vsel %vm5277, %v5194, %v5309
      %v5342 = vsel %vm5278, %v5197, %v5310
      %v5343 = vsel %vm5279, %v5200, %v5311
      %v5344 = vsel %vm5280, %v5203, %v5312
      %v5345 = vsel %vm5281, %v5206, %v5313
      %v5346 = vsel %vm5282, %v5209, %v5314
      %v5347 = vsel %vm5283, %v5212, %v5315
      %v5348 = vsel %vm5284, %v5215, %v5316
      %v5349 = vsel %vm5285, %v5218, %v5317
      %v5350 = vsel %vm5286, %v5221, %v5318
      %v5351 = vsel %vm5287, %v5224, %v5319
      %v5352 = vsel %vm5288, %v5227, %v5320
      %v5353 = vsel %vm5289, %v5230, %v5321
      %v5354 = vsel %vm5290, %v5233, %v5322
      %v5355 = vsel %vm5291, %v5236, %v5323
      %v5356 = vsel %vm5292, %v5239, %v5324
      %v5357 = vsel %vm5293, %v5242, %v5325
      %v5358 = vsel %vm5294, %v5245, %v5326
      %v5359 = vsel %vm5295, %v5248, %v5327
      %v5360 = vsel %vm5296, %v5251, %v5328
      %v5361 = vsel %vm5297, %v5254, %v5329
      %v5362 = vsel %vm5298, %v5257, %v5330
      %v5363 = vsel %vm5299, %v5260, %v5331
      %v5364 = vsel %vm5300, %v5263, %v5332
      %v5365 = vsel %vm5301, %v5266, %v5333
      %v5366 = vsel %vm5302, %v5269, %v5334
      %5367 = vst.msk [vmem:[%s378 + $0x1] sm:$0xff] %vm225, %v5335
      %5368 = vst.msk [vmem:[%s378 + $0x9] sm:$0xff] %vm225, %v5336
      %5369 = vst.msk [vmem:[%s378 + $0x19] sm:$0xff] %vm225, %v5337
      %5370 = vst.msk [vmem:[%s378 + $0x21] sm:$0xff] %vm225, %v5338
      %5371 = vst.msk [vmem:[%s378 + $0x31] sm:$0xff] %vm225, %v5339
      %5372 = vst.msk [vmem:[%s378 + $0x39] sm:$0xff] %vm225, %v5340
      %5373 = vst.msk [vmem:[%s378 + $0x49] sm:$0xff] %vm225, %v5341
      %5374 = vst.msk [vmem:[%s378 + $0x51] sm:$0xff] %vm225, %v5342
      %5375 = vst.msk [vmem:[%s378 + $0x61] sm:$0xff] %vm225, %v5343
      %5376 = vst.msk [vmem:[%s378 + $0x69] sm:$0xff] %vm225, %v5344
      %5377 = vst.msk [vmem:[%s378 + $0x79] sm:$0xff] %vm225, %v5345
      %5378 = vst.msk [vmem:[%s378 + $0x81] sm:$0xff] %vm225, %v5346
      %5379 = vst.msk [vmem:[%s378 + $0x91] sm:$0xff] %vm225, %v5347
      %5380 = vst.msk [vmem:[%s378 + $0x99] sm:$0xff] %vm225, %v5348
      %5381 = vst.msk [vmem:[%s378 + $0xa9] sm:$0xff] %vm225, %v5349
      %5382 = vst.msk [vmem:[%s378 + $0xb1] sm:$0xff] %vm225, %v5350
      %5383 = vst.msk [vmem:[%s378 + $0xc1] sm:$0xff] %vm225, %v5351
      %5384 = vst.msk [vmem:[%s378 + $0xc9] sm:$0xff] %vm225, %v5352
      %5385 = vst.msk [vmem:[%s378 + $0xd9] sm:$0xff] %vm225, %v5353
      %5386 = vst.msk [vmem:[%s378 + $0xe1] sm:$0xff] %vm225, %v5354
      %5387 = vst.msk [vmem:[%s378 + $0xf1] sm:$0xff] %vm225, %v5355
      %5388 = vst.msk [vmem:[%s378 + $0xf9] sm:$0xff] %vm225, %v5356
      %5389 = vst.msk [vmem:[%s378 + $0x109] sm:$0xff] %vm225, %v5357
      %5390 = vst.msk [vmem:[%s378 + $0x111] sm:$0xff] %vm225, %v5358
      %5391 = vst.msk [vmem:[%s378 + $0x121] sm:$0xff] %vm225, %v5359
      %5392 = vst.msk [vmem:[%s378 + $0x129] sm:$0xff] %vm225, %v5360
      %5393 = vst.msk [vmem:[%s378 + $0x139] sm:$0xff] %vm225, %v5361
      %5394 = vst.msk [vmem:[%s378 + $0x141] sm:$0xff] %vm225, %v5362
      %5395 = vst.msk [vmem:[%s378 + $0x151] sm:$0xff] %vm225, %v5363
      %5396 = vst.msk [vmem:[%s378 + $0x159] sm:$0xff] %vm225, %v5364
      %5397 = vst.msk [vmem:[%s378 + $0x169] sm:$0xff] %vm225, %v5365
      %5398 = vst.msk [vmem:[%s378 + $0x171] sm:$0xff] %vm225, %v5366
      %v5399 = vld [vmem:[#allocation2] sm:$0xff]
      %v5400 = vld [vmem:[#allocation2 + $0x8] sm:$0xff]
      %v5401 = vld [vmem:[#allocation2 + $0x18] sm:$0xff]
      %v5402 = vld [vmem:[#allocation2 + $0x20] sm:$0xff]
      %v5403 = vld [vmem:[#allocation2 + $0x30] sm:$0xff]
      %v5404 = vld [vmem:[#allocation2 + $0x38] sm:$0xff]
      %v5405 = vld [vmem:[#allocation2 + $0x48] sm:$0xff]
      %v5406 = vld [vmem:[#allocation2 + $0x50] sm:$0xff]
      %v5407 = vld [vmem:[#allocation2 + $0x60] sm:$0xff]
      %v5408 = vld [vmem:[#allocation2 + $0x68] sm:$0xff]
      %v5409 = vld [vmem:[#allocation2 + $0x78] sm:$0xff]
      %v5410 = vld [vmem:[#allocation2 + $0x80] sm:$0xff]
      %v5411 = vld [vmem:[#allocation2 + $0x90] sm:$0xff]
      %v5412 = vld [vmem:[#allocation2 + $0x98] sm:$0xff]
      %v5413 = vld [vmem:[#allocation2 + $0xa8] sm:$0xff]
      %v5414 = vld [vmem:[#allocation2 + $0xb0] sm:$0xff]
      %v5415 = vld [vmem:[#allocation2 + $0xc0] sm:$0xff]
      %v5416 = vld [vmem:[#allocation2 + $0xc8] sm:$0xff]
      %v5417 = vld [vmem:[#allocation2 + $0xd8] sm:$0xff]
      %v5418 = vld [vmem:[#allocation2 + $0xe0] sm:$0xff]
      %v5419 = vld [vmem:[#allocation2 + $0xf0] sm:$0xff]
      %v5420 = vld [vmem:[#allocation2 + $0xf8] sm:$0xff]
      %v5421 = vld [vmem:[#allocation2 + $0x108] sm:$0xff]
      %v5422 = vld [vmem:[#allocation2 + $0x110] sm:$0xff]
      %v5423 = vld [vmem:[#allocation2 + $0x120] sm:$0xff]
      %v5424 = vld [vmem:[#allocation2 + $0x128] sm:$0xff]
      %v5425 = vld [vmem:[#allocation2 + $0x138] sm:$0xff]
      %v5426 = vld [vmem:[#allocation2 + $0x140] sm:$0xff]
      %v5427 = vld [vmem:[#allocation2 + $0x150] sm:$0xff]
      %v5428 = vld [vmem:[#allocation2 + $0x158] sm:$0xff]
      %v5429 = vld [vmem:[#allocation2 + $0x168] sm:$0xff]
      %v5430 = vld [vmem:[#allocation2 + $0x170] sm:$0xff]
      %5431 = vst.msk [vmem:[#allocation3] sm:$0xff] %vm225, %v5399
      %5432 = vst.msk [vmem:[#allocation3 + $0x8] sm:$0xff] %vm225, %v5400
      %5433 = vst.msk [vmem:[#allocation3 + $0x10] sm:$0xff] %vm225, %v5401
      %5434 = vst.msk [vmem:[#allocation3 + $0x18] sm:$0xff] %vm225, %v5402
      %5435 = vst.msk [vmem:[#allocation3 + $0x20] sm:$0xff] %vm225, %v5403
      %5436 = vst.msk [vmem:[#allocation3 + $0x28] sm:$0xff] %vm225, %v5404
      %5437 = vst.msk [vmem:[#allocation3 + $0x30] sm:$0xff] %vm225, %v5405
      %5438 = vst.msk [vmem:[#allocation3 + $0x38] sm:$0xff] %vm225, %v5406
      %5439 = vst.msk [vmem:[#allocation3 + $0x40] sm:$0xff] %vm225, %v5407
      %5440 = vst.msk [vmem:[#allocation3 + $0x48] sm:$0xff] %vm225, %v5408
      %5441 = vst.msk [vmem:[#allocation3 + $0x50] sm:$0xff] %vm225, %v5409
      %5442 = vst.msk [vmem:[#allocation3 + $0x58] sm:$0xff] %vm225, %v5410
      %5443 = vst.msk [vmem:[#allocation3 + $0x60] sm:$0xff] %vm225, %v5411
      %5444 = vst.msk [vmem:[#allocation3 + $0x68] sm:$0xff] %vm225, %v5412
      %5445 = vst.msk [vmem:[#allocation3 + $0x70] sm:$0xff] %vm225, %v5413
      %5446 = vst.msk [vmem:[#allocation3 + $0x78] sm:$0xff] %vm225, %v5414
      %5447 = vst.msk [vmem:[#allocation3 + $0x80] sm:$0xff] %vm225, %v5415
      %5448 = vst.msk [vmem:[#allocation3 + $0x88] sm:$0xff] %vm225, %v5416
      %5449 = vst.msk [vmem:[#allocation3 + $0x90] sm:$0xff] %vm225, %v5417
      %5450 = vst.msk [vmem:[#allocation3 + $0x98] sm:$0xff] %vm225, %v5418
      %5451 = vst.msk [vmem:[#allocation3 + $0xa0] sm:$0xff] %vm225, %v5419
      %5452 = vst.msk [vmem:[#allocation3 + $0xa8] sm:$0xff] %vm225, %v5420
      %5453 = vst.msk [vmem:[#allocation3 + $0xb0] sm:$0xff] %vm225, %v5421
      %5454 = vst.msk [vmem:[#allocation3 + $0xb8] sm:$0xff] %vm225, %v5422
      %5455 = vst.msk [vmem:[#allocation3 + $0xc0] sm:$0xff] %vm225, %v5423
      %5456 = vst.msk [vmem:[#allocation3 + $0xc8] sm:$0xff] %vm225, %v5424
      %5457 = vst.msk [vmem:[#allocation3 + $0xd0] sm:$0xff] %vm225, %v5425
      %5458 = vst.msk [vmem:[#allocation3 + $0xd8] sm:$0xff] %vm225, %v5426
      %5459 = vst.msk [vmem:[#allocation3 + $0xe0] sm:$0xff] %vm225, %v5427
      %5460 = vst.msk [vmem:[#allocation3 + $0xe8] sm:$0xff] %vm225, %v5428
      %5461 = vst.msk [vmem:[#allocation3 + $0xf0] sm:$0xff] %vm225, %v5429
      %5462 = vst.msk [vmem:[#allocation3 + $0xf8] sm:$0xff] %vm225, %v5430
      %v5463 = vld [vmem:[#allocation2 + $0x1] sm:$0xff]
      %v5464 = vld [vmem:[#allocation2 + $0x9] sm:$0xff]
      %v5465 = vld [vmem:[#allocation2 + $0x19] sm:$0xff]
      %v5466 = vld [vmem:[#allocation2 + $0x21] sm:$0xff]
      %v5467 = vld [vmem:[#allocation2 + $0x31] sm:$0xff]
      %v5468 = vld [vmem:[#allocation2 + $0x39] sm:$0xff]
      %v5469 = vld [vmem:[#allocation2 + $0x49] sm:$0xff]
      %v5470 = vld [vmem:[#allocation2 + $0x51] sm:$0xff]
      %v5471 = vld [vmem:[#allocation2 + $0x61] sm:$0xff]
      %v5472 = vld [vmem:[#allocation2 + $0x69] sm:$0xff]
      %v5473 = vld [vmem:[#allocation2 + $0x79] sm:$0xff]
      %v5474 = vld [vmem:[#allocation2 + $0x81] sm:$0xff]
      %v5475 = vld [vmem:[#allocation2 + $0x91] sm:$0xff]
      %v5476 = vld [vmem:[#allocation2 + $0x99] sm:$0xff]
      %v5477 = vld [vmem:[#allocation2 + $0xa9] sm:$0xff]
      %v5478 = vld [vmem:[#allocation2 + $0xb1] sm:$0xff]
      %v5479 = vld [vmem:[#allocation2 + $0xc1] sm:$0xff]
      %v5480 = vld [vmem:[#allocation2 + $0xc9] sm:$0xff]
      %v5481 = vld [vmem:[#allocation2 + $0xd9] sm:$0xff]
      %v5482 = vld [vmem:[#allocation2 + $0xe1] sm:$0xff]
      %v5483 = vld [vmem:[#allocation2 + $0xf1] sm:$0xff]
      %v5484 = vld [vmem:[#allocation2 + $0xf9] sm:$0xff]
      %v5485 = vld [vmem:[#allocation2 + $0x109] sm:$0xff]
      %v5486 = vld [vmem:[#allocation2 + $0x111] sm:$0xff]
      %v5487 = vld [vmem:[#allocation2 + $0x121] sm:$0xff]
      %v5488 = vld [vmem:[#allocation2 + $0x129] sm:$0xff]
      %v5489 = vld [vmem:[#allocation2 + $0x139] sm:$0xff]
      %v5490 = vld [vmem:[#allocation2 + $0x141] sm:$0xff]
      %v5491 = vld [vmem:[#allocation2 + $0x151] sm:$0xff]
      %v5492 = vld [vmem:[#allocation2 + $0x159] sm:$0xff]
      %v5493 = vld [vmem:[#allocation2 + $0x169] sm:$0xff]
      %v5494 = vld [vmem:[#allocation2 + $0x171] sm:$0xff]
      %5527 = vrot.lane.b32.xlu0 %v5463, 8
      %v5528 = vpop.permute.xlu0 %5527
      %5529 = vrot.lane.b32.xlu0 %v5464, 8
      %v5530 = vpop.permute.xlu0 %5529
      %5531 = vrot.lane.b32.xlu0 %v5465, 8
      %v5532 = vpop.permute.xlu0 %5531
      %5533 = vrot.lane.b32.xlu0 %v5466, 8
      %v5534 = vpop.permute.xlu0 %5533
      %5535 = vrot.lane.b32.xlu0 %v5467, 8
      %v5536 = vpop.permute.xlu0 %5535
      %5537 = vrot.lane.b32.xlu0 %v5468, 8
      %v5538 = vpop.permute.xlu0 %5537
      %5539 = vrot.lane.b32.xlu0 %v5469, 8
      %v5540 = vpop.permute.xlu0 %5539
      %5541 = vrot.lane.b32.xlu0 %v5470, 8
      %v5542 = vpop.permute.xlu0 %5541
      %5543 = vrot.lane.b32.xlu0 %v5471, 8
      %v5544 = vpop.permute.xlu0 %5543
      %5545 = vrot.lane.b32.xlu0 %v5472, 8
      %v5546 = vpop.permute.xlu0 %5545
      %5547 = vrot.lane.b32.xlu0 %v5473, 8
      %v5548 = vpop.permute.xlu0 %5547
      %5549 = vrot.lane.b32.xlu0 %v5474, 8
      %v5550 = vpop.permute.xlu0 %5549
      %5551 = vrot.lane.b32.xlu0 %v5475, 8
      %v5552 = vpop.permute.xlu0 %5551
      %5553 = vrot.lane.b32.xlu0 %v5476, 8
      %v5554 = vpop.permute.xlu0 %5553
      %5555 = vrot.lane.b32.xlu0 %v5477, 8
      %v5556 = vpop.permute.xlu0 %5555
      %5557 = vrot.lane.b32.xlu0 %v5478, 8
      %v5558 = vpop.permute.xlu0 %5557
      %5559 = vrot.lane.b32.xlu0 %v5479, 8
      %v5560 = vpop.permute.xlu0 %5559
      %5561 = vrot.lane.b32.xlu0 %v5480, 8
      %v5562 = vpop.permute.xlu0 %5561
      %5563 = vrot.lane.b32.xlu0 %v5481, 8
      %v5564 = vpop.permute.xlu0 %5563
      %5565 = vrot.lane.b32.xlu0 %v5482, 8
      %v5566 = vpop.permute.xlu0 %5565
      %5567 = vrot.lane.b32.xlu0 %v5483, 8
      %v5568 = vpop.permute.xlu0 %5567
      %5569 = vrot.lane.b32.xlu0 %v5484, 8
      %v5570 = vpop.permute.xlu0 %5569
      %5571 = vrot.lane.b32.xlu0 %v5485, 8
      %v5572 = vpop.permute.xlu0 %5571
      %5573 = vrot.lane.b32.xlu0 %v5486, 8
      %v5574 = vpop.permute.xlu0 %5573
      %5575 = vrot.lane.b32.xlu0 %v5487, 8
      %v5576 = vpop.permute.xlu0 %5575
      %5577 = vrot.lane.b32.xlu0 %v5488, 8
      %v5578 = vpop.permute.xlu0 %5577
      %5579 = vrot.lane.b32.xlu0 %v5489, 8
      %v5580 = vpop.permute.xlu0 %5579
      %5581 = vrot.lane.b32.xlu0 %v5490, 8
      %v5582 = vpop.permute.xlu0 %5581
      %5583 = vrot.lane.b32.xlu0 %v5491, 8
      %v5584 = vpop.permute.xlu0 %5583
      %5585 = vrot.lane.b32.xlu0 %v5492, 8
      %v5586 = vpop.permute.xlu0 %5585
      %5587 = vrot.lane.b32.xlu0 %v5493, 8
      %v5588 = vpop.permute.xlu0 %5587
      %5589 = vrot.lane.b32.xlu0 %v5494, 8
      %v5590 = vpop.permute.xlu0 %5589
      %5623 = vst.msk [vmem:[#allocation3] sm:$0xff] %vm635, %v5528
      %5624 = vst.msk [vmem:[#allocation3 + $0x8] sm:$0xff] %vm635, %v5530
      %5625 = vst.msk [vmem:[#allocation3 + $0x10] sm:$0xff] %vm635, %v5532
      %5626 = vst.msk [vmem:[#allocation3 + $0x18] sm:$0xff] %vm635, %v5534
      %5627 = vst.msk [vmem:[#allocation3 + $0x20] sm:$0xff] %vm635, %v5536
      %5628 = vst.msk [vmem:[#allocation3 + $0x28] sm:$0xff] %vm635, %v5538
      %5629 = vst.msk [vmem:[#allocation3 + $0x30] sm:$0xff] %vm635, %v5540
      %5630 = vst.msk [vmem:[#allocation3 + $0x38] sm:$0xff] %vm635, %v5542
      %5631 = vst.msk [vmem:[#allocation3 + $0x40] sm:$0xff] %vm635, %v5544
      %5632 = vst.msk [vmem:[#allocation3 + $0x48] sm:$0xff] %vm635, %v5546
      %5633 = vst.msk [vmem:[#allocation3 + $0x50] sm:$0xff] %vm635, %v5548
      %5634 = vst.msk [vmem:[#allocation3 + $0x58] sm:$0xff] %vm635, %v5550
      %5635 = vst.msk [vmem:[#allocation3 + $0x60] sm:$0xff] %vm635, %v5552
      %5636 = vst.msk [vmem:[#allocation3 + $0x68] sm:$0xff] %vm635, %v5554
      %5637 = vst.msk [vmem:[#allocation3 + $0x70] sm:$0xff] %vm635, %v5556
      %5638 = vst.msk [vmem:[#allocation3 + $0x78] sm:$0xff] %vm635, %v5558
      %5639 = vst.msk [vmem:[#allocation3 + $0x80] sm:$0xff] %vm635, %v5560
      %5640 = vst.msk [vmem:[#allocation3 + $0x88] sm:$0xff] %vm635, %v5562
      %5641 = vst.msk [vmem:[#allocation3 + $0x90] sm:$0xff] %vm635, %v5564
      %5642 = vst.msk [vmem:[#allocation3 + $0x98] sm:$0xff] %vm635, %v5566
      %5643 = vst.msk [vmem:[#allocation3 + $0xa0] sm:$0xff] %vm635, %v5568
      %5644 = vst.msk [vmem:[#allocation3 + $0xa8] sm:$0xff] %vm635, %v5570
      %5645 = vst.msk [vmem:[#allocation3 + $0xb0] sm:$0xff] %vm635, %v5572
      %5646 = vst.msk [vmem:[#allocation3 + $0xb8] sm:$0xff] %vm635, %v5574
      %5647 = vst.msk [vmem:[#allocation3 + $0xc0] sm:$0xff] %vm635, %v5576
      %5648 = vst.msk [vmem:[#allocation3 + $0xc8] sm:$0xff] %vm635, %v5578
      %5649 = vst.msk [vmem:[#allocation3 + $0xd0] sm:$0xff] %vm635, %v5580
      %5650 = vst.msk [vmem:[#allocation3 + $0xd8] sm:$0xff] %vm635, %v5582
      %5651 = vst.msk [vmem:[#allocation3 + $0xe0] sm:$0xff] %vm635, %v5584
      %5652 = vst.msk [vmem:[#allocation3 + $0xe8] sm:$0xff] %vm635, %v5586
      %5653 = vst.msk [vmem:[#allocation3 + $0xf0] sm:$0xff] %vm635, %v5588
      %5654 = vst.msk [vmem:[#allocation3 + $0xf8] sm:$0xff] %vm635, %v5590
      %v5655 = vld [vmem:[#allocation2 + $0x2] sm:$0xff]
      %v5656 = vld [vmem:[#allocation2 + $0xa] sm:$0xff]
      %v5657 = vld [vmem:[#allocation2 + $0x1a] sm:$0xff]
      %v5658 = vld [vmem:[#allocation2 + $0x22] sm:$0xff]
      %v5659 = vld [vmem:[#allocation2 + $0x32] sm:$0xff]
      %v5660 = vld [vmem:[#allocation2 + $0x3a] sm:$0xff]
      %v5661 = vld [vmem:[#allocation2 + $0x4a] sm:$0xff]
      %v5662 = vld [vmem:[#allocation2 + $0x52] sm:$0xff]
      %v5663 = vld [vmem:[#allocation2 + $0x62] sm:$0xff]
      %v5664 = vld [vmem:[#allocation2 + $0x6a] sm:$0xff]
      %v5665 = vld [vmem:[#allocation2 + $0x7a] sm:$0xff]
      %v5666 = vld [vmem:[#allocation2 + $0x82] sm:$0xff]
      %v5667 = vld [vmem:[#allocation2 + $0x92] sm:$0xff]
      %v5668 = vld [vmem:[#allocation2 + $0x9a] sm:$0xff]
      %v5669 = vld [vmem:[#allocation2 + $0xaa] sm:$0xff]
      %v5670 = vld [vmem:[#allocation2 + $0xb2] sm:$0xff]
      %v5671 = vld [vmem:[#allocation2 + $0xc2] sm:$0xff]
      %v5672 = vld [vmem:[#allocation2 + $0xca] sm:$0xff]
      %v5673 = vld [vmem:[#allocation2 + $0xda] sm:$0xff]
      %v5674 = vld [vmem:[#allocation2 + $0xe2] sm:$0xff]
      %v5675 = vld [vmem:[#allocation2 + $0xf2] sm:$0xff]
      %v5676 = vld [vmem:[#allocation2 + $0xfa] sm:$0xff]
      %v5677 = vld [vmem:[#allocation2 + $0x10a] sm:$0xff]
      %v5678 = vld [vmem:[#allocation2 + $0x112] sm:$0xff]
      %v5679 = vld [vmem:[#allocation2 + $0x122] sm:$0xff]
      %v5680 = vld [vmem:[#allocation2 + $0x12a] sm:$0xff]
      %v5681 = vld [vmem:[#allocation2 + $0x13a] sm:$0xff]
      %v5682 = vld [vmem:[#allocation2 + $0x142] sm:$0xff]
      %v5683 = vld [vmem:[#allocation2 + $0x152] sm:$0xff]
      %v5684 = vld [vmem:[#allocation2 + $0x15a] sm:$0xff]
      %v5685 = vld [vmem:[#allocation2 + $0x16a] sm:$0xff]
      %v5686 = vld [vmem:[#allocation2 + $0x172] sm:$0xff]
      %5719 = vrot.lane.b32.xlu0 %v5655, 16
      %v5720 = vpop.permute.xlu0 %5719
      %5721 = vrot.lane.b32.xlu0 %v5656, 16
      %v5722 = vpop.permute.xlu0 %5721
      %5723 = vrot.lane.b32.xlu0 %v5657, 16
      %v5724 = vpop.permute.xlu0 %5723
      %5725 = vrot.lane.b32.xlu0 %v5658, 16
      %v5726 = vpop.permute.xlu0 %5725
      %5727 = vrot.lane.b32.xlu0 %v5659, 16
      %v5728 = vpop.permute.xlu0 %5727
      %5729 = vrot.lane.b32.xlu0 %v5660, 16
      %v5730 = vpop.permute.xlu0 %5729
      %5731 = vrot.lane.b32.xlu0 %v5661, 16
      %v5732 = vpop.permute.xlu0 %5731
      %5733 = vrot.lane.b32.xlu0 %v5662, 16
      %v5734 = vpop.permute.xlu0 %5733
      %5735 = vrot.lane.b32.xlu0 %v5663, 16
      %v5736 = vpop.permute.xlu0 %5735
      %5737 = vrot.lane.b32.xlu0 %v5664, 16
      %v5738 = vpop.permute.xlu0 %5737
      %5739 = vrot.lane.b32.xlu0 %v5665, 16
      %v5740 = vpop.permute.xlu0 %5739
      %5741 = vrot.lane.b32.xlu0 %v5666, 16
      %v5742 = vpop.permute.xlu0 %5741
      %5743 = vrot.lane.b32.xlu0 %v5667, 16
      %v5744 = vpop.permute.xlu0 %5743
      %5745 = vrot.lane.b32.xlu0 %v5668, 16
      %v5746 = vpop.permute.xlu0 %5745
      %5747 = vrot.lane.b32.xlu0 %v5669, 16
      %v5748 = vpop.permute.xlu0 %5747
      %5749 = vrot.lane.b32.xlu0 %v5670, 16
      %v5750 = vpop.permute.xlu0 %5749
      %5751 = vrot.lane.b32.xlu0 %v5671, 16
      %v5752 = vpop.permute.xlu0 %5751
      %5753 = vrot.lane.b32.xlu0 %v5672, 16
      %v5754 = vpop.permute.xlu0 %5753
      %5755 = vrot.lane.b32.xlu0 %v5673, 16
      %v5756 = vpop.permute.xlu0 %5755
      %5757 = vrot.lane.b32.xlu0 %v5674, 16
      %v5758 = vpop.permute.xlu0 %5757
      %5759 = vrot.lane.b32.xlu0 %v5675, 16
      %v5760 = vpop.permute.xlu0 %5759
      %5761 = vrot.lane.b32.xlu0 %v5676, 16
      %v5762 = vpop.permute.xlu0 %5761
      %5763 = vrot.lane.b32.xlu0 %v5677, 16
      %v5764 = vpop.permute.xlu0 %5763
      %5765 = vrot.lane.b32.xlu0 %v5678, 16
      %v5766 = vpop.permute.xlu0 %5765
      %5767 = vrot.lane.b32.xlu0 %v5679, 16
      %v5768 = vpop.permute.xlu0 %5767
      %5769 = vrot.lane.b32.xlu0 %v5680, 16
      %v5770 = vpop.permute.xlu0 %5769
      %5771 = vrot.lane.b32.xlu0 %v5681, 16
      %v5772 = vpop.permute.xlu0 %5771
      %5773 = vrot.lane.b32.xlu0 %v5682, 16
      %v5774 = vpop.permute.xlu0 %5773
      %5775 = vrot.lane.b32.xlu0 %v5683, 16
      %v5776 = vpop.permute.xlu0 %5775
      %5777 = vrot.lane.b32.xlu0 %v5684, 16
      %v5778 = vpop.permute.xlu0 %5777
      %5779 = vrot.lane.b32.xlu0 %v5685, 16
      %v5780 = vpop.permute.xlu0 %5779
      %5781 = vrot.lane.b32.xlu0 %v5686, 16
      %v5782 = vpop.permute.xlu0 %5781
      %5815 = vst.msk [vmem:[#allocation3] sm:$0xff] %vm828, %v5720
      %5816 = vst.msk [vmem:[#allocation3 + $0x8] sm:$0xff] %vm828, %v5722
      %5817 = vst.msk [vmem:[#allocation3 + $0x10] sm:$0xff] %vm828, %v5724
      %5818 = vst.msk [vmem:[#allocation3 + $0x18] sm:$0xff] %vm828, %v5726
      %5819 = vst.msk [vmem:[#allocation3 + $0x20] sm:$0xff] %vm828, %v5728
      %5820 = vst.msk [vmem:[#allocation3 + $0x28] sm:$0xff] %vm828, %v5730
      %5821 = vst.msk [vmem:[#allocation3 + $0x30] sm:$0xff] %vm828, %v5732
      %5822 = vst.msk [vmem:[#allocation3 + $0x38] sm:$0xff] %vm828, %v5734
      %5823 = vst.msk [vmem:[#allocation3 + $0x40] sm:$0xff] %vm828, %v5736
      %5824 = vst.msk [vmem:[#allocation3 + $0x48] sm:$0xff] %vm828, %v5738
      %5825 = vst.msk [vmem:[#allocation3 + $0x50] sm:$0xff] %vm828, %v5740
      %5826 = vst.msk [vmem:[#allocation3 + $0x58] sm:$0xff] %vm828, %v5742
      %5827 = vst.msk [vmem:[#allocation3 + $0x60] sm:$0xff] %vm828, %v5744
      %5828 = vst.msk [vmem:[#allocation3 + $0x68] sm:$0xff] %vm828, %v5746
      %5829 = vst.msk [vmem:[#allocation3 + $0x70] sm:$0xff] %vm828, %v5748
      %5830 = vst.msk [vmem:[#allocation3 + $0x78] sm:$0xff] %vm828, %v5750
      %5831 = vst.msk [vmem:[#allocation3 + $0x80] sm:$0xff] %vm828, %v5752
      %5832 = vst.msk [vmem:[#allocation3 + $0x88] sm:$0xff] %vm828, %v5754
      %5833 = vst.msk [vmem:[#allocation3 + $0x90] sm:$0xff] %vm828, %v5756
      %5834 = vst.msk [vmem:[#allocation3 + $0x98] sm:$0xff] %vm828, %v5758
      %5835 = vst.msk [vmem:[#allocation3 + $0xa0] sm:$0xff] %vm828, %v5760
      %5836 = vst.msk [vmem:[#allocation3 + $0xa8] sm:$0xff] %vm828, %v5762
      %5837 = vst.msk [vmem:[#allocation3 + $0xb0] sm:$0xff] %vm828, %v5764
      %5838 = vst.msk [vmem:[#allocation3 + $0xb8] sm:$0xff] %vm828, %v5766
      %5839 = vst.msk [vmem:[#allocation3 + $0xc0] sm:$0xff] %vm828, %v5768
      %5840 = vst.msk [vmem:[#allocation3 + $0xc8] sm:$0xff] %vm828, %v5770
      %5841 = vst.msk [vmem:[#allocation3 + $0xd0] sm:$0xff] %vm828, %v5772
      %5842 = vst.msk [vmem:[#allocation3 + $0xd8] sm:$0xff] %vm828, %v5774
      %5843 = vst.msk [vmem:[#allocation3 + $0xe0] sm:$0xff] %vm828, %v5776
      %5844 = vst.msk [vmem:[#allocation3 + $0xe8] sm:$0xff] %vm828, %v5778
      %5845 = vst.msk [vmem:[#allocation3 + $0xf0] sm:$0xff] %vm828, %v5780
      %5846 = vst.msk [vmem:[#allocation3 + $0xf8] sm:$0xff] %vm828, %v5782
      %v5847 = vld [vmem:[%s378] sm:$0xff]
      %v5848 = vld [vmem:[%s378 + $0x8] sm:$0xff]
      %v5849 = vld [vmem:[%s378 + $0x18] sm:$0xff]
      %v5850 = vld [vmem:[%s378 + $0x20] sm:$0xff]
      %v5851 = vld [vmem:[%s378 + $0x30] sm:$0xff]
      %v5852 = vld [vmem:[%s378 + $0x38] sm:$0xff]
      %v5853 = vld [vmem:[%s378 + $0x48] sm:$0xff]
      %v5854 = vld [vmem:[%s378 + $0x50] sm:$0xff]
      %v5855 = vld [vmem:[%s378 + $0x60] sm:$0xff]
      %v5856 = vld [vmem:[%s378 + $0x68] sm:$0xff]
      %v5857 = vld [vmem:[%s378 + $0x78] sm:$0xff]
      %v5858 = vld [vmem:[%s378 + $0x80] sm:$0xff]
      %v5859 = vld [vmem:[%s378 + $0x90] sm:$0xff]
      %v5860 = vld [vmem:[%s378 + $0x98] sm:$0xff]
      %v5861 = vld [vmem:[%s378 + $0xa8] sm:$0xff]
      %v5862 = vld [vmem:[%s378 + $0xb0] sm:$0xff]
      %v5863 = vld [vmem:[%s378 + $0xc0] sm:$0xff]
      %v5864 = vld [vmem:[%s378 + $0xc8] sm:$0xff]
      %v5865 = vld [vmem:[%s378 + $0xd8] sm:$0xff]
      %v5866 = vld [vmem:[%s378 + $0xe0] sm:$0xff]
      %v5867 = vld [vmem:[%s378 + $0xf0] sm:$0xff]
      %v5868 = vld [vmem:[%s378 + $0xf8] sm:$0xff]
      %v5869 = vld [vmem:[%s378 + $0x108] sm:$0xff]
      %v5870 = vld [vmem:[%s378 + $0x110] sm:$0xff]
      %v5871 = vld [vmem:[%s378 + $0x120] sm:$0xff]
      %v5872 = vld [vmem:[%s378 + $0x128] sm:$0xff]
      %v5873 = vld [vmem:[%s378 + $0x138] sm:$0xff]
      %v5874 = vld [vmem:[%s378 + $0x140] sm:$0xff]
      %v5875 = vld [vmem:[%s378 + $0x150] sm:$0xff]
      %v5876 = vld [vmem:[%s378 + $0x158] sm:$0xff]
      %v5877 = vld [vmem:[%s378 + $0x168] sm:$0xff]
      %v5878 = vld [vmem:[%s378 + $0x170] sm:$0xff]
      %5911 = vrot.lane.b32.xlu0 %v5847, 24
      %v5912 = vpop.permute.xlu0 %5911
      %5913 = vrot.lane.b32.xlu0 %v5848, 24
      %v5914 = vpop.permute.xlu0 %5913
      %5915 = vrot.lane.b32.xlu0 %v5849, 24
      %v5916 = vpop.permute.xlu0 %5915
      %5917 = vrot.lane.b32.xlu0 %v5850, 24
      %v5918 = vpop.permute.xlu0 %5917
      %5919 = vrot.lane.b32.xlu0 %v5851, 24
      %v5920 = vpop.permute.xlu0 %5919
      %5921 = vrot.lane.b32.xlu0 %v5852, 24
      %v5922 = vpop.permute.xlu0 %5921
      %5923 = vrot.lane.b32.xlu0 %v5853, 24
      %v5924 = vpop.permute.xlu0 %5923
      %5925 = vrot.lane.b32.xlu0 %v5854, 24
      %v5926 = vpop.permute.xlu0 %5925
      %5927 = vrot.lane.b32.xlu0 %v5855, 24
      %v5928 = vpop.permute.xlu0 %5927
      %5929 = vrot.lane.b32.xlu0 %v5856, 24
      %v5930 = vpop.permute.xlu0 %5929
      %5931 = vrot.lane.b32.xlu0 %v5857, 24
      %v5932 = vpop.permute.xlu0 %5931
      %5933 = vrot.lane.b32.xlu0 %v5858, 24
      %v5934 = vpop.permute.xlu0 %5933
      %5935 = vrot.lane.b32.xlu0 %v5859, 24
      %v5936 = vpop.permute.xlu0 %5935
      %5937 = vrot.lane.b32.xlu0 %v5860, 24
      %v5938 = vpop.permute.xlu0 %5937
      %5939 = vrot.lane.b32.xlu0 %v5861, 24
      %v5940 = vpop.permute.xlu0 %5939
      %5941 = vrot.lane.b32.xlu0 %v5862, 24
      %v5942 = vpop.permute.xlu0 %5941
      %5943 = vrot.lane.b32.xlu0 %v5863, 24
      %v5944 = vpop.permute.xlu0 %5943
      %5945 = vrot.lane.b32.xlu0 %v5864, 24
      %v5946 = vpop.permute.xlu0 %5945
      %5947 = vrot.lane.b32.xlu0 %v5865, 24
      %v5948 = vpop.permute.xlu0 %5947
      %5949 = vrot.lane.b32.xlu0 %v5866, 24
      %v5950 = vpop.permute.xlu0 %5949
      %5951 = vrot.lane.b32.xlu0 %v5867, 24
      %v5952 = vpop.permute.xlu0 %5951
      %5953 = vrot.lane.b32.xlu0 %v5868, 24
      %v5954 = vpop.permute.xlu0 %5953
      %5955 = vrot.lane.b32.xlu0 %v5869, 24
      %v5956 = vpop.permute.xlu0 %5955
      %5957 = vrot.lane.b32.xlu0 %v5870, 24
      %v5958 = vpop.permute.xlu0 %5957
      %5959 = vrot.lane.b32.xlu0 %v5871, 24
      %v5960 = vpop.permute.xlu0 %5959
      %5961 = vrot.lane.b32.xlu0 %v5872, 24
      %v5962 = vpop.permute.xlu0 %5961
      %5963 = vrot.lane.b32.xlu0 %v5873, 24
      %v5964 = vpop.permute.xlu0 %5963
      %5965 = vrot.lane.b32.xlu0 %v5874, 24
      %v5966 = vpop.permute.xlu0 %5965
      %5967 = vrot.lane.b32.xlu0 %v5875, 24
      %v5968 = vpop.permute.xlu0 %5967
      %5969 = vrot.lane.b32.xlu0 %v5876, 24
      %v5970 = vpop.permute.xlu0 %5969
      %5971 = vrot.lane.b32.xlu0 %v5877, 24
      %v5972 = vpop.permute.xlu0 %5971
      %5973 = vrot.lane.b32.xlu0 %v5878, 24
      %v5974 = vpop.permute.xlu0 %5973
      %6007 = vst.msk [vmem:[#allocation3] sm:$0xff] %vm1021, %v5912
      %6008 = vst.msk [vmem:[#allocation3 + $0x8] sm:$0xff] %vm1021, %v5914
      %6009 = vst.msk [vmem:[#allocation3 + $0x10] sm:$0xff] %vm1021, %v5916
      %6010 = vst.msk [vmem:[#allocation3 + $0x18] sm:$0xff] %vm1021, %v5918
      %6011 = vst.msk [vmem:[#allocation3 + $0x20] sm:$0xff] %vm1021, %v5920
      %6012 = vst.msk [vmem:[#allocation3 + $0x28] sm:$0xff] %vm1021, %v5922
      %6013 = vst.msk [vmem:[#allocation3 + $0x30] sm:$0xff] %vm1021, %v5924
      %6014 = vst.msk [vmem:[#allocation3 + $0x38] sm:$0xff] %vm1021, %v5926
      %6015 = vst.msk [vmem:[#allocation3 + $0x40] sm:$0xff] %vm1021, %v5928
      %6016 = vst.msk [vmem:[#allocation3 + $0x48] sm:$0xff] %vm1021, %v5930
      %6017 = vst.msk [vmem:[#allocation3 + $0x50] sm:$0xff] %vm1021, %v5932
      %6018 = vst.msk [vmem:[#allocation3 + $0x58] sm:$0xff] %vm1021, %v5934
      %6019 = vst.msk [vmem:[#allocation3 + $0x60] sm:$0xff] %vm1021, %v5936
      %6020 = vst.msk [vmem:[#allocation3 + $0x68] sm:$0xff] %vm1021, %v5938
      %6021 = vst.msk [vmem:[#allocation3 + $0x70] sm:$0xff] %vm1021, %v5940
      %6022 = vst.msk [vmem:[#allocation3 + $0x78] sm:$0xff] %vm1021, %v5942
      %6023 = vst.msk [vmem:[#allocation3 + $0x80] sm:$0xff] %vm1021, %v5944
      %6024 = vst.msk [vmem:[#allocation3 + $0x88] sm:$0xff] %vm1021, %v5946
      %6025 = vst.msk [vmem:[#allocation3 + $0x90] sm:$0xff] %vm1021, %v5948
      %6026 = vst.msk [vmem:[#allocation3 + $0x98] sm:$0xff] %vm1021, %v5950
      %6027 = vst.msk [vmem:[#allocation3 + $0xa0] sm:$0xff] %vm1021, %v5952
      %6028 = vst.msk [vmem:[#allocation3 + $0xa8] sm:$0xff] %vm1021, %v5954
      %6029 = vst.msk [vmem:[#allocation3 + $0xb0] sm:$0xff] %vm1021, %v5956
      %6030 = vst.msk [vmem:[#allocation3 + $0xb8] sm:$0xff] %vm1021, %v5958
      %6031 = vst.msk [vmem:[#allocation3 + $0xc0] sm:$0xff] %vm1021, %v5960
      %6032 = vst.msk [vmem:[#allocation3 + $0xc8] sm:$0xff] %vm1021, %v5962
      %6033 = vst.msk [vmem:[#allocation3 + $0xd0] sm:$0xff] %vm1021, %v5964
      %6034 = vst.msk [vmem:[#allocation3 + $0xd8] sm:$0xff] %vm1021, %v5966
      %6035 = vst.msk [vmem:[#allocation3 + $0xe0] sm:$0xff] %vm1021, %v5968
      %6036 = vst.msk [vmem:[#allocation3 + $0xe8] sm:$0xff] %vm1021, %v5970
      %6037 = vst.msk [vmem:[#allocation3 + $0xf0] sm:$0xff] %vm1021, %v5972
      %6038 = vst.msk [vmem:[#allocation3 + $0xf8] sm:$0xff] %vm1021, %v5974
      %v6039 = vld [vmem:[%s378 + $0x1] sm:$0xff]
      %v6040 = vld [vmem:[%s378 + $0x9] sm:$0xff]
      %v6041 = vld [vmem:[%s378 + $0x19] sm:$0xff]
      %v6042 = vld [vmem:[%s378 + $0x21] sm:$0xff]
      %v6043 = vld [vmem:[%s378 + $0x31] sm:$0xff]
      %v6044 = vld [vmem:[%s378 + $0x39] sm:$0xff]
      %v6045 = vld [vmem:[%s378 + $0x49] sm:$0xff]
      %v6046 = vld [vmem:[%s378 + $0x51] sm:$0xff]
      %v6047 = vld [vmem:[%s378 + $0x61] sm:$0xff]
      %v6048 = vld [vmem:[%s378 + $0x69] sm:$0xff]
      %v6049 = vld [vmem:[%s378 + $0x79] sm:$0xff]
      %v6050 = vld [vmem:[%s378 + $0x81] sm:$0xff]
      %v6051 = vld [vmem:[%s378 + $0x91] sm:$0xff]
      %v6052 = vld [vmem:[%s378 + $0x99] sm:$0xff]
      %v6053 = vld [vmem:[%s378 + $0xa9] sm:$0xff]
      %v6054 = vld [vmem:[%s378 + $0xb1] sm:$0xff]
      %v6055 = vld [vmem:[%s378 + $0xc1] sm:$0xff]
      %v6056 = vld [vmem:[%s378 + $0xc9] sm:$0xff]
      %v6057 = vld [vmem:[%s378 + $0xd9] sm:$0xff]
      %v6058 = vld [vmem:[%s378 + $0xe1] sm:$0xff]
      %v6059 = vld [vmem:[%s378 + $0xf1] sm:$0xff]
      %v6060 = vld [vmem:[%s378 + $0xf9] sm:$0xff]
      %v6061 = vld [vmem:[%s378 + $0x109] sm:$0xff]
      %v6062 = vld [vmem:[%s378 + $0x111] sm:$0xff]
      %v6063 = vld [vmem:[%s378 + $0x121] sm:$0xff]
      %v6064 = vld [vmem:[%s378 + $0x129] sm:$0xff]
      %v6065 = vld [vmem:[%s378 + $0x139] sm:$0xff]
      %v6066 = vld [vmem:[%s378 + $0x141] sm:$0xff]
      %v6067 = vld [vmem:[%s378 + $0x151] sm:$0xff]
      %v6068 = vld [vmem:[%s378 + $0x159] sm:$0xff]
      %v6069 = vld [vmem:[%s378 + $0x169] sm:$0xff]
      %v6070 = vld [vmem:[%s378 + $0x171] sm:$0xff]
      %6103 = vrot.lane.b32.xlu0 %v6039, 32
      %v6104 = vpop.permute.xlu0 %6103
      %6105 = vrot.lane.b32.xlu0 %v6040, 32
      %v6106 = vpop.permute.xlu0 %6105
      %6107 = vrot.lane.b32.xlu0 %v6041, 32
      %v6108 = vpop.permute.xlu0 %6107
      %6109 = vrot.lane.b32.xlu0 %v6042, 32
      %v6110 = vpop.permute.xlu0 %6109
      %6111 = vrot.lane.b32.xlu0 %v6043, 32
      %v6112 = vpop.permute.xlu0 %6111
      %6113 = vrot.lane.b32.xlu0 %v6044, 32
      %v6114 = vpop.permute.xlu0 %6113
      %6115 = vrot.lane.b32.xlu0 %v6045, 32
      %v6116 = vpop.permute.xlu0 %6115
      %6117 = vrot.lane.b32.xlu0 %v6046, 32
      %v6118 = vpop.permute.xlu0 %6117
      %6119 = vrot.lane.b32.xlu0 %v6047, 32
      %v6120 = vpop.permute.xlu0 %6119
      %6121 = vrot.lane.b32.xlu0 %v6048, 32
      %v6122 = vpop.permute.xlu0 %6121
      %6123 = vrot.lane.b32.xlu0 %v6049, 32
      %v6124 = vpop.permute.xlu0 %6123
      %6125 = vrot.lane.b32.xlu0 %v6050, 32
      %v6126 = vpop.permute.xlu0 %6125
      %6127 = vrot.lane.b32.xlu0 %v6051, 32
      %v6128 = vpop.permute.xlu0 %6127
      %6129 = vrot.lane.b32.xlu0 %v6052, 32
      %v6130 = vpop.permute.xlu0 %6129
      %6131 = vrot.lane.b32.xlu0 %v6053, 32
      %v6132 = vpop.permute.xlu0 %6131
      %6133 = vrot.lane.b32.xlu0 %v6054, 32
      %v6134 = vpop.permute.xlu0 %6133
      %6135 = vrot.lane.b32.xlu0 %v6055, 32
      %v6136 = vpop.permute.xlu0 %6135
      %6137 = vrot.lane.b32.xlu0 %v6056, 32
      %v6138 = vpop.permute.xlu0 %6137
      %6139 = vrot.lane.b32.xlu0 %v6057, 32
      %v6140 = vpop.permute.xlu0 %6139
      %6141 = vrot.lane.b32.xlu0 %v6058, 32
      %v6142 = vpop.permute.xlu0 %6141
      %6143 = vrot.lane.b32.xlu0 %v6059, 32
      %v6144 = vpop.permute.xlu0 %6143
      %6145 = vrot.lane.b32.xlu0 %v6060, 32
      %v6146 = vpop.permute.xlu0 %6145
      %6147 = vrot.lane.b32.xlu0 %v6061, 32
      %v6148 = vpop.permute.xlu0 %6147
      %6149 = vrot.lane.b32.xlu0 %v6062, 32
      %v6150 = vpop.permute.xlu0 %6149
      %6151 = vrot.lane.b32.xlu0 %v6063, 32
      %v6152 = vpop.permute.xlu0 %6151
      %6153 = vrot.lane.b32.xlu0 %v6064, 32
      %v6154 = vpop.permute.xlu0 %6153
      %6155 = vrot.lane.b32.xlu0 %v6065, 32
      %v6156 = vpop.permute.xlu0 %6155
      %6157 = vrot.lane.b32.xlu0 %v6066, 32
      %v6158 = vpop.permute.xlu0 %6157
      %6159 = vrot.lane.b32.xlu0 %v6067, 32
      %v6160 = vpop.permute.xlu0 %6159
      %6161 = vrot.lane.b32.xlu0 %v6068, 32
      %v6162 = vpop.permute.xlu0 %6161
      %6163 = vrot.lane.b32.xlu0 %v6069, 32
      %v6164 = vpop.permute.xlu0 %6163
      %6165 = vrot.lane.b32.xlu0 %v6070, 32
      %v6166 = vpop.permute.xlu0 %6165
      %6199 = vst.msk [vmem:[#allocation3] sm:$0xff] %vm1214, %v6104
      %6200 = vst.msk [vmem:[#allocation3 + $0x8] sm:$0xff] %vm1214, %v6106
      %6201 = vst.msk [vmem:[#allocation3 + $0x10] sm:$0xff] %vm1214, %v6108
      %6202 = vst.msk [vmem:[#allocation3 + $0x18] sm:$0xff] %vm1214, %v6110
      %6203 = vst.msk [vmem:[#allocation3 + $0x20] sm:$0xff] %vm1214, %v6112
      %6204 = vst.msk [vmem:[#allocation3 + $0x28] sm:$0xff] %vm1214, %v6114
      %6205 = vst.msk [vmem:[#allocation3 + $0x30] sm:$0xff] %vm1214, %v6116
      %6206 = vst.msk [vmem:[#allocation3 + $0x38] sm:$0xff] %vm1214, %v6118
      %6207 = vst.msk [vmem:[#allocation3 + $0x40] sm:$0xff] %vm1214, %v6120
      %6208 = vst.msk [vmem:[#allocation3 + $0x48] sm:$0xff] %vm1214, %v6122
      %6209 = vst.msk [vmem:[#allocation3 + $0x50] sm:$0xff] %vm1214, %v6124
      %6210 = vst.msk [vmem:[#allocation3 + $0x58] sm:$0xff] %vm1214, %v6126
      %6211 = vst.msk [vmem:[#allocation3 + $0x60] sm:$0xff] %vm1214, %v6128
      %6212 = vst.msk [vmem:[#allocation3 + $0x68] sm:$0xff] %vm1214, %v6130
      %6213 = vst.msk [vmem:[#allocation3 + $0x70] sm:$0xff] %vm1214, %v6132
      %6214 = vst.msk [vmem:[#allocation3 + $0x78] sm:$0xff] %vm1214, %v6134
      %6215 = vst.msk [vmem:[#allocation3 + $0x80] sm:$0xff] %vm1214, %v6136
      %6216 = vst.msk [vmem:[#allocation3 + $0x88] sm:$0xff] %vm1214, %v6138
      %6217 = vst.msk [vmem:[#allocation3 + $0x90] sm:$0xff] %vm1214, %v6140
      %6218 = vst.msk [vmem:[#allocation3 + $0x98] sm:$0xff] %vm1214, %v6142
      %6219 = vst.msk [vmem:[#allocation3 + $0xa0] sm:$0xff] %vm1214, %v6144
      %6220 = vst.msk [vmem:[#allocation3 + $0xa8] sm:$0xff] %vm1214, %v6146
      %6221 = vst.msk [vmem:[#allocation3 + $0xb0] sm:$0xff] %vm1214, %v6148
      %6222 = vst.msk [vmem:[#allocation3 + $0xb8] sm:$0xff] %vm1214, %v6150
      %6223 = vst.msk [vmem:[#allocation3 + $0xc0] sm:$0xff] %vm1214, %v6152
      %6224 = vst.msk [vmem:[#allocation3 + $0xc8] sm:$0xff] %vm1214, %v6154
      %6225 = vst.msk [vmem:[#allocation3 + $0xd0] sm:$0xff] %vm1214, %v6156
      %6226 = vst.msk [vmem:[#allocation3 + $0xd8] sm:$0xff] %vm1214, %v6158
      %6227 = vst.msk [vmem:[#allocation3 + $0xe0] sm:$0xff] %vm1214, %v6160
      %6228 = vst.msk [vmem:[#allocation3 + $0xe8] sm:$0xff] %vm1214, %v6162
      %6229 = vst.msk [vmem:[#allocation3 + $0xf0] sm:$0xff] %vm1214, %v6164
      %6230 = vst.msk [vmem:[#allocation3 + $0xf8] sm:$0xff] %vm1214, %v6166
      %v6231 = vld [vmem:[%s378 + $0x2] sm:$0xff]
      %v6232 = vld [vmem:[%s378 + $0xa] sm:$0xff]
      %v6233 = vld [vmem:[%s378 + $0x1a] sm:$0xff]
      %v6234 = vld [vmem:[%s378 + $0x22] sm:$0xff]
      %v6235 = vld [vmem:[%s378 + $0x32] sm:$0xff]
      %v6236 = vld [vmem:[%s378 + $0x3a] sm:$0xff]
      %v6237 = vld [vmem:[%s378 + $0x4a] sm:$0xff]
      %v6238 = vld [vmem:[%s378 + $0x52] sm:$0xff]
      %v6239 = vld [vmem:[%s378 + $0x62] sm:$0xff]
      %v6240 = vld [vmem:[%s378 + $0x6a] sm:$0xff]
      %v6241 = vld [vmem:[%s378 + $0x7a] sm:$0xff]
      %v6242 = vld [vmem:[%s378 + $0x82] sm:$0xff]
      %v6243 = vld [vmem:[%s378 + $0x92] sm:$0xff]
      %v6244 = vld [vmem:[%s378 + $0x9a] sm:$0xff]
      %v6245 = vld [vmem:[%s378 + $0xaa] sm:$0xff]
      %v6246 = vld [vmem:[%s378 + $0xb2] sm:$0xff]
      %v6247 = vld [vmem:[%s378 + $0xc2] sm:$0xff]
      %v6248 = vld [vmem:[%s378 + $0xca] sm:$0xff]
      %v6249 = vld [vmem:[%s378 + $0xda] sm:$0xff]
      %v6250 = vld [vmem:[%s378 + $0xe2] sm:$0xff]
      %v6251 = vld [vmem:[%s378 + $0xf2] sm:$0xff]
      %v6252 = vld [vmem:[%s378 + $0xfa] sm:$0xff]
      %v6253 = vld [vmem:[%s378 + $0x10a] sm:$0xff]
      %v6254 = vld [vmem:[%s378 + $0x112] sm:$0xff]
      %v6255 = vld [vmem:[%s378 + $0x122] sm:$0xff]
      %v6256 = vld [vmem:[%s378 + $0x12a] sm:$0xff]
      %v6257 = vld [vmem:[%s378 + $0x13a] sm:$0xff]
      %v6258 = vld [vmem:[%s378 + $0x142] sm:$0xff]
      %v6259 = vld [vmem:[%s378 + $0x152] sm:$0xff]
      %v6260 = vld [vmem:[%s378 + $0x15a] sm:$0xff]
      %v6261 = vld [vmem:[%s378 + $0x16a] sm:$0xff]
      %v6262 = vld [vmem:[%s378 + $0x172] sm:$0xff]
      %6295 = vrot.lane.b32.xlu0 %v6231, 40
      %v6296 = vpop.permute.xlu0 %6295
      %6297 = vrot.lane.b32.xlu0 %v6232, 40
      %v6298 = vpop.permute.xlu0 %6297
      %6299 = vrot.lane.b32.xlu0 %v6233, 40
      %v6300 = vpop.permute.xlu0 %6299
      %6301 = vrot.lane.b32.xlu0 %v6234, 40
      %v6302 = vpop.permute.xlu0 %6301
      %6303 = vrot.lane.b32.xlu0 %v6235, 40
      %v6304 = vpop.permute.xlu0 %6303
      %6305 = vrot.lane.b32.xlu0 %v6236, 40
      %v6306 = vpop.permute.xlu0 %6305
      %6307 = vrot.lane.b32.xlu0 %v6237, 40
      %v6308 = vpop.permute.xlu0 %6307
      %6309 = vrot.lane.b32.xlu0 %v6238, 40
      %v6310 = vpop.permute.xlu0 %6309
      %6311 = vrot.lane.b32.xlu0 %v6239, 40
      %v6312 = vpop.permute.xlu0 %6311
      %6313 = vrot.lane.b32.xlu0 %v6240, 40
      %v6314 = vpop.permute.xlu0 %6313
      %6315 = vrot.lane.b32.xlu0 %v6241, 40
      %v6316 = vpop.permute.xlu0 %6315
      %6317 = vrot.lane.b32.xlu0 %v6242, 40
      %v6318 = vpop.permute.xlu0 %6317
      %6319 = vrot.lane.b32.xlu0 %v6243, 40
      %v6320 = vpop.permute.xlu0 %6319
      %6321 = vrot.lane.b32.xlu0 %v6244, 40
      %v6322 = vpop.permute.xlu0 %6321
      %6323 = vrot.lane.b32.xlu0 %v6245, 40
      %v6324 = vpop.permute.xlu0 %6323
      %6325 = vrot.lane.b32.xlu0 %v6246, 40
      %v6326 = vpop.permute.xlu0 %6325
      %6327 = vrot.lane.b32.xlu0 %v6247, 40
      %v6328 = vpop.permute.xlu0 %6327
      %6329 = vrot.lane.b32.xlu0 %v6248, 40
      %v6330 = vpop.permute.xlu0 %6329
      %6331 = vrot.lane.b32.xlu0 %v6249, 40
      %v6332 = vpop.permute.xlu0 %6331
      %6333 = vrot.lane.b32.xlu0 %v6250, 40
      %v6334 = vpop.permute.xlu0 %6333
      %6335 = vrot.lane.b32.xlu0 %v6251, 40
      %v6336 = vpop.permute.xlu0 %6335
      %6337 = vrot.lane.b32.xlu0 %v6252, 40
      %v6338 = vpop.permute.xlu0 %6337
      %6339 = vrot.lane.b32.xlu0 %v6253, 40
      %v6340 = vpop.permute.xlu0 %6339
      %6341 = vrot.lane.b32.xlu0 %v6254, 40
      %v6342 = vpop.permute.xlu0 %6341
      %6343 = vrot.lane.b32.xlu0 %v6255, 40
      %v6344 = vpop.permute.xlu0 %6343
      %6345 = vrot.lane.b32.xlu0 %v6256, 40
      %v6346 = vpop.permute.xlu0 %6345
      %6347 = vrot.lane.b32.xlu0 %v6257, 40
      %v6348 = vpop.permute.xlu0 %6347
      %6349 = vrot.lane.b32.xlu0 %v6258, 40
      %v6350 = vpop.permute.xlu0 %6349
      %6351 = vrot.lane.b32.xlu0 %v6259, 40
      %v6352 = vpop.permute.xlu0 %6351
      %6353 = vrot.lane.b32.xlu0 %v6260, 40
      %v6354 = vpop.permute.xlu0 %6353
      %6355 = vrot.lane.b32.xlu0 %v6261, 40
      %v6356 = vpop.permute.xlu0 %6355
      %6357 = vrot.lane.b32.xlu0 %v6262, 40
      %v6358 = vpop.permute.xlu0 %6357
      %6391 = vst.msk [vmem:[#allocation3] sm:$0xff] %vm1407, %v6296
      %6392 = vst.msk [vmem:[#allocation3 + $0x8] sm:$0xff] %vm1407, %v6298
      %6393 = vst.msk [vmem:[#allocation3 + $0x10] sm:$0xff] %vm1407, %v6300
      %6394 = vst.msk [vmem:[#allocation3 + $0x18] sm:$0xff] %vm1407, %v6302
      %6395 = vst.msk [vmem:[#allocation3 + $0x20] sm:$0xff] %vm1407, %v6304
      %6396 = vst.msk [vmem:[#allocation3 + $0x28] sm:$0xff] %vm1407, %v6306
      %6397 = vst.msk [vmem:[#allocation3 + $0x30] sm:$0xff] %vm1407, %v6308
      %6398 = vst.msk [vmem:[#allocation3 + $0x38] sm:$0xff] %vm1407, %v6310
      %6399 = vst.msk [vmem:[#allocation3 + $0x40] sm:$0xff] %vm1407, %v6312
      %6400 = vst.msk [vmem:[#allocation3 + $0x48] sm:$0xff] %vm1407, %v6314
      %6401 = vst.msk [vmem:[#allocation3 + $0x50] sm:$0xff] %vm1407, %v6316
      %6402 = vst.msk [vmem:[#allocation3 + $0x58] sm:$0xff] %vm1407, %v6318
      %6403 = vst.msk [vmem:[#allocation3 + $0x60] sm:$0xff] %vm1407, %v6320
      %6404 = vst.msk [vmem:[#allocation3 + $0x68] sm:$0xff] %vm1407, %v6322
      %6405 = vst.msk [vmem:[#allocation3 + $0x70] sm:$0xff] %vm1407, %v6324
      %6406 = vst.msk [vmem:[#allocation3 + $0x78] sm:$0xff] %vm1407, %v6326
      %6407 = vst.msk [vmem:[#allocation3 + $0x80] sm:$0xff] %vm1407, %v6328
      %6408 = vst.msk [vmem:[#allocation3 + $0x88] sm:$0xff] %vm1407, %v6330
      %6409 = vst.msk [vmem:[#allocation3 + $0x90] sm:$0xff] %vm1407, %v6332
      %6410 = vst.msk [vmem:[#allocation3 + $0x98] sm:$0xff] %vm1407, %v6334
      %6411 = vst.msk [vmem:[#allocation3 + $0xa0] sm:$0xff] %vm1407, %v6336
      %6412 = vst.msk [vmem:[#allocation3 + $0xa8] sm:$0xff] %vm1407, %v6338
      %6413 = vst.msk [vmem:[#allocation3 + $0xb0] sm:$0xff] %vm1407, %v6340
      %6414 = vst.msk [vmem:[#allocation3 + $0xb8] sm:$0xff] %vm1407, %v6342
      %6415 = vst.msk [vmem:[#allocation3 + $0xc0] sm:$0xff] %vm1407, %v6344
      %6416 = vst.msk [vmem:[#allocation3 + $0xc8] sm:$0xff] %vm1407, %v6346
      %6417 = vst.msk [vmem:[#allocation3 + $0xd0] sm:$0xff] %vm1407, %v6348
      %6418 = vst.msk [vmem:[#allocation3 + $0xd8] sm:$0xff] %vm1407, %v6350
      %6419 = vst.msk [vmem:[#allocation3 + $0xe0] sm:$0xff] %vm1407, %v6352
      %6420 = vst.msk [vmem:[#allocation3 + $0xe8] sm:$0xff] %vm1407, %v6354
      %6421 = vst.msk [vmem:[#allocation3 + $0xf0] sm:$0xff] %vm1407, %v6356
      %6422 = vst.msk [vmem:[#allocation3 + $0xf8] sm:$0xff] %vm1407, %v6358
      %v6423 = vld [vmem:[%s1440] sm:$0xff]
      %v6424 = vld [vmem:[%s1440 + $0x8] sm:$0xff]
      %v6425 = vld [vmem:[%s1440 + $0x18] sm:$0xff]
      %v6426 = vld [vmem:[%s1440 + $0x20] sm:$0xff]
      %v6427 = vld [vmem:[%s1440 + $0x30] sm:$0xff]
      %v6428 = vld [vmem:[%s1440 + $0x38] sm:$0xff]
      %v6429 = vld [vmem:[%s1440 + $0x48] sm:$0xff]
      %v6430 = vld [vmem:[%s1440 + $0x50] sm:$0xff]
      %v6431 = vld [vmem:[%s1440 + $0x60] sm:$0xff]
      %v6432 = vld [vmem:[%s1440 + $0x68] sm:$0xff]
      %v6433 = vld [vmem:[%s1440 + $0x78] sm:$0xff]
      %v6434 = vld [vmem:[%s1440 + $0x80] sm:$0xff]
      %v6435 = vld [vmem:[%s1440 + $0x90] sm:$0xff]
      %v6436 = vld [vmem:[%s1440 + $0x98] sm:$0xff]
      %v6437 = vld [vmem:[%s1440 + $0xa8] sm:$0xff]
      %v6438 = vld [vmem:[%s1440 + $0xb0] sm:$0xff]
      %v6439 = vld [vmem:[%s1440 + $0xc0] sm:$0xff]
      %v6440 = vld [vmem:[%s1440 + $0xc8] sm:$0xff]
      %v6441 = vld [vmem:[%s1440 + $0xd8] sm:$0xff]
      %v6442 = vld [vmem:[%s1440 + $0xe0] sm:$0xff]
      %v6443 = vld [vmem:[%s1440 + $0xf0] sm:$0xff]
      %v6444 = vld [vmem:[%s1440 + $0xf8] sm:$0xff]
      %v6445 = vld [vmem:[%s1440 + $0x108] sm:$0xff]
      %v6446 = vld [vmem:[%s1440 + $0x110] sm:$0xff]
      %v6447 = vld [vmem:[%s1440 + $0x120] sm:$0xff]
      %v6448 = vld [vmem:[%s1440 + $0x128] sm:$0xff]
      %v6449 = vld [vmem:[%s1440 + $0x138] sm:$0xff]
      %v6450 = vld [vmem:[%s1440 + $0x140] sm:$0xff]
      %v6451 = vld [vmem:[%s1440 + $0x150] sm:$0xff]
      %v6452 = vld [vmem:[%s1440 + $0x158] sm:$0xff]
      %v6453 = vld [vmem:[%s1440 + $0x168] sm:$0xff]
      %v6454 = vld [vmem:[%s1440 + $0x170] sm:$0xff]
      %6487 = vrot.lane.b32.xlu0 %v6423, 48
      %v6488 = vpop.permute.xlu0 %6487
      %6489 = vrot.lane.b32.xlu0 %v6424, 48
      %v6490 = vpop.permute.xlu0 %6489
      %6491 = vrot.lane.b32.xlu0 %v6425, 48
      %v6492 = vpop.permute.xlu0 %6491
      %6493 = vrot.lane.b32.xlu0 %v6426, 48
      %v6494 = vpop.permute.xlu0 %6493
      %6495 = vrot.lane.b32.xlu0 %v6427, 48
      %v6496 = vpop.permute.xlu0 %6495
      %6497 = vrot.lane.b32.xlu0 %v6428, 48
      %v6498 = vpop.permute.xlu0 %6497
      %6499 = vrot.lane.b32.xlu0 %v6429, 48
      %v6500 = vpop.permute.xlu0 %6499
      %6501 = vrot.lane.b32.xlu0 %v6430, 48
      %v6502 = vpop.permute.xlu0 %6501
      %6503 = vrot.lane.b32.xlu0 %v6431, 48
      %v6504 = vpop.permute.xlu0 %6503
      %6505 = vrot.lane.b32.xlu0 %v6432, 48
      %v6506 = vpop.permute.xlu0 %6505
      %6507 = vrot.lane.b32.xlu0 %v6433, 48
      %v6508 = vpop.permute.xlu0 %6507
      %6509 = vrot.lane.b32.xlu0 %v6434, 48
      %v6510 = vpop.permute.xlu0 %6509
      %6511 = vrot.lane.b32.xlu0 %v6435, 48
      %v6512 = vpop.permute.xlu0 %6511
      %6513 = vrot.lane.b32.xlu0 %v6436, 48
      %v6514 = vpop.permute.xlu0 %6513
      %6515 = vrot.lane.b32.xlu0 %v6437, 48
      %v6516 = vpop.permute.xlu0 %6515
      %6517 = vrot.lane.b32.xlu0 %v6438, 48
      %v6518 = vpop.permute.xlu0 %6517
      %6519 = vrot.lane.b32.xlu0 %v6439, 48
      %v6520 = vpop.permute.xlu0 %6519
      %6521 = vrot.lane.b32.xlu0 %v6440, 48
      %v6522 = vpop.permute.xlu0 %6521
      %6523 = vrot.lane.b32.xlu0 %v6441, 48
      %v6524 = vpop.permute.xlu0 %6523
      %6525 = vrot.lane.b32.xlu0 %v6442, 48
      %v6526 = vpop.permute.xlu0 %6525
      %6527 = vrot.lane.b32.xlu0 %v6443, 48
      %v6528 = vpop.permute.xlu0 %6527
      %6529 = vrot.lane.b32.xlu0 %v6444, 48
      %v6530 = vpop.permute.xlu0 %6529
      %6531 = vrot.lane.b32.xlu0 %v6445, 48
      %v6532 = vpop.permute.xlu0 %6531
      %6533 = vrot.lane.b32.xlu0 %v6446, 48
      %v6534 = vpop.permute.xlu0 %6533
      %6535 = vrot.lane.b32.xlu0 %v6447, 48
      %v6536 = vpop.permute.xlu0 %6535
      %6537 = vrot.lane.b32.xlu0 %v6448, 48
      %v6538 = vpop.permute.xlu0 %6537
      %6539 = vrot.lane.b32.xlu0 %v6449, 48
      %v6540 = vpop.permute.xlu0 %6539
      %6541 = vrot.lane.b32.xlu0 %v6450, 48
      %v6542 = vpop.permute.xlu0 %6541
      %6543 = vrot.lane.b32.xlu0 %v6451, 48
      %v6544 = vpop.permute.xlu0 %6543
      %6545 = vrot.lane.b32.xlu0 %v6452, 48
      %v6546 = vpop.permute.xlu0 %6545
      %6547 = vrot.lane.b32.xlu0 %v6453, 48
      %v6548 = vpop.permute.xlu0 %6547
      %6549 = vrot.lane.b32.xlu0 %v6454, 48
      %v6550 = vpop.permute.xlu0 %6549
      %6583 = vst.msk [vmem:[#allocation3] sm:$0xff] %vm1601, %v6488
      %6584 = vst.msk [vmem:[#allocation3 + $0x8] sm:$0xff] %vm1601, %v6490
      %6585 = vst.msk [vmem:[#allocation3 + $0x10] sm:$0xff] %vm1601, %v6492
      %6586 = vst.msk [vmem:[#allocation3 + $0x18] sm:$0xff] %vm1601, %v6494
      %6587 = vst.msk [vmem:[#allocation3 + $0x20] sm:$0xff] %vm1601, %v6496
      %6588 = vst.msk [vmem:[#allocation3 + $0x28] sm:$0xff] %vm1601, %v6498
      %6589 = vst.msk [vmem:[#allocation3 + $0x30] sm:$0xff] %vm1601, %v6500
      %6590 = vst.msk [vmem:[#allocation3 + $0x38] sm:$0xff] %vm1601, %v6502
      %6591 = vst.msk [vmem:[#allocation3 + $0x40] sm:$0xff] %vm1601, %v6504
      %6592 = vst.msk [vmem:[#allocation3 + $0x48] sm:$0xff] %vm1601, %v6506
      %6593 = vst.msk [vmem:[#allocation3 + $0x50] sm:$0xff] %vm1601, %v6508
      %6594 = vst.msk [vmem:[#allocation3 + $0x58] sm:$0xff] %vm1601, %v6510
      %6595 = vst.msk [vmem:[#allocation3 + $0x60] sm:$0xff] %vm1601, %v6512
      %6596 = vst.msk [vmem:[#allocation3 + $0x68] sm:$0xff] %vm1601, %v6514
      %6597 = vst.msk [vmem:[#allocation3 + $0x70] sm:$0xff] %vm1601, %v6516
      %6598 = vst.msk [vmem:[#allocation3 + $0x78] sm:$0xff] %vm1601, %v6518
      %6599 = vst.msk [vmem:[#allocation3 + $0x80] sm:$0xff] %vm1601, %v6520
      %6600 = vst.msk [vmem:[#allocation3 + $0x88] sm:$0xff] %vm1601, %v6522
      %6601 = vst.msk [vmem:[#allocation3 + $0x90] sm:$0xff] %vm1601, %v6524
      %6602 = vst.msk [vmem:[#allocation3 + $0x98] sm:$0xff] %vm1601, %v6526
      %6603 = vst.msk [vmem:[#allocation3 + $0xa0] sm:$0xff] %vm1601, %v6528
      %6604 = vst.msk [vmem:[#allocation3 + $0xa8] sm:$0xff] %vm1601, %v6530
      %6605 = vst.msk [vmem:[#allocation3 + $0xb0] sm:$0xff] %vm1601, %v6532
      %6606 = vst.msk [vmem:[#allocation3 + $0xb8] sm:$0xff] %vm1601, %v6534
      %6607 = vst.msk [vmem:[#allocation3 + $0xc0] sm:$0xff] %vm1601, %v6536
      %6608 = vst.msk [vmem:[#allocation3 + $0xc8] sm:$0xff] %vm1601, %v6538
      %6609 = vst.msk [vmem:[#allocation3 + $0xd0] sm:$0xff] %vm1601, %v6540
      %6610 = vst.msk [vmem:[#allocation3 + $0xd8] sm:$0xff] %vm1601, %v6542
      %6611 = vst.msk [vmem:[#allocation3 + $0xe0] sm:$0xff] %vm1601, %v6544
      %6612 = vst.msk [vmem:[#allocation3 + $0xe8] sm:$0xff] %vm1601, %v6546
      %6613 = vst.msk [vmem:[#allocation3 + $0xf0] sm:$0xff] %vm1601, %v6548
      %6614 = vst.msk [vmem:[#allocation3 + $0xf8] sm:$0xff] %vm1601, %v6550
      %v6615 = vld [vmem:[%s1440 + $0x1] sm:$0xff]
      %v6616 = vld [vmem:[%s1440 + $0x9] sm:$0xff]
      %v6617 = vld [vmem:[%s1440 + $0x19] sm:$0xff]
      %v6618 = vld [vmem:[%s1440 + $0x21] sm:$0xff]
      %v6619 = vld [vmem:[%s1440 + $0x31] sm:$0xff]
      %v6620 = vld [vmem:[%s1440 + $0x39] sm:$0xff]
      %v6621 = vld [vmem:[%s1440 + $0x49] sm:$0xff]
      %v6622 = vld [vmem:[%s1440 + $0x51] sm:$0xff]
      %v6623 = vld [vmem:[%s1440 + $0x61] sm:$0xff]
      %v6624 = vld [vmem:[%s1440 + $0x69] sm:$0xff]
      %v6625 = vld [vmem:[%s1440 + $0x79] sm:$0xff]
      %v6626 = vld [vmem:[%s1440 + $0x81] sm:$0xff]
      %v6627 = vld [vmem:[%s1440 + $0x91] sm:$0xff]
      %v6628 = vld [vmem:[%s1440 + $0x99] sm:$0xff]
      %v6629 = vld [vmem:[%s1440 + $0xa9] sm:$0xff]
      %v6630 = vld [vmem:[%s1440 + $0xb1] sm:$0xff]
      %v6631 = vld [vmem:[%s1440 + $0xc1] sm:$0xff]
      %v6632 = vld [vmem:[%s1440 + $0xc9] sm:$0xff]
      %v6633 = vld [vmem:[%s1440 + $0xd9] sm:$0xff]
      %v6634 = vld [vmem:[%s1440 + $0xe1] sm:$0xff]
      %v6635 = vld [vmem:[%s1440 + $0xf1] sm:$0xff]
      %v6636 = vld [vmem:[%s1440 + $0xf9] sm:$0xff]
      %v6637 = vld [vmem:[%s1440 + $0x109] sm:$0xff]
      %v6638 = vld [vmem:[%s1440 + $0x111] sm:$0xff]
      %v6639 = vld [vmem:[%s1440 + $0x121] sm:$0xff]
      %v6640 = vld [vmem:[%s1440 + $0x129] sm:$0xff]
      %v6641 = vld [vmem:[%s1440 + $0x139] sm:$0xff]
      %v6642 = vld [vmem:[%s1440 + $0x141] sm:$0xff]
      %v6643 = vld [vmem:[%s1440 + $0x151] sm:$0xff]
      %v6644 = vld [vmem:[%s1440 + $0x159] sm:$0xff]
      %v6645 = vld [vmem:[%s1440 + $0x169] sm:$0xff]
      %v6646 = vld [vmem:[%s1440 + $0x171] sm:$0xff]
      %6679 = vrot.lane.b32.xlu0 %v6615, 56
      %v6680 = vpop.permute.xlu0 %6679
      %6681 = vrot.lane.b32.xlu0 %v6616, 56
      %v6682 = vpop.permute.xlu0 %6681
      %6683 = vrot.lane.b32.xlu0 %v6617, 56
      %v6684 = vpop.permute.xlu0 %6683
      %6685 = vrot.lane.b32.xlu0 %v6618, 56
      %v6686 = vpop.permute.xlu0 %6685
      %6687 = vrot.lane.b32.xlu0 %v6619, 56
      %v6688 = vpop.permute.xlu0 %6687
      %6689 = vrot.lane.b32.xlu0 %v6620, 56
      %v6690 = vpop.permute.xlu0 %6689
      %6691 = vrot.lane.b32.xlu0 %v6621, 56
      %v6692 = vpop.permute.xlu0 %6691
      %6693 = vrot.lane.b32.xlu0 %v6622, 56
      %v6694 = vpop.permute.xlu0 %6693
      %6695 = vrot.lane.b32.xlu0 %v6623, 56
      %v6696 = vpop.permute.xlu0 %6695
      %6697 = vrot.lane.b32.xlu0 %v6624, 56
      %v6698 = vpop.permute.xlu0 %6697
      %6699 = vrot.lane.b32.xlu0 %v6625, 56
      %v6700 = vpop.permute.xlu0 %6699
      %6701 = vrot.lane.b32.xlu0 %v6626, 56
      %v6702 = vpop.permute.xlu0 %6701
      %6703 = vrot.lane.b32.xlu0 %v6627, 56
      %v6704 = vpop.permute.xlu0 %6703
      %6705 = vrot.lane.b32.xlu0 %v6628, 56
      %v6706 = vpop.permute.xlu0 %6705
      %6707 = vrot.lane.b32.xlu0 %v6629, 56
      %v6708 = vpop.permute.xlu0 %6707
      %6709 = vrot.lane.b32.xlu0 %v6630, 56
      %v6710 = vpop.permute.xlu0 %6709
      %6711 = vrot.lane.b32.xlu0 %v6631, 56
      %v6712 = vpop.permute.xlu0 %6711
      %6713 = vrot.lane.b32.xlu0 %v6632, 56
      %v6714 = vpop.permute.xlu0 %6713
      %6715 = vrot.lane.b32.xlu0 %v6633, 56
      %v6716 = vpop.permute.xlu0 %6715
      %6717 = vrot.lane.b32.xlu0 %v6634, 56
      %v6718 = vpop.permute.xlu0 %6717
      %6719 = vrot.lane.b32.xlu0 %v6635, 56
      %v6720 = vpop.permute.xlu0 %6719
      %6721 = vrot.lane.b32.xlu0 %v6636, 56
      %v6722 = vpop.permute.xlu0 %6721
      %6723 = vrot.lane.b32.xlu0 %v6637, 56
      %v6724 = vpop.permute.xlu0 %6723
      %6725 = vrot.lane.b32.xlu0 %v6638, 56
      %v6726 = vpop.permute.xlu0 %6725
      %6727 = vrot.lane.b32.xlu0 %v6639, 56
      %v6728 = vpop.permute.xlu0 %6727
      %6729 = vrot.lane.b32.xlu0 %v6640, 56
      %v6730 = vpop.permute.xlu0 %6729
      %6731 = vrot.lane.b32.xlu0 %v6641, 56
      %v6732 = vpop.permute.xlu0 %6731
      %6733 = vrot.lane.b32.xlu0 %v6642, 56
      %v6734 = vpop.permute.xlu0 %6733
      %6735 = vrot.lane.b32.xlu0 %v6643, 56
      %v6736 = vpop.permute.xlu0 %6735
      %6737 = vrot.lane.b32.xlu0 %v6644, 56
      %v6738 = vpop.permute.xlu0 %6737
      %6739 = vrot.lane.b32.xlu0 %v6645, 56
      %v6740 = vpop.permute.xlu0 %6739
      %6741 = vrot.lane.b32.xlu0 %v6646, 56
      %v6742 = vpop.permute.xlu0 %6741
      %6775 = vst.msk [vmem:[#allocation3] sm:$0xff] %vm1794, %v6680
      %6776 = vst.msk [vmem:[#allocation3 + $0x8] sm:$0xff] %vm1794, %v6682
      %6777 = vst.msk [vmem:[#allocation3 + $0x10] sm:$0xff] %vm1794, %v6684
      %6778 = vst.msk [vmem:[#allocation3 + $0x18] sm:$0xff] %vm1794, %v6686
      %6779 = vst.msk [vmem:[#allocation3 + $0x20] sm:$0xff] %vm1794, %v6688
      %6780 = vst.msk [vmem:[#allocation3 + $0x28] sm:$0xff] %vm1794, %v6690
      %6781 = vst.msk [vmem:[#allocation3 + $0x30] sm:$0xff] %vm1794, %v6692
      %6782 = vst.msk [vmem:[#allocation3 + $0x38] sm:$0xff] %vm1794, %v6694
      %6783 = vst.msk [vmem:[#allocation3 + $0x40] sm:$0xff] %vm1794, %v6696
      %6784 = vst.msk [vmem:[#allocation3 + $0x48] sm:$0xff] %vm1794, %v6698
      %6785 = vst.msk [vmem:[#allocation3 + $0x50] sm:$0xff] %vm1794, %v6700
      %6786 = vst.msk [vmem:[#allocation3 + $0x58] sm:$0xff] %vm1794, %v6702
      %6787 = vst.msk [vmem:[#allocation3 + $0x60] sm:$0xff] %vm1794, %v6704
      %6788 = vst.msk [vmem:[#allocation3 + $0x68] sm:$0xff] %vm1794, %v6706
      %6789 = vst.msk [vmem:[#allocation3 + $0x70] sm:$0xff] %vm1794, %v6708
      %6790 = vst.msk [vmem:[#allocation3 + $0x78] sm:$0xff] %vm1794, %v6710
      %6791 = vst.msk [vmem:[#allocation3 + $0x80] sm:$0xff] %vm1794, %v6712
      %6792 = vst.msk [vmem:[#allocation3 + $0x88] sm:$0xff] %vm1794, %v6714
      %6793 = vst.msk [vmem:[#allocation3 + $0x90] sm:$0xff] %vm1794, %v6716
      %6794 = vst.msk [vmem:[#allocation3 + $0x98] sm:$0xff] %vm1794, %v6718
      %6795 = vst.msk [vmem:[#allocation3 + $0xa0] sm:$0xff] %vm1794, %v6720
      %6796 = vst.msk [vmem:[#allocation3 + $0xa8] sm:$0xff] %vm1794, %v6722
      %6797 = vst.msk [vmem:[#allocation3 + $0xb0] sm:$0xff] %vm1794, %v6724
      %6798 = vst.msk [vmem:[#allocation3 + $0xb8] sm:$0xff] %vm1794, %v6726
      %6799 = vst.msk [vmem:[#allocation3 + $0xc0] sm:$0xff] %vm1794, %v6728
      %6800 = vst.msk [vmem:[#allocation3 + $0xc8] sm:$0xff] %vm1794, %v6730
      %6801 = vst.msk [vmem:[#allocation3 + $0xd0] sm:$0xff] %vm1794, %v6732
      %6802 = vst.msk [vmem:[#allocation3 + $0xd8] sm:$0xff] %vm1794, %v6734
      %6803 = vst.msk [vmem:[#allocation3 + $0xe0] sm:$0xff] %vm1794, %v6736
      %6804 = vst.msk [vmem:[#allocation3 + $0xe8] sm:$0xff] %vm1794, %v6738
      %6805 = vst.msk [vmem:[#allocation3 + $0xf0] sm:$0xff] %vm1794, %v6740
      %6806 = vst.msk [vmem:[#allocation3 + $0xf8] sm:$0xff] %vm1794, %v6742
      %v6807 = vld [vmem:[%s1440 + $0x2] sm:$0xff]
      %v6808 = vld [vmem:[%s1440 + $0xa] sm:$0xff]
      %v6809 = vld [vmem:[%s1440 + $0x1a] sm:$0xff]
      %v6810 = vld [vmem:[%s1440 + $0x22] sm:$0xff]
      %v6811 = vld [vmem:[%s1440 + $0x32] sm:$0xff]
      %v6812 = vld [vmem:[%s1440 + $0x3a] sm:$0xff]
      %v6813 = vld [vmem:[%s1440 + $0x4a] sm:$0xff]
      %v6814 = vld [vmem:[%s1440 + $0x52] sm:$0xff]
      %v6815 = vld [vmem:[%s1440 + $0x62] sm:$0xff]
      %v6816 = vld [vmem:[%s1440 + $0x6a] sm:$0xff]
      %v6817 = vld [vmem:[%s1440 + $0x7a] sm:$0xff]
      %v6818 = vld [vmem:[%s1440 + $0x82] sm:$0xff]
      %v6819 = vld [vmem:[%s1440 + $0x92] sm:$0xff]
      %v6820 = vld [vmem:[%s1440 + $0x9a] sm:$0xff]
      %v6821 = vld [vmem:[%s1440 + $0xaa] sm:$0xff]
      %v6822 = vld [vmem:[%s1440 + $0xb2] sm:$0xff]
      %v6823 = vld [vmem:[%s1440 + $0xc2] sm:$0xff]
      %v6824 = vld [vmem:[%s1440 + $0xca] sm:$0xff]
      %v6825 = vld [vmem:[%s1440 + $0xda] sm:$0xff]
      %v6826 = vld [vmem:[%s1440 + $0xe2] sm:$0xff]
      %v6827 = vld [vmem:[%s1440 + $0xf2] sm:$0xff]
      %v6828 = vld [vmem:[%s1440 + $0xfa] sm:$0xff]
      %v6829 = vld [vmem:[%s1440 + $0x10a] sm:$0xff]
      %v6830 = vld [vmem:[%s1440 + $0x112] sm:$0xff]
      %v6831 = vld [vmem:[%s1440 + $0x122] sm:$0xff]
      %v6832 = vld [vmem:[%s1440 + $0x12a] sm:$0xff]
      %v6833 = vld [vmem:[%s1440 + $0x13a] sm:$0xff]
      %v6834 = vld [vmem:[%s1440 + $0x142] sm:$0xff]
      %v6835 = vld [vmem:[%s1440 + $0x152] sm:$0xff]
      %v6836 = vld [vmem:[%s1440 + $0x15a] sm:$0xff]
      %v6837 = vld [vmem:[%s1440 + $0x16a] sm:$0xff]
      %v6838 = vld [vmem:[%s1440 + $0x172] sm:$0xff]
      %6871 = vrot.lane.b32.xlu0 %v6807, 64
      %v6872 = vpop.permute.xlu0 %6871
      %6873 = vrot.lane.b32.xlu0 %v6808, 64
      %v6874 = vpop.permute.xlu0 %6873
      %6875 = vrot.lane.b32.xlu0 %v6809, 64
      %v6876 = vpop.permute.xlu0 %6875
      %6877 = vrot.lane.b32.xlu0 %v6810, 64
      %v6878 = vpop.permute.xlu0 %6877
      %6879 = vrot.lane.b32.xlu0 %v6811, 64
      %v6880 = vpop.permute.xlu0 %6879
      %6881 = vrot.lane.b32.xlu0 %v6812, 64
      %v6882 = vpop.permute.xlu0 %6881
      %6883 = vrot.lane.b32.xlu0 %v6813, 64
      %v6884 = vpop.permute.xlu0 %6883
      %6885 = vrot.lane.b32.xlu0 %v6814, 64
      %v6886 = vpop.permute.xlu0 %6885
      %6887 = vrot.lane.b32.xlu0 %v6815, 64
      %v6888 = vpop.permute.xlu0 %6887
      %6889 = vrot.lane.b32.xlu0 %v6816, 64
      %v6890 = vpop.permute.xlu0 %6889
      %6891 = vrot.lane.b32.xlu0 %v6817, 64
      %v6892 = vpop.permute.xlu0 %6891
      %6893 = vrot.lane.b32.xlu0 %v6818, 64
      %v6894 = vpop.permute.xlu0 %6893
      %6895 = vrot.lane.b32.xlu0 %v6819, 64
      %v6896 = vpop.permute.xlu0 %6895
      %6897 = vrot.lane.b32.xlu0 %v6820, 64
      %v6898 = vpop.permute.xlu0 %6897
      %6899 = vrot.lane.b32.xlu0 %v6821, 64
      %v6900 = vpop.permute.xlu0 %6899
      %6901 = vrot.lane.b32.xlu0 %v6822, 64
      %v6902 = vpop.permute.xlu0 %6901
      %6903 = vrot.lane.b32.xlu0 %v6823, 64
      %v6904 = vpop.permute.xlu0 %6903
      %6905 = vrot.lane.b32.xlu0 %v6824, 64
      %v6906 = vpop.permute.xlu0 %6905
      %6907 = vrot.lane.b32.xlu0 %v6825, 64
      %v6908 = vpop.permute.xlu0 %6907
      %6909 = vrot.lane.b32.xlu0 %v6826, 64
      %v6910 = vpop.permute.xlu0 %6909
      %6911 = vrot.lane.b32.xlu0 %v6827, 64
      %v6912 = vpop.permute.xlu0 %6911
      %6913 = vrot.lane.b32.xlu0 %v6828, 64
      %v6914 = vpop.permute.xlu0 %6913
      %6915 = vrot.lane.b32.xlu0 %v6829, 64
      %v6916 = vpop.permute.xlu0 %6915
      %6917 = vrot.lane.b32.xlu0 %v6830, 64
      %v6918 = vpop.permute.xlu0 %6917
      %6919 = vrot.lane.b32.xlu0 %v6831, 64
      %v6920 = vpop.permute.xlu0 %6919
      %6921 = vrot.lane.b32.xlu0 %v6832, 64
      %v6922 = vpop.permute.xlu0 %6921
      %6923 = vrot.lane.b32.xlu0 %v6833, 64
      %v6924 = vpop.permute.xlu0 %6923
      %6925 = vrot.lane.b32.xlu0 %v6834, 64
      %v6926 = vpop.permute.xlu0 %6925
      %6927 = vrot.lane.b32.xlu0 %v6835, 64
      %v6928 = vpop.permute.xlu0 %6927
      %6929 = vrot.lane.b32.xlu0 %v6836, 64
      %v6930 = vpop.permute.xlu0 %6929
      %6931 = vrot.lane.b32.xlu0 %v6837, 64
      %v6932 = vpop.permute.xlu0 %6931
      %6933 = vrot.lane.b32.xlu0 %v6838, 64
      %v6934 = vpop.permute.xlu0 %6933
      %6967 = vst.msk [vmem:[#allocation3] sm:$0xff] %vm1987, %v6872
      %6968 = vst.msk [vmem:[#allocation3 + $0x8] sm:$0xff] %vm1987, %v6874
      %6969 = vst.msk [vmem:[#allocation3 + $0x10] sm:$0xff] %vm1987, %v6876
      %6970 = vst.msk [vmem:[#allocation3 + $0x18] sm:$0xff] %vm1987, %v6878
      %6971 = vst.msk [vmem:[#allocation3 + $0x20] sm:$0xff] %vm1987, %v6880
      %6972 = vst.msk [vmem:[#allocation3 + $0x28] sm:$0xff] %vm1987, %v6882
      %6973 = vst.msk [vmem:[#allocation3 + $0x30] sm:$0xff] %vm1987, %v6884
      %6974 = vst.msk [vmem:[#allocation3 + $0x38] sm:$0xff] %vm1987, %v6886
      %6975 = vst.msk [vmem:[#allocation3 + $0x40] sm:$0xff] %vm1987, %v6888
      %6976 = vst.msk [vmem:[#allocation3 + $0x48] sm:$0xff] %vm1987, %v6890
      %6977 = vst.msk [vmem:[#allocation3 + $0x50] sm:$0xff] %vm1987, %v6892
      %6978 = vst.msk [vmem:[#allocation3 + $0x58] sm:$0xff] %vm1987, %v6894
      %6979 = vst.msk [vmem:[#allocation3 + $0x60] sm:$0xff] %vm1987, %v6896
      %6980 = vst.msk [vmem:[#allocation3 + $0x68] sm:$0xff] %vm1987, %v6898
      %6981 = vst.msk [vmem:[#allocation3 + $0x70] sm:$0xff] %vm1987, %v6900
      %6982 = vst.msk [vmem:[#allocation3 + $0x78] sm:$0xff] %vm1987, %v6902
      %6983 = vst.msk [vmem:[#allocation3 + $0x80] sm:$0xff] %vm1987, %v6904
      %6984 = vst.msk [vmem:[#allocation3 + $0x88] sm:$0xff] %vm1987, %v6906
      %6985 = vst.msk [vmem:[#allocation3 + $0x90] sm:$0xff] %vm1987, %v6908
      %6986 = vst.msk [vmem:[#allocation3 + $0x98] sm:$0xff] %vm1987, %v6910
      %6987 = vst.msk [vmem:[#allocation3 + $0xa0] sm:$0xff] %vm1987, %v6912
      %6988 = vst.msk [vmem:[#allocation3 + $0xa8] sm:$0xff] %vm1987, %v6914
      %6989 = vst.msk [vmem:[#allocation3 + $0xb0] sm:$0xff] %vm1987, %v6916
      %6990 = vst.msk [vmem:[#allocation3 + $0xb8] sm:$0xff] %vm1987, %v6918
      %6991 = vst.msk [vmem:[#allocation3 + $0xc0] sm:$0xff] %vm1987, %v6920
      %6992 = vst.msk [vmem:[#allocation3 + $0xc8] sm:$0xff] %vm1987, %v6922
      %6993 = vst.msk [vmem:[#allocation3 + $0xd0] sm:$0xff] %vm1987, %v6924
      %6994 = vst.msk [vmem:[#allocation3 + $0xd8] sm:$0xff] %vm1987, %v6926
      %6995 = vst.msk [vmem:[#allocation3 + $0xe0] sm:$0xff] %vm1987, %v6928
      %6996 = vst.msk [vmem:[#allocation3 + $0xe8] sm:$0xff] %vm1987, %v6930
      %6997 = vst.msk [vmem:[#allocation3 + $0xf0] sm:$0xff] %vm1987, %v6932
      %6998 = vst.msk [vmem:[#allocation3 + $0xf8] sm:$0xff] %vm1987, %v6934
      %v6999 = vld [vmem:[#allocation3] sm:$0xff]
      %v7000 = vld [vmem:[#allocation3 + $0x8] sm:$0xff]
      %v7001 = vld [vmem:[#allocation3 + $0x10] sm:$0xff]
      %v7002 = vld [vmem:[#allocation3 + $0x18] sm:$0xff]
      %v7003 = vld [vmem:[#allocation3 + $0x20] sm:$0xff]
      %v7004 = vld [vmem:[#allocation3 + $0x28] sm:$0xff]
      %v7005 = vld [vmem:[#allocation3 + $0x30] sm:$0xff]
      %v7006 = vld [vmem:[#allocation3 + $0x38] sm:$0xff]
      %v7007 = vld [vmem:[#allocation3 + $0x40] sm:$0xff]
      %v7008 = vld [vmem:[#allocation3 + $0x48] sm:$0xff]
      %v7009 = vld [vmem:[#allocation3 + $0x50] sm:$0xff]
      %v7010 = vld [vmem:[#allocation3 + $0x58] sm:$0xff]
      %v7011 = vld [vmem:[#allocation3 + $0x60] sm:$0xff]
      %v7012 = vld [vmem:[#allocation3 + $0x68] sm:$0xff]
      %v7013 = vld [vmem:[#allocation3 + $0x70] sm:$0xff]
      %v7014 = vld [vmem:[#allocation3 + $0x78] sm:$0xff]
      %v7015 = vld [vmem:[#allocation3 + $0x80] sm:$0xff]
      %v7016 = vld [vmem:[#allocation3 + $0x88] sm:$0xff]
      %v7017 = vld [vmem:[#allocation3 + $0x90] sm:$0xff]
      %v7018 = vld [vmem:[#allocation3 + $0x98] sm:$0xff]
      %v7019 = vld [vmem:[#allocation3 + $0xa0] sm:$0xff]
      %v7020 = vld [vmem:[#allocation3 + $0xa8] sm:$0xff]
      %v7021 = vld [vmem:[#allocation3 + $0xb0] sm:$0xff]
      %v7022 = vld [vmem:[#allocation3 + $0xb8] sm:$0xff]
      %v7023 = vld [vmem:[#allocation3 + $0xc0] sm:$0xff]
      %v7024 = vld [vmem:[#allocation3 + $0xc8] sm:$0xff]
      %v7025 = vld [vmem:[#allocation3 + $0xd0] sm:$0xff]
      %v7026 = vld [vmem:[#allocation3 + $0xd8] sm:$0xff]
      %v7027 = vld [vmem:[#allocation3 + $0xe0] sm:$0xff]
      %v7028 = vld [vmem:[#allocation3 + $0xe8] sm:$0xff]
      %v7029 = vld [vmem:[#allocation3 + $0xf0] sm:$0xff]
      %v7030 = vld [vmem:[#allocation3 + $0xf8] sm:$0xff]
      %s7031 = scalar_lea.vmem %s1, 144
      %v7032 = vld [vmem:[%s7031] sm:$0xff]
      %v7033 = vld [vmem:[%s7031 + $0x8] sm:$0xff]
      %v7034 = vld [vmem:[%s7031 + $0x10] sm:$0xff]
      %v7035 = vld [vmem:[%s7031 + $0x18] sm:$0xff]
      %v7036 = vld [vmem:[%s7031 + $0x20] sm:$0xff]
      %v7037 = vld [vmem:[%s7031 + $0x28] sm:$0xff]
      %v7038 = vld [vmem:[%s7031 + $0x30] sm:$0xff]
      %v7039 = vld [vmem:[%s7031 + $0x38] sm:$0xff]
      %v7040 = vld [vmem:[%s7031 + $0x40] sm:$0xff]
      %s7041 = scalar_lea.vmem %s2, 2
      %v7042 = vld [vmem:[%s7041] sm:$0x1]
      %v7044 = vperm.slane %v7042, 0
      %v7047 = vsel %vm2065, %v6999, 0
      %v7050 = vsel %vm2065, %v7000, 0
      %v7053 = vsel %vm2065, %v7001, 0
      %v7056 = vsel %vm2065, %v7002, 0
      %v7059 = vsel %vm2065, %v7003, 0
      %v7062 = vsel %vm2065, %v7004, 0
      %v7065 = vsel %vm2065, %v7005, 0
      %v7068 = vsel %vm2065, %v7006, 0
      %v7071 = vsel %vm2065, %v7007, 0
      %v7074 = vsel %vm2065, %v7008, 0
      %v7077 = vsel %vm2065, %v7009, 0
      %v7080 = vsel %vm2065, %v7010, 0
      %v7083 = vsel %vm2065, %v7011, 0
      %v7086 = vsel %vm2065, %v7012, 0
      %v7089 = vsel %vm2065, %v7013, 0
      %v7092 = vsel %vm2065, %v7014, 0
      %v7095 = vsel %vm2065, %v7015, 0
      %v7098 = vsel %vm2065, %v7016, 0
      %v7101 = vsel %vm2065, %v7017, 0
      %v7104 = vsel %vm2065, %v7018, 0
      %v7107 = vsel %vm2065, %v7019, 0
      %v7110 = vsel %vm2065, %v7020, 0
      %v7113 = vsel %vm2065, %v7021, 0
      %v7116 = vsel %vm2065, %v7022, 0
      %v7119 = vsel %vm2065, %v7023, 0
      %v7122 = vsel %vm2065, %v7024, 0
      %v7125 = vsel %vm2065, %v7025, 0
      %v7128 = vsel %vm2065, %v7026, 0
      %v7131 = vsel %vm2065, %v7027, 0
      %v7134 = vsel %vm2065, %v7028, 0
      %v7137 = vsel %vm2065, %v7029, 0
      %v7140 = vsel %vm2065, %v7030, 0
      %7142 = vmatpush.msra.mxu0 0.0
      %7143 = vmatpush.msra.mxu0 0.0
      %7144 = vmatpush.msra.mxu0 0.0
      %7145 = vmatpush.msra.mxu0 0.0
      %7146 = vmatpush.msra.mxu0 0.0
      %7147 = vmatpush.msra.mxu0 0.0
      %7148 = vmatpush.msra.mxu0 0.0
      %7149 = vmatpush.msra.mxu0 %v7040
      %7150 = vmatpush.msra.mxu0 %v7039
      %7151 = vmatpush.msra.mxu0 %v7038
      %7152 = vmatpush.msra.mxu0 %v7037
      %7153 = vmatpush.msra.mxu0 %v7036
      %7154 = vmatpush.msra.mxu0 %v7035
      %7155 = vmatpush.msra.mxu0 %v7034
      %7156 = vmatpush.msra.mxu0 %v7033
      %7157 = vmatpush.msra.mxu0 %v7032
      %7158 = vmatmul.f32.gmra.mxu0 %v7047
      %v7159 = vpop.f32.mrf.mxu0
      %v7160 = vadd.f32 %v7044, %v7159
      %7161 = vmatmul.f32.gmra.mxu0 %v7050
      %v7162 = vpop.f32.mrf.mxu0
      %v7163 = vadd.f32 %v7044, %v7162
      %7164 = vmatmul.f32.gmra.mxu0 %v7053
      %v7165 = vpop.f32.mrf.mxu0
      %v7166 = vadd.f32 %v7044, %v7165
      %7167 = vmatmul.f32.gmra.mxu0 %v7056
      %v7168 = vpop.f32.mrf.mxu0
      %v7169 = vadd.f32 %v7044, %v7168
      %7170 = vmatmul.f32.gmra.mxu0 %v7059
      %v7171 = vpop.f32.mrf.mxu0
      %v7172 = vadd.f32 %v7044, %v7171
      %7173 = vmatmul.f32.gmra.mxu0 %v7062
      %v7174 = vpop.f32.mrf.mxu0
      %v7175 = vadd.f32 %v7044, %v7174
      %7176 = vmatmul.f32.gmra.mxu0 %v7065
      %v7177 = vpop.f32.mrf.mxu0
      %v7178 = vadd.f32 %v7044, %v7177
      %7179 = vmatmul.f32.gmra.mxu0 %v7068
      %v7180 = vpop.f32.mrf.mxu0
      %v7181 = vadd.f32 %v7044, %v7180
      %7182 = vmatmul.f32.gmra.mxu0 %v7071
      %v7183 = vpop.f32.mrf.mxu0
      %v7184 = vadd.f32 %v7044, %v7183
      %7185 = vmatmul.f32.gmra.mxu0 %v7074
      %v7186 = vpop.f32.mrf.mxu0
      %v7187 = vadd.f32 %v7044, %v7186
      %7188 = vmatmul.f32.gmra.mxu0 %v7077
      %v7189 = vpop.f32.mrf.mxu0
      %v7190 = vadd.f32 %v7044, %v7189
      %7191 = vmatmul.f32.gmra.mxu0 %v7080
      %v7192 = vpop.f32.mrf.mxu0
      %v7193 = vadd.f32 %v7044, %v7192
      %7194 = vmatmul.f32.gmra.mxu0 %v7083
      %v7195 = vpop.f32.mrf.mxu0
      %v7196 = vadd.f32 %v7044, %v7195
      %7197 = vmatmul.f32.gmra.mxu0 %v7086
      %v7198 = vpop.f32.mrf.mxu0
      %v7199 = vadd.f32 %v7044, %v7198
      %7200 = vmatmul.f32.gmra.mxu0 %v7089
      %v7201 = vpop.f32.mrf.mxu0
      %v7202 = vadd.f32 %v7044, %v7201
      %7203 = vmatmul.f32.gmra.mxu0 %v7092
      %v7204 = vpop.f32.mrf.mxu0
      %v7205 = vadd.f32 %v7044, %v7204
      %7206 = vmatmul.f32.gmra.mxu0 %v7095
      %v7207 = vpop.f32.mrf.mxu0
      %v7208 = vadd.f32 %v7044, %v7207
      %7209 = vmatmul.f32.gmra.mxu0 %v7098
      %v7210 = vpop.f32.mrf.mxu0
      %v7211 = vadd.f32 %v7044, %v7210
      %7212 = vmatmul.f32.gmra.mxu0 %v7101
      %v7213 = vpop.f32.mrf.mxu0
      %v7214 = vadd.f32 %v7044, %v7213
      %7215 = vmatmul.f32.gmra.mxu0 %v7104
      %v7216 = vpop.f32.mrf.mxu0
      %v7217 = vadd.f32 %v7044, %v7216
      %7218 = vmatmul.f32.gmra.mxu0 %v7107
      %v7219 = vpop.f32.mrf.mxu0
      %v7220 = vadd.f32 %v7044, %v7219
      %7221 = vmatmul.f32.gmra.mxu0 %v7110
      %v7222 = vpop.f32.mrf.mxu0
      %v7223 = vadd.f32 %v7044, %v7222
      %7224 = vmatmul.f32.gmra.mxu0 %v7113
      %v7225 = vpop.f32.mrf.mxu0
      %v7226 = vadd.f32 %v7044, %v7225
      %7227 = vmatmul.f32.gmra.mxu0 %v7116
      %v7228 = vpop.f32.mrf.mxu0
      %v7229 = vadd.f32 %v7044, %v7228
      %7230 = vmatmul.f32.gmra.mxu0 %v7119
      %v7231 = vpop.f32.mrf.mxu0
      %v7232 = vadd.f32 %v7044, %v7231
      %7233 = vmatmul.f32.gmra.mxu0 %v7122
      %v7234 = vpop.f32.mrf.mxu0
      %v7235 = vadd.f32 %v7044, %v7234
      %7236 = vmatmul.f32.gmra.mxu0 %v7125
      %v7237 = vpop.f32.mrf.mxu0
      %v7238 = vadd.f32 %v7044, %v7237
      %7239 = vmatmul.f32.gmra.mxu0 %v7128
      %v7240 = vpop.f32.mrf.mxu0
      %v7241 = vadd.f32 %v7044, %v7240
      %7242 = vmatmul.f32.gmra.mxu0 %v7131
      %v7243 = vpop.f32.mrf.mxu0
      %v7244 = vadd.f32 %v7044, %v7243
      %7245 = vmatmul.f32.gmra.mxu0 %v7134
      %v7246 = vpop.f32.mrf.mxu0
      %v7247 = vadd.f32 %v7044, %v7246
      %7248 = vmatmul.f32.gmra.mxu0 %v7137
      %v7249 = vpop.f32.mrf.mxu0
      %v7250 = vadd.f32 %v7044, %v7249
      %7251 = vmatmul.f32.gmra.mxu0 %v7140
      %v7252 = vpop.f32.mrf.mxu0
      %v7253 = vadd.f32 %v7044, %v7252
      %7254 = vdwg.mxu0
      %vm7255 = vcmp.gt.f32.partialorder %v7160, 0.0
      %vm7256 = vcmp.gt.f32.partialorder %v7163, 0.0
      %vm7257 = vcmp.gt.f32.partialorder %v7166, 0.0
      %vm7258 = vcmp.gt.f32.partialorder %v7169, 0.0
      %vm7259 = vcmp.gt.f32.partialorder %v7172, 0.0
      %vm7260 = vcmp.gt.f32.partialorder %v7175, 0.0
      %vm7261 = vcmp.gt.f32.partialorder %v7178, 0.0
      %vm7262 = vcmp.gt.f32.partialorder %v7181, 0.0
      %vm7263 = vcmp.gt.f32.partialorder %v7184, 0.0
      %vm7264 = vcmp.gt.f32.partialorder %v7187, 0.0
      %vm7265 = vcmp.gt.f32.partialorder %v7190, 0.0
      %vm7266 = vcmp.gt.f32.partialorder %v7193, 0.0
      %vm7267 = vcmp.gt.f32.partialorder %v7196, 0.0
      %vm7268 = vcmp.gt.f32.partialorder %v7199, 0.0
      %vm7269 = vcmp.gt.f32.partialorder %v7202, 0.0
      %vm7270 = vcmp.gt.f32.partialorder %v7205, 0.0
      %vm7271 = vcmp.gt.f32.partialorder %v7208, 0.0
      %vm7272 = vcmp.gt.f32.partialorder %v7211, 0.0
      %vm7273 = vcmp.gt.f32.partialorder %v7214, 0.0
      %vm7274 = vcmp.gt.f32.partialorder %v7217, 0.0
      %vm7275 = vcmp.gt.f32.partialorder %v7220, 0.0
      %vm7276 = vcmp.gt.f32.partialorder %v7223, 0.0
      %vm7277 = vcmp.gt.f32.partialorder %v7226, 0.0
      %vm7278 = vcmp.gt.f32.partialorder %v7229, 0.0
      %vm7279 = vcmp.gt.f32.partialorder %v7232, 0.0
      %vm7280 = vcmp.gt.f32.partialorder %v7235, 0.0
      %vm7281 = vcmp.gt.f32.partialorder %v7238, 0.0
      %vm7282 = vcmp.gt.f32.partialorder %v7241, 0.0
      %vm7283 = vcmp.gt.f32.partialorder %v7244, 0.0
      %vm7284 = vcmp.gt.f32.partialorder %v7247, 0.0
      %vm7285 = vcmp.gt.f32.partialorder %v7250, 0.0
      %vm7286 = vcmp.gt.f32.partialorder %v7253, 0.0
      %v7287 = vmul.f32 %v7160, 0.2
      %v7288 = vmul.f32 %v7163, 0.2
      %v7289 = vmul.f32 %v7166, 0.2
      %v7290 = vmul.f32 %v7169, 0.2
      %v7291 = vmul.f32 %v7172, 0.2
      %v7292 = vmul.f32 %v7175, 0.2
      %v7293 = vmul.f32 %v7178, 0.2
      %v7294 = vmul.f32 %v7181, 0.2
      %v7295 = vmul.f32 %v7184, 0.2
      %v7296 = vmul.f32 %v7187, 0.2
      %v7297 = vmul.f32 %v7190, 0.2
      %v7298 = vmul.f32 %v7193, 0.2
      %v7299 = vmul.f32 %v7196, 0.2
      %v7300 = vmul.f32 %v7199, 0.2
      %v7301 = vmul.f32 %v7202, 0.2
      %v7302 = vmul.f32 %v7205, 0.2
      %v7303 = vmul.f32 %v7208, 0.2
      %v7304 = vmul.f32 %v7211, 0.2
      %v7305 = vmul.f32 %v7214, 0.2
      %v7306 = vmul.f32 %v7217, 0.2
      %v7307 = vmul.f32 %v7220, 0.2
      %v7308 = vmul.f32 %v7223, 0.2
      %v7309 = vmul.f32 %v7226, 0.2
      %v7310 = vmul.f32 %v7229, 0.2
      %v7311 = vmul.f32 %v7232, 0.2
      %v7312 = vmul.f32 %v7235, 0.2
      %v7313 = vmul.f32 %v7238, 0.2
      %v7314 = vmul.f32 %v7241, 0.2
      %v7315 = vmul.f32 %v7244, 0.2
      %v7316 = vmul.f32 %v7247, 0.2
      %v7317 = vmul.f32 %v7250, 0.2
      %v7318 = vmul.f32 %v7253, 0.2
      %v7319 = vsel %vm7255, %v7160, %v7287
      %v7320 = vsel %vm7256, %v7163, %v7288
      %v7321 = vsel %vm7257, %v7166, %v7289
      %v7322 = vsel %vm7258, %v7169, %v7290
      %v7323 = vsel %vm7259, %v7172, %v7291
      %v7324 = vsel %vm7260, %v7175, %v7292
      %v7325 = vsel %vm7261, %v7178, %v7293
      %v7326 = vsel %vm7262, %v7181, %v7294
      %v7327 = vsel %vm7263, %v7184, %v7295
      %v7328 = vsel %vm7264, %v7187, %v7296
      %v7329 = vsel %vm7265, %v7190, %v7297
      %v7330 = vsel %vm7266, %v7193, %v7298
      %v7331 = vsel %vm7267, %v7196, %v7299
      %v7332 = vsel %vm7268, %v7199, %v7300
      %v7333 = vsel %vm7269, %v7202, %v7301
      %v7334 = vsel %vm7270, %v7205, %v7302
      %v7335 = vsel %vm7271, %v7208, %v7303
      %v7336 = vsel %vm7272, %v7211, %v7304
      %v7337 = vsel %vm7273, %v7214, %v7305
      %v7338 = vsel %vm7274, %v7217, %v7306
      %v7339 = vsel %vm7275, %v7220, %v7307
      %v7340 = vsel %vm7276, %v7223, %v7308
      %v7341 = vsel %vm7277, %v7226, %v7309
      %v7342 = vsel %vm7278, %v7229, %v7310
      %v7343 = vsel %vm7279, %v7232, %v7311
      %v7344 = vsel %vm7280, %v7235, %v7312
      %v7345 = vsel %vm7281, %v7238, %v7313
      %v7346 = vsel %vm7282, %v7241, %v7314
      %v7347 = vsel %vm7283, %v7244, %v7315
      %v7348 = vsel %vm7284, %v7247, %v7316
      %v7349 = vsel %vm7285, %v7250, %v7317
      %v7350 = vsel %vm7286, %v7253, %v7318
      %7383 = vrot.lane.b32.xlu0 %v7319, 24
      %v7384 = vpop.permute.xlu0 %7383
      %7385 = vrot.lane.b32.xlu0 %v7320, 24
      %v7386 = vpop.permute.xlu0 %7385
      %7387 = vrot.lane.b32.xlu0 %v7321, 24
      %v7388 = vpop.permute.xlu0 %7387
      %7389 = vrot.lane.b32.xlu0 %v7322, 24
      %v7390 = vpop.permute.xlu0 %7389
      %7391 = vrot.lane.b32.xlu0 %v7323, 24
      %v7392 = vpop.permute.xlu0 %7391
      %7393 = vrot.lane.b32.xlu0 %v7324, 24
      %v7394 = vpop.permute.xlu0 %7393
      %7395 = vrot.lane.b32.xlu0 %v7325, 24
      %v7396 = vpop.permute.xlu0 %7395
      %7397 = vrot.lane.b32.xlu0 %v7326, 24
      %v7398 = vpop.permute.xlu0 %7397
      %7399 = vrot.lane.b32.xlu0 %v7327, 24
      %v7400 = vpop.permute.xlu0 %7399
      %7401 = vrot.lane.b32.xlu0 %v7328, 24
      %v7402 = vpop.permute.xlu0 %7401
      %7403 = vrot.lane.b32.xlu0 %v7329, 24
      %v7404 = vpop.permute.xlu0 %7403
      %7405 = vrot.lane.b32.xlu0 %v7330, 24
      %v7406 = vpop.permute.xlu0 %7405
      %7407 = vrot.lane.b32.xlu0 %v7331, 24
      %v7408 = vpop.permute.xlu0 %7407
      %7409 = vrot.lane.b32.xlu0 %v7332, 24
      %v7410 = vpop.permute.xlu0 %7409
      %7411 = vrot.lane.b32.xlu0 %v7333, 24
      %v7412 = vpop.permute.xlu0 %7411
      %7413 = vrot.lane.b32.xlu0 %v7334, 24
      %v7414 = vpop.permute.xlu0 %7413
      %7415 = vrot.lane.b32.xlu0 %v7335, 24
      %v7416 = vpop.permute.xlu0 %7415
      %7417 = vrot.lane.b32.xlu0 %v7336, 24
      %v7418 = vpop.permute.xlu0 %7417
      %7419 = vrot.lane.b32.xlu0 %v7337, 24
      %v7420 = vpop.permute.xlu0 %7419
      %7421 = vrot.lane.b32.xlu0 %v7338, 24
      %v7422 = vpop.permute.xlu0 %7421
      %7423 = vrot.lane.b32.xlu0 %v7339, 24
      %v7424 = vpop.permute.xlu0 %7423
      %7425 = vrot.lane.b32.xlu0 %v7340, 24
      %v7426 = vpop.permute.xlu0 %7425
      %7427 = vrot.lane.b32.xlu0 %v7341, 24
      %v7428 = vpop.permute.xlu0 %7427
      %7429 = vrot.lane.b32.xlu0 %v7342, 24
      %v7430 = vpop.permute.xlu0 %7429
      %7431 = vrot.lane.b32.xlu0 %v7343, 24
      %v7432 = vpop.permute.xlu0 %7431
      %7433 = vrot.lane.b32.xlu0 %v7344, 24
      %v7434 = vpop.permute.xlu0 %7433
      %7435 = vrot.lane.b32.xlu0 %v7345, 24
      %v7436 = vpop.permute.xlu0 %7435
      %7437 = vrot.lane.b32.xlu0 %v7346, 24
      %v7438 = vpop.permute.xlu0 %7437
      %7439 = vrot.lane.b32.xlu0 %v7347, 24
      %v7440 = vpop.permute.xlu0 %7439
      %7441 = vrot.lane.b32.xlu0 %v7348, 24
      %v7442 = vpop.permute.xlu0 %7441
      %7443 = vrot.lane.b32.xlu0 %v7349, 24
      %v7444 = vpop.permute.xlu0 %7443
      %7445 = vrot.lane.b32.xlu0 %v7350, 24
      %v7446 = vpop.permute.xlu0 %7445
      %7479 = vst.msk [vmem:[#allocation4] sm:$0xff] %vm1021, %v7384
      %7480 = vst.msk [vmem:[#allocation4 + $0x8] sm:$0xff] %vm1021, %v7386
      %7481 = vst.msk [vmem:[#allocation4 + $0x10] sm:$0xff] %vm1021, %v7388
      %7482 = vst.msk [vmem:[#allocation4 + $0x18] sm:$0xff] %vm1021, %v7390
      %7483 = vst.msk [vmem:[#allocation4 + $0x20] sm:$0xff] %vm1021, %v7392
      %7484 = vst.msk [vmem:[#allocation4 + $0x28] sm:$0xff] %vm1021, %v7394
      %7485 = vst.msk [vmem:[#allocation4 + $0x30] sm:$0xff] %vm1021, %v7396
      %7486 = vst.msk [vmem:[#allocation4 + $0x38] sm:$0xff] %vm1021, %v7398
      %7487 = vst.msk [vmem:[#allocation4 + $0x40] sm:$0xff] %vm1021, %v7400
      %7488 = vst.msk [vmem:[#allocation4 + $0x48] sm:$0xff] %vm1021, %v7402
      %7489 = vst.msk [vmem:[#allocation4 + $0x50] sm:$0xff] %vm1021, %v7404
      %7490 = vst.msk [vmem:[#allocation4 + $0x58] sm:$0xff] %vm1021, %v7406
      %7491 = vst.msk [vmem:[#allocation4 + $0x60] sm:$0xff] %vm1021, %v7408
      %7492 = vst.msk [vmem:[#allocation4 + $0x68] sm:$0xff] %vm1021, %v7410
      %7493 = vst.msk [vmem:[#allocation4 + $0x70] sm:$0xff] %vm1021, %v7412
      %7494 = vst.msk [vmem:[#allocation4 + $0x78] sm:$0xff] %vm1021, %v7414
      %7495 = vst.msk [vmem:[#allocation4 + $0x80] sm:$0xff] %vm1021, %v7416
      %7496 = vst.msk [vmem:[#allocation4 + $0x88] sm:$0xff] %vm1021, %v7418
      %7497 = vst.msk [vmem:[#allocation4 + $0x90] sm:$0xff] %vm1021, %v7420
      %7498 = vst.msk [vmem:[#allocation4 + $0x98] sm:$0xff] %vm1021, %v7422
      %7499 = vst.msk [vmem:[#allocation4 + $0xa0] sm:$0xff] %vm1021, %v7424
      %7500 = vst.msk [vmem:[#allocation4 + $0xa8] sm:$0xff] %vm1021, %v7426
      %7501 = vst.msk [vmem:[#allocation4 + $0xb0] sm:$0xff] %vm1021, %v7428
      %7502 = vst.msk [vmem:[#allocation4 + $0xb8] sm:$0xff] %vm1021, %v7430
      %7503 = vst.msk [vmem:[#allocation4 + $0xc0] sm:$0xff] %vm1021, %v7432
      %7504 = vst.msk [vmem:[#allocation4 + $0xc8] sm:$0xff] %vm1021, %v7434
      %7505 = vst.msk [vmem:[#allocation4 + $0xd0] sm:$0xff] %vm1021, %v7436
      %7506 = vst.msk [vmem:[#allocation4 + $0xd8] sm:$0xff] %vm1021, %v7438
      %7507 = vst.msk [vmem:[#allocation4 + $0xe0] sm:$0xff] %vm1021, %v7440
      %7508 = vst.msk [vmem:[#allocation4 + $0xe8] sm:$0xff] %vm1021, %v7442
      %7509 = vst.msk [vmem:[#allocation4 + $0xf0] sm:$0xff] %vm1021, %v7444
      %7510 = vst.msk [vmem:[#allocation4 + $0xf8] sm:$0xff] %vm1021, %v7446
      %v7511 = vld [vmem:[#allocation4] sm:$0xff]
      %v7512 = vld [vmem:[#allocation4 + $0x8] sm:$0xff]
      %v7513 = vld [vmem:[#allocation4 + $0x10] sm:$0xff]
      %v7514 = vld [vmem:[#allocation4 + $0x18] sm:$0xff]
      %v7515 = vld [vmem:[#allocation4 + $0x20] sm:$0xff]
      %v7516 = vld [vmem:[#allocation4 + $0x28] sm:$0xff]
      %v7517 = vld [vmem:[#allocation4 + $0x30] sm:$0xff]
      %v7518 = vld [vmem:[#allocation4 + $0x38] sm:$0xff]
      %v7519 = vld [vmem:[#allocation4 + $0x40] sm:$0xff]
      %v7520 = vld [vmem:[#allocation4 + $0x48] sm:$0xff]
      %v7521 = vld [vmem:[#allocation4 + $0x50] sm:$0xff]
      %v7522 = vld [vmem:[#allocation4 + $0x58] sm:$0xff]
      %v7523 = vld [vmem:[#allocation4 + $0x60] sm:$0xff]
      %v7524 = vld [vmem:[#allocation4 + $0x68] sm:$0xff]
      %v7525 = vld [vmem:[#allocation4 + $0x70] sm:$0xff]
      %v7526 = vld [vmem:[#allocation4 + $0x78] sm:$0xff]
      %v7527 = vld [vmem:[#allocation4 + $0x80] sm:$0xff]
      %v7528 = vld [vmem:[#allocation4 + $0x88] sm:$0xff]
      %v7529 = vld [vmem:[#allocation4 + $0x90] sm:$0xff]
      %v7530 = vld [vmem:[#allocation4 + $0x98] sm:$0xff]
      %v7531 = vld [vmem:[#allocation4 + $0xa0] sm:$0xff]
      %v7532 = vld [vmem:[#allocation4 + $0xa8] sm:$0xff]
      %v7533 = vld [vmem:[#allocation4 + $0xb0] sm:$0xff]
      %v7534 = vld [vmem:[#allocation4 + $0xb8] sm:$0xff]
      %v7535 = vld [vmem:[#allocation4 + $0xc0] sm:$0xff]
      %v7536 = vld [vmem:[#allocation4 + $0xc8] sm:$0xff]
      %v7537 = vld [vmem:[#allocation4 + $0xd0] sm:$0xff]
      %v7538 = vld [vmem:[#allocation4 + $0xd8] sm:$0xff]
      %v7539 = vld [vmem:[#allocation4 + $0xe0] sm:$0xff]
      %v7540 = vld [vmem:[#allocation4 + $0xe8] sm:$0xff]
      %v7541 = vld [vmem:[#allocation4 + $0xf0] sm:$0xff]
      %v7542 = vld [vmem:[#allocation4 + $0xf8] sm:$0xff]
      %s7543 = scalar_lea.vmem %s3, 64
      %v7544 = vld [vmem:[%s7543] sm:$0xff]
      %v7545 = vld [vmem:[%s7543 + $0x8] sm:$0xff]
      %v7546 = vld [vmem:[%s7543 + $0x10] sm:$0xff]
      %v7547 = vld [vmem:[%s7543 + $0x18] sm:$0xff]
      %s7548 = scalar_lea.vmem %s4, 2
      %v7549 = vld [vmem:[%s7548] sm:$0x1]
      %v7551 = vperm.slane %v7549, 0
      %v7554 = vsel %vm281, %v7511, 0
      %v7557 = vsel %vm281, %v7512, 0
      %v7560 = vsel %vm281, %v7513, 0
      %v7563 = vsel %vm281, %v7514, 0
      %v7566 = vsel %vm281, %v7515, 0
      %v7569 = vsel %vm281, %v7516, 0
      %v7572 = vsel %vm281, %v7517, 0
      %v7575 = vsel %vm281, %v7518, 0
      %v7578 = vsel %vm281, %v7519, 0
      %v7581 = vsel %vm281, %v7520, 0
      %v7584 = vsel %vm281, %v7521, 0
      %v7587 = vsel %vm281, %v7522, 0
      %v7590 = vsel %vm281, %v7523, 0
      %v7593 = vsel %vm281, %v7524, 0
      %v7596 = vsel %vm281, %v7525, 0
      %v7599 = vsel %vm281, %v7526, 0
      %v7602 = vsel %vm281, %v7527, 0
      %v7605 = vsel %vm281, %v7528, 0
      %v7608 = vsel %vm281, %v7529, 0
      %v7611 = vsel %vm281, %v7530, 0
      %v7614 = vsel %vm281, %v7531, 0
      %v7617 = vsel %vm281, %v7532, 0
      %v7620 = vsel %vm281, %v7533, 0
      %v7623 = vsel %vm281, %v7534, 0
      %v7626 = vsel %vm281, %v7535, 0
      %v7629 = vsel %vm281, %v7536, 0
      %v7632 = vsel %vm281, %v7537, 0
      %v7635 = vsel %vm281, %v7538, 0
      %v7638 = vsel %vm281, %v7539, 0
      %v7641 = vsel %vm281, %v7540, 0
      %v7644 = vsel %vm281, %v7541, 0
      %v7647 = vsel %vm281, %v7542, 0
      %7649 = vmatpush.msra.mxu0 0.0
      %7650 = vmatpush.msra.mxu0 0.0
      %7651 = vmatpush.msra.mxu0 0.0
      %7652 = vmatpush.msra.mxu0 0.0
      %7653 = vmatpush.msra.mxu0 0.0
      %7654 = vmatpush.msra.mxu0 0.0
      %7655 = vmatpush.msra.mxu0 0.0
      %7656 = vmatpush.msra.mxu0 0.0
      %7657 = vmatpush.msra.mxu0 0.0
      %7658 = vmatpush.msra.mxu0 0.0
      %7659 = vmatpush.msra.mxu0 0.0
      %7660 = vmatpush.msra.mxu0 0.0
      %7661 = vmatpush.msra.mxu0 %v7547
      %7662 = vmatpush.msra.mxu0 %v7546
      %7663 = vmatpush.msra.mxu0 %v7545
      %7664 = vmatpush.msra.mxu0 %v7544
      %7665 = vmatmul.f32.gmra.mxu0 %v7554
      %v7666 = vpop.f32.mrf.mxu0
      %v7667 = vadd.f32 %v7551, %v7666
      %7668 = vmatmul.f32.gmra.mxu0 %v7557
      %v7669 = vpop.f32.mrf.mxu0
      %v7670 = vadd.f32 %v7551, %v7669
      %7671 = vmatmul.f32.gmra.mxu0 %v7560
      %v7672 = vpop.f32.mrf.mxu0
      %v7673 = vadd.f32 %v7551, %v7672
      %7674 = vmatmul.f32.gmra.mxu0 %v7563
      %v7675 = vpop.f32.mrf.mxu0
      %v7676 = vadd.f32 %v7551, %v7675
      %7677 = vmatmul.f32.gmra.mxu0 %v7566
      %v7678 = vpop.f32.mrf.mxu0
      %v7679 = vadd.f32 %v7551, %v7678
      %7680 = vmatmul.f32.gmra.mxu0 %v7569
      %v7681 = vpop.f32.mrf.mxu0
      %v7682 = vadd.f32 %v7551, %v7681
      %7683 = vmatmul.f32.gmra.mxu0 %v7572
      %v7684 = vpop.f32.mrf.mxu0
      %v7685 = vadd.f32 %v7551, %v7684
      %7686 = vmatmul.f32.gmra.mxu0 %v7575
      %v7687 = vpop.f32.mrf.mxu0
      %v7688 = vadd.f32 %v7551, %v7687
      %7689 = vmatmul.f32.gmra.mxu0 %v7578
      %v7690 = vpop.f32.mrf.mxu0
      %v7691 = vadd.f32 %v7551, %v7690
      %7692 = vmatmul.f32.gmra.mxu0 %v7581
      %v7693 = vpop.f32.mrf.mxu0
      %v7694 = vadd.f32 %v7551, %v7693
      %7695 = vmatmul.f32.gmra.mxu0 %v7584
      %v7696 = vpop.f32.mrf.mxu0
      %v7697 = vadd.f32 %v7551, %v7696
      %7698 = vmatmul.f32.gmra.mxu0 %v7587
      %v7699 = vpop.f32.mrf.mxu0
      %v7700 = vadd.f32 %v7551, %v7699
      %7701 = vmatmul.f32.gmra.mxu0 %v7590
      %v7702 = vpop.f32.mrf.mxu0
      %v7703 = vadd.f32 %v7551, %v7702
      %7704 = vmatmul.f32.gmra.mxu0 %v7593
      %v7705 = vpop.f32.mrf.mxu0
      %v7706 = vadd.f32 %v7551, %v7705
      %7707 = vmatmul.f32.gmra.mxu0 %v7596
      %v7708 = vpop.f32.mrf.mxu0
      %v7709 = vadd.f32 %v7551, %v7708
      %7710 = vmatmul.f32.gmra.mxu0 %v7599
      %v7711 = vpop.f32.mrf.mxu0
      %v7712 = vadd.f32 %v7551, %v7711
      %7713 = vmatmul.f32.gmra.mxu0 %v7602
      %v7714 = vpop.f32.mrf.mxu0
      %v7715 = vadd.f32 %v7551, %v7714
      %7716 = vmatmul.f32.gmra.mxu0 %v7605
      %v7717 = vpop.f32.mrf.mxu0
      %v7718 = vadd.f32 %v7551, %v7717
      %7719 = vmatmul.f32.gmra.mxu0 %v7608
      %v7720 = vpop.f32.mrf.mxu0
      %v7721 = vadd.f32 %v7551, %v7720
      %7722 = vmatmul.f32.gmra.mxu0 %v7611
      %v7723 = vpop.f32.mrf.mxu0
      %v7724 = vadd.f32 %v7551, %v7723
      %7725 = vmatmul.f32.gmra.mxu0 %v7614
      %v7726 = vpop.f32.mrf.mxu0
      %v7727 = vadd.f32 %v7551, %v7726
      %7728 = vmatmul.f32.gmra.mxu0 %v7617
      %v7729 = vpop.f32.mrf.mxu0
      %v7730 = vadd.f32 %v7551, %v7729
      %7731 = vmatmul.f32.gmra.mxu0 %v7620
      %v7732 = vpop.f32.mrf.mxu0
      %v7733 = vadd.f32 %v7551, %v7732
      %7734 = vmatmul.f32.gmra.mxu0 %v7623
      %v7735 = vpop.f32.mrf.mxu0
      %v7736 = vadd.f32 %v7551, %v7735
      %7737 = vmatmul.f32.gmra.mxu0 %v7626
      %v7738 = vpop.f32.mrf.mxu0
      %v7739 = vadd.f32 %v7551, %v7738
      %7740 = vmatmul.f32.gmra.mxu0 %v7629
      %v7741 = vpop.f32.mrf.mxu0
      %v7742 = vadd.f32 %v7551, %v7741
      %7743 = vmatmul.f32.gmra.mxu0 %v7632
      %v7744 = vpop.f32.mrf.mxu0
      %v7745 = vadd.f32 %v7551, %v7744
      %7746 = vmatmul.f32.gmra.mxu0 %v7635
      %v7747 = vpop.f32.mrf.mxu0
      %v7748 = vadd.f32 %v7551, %v7747
      %7749 = vmatmul.f32.gmra.mxu0 %v7638
      %v7750 = vpop.f32.mrf.mxu0
      %v7751 = vadd.f32 %v7551, %v7750
      %7752 = vmatmul.f32.gmra.mxu0 %v7641
      %v7753 = vpop.f32.mrf.mxu0
      %v7754 = vadd.f32 %v7551, %v7753
      %7755 = vmatmul.f32.gmra.mxu0 %v7644
      %v7756 = vpop.f32.mrf.mxu0
      %v7757 = vadd.f32 %v7551, %v7756
      %7758 = vmatmul.f32.gmra.mxu0 %v7647
      %v7759 = vpop.f32.mrf.mxu0
      %v7760 = vadd.f32 %v7551, %v7759
      %7761 = vdwg.mxu0
      %vm7762 = vcmp.gt.f32.partialorder %v7667, 0.0
      %vm7763 = vcmp.gt.f32.partialorder %v7670, 0.0
      %vm7764 = vcmp.gt.f32.partialorder %v7673, 0.0
      %vm7765 = vcmp.gt.f32.partialorder %v7676, 0.0
      %vm7766 = vcmp.gt.f32.partialorder %v7679, 0.0
      %vm7767 = vcmp.gt.f32.partialorder %v7682, 0.0
      %vm7768 = vcmp.gt.f32.partialorder %v7685, 0.0
      %vm7769 = vcmp.gt.f32.partialorder %v7688, 0.0
      %vm7770 = vcmp.gt.f32.partialorder %v7691, 0.0
      %vm7771 = vcmp.gt.f32.partialorder %v7694, 0.0
      %vm7772 = vcmp.gt.f32.partialorder %v7697, 0.0
      %vm7773 = vcmp.gt.f32.partialorder %v7700, 0.0
      %vm7774 = vcmp.gt.f32.partialorder %v7703, 0.0
      %vm7775 = vcmp.gt.f32.partialorder %v7706, 0.0
      %vm7776 = vcmp.gt.f32.partialorder %v7709, 0.0
      %vm7777 = vcmp.gt.f32.partialorder %v7712, 0.0
      %vm7778 = vcmp.gt.f32.partialorder %v7715, 0.0
      %vm7779 = vcmp.gt.f32.partialorder %v7718, 0.0
      %vm7780 = vcmp.gt.f32.partialorder %v7721, 0.0
      %vm7781 = vcmp.gt.f32.partialorder %v7724, 0.0
      %vm7782 = vcmp.gt.f32.partialorder %v7727, 0.0
      %vm7783 = vcmp.gt.f32.partialorder %v7730, 0.0
      %vm7784 = vcmp.gt.f32.partialorder %v7733, 0.0
      %vm7785 = vcmp.gt.f32.partialorder %v7736, 0.0
      %vm7786 = vcmp.gt.f32.partialorder %v7739, 0.0
      %vm7787 = vcmp.gt.f32.partialorder %v7742, 0.0
      %vm7788 = vcmp.gt.f32.partialorder %v7745, 0.0
      %vm7789 = vcmp.gt.f32.partialorder %v7748, 0.0
      %vm7790 = vcmp.gt.f32.partialorder %v7751, 0.0
      %vm7791 = vcmp.gt.f32.partialorder %v7754, 0.0
      %vm7792 = vcmp.gt.f32.partialorder %v7757, 0.0
      %vm7793 = vcmp.gt.f32.partialorder %v7760, 0.0
      %v7794 = vmul.f32 %v7667, 0.2
      %v7795 = vmul.f32 %v7670, 0.2
      %v7796 = vmul.f32 %v7673, 0.2
      %v7797 = vmul.f32 %v7676, 0.2
      %v7798 = vmul.f32 %v7679, 0.2
      %v7799 = vmul.f32 %v7682, 0.2
      %v7800 = vmul.f32 %v7685, 0.2
      %v7801 = vmul.f32 %v7688, 0.2
      %v7802 = vmul.f32 %v7691, 0.2
      %v7803 = vmul.f32 %v7694, 0.2
      %v7804 = vmul.f32 %v7697, 0.2
      %v7805 = vmul.f32 %v7700, 0.2
      %v7806 = vmul.f32 %v7703, 0.2
      %v7807 = vmul.f32 %v7706, 0.2
      %v7808 = vmul.f32 %v7709, 0.2
      %v7809 = vmul.f32 %v7712, 0.2
      %v7810 = vmul.f32 %v7715, 0.2
      %v7811 = vmul.f32 %v7718, 0.2
      %v7812 = vmul.f32 %v7721, 0.2
      %v7813 = vmul.f32 %v7724, 0.2
      %v7814 = vmul.f32 %v7727, 0.2
      %v7815 = vmul.f32 %v7730, 0.2
      %v7816 = vmul.f32 %v7733, 0.2
      %v7817 = vmul.f32 %v7736, 0.2
      %v7818 = vmul.f32 %v7739, 0.2
      %v7819 = vmul.f32 %v7742, 0.2
      %v7820 = vmul.f32 %v7745, 0.2
      %v7821 = vmul.f32 %v7748, 0.2
      %v7822 = vmul.f32 %v7751, 0.2
      %v7823 = vmul.f32 %v7754, 0.2
      %v7824 = vmul.f32 %v7757, 0.2
      %v7825 = vmul.f32 %v7760, 0.2
      %v7826 = vsel %vm7762, %v7667, %v7794
      %v7827 = vsel %vm7763, %v7670, %v7795
      %v7828 = vsel %vm7764, %v7673, %v7796
      %v7829 = vsel %vm7765, %v7676, %v7797
      %v7830 = vsel %vm7766, %v7679, %v7798
      %v7831 = vsel %vm7767, %v7682, %v7799
      %v7832 = vsel %vm7768, %v7685, %v7800
      %v7833 = vsel %vm7769, %v7688, %v7801
      %v7834 = vsel %vm7770, %v7691, %v7802
      %v7835 = vsel %vm7771, %v7694, %v7803
      %v7836 = vsel %vm7772, %v7697, %v7804
      %v7837 = vsel %vm7773, %v7700, %v7805
      %v7838 = vsel %vm7774, %v7703, %v7806
      %v7839 = vsel %vm7775, %v7706, %v7807
      %v7840 = vsel %vm7776, %v7709, %v7808
      %v7841 = vsel %vm7777, %v7712, %v7809
      %v7842 = vsel %vm7778, %v7715, %v7810
      %v7843 = vsel %vm7779, %v7718, %v7811
      %v7844 = vsel %vm7780, %v7721, %v7812
      %v7845 = vsel %vm7781, %v7724, %v7813
      %v7846 = vsel %vm7782, %v7727, %v7814
      %v7847 = vsel %vm7783, %v7730, %v7815
      %v7848 = vsel %vm7784, %v7733, %v7816
      %v7849 = vsel %vm7785, %v7736, %v7817
      %v7850 = vsel %vm7786, %v7739, %v7818
      %v7851 = vsel %vm7787, %v7742, %v7819
      %v7852 = vsel %vm7788, %v7745, %v7820
      %v7853 = vsel %vm7789, %v7748, %v7821
      %v7854 = vsel %vm7790, %v7751, %v7822
      %v7855 = vsel %vm7791, %v7754, %v7823
      %v7856 = vsel %vm7792, %v7757, %v7824
      %v7857 = vsel %vm7793, %v7760, %v7825
      %7858 = vst.msk [vmem:[%s224] sm:$0xff] %vm225, %v7826
      %7859 = vst.msk [vmem:[%s224 + $0x8] sm:$0xff] %vm225, %v7827
      %7860 = vst.msk [vmem:[%s224 + $0x10] sm:$0xff] %vm225, %v7828
      %7861 = vst.msk [vmem:[%s224 + $0x18] sm:$0xff] %vm225, %v7829
      %7862 = vst.msk [vmem:[%s224 + $0x20] sm:$0xff] %vm225, %v7830
      %7863 = vst.msk [vmem:[%s224 + $0x28] sm:$0xff] %vm225, %v7831
      %7864 = vst.msk [vmem:[%s224 + $0x30] sm:$0xff] %vm225, %v7832
      %7865 = vst.msk [vmem:[%s224 + $0x38] sm:$0xff] %vm225, %v7833
      %7866 = vst.msk [vmem:[%s224 + $0x40] sm:$0xff] %vm225, %v7834
      %7867 = vst.msk [vmem:[%s224 + $0x48] sm:$0xff] %vm225, %v7835
      %7868 = vst.msk [vmem:[%s224 + $0x50] sm:$0xff] %vm225, %v7836
      %7869 = vst.msk [vmem:[%s224 + $0x58] sm:$0xff] %vm225, %v7837
      %7870 = vst.msk [vmem:[%s224 + $0x60] sm:$0xff] %vm225, %v7838
      %7871 = vst.msk [vmem:[%s224 + $0x68] sm:$0xff] %vm225, %v7839
      %7872 = vst.msk [vmem:[%s224 + $0x70] sm:$0xff] %vm225, %v7840
      %7873 = vst.msk [vmem:[%s224 + $0x78] sm:$0xff] %vm225, %v7841
      %7874 = vst.msk [vmem:[%s224 + $0x80] sm:$0xff] %vm225, %v7842
      %7875 = vst.msk [vmem:[%s224 + $0x88] sm:$0xff] %vm225, %v7843
      %7876 = vst.msk [vmem:[%s224 + $0x90] sm:$0xff] %vm225, %v7844
      %7877 = vst.msk [vmem:[%s224 + $0x98] sm:$0xff] %vm225, %v7845
      %7878 = vst.msk [vmem:[%s224 + $0xa0] sm:$0xff] %vm225, %v7846
      %7879 = vst.msk [vmem:[%s224 + $0xa8] sm:$0xff] %vm225, %v7847
      %7880 = vst.msk [vmem:[%s224 + $0xb0] sm:$0xff] %vm225, %v7848
      %7881 = vst.msk [vmem:[%s224 + $0xb8] sm:$0xff] %vm225, %v7849
      %7882 = vst.msk [vmem:[%s224 + $0xc0] sm:$0xff] %vm225, %v7850
      %7883 = vst.msk [vmem:[%s224 + $0xc8] sm:$0xff] %vm225, %v7851
      %7884 = vst.msk [vmem:[%s224 + $0xd0] sm:$0xff] %vm225, %v7852
      %7885 = vst.msk [vmem:[%s224 + $0xd8] sm:$0xff] %vm225, %v7853
      %7886 = vst.msk [vmem:[%s224 + $0xe0] sm:$0xff] %vm225, %v7854
      %7887 = vst.msk [vmem:[%s224 + $0xe8] sm:$0xff] %vm225, %v7855
      %7888 = vst.msk [vmem:[%s224 + $0xf0] sm:$0xff] %vm225, %v7856
      %7889 = vst.msk [vmem:[%s224 + $0xf8] sm:$0xff] %vm225, %v7857
      %p7890 = scmp.lt.s32.totalorder %s16, 1
      %s7891 = scalar_select %p7890, %s16, 1
      %s7892 = smul.addr %s7891, 32
      %s7893 = smul.addr %s7892, 8
      %s7894 = scalar_lea.vmem %s5, %s7893
      // Predicated region
      $region41: #{tpu_custom_call.1} parent=39 // pred_check
        %p7895 = pneg %p144
      $region42: #{tpu_custom_call.1} parent=39 // pred_check_branch
        %7897 = sbr.rel (%p7895) target = $region44
      $region43: #{tpu_custom_call.1} parent=39 // pred_region
        _
      $region44: #{tpu_custom_call.1} parent=39 // pred_fallthru
        _
    $region40: #{tpu_custom_call.1} parent=5 // pred_fallthru
      _
    %p7898 = scmp.le.s32.totalorder 2, %s11
    // Predicated region
    $region45: #{tpu_custom_call.1} parent=5 // pred_check
      %p7899 = pneg %p7898
    $region46: #{tpu_custom_call.1} parent=5 // pred_check_branch
      %7901 = sbr.rel (%p7899) target = $region48
    $region47: #{tpu_custom_call.1} parent=5 // pred_region
      %s7902 = ssub.s32 %s11, 2
      // Predicated region
      $region49: #{tpu_custom_call.1} parent=47 // pred_check
        %p7903 = pneg %p150
      $region50: #{tpu_custom_call.1} parent=47 // pred_check_branch
        %7905 = sbr.rel (%p7903) target = $region52
      $region51: #{tpu_custom_call.1} parent=47 // pred_region
        %p7906 = scmp.lt.s32.totalorder %s17, 1
        %s7907 = scalar_select %p7906, %s17, 1
        %s7908 = smul.addr %s7907, 32
        %s7909 = smul.addr %s7908, 8
        %s7910 = scalar_lea.vmem %s5, %s7909
      $region52: #{tpu_custom_call.1} parent=47 // pred_fallthru
        _
    $region48: #{tpu_custom_call.1} parent=5 // pred_fallthru
      _
  $region6: #{tpu_custom_call.1} parent=0 // loop_footer
    %s15 = sadd.s32 1, %s11
  $region7: #{tpu_custom_call.1} parent=0 // loop_footer_branch
    %10 = sbr.rel target = $region3
  $region8: #{tpu_custom_call.1} parent=0 // loop_exit
    _

</llo_original>
